<compile_context>
chip_gen: v5e
topology: v5e:2x2
jax: 0.10.0
libtpu: 0.0.40
codegen_flags: <defaults>
</compile_context>

<pallas_src>
import jax
import jax.numpy as jnp
from jax import lax
from jax.experimental import pallas as pl
from jax.experimental.pallas import tpu as pltpu


# ----------------------------------------------------------------------------
# Helpers
# ----------------------------------------------------------------------------
def _pick_row_tile(H, W, target_rows, need_even):
    """Largest divisor of H (even if required) whose flattened row count
    th*W stays under target_rows; falls back to the smallest legal divisor."""
    smallest = None
    for th in range(H, 0, -1):
        if H % th:
            continue
        if need_even and (th % 2):
            continue
        smallest = th
        if th * W <= target_rows:
            return th
    return smallest if smallest is not None else H


# ----------------------------------------------------------------------------
# 1x1 convolution (pointwise): out = x @ W + b, optionally + nearest-2x
# upsample of the coarser lateral fused in-kernel (FPN top-down pathway).
# ----------------------------------------------------------------------------
def _pw_kernel(x_ref, w_ref, b_ref, o_ref):
    _, th, W, cin = x_ref.shape
    cout = w_ref.shape[1]
    x = x_ref[...].reshape(th * W, cin).astype(jnp.bfloat16)
    y = jnp.dot(x, w_ref[...], preferred_element_type=jnp.float32) + b_ref[...]
    o_ref[...] = y.reshape(1, th, W, cout).astype(o_ref.dtype)


def _pw_upadd_kernel(x_ref, c_ref, w_ref, b_ref, o_ref):
    _, th, W, cin = x_ref.shape
    cout = w_ref.shape[1]
    x = x_ref[...].reshape(th * W, cin).astype(jnp.bfloat16)
    y = jnp.dot(x, w_ref[...], preferred_element_type=jnp.float32) + b_ref[...]
    y = y.reshape(th, W, cout)
    c = c_ref[...].reshape(th // 2, W // 2, cout)          # coarse lateral, f32
    hc, wc = th // 2, W // 2
    # nearest 2x upsample fused in-kernel; lane dim (cout=128k) stays untouched.
    cw = jnp.broadcast_to(c[:, :, None, :], (hc, wc, 2, cout)).reshape(hc, 2 * wc, cout)
    cu = jnp.broadcast_to(cw[:, None, :, :], (hc, 2, 2 * wc, cout)).reshape(th, W, cout)
    o_ref[...] = (y + cu).reshape(1, th, W, cout).astype(o_ref.dtype)


def conv1x1(x_nhwc, w_io, b_1c, coarse=None, target_rows=1024):
    """1x1 conv over NHWC input. w_io: (Cin, Cout) bf16; b_1c: (1, Cout) f32.
    `coarse` (optional): NHWC tensor at half spatial resolution whose nearest-2x
    upsample is added to the output inside the kernel (FPN top-down add)."""
    N, H, W, Cin = x_nhwc.shape
    Cout = w_io.shape[1]
    need_up = coarse is not None
    if need_up:
        assert coarse.shape == (N, H // 2, W // 2, Cout) and H % 2 == 0 and W % 2 == 0
    th = _pick_row_tile(H, W, target_rows, need_even=need_up)
    grid = (N, H // th)

    x_spec = pl.BlockSpec((1, th, W, Cin), lambda n, i: (n, i, 0, 0))
    w_spec = pl.BlockSpec((Cin, Cout), lambda n, i: (0, 0))
    b_spec = pl.BlockSpec((1, Cout), lambda n, i: (0, 0))
    o_spec = pl.BlockSpec((1, th, W, Cout), lambda n, i: (n, i, 0, 0))
    cp = pltpu.CompilerParams(dimension_semantics=("parallel", "parallel"))
    out_shape = jax.ShapeDtypeStruct((N, H, W, Cout), x_nhwc.dtype)

    if not need_up:
        return pl.pallas_call(
            _pw_kernel, out_shape=out_shape, grid=grid,
            in_specs=[x_spec, w_spec, b_spec], out_specs=o_spec,
            compiler_params=cp,
        )(x_nhwc, w_io, b_1c)

    c_spec = pl.BlockSpec((1, th // 2, W // 2, Cout), lambda n, i: (n, i, 0, 0))
    return pl.pallas_call(
        _pw_upadd_kernel, out_shape=out_shape, grid=grid,
        in_specs=[x_spec, c_spec, w_spec, b_spec], out_specs=o_spec,
        compiler_params=cp,
    )(x_nhwc, coarse, w_io, b_1c)


# ----------------------------------------------------------------------------
# 3x3 / stride-1 / pad-1 conv: 9 accumulating bf16 tap matmuls, f32 accumulate.
# ----------------------------------------------------------------------------
def _make_conv3x3_kernel(apply_relu):
    def kernel(xp_ref, w_ref, b_ref, o_ref):
        _, Hp, Wp, cin = xp_ref.shape
        H, W = Hp - 2, Wp - 2
        cout = o_ref.shape[-1]
        xp = xp_ref[...][0]                          # (H+2, W+2, Cin) f32
        w = w_ref[...]                               # (9, Cin, Cout) bf16
        acc = jnp.zeros((H * W, cout), jnp.float32)
        for dy in range(3):
            for dx in range(3):
                tap = xp[dy:dy + H, dx:dx + W, :].reshape(H * W, cin)
                acc = acc + jnp.dot(tap.astype(jnp.bfloat16), w[3 * dy + dx],
                                    preferred_element_type=jnp.float32)
        y = acc + b_ref[...]
        if apply_relu:
            y = jnp.maximum(y, 0.0)
        o_ref[...] = y.reshape(1, H, W, cout).astype(o_ref.dtype)
    return kernel


def conv3x3(x_nhwc, w_taps, b_1c, relu=False):
    """3x3 stride-1 'SAME' conv over NHWC. w_taps: (9, Cin, Cout) bf16 in
    (ky, kx) row order; b_1c: (1, Cout) f32."""
    N, H, W, Cin = x_nhwc.shape
    Cout = w_taps.shape[-1]
    xp = jnp.pad(x_nhwc, ((0, 0), (1, 1), (1, 1), (0, 0)))   # thin XLA glue
    # TODO(synk): row-tile with a 1-row halo via manual DMA for large spatial
    # sizes (P3 at realistic resolutions); whole-image blocks are fine here.
    return pl.pallas_call(
        _make_conv3x3_kernel(relu),
        out_shape=jax.ShapeDtypeStruct((N, H, W, Cout), x_nhwc.dtype),
        grid=(N,),
        in_specs=[pl.BlockSpec((1, H + 2, W + 2, Cin), lambda n: (n, 0, 0, 0)),
                  pl.BlockSpec((9, Cin, Cout), lambda n: (0, 0, 0)),
                  pl.BlockSpec((1, Cout), lambda n: (0, 0))],
        out_specs=pl.BlockSpec((1, H, W, Cout), lambda n: (n, 0, 0, 0)),
        compiler_params=pltpu.CompilerParams(dimension_semantics=("parallel",)),
    )(xp, w_taps, b_1c)


# ----------------------------------------------------------------------------
# 3x3 / stride-2 / pad-1 conv (P6, P7): parity-split input so every tap is a
# contiguous slice; matmul M is exactly Ho*Wo (no overcompute, no subsample).
# ----------------------------------------------------------------------------
def _make_conv3x3_s2_kernel(apply_relu):
    def kernel(ph_ref, w_ref, b_ref, o_ref):
        _, _, hp, wp, cin = ph_ref.shape
        _, Ho, Wo, cout = o_ref.shape
        ph = ph_ref[...][0]                          # (4, hp, wp, Cin) f32
        w = w_ref[...]                               # (9, Cin, Cout) bf16
        acc = jnp.zeros((Ho * Wo, cout), jnp.float32)
        for dy in range(3):
            for dx in range(3):
                p = 2 * (dy % 2) + (dx % 2)
                tap = ph[p, dy // 2:dy // 2 + Ho, dx // 2:dx // 2 + Wo, :]
                tap = tap.reshape(Ho * Wo, cin)
                acc = acc + jnp.dot(tap.astype(jnp.bfloat16), w[3 * dy + dx],
                                    preferred_element_type=jnp.float32)
        y = acc + b_ref[...]
        if apply_relu:
            y = jnp.maximum(y, 0.0)
        o_ref[...] = y.reshape(1, Ho, Wo, cout).astype(o_ref.dtype)
    return kernel


def conv3x3_s2(x_nhwc, w_taps, b_1c, relu=False):
    """3x3 stride-2 pad-1 conv over NHWC (even H, W)."""
    N, H, W, Cin = x_nhwc.shape
    Cout = w_taps.shape[-1]
    assert H % 2 == 0 and W % 2 == 0  # TODO(synk): general odd-size stride-2 path
    Ho, Wo = H // 2, W // 2
    xp = jnp.pad(x_nhwc, ((0, 0), (1, 1), (1, 1), (0, 0)))
    hp, wp = (H + 2) // 2, (W + 2) // 2
    # space-to-depth by parity (thin XLA glue on the small top-of-pyramid inputs)
    ph = xp.reshape(N, hp, 2, wp, 2, Cin).transpose(0, 2, 4, 1, 3, 5)
    ph = ph.reshape(N, 4, hp, wp, Cin)           # ph[n, 2*r+c, i, j] = xp[n, 2i+r, 2j+c]
    return pl.pallas_call(
        _make_conv3x3_s2_kernel(relu),
        out_shape=jax.ShapeDtypeStruct((N, Ho, Wo, Cout), x_nhwc.dtype),
        grid=(N,),
        in_specs=[pl.BlockSpec((1, 4, hp, wp, Cin), lambda n: (n, 0, 0, 0, 0)),
                  pl.BlockSpec((9, Cin, Cout), lambda n: (0, 0, 0)),
                  pl.BlockSpec((1, Cout), lambda n: (0, 0))],
        out_specs=pl.BlockSpec((1, Ho, Wo, Cout), lambda n: (n, 0, 0, 0)),
        compiler_params=pltpu.CompilerParams(dimension_semantics=("parallel",)),
    )(ph, w_taps, b_1c)


# ----------------------------------------------------------------------------
# Wrapper: full FPN forward (PyTorch NCHW / OIHW interface).
# ----------------------------------------------------------------------------
def _w1x1(w_oihw):                               # (F, Cin, 1, 1) -> (Cin, F) bf16
    return jnp.transpose(w_oihw[:, :, 0, 0], (1, 0)).astype(jnp.bfloat16)


def _w3x3_taps(w_oihw):                          # (F, Cin, 3, 3) -> (9, Cin, F) bf16
    F, Cin = w_oihw.shape[0], w_oihw.shape[1]
    w = jnp.transpose(w_oihw, (2, 3, 1, 0)).reshape(9, Cin, F)
    return w.astype(jnp.bfloat16)


def _b(b):
    return b.reshape(1, -1).astype(jnp.float32)


def pyramid_forward(C3, C4, C5, p):
    """Inputs NCHW; weights PyTorch-style OIHW; returns [P3, P4, P5, P6, P7] NCHW."""
    to_nhwc = lambda t: jnp.transpose(t, (0, 2, 3, 1))
    to_nchw = lambda t: jnp.transpose(t, (0, 3, 1, 2))
    c3, c4, c5 = to_nhwc(C3), to_nhwc(C4), to_nhwc(C5)

    w5_2, b5_2 = _w3x3_taps(p["P5_2.w"]), _b(p["P5_2.b"])   # reused for P4/P3 smoothing

    p5_lat = conv1x1(c5, _w1x1(p["P5_1.w"]), _b(p["P5_1.b"]))
    P5 = conv3x3(p5_lat, w5_2, b5_2)

    # top-down adds: nearest-2x upsample fused into the 1x1 kernel
    p4_lat = conv1x1(c4, _w1x1(p["P4_1.w"]), _b(p["P4_1.b"]), coarse=p5_lat)
    P4 = conv3x3(p4_lat, w5_2, b5_2)

    p3_lat = conv1x1(c3, _w1x1(p["P3_1.w"]), _b(p["P3_1.b"]), coarse=p4_lat)
    P3 = conv3x3(p3_lat, w5_2, b5_2)

    P6 = conv3x3_s2(c5, _w3x3_taps(p["P6_1.w"]), _b(p["P6_1.b"]))
    P7 = conv3x3_s2(P6, _w3x3_taps(p["P7_1.w"]), _b(p["P7_1.b"]), relu=True)
    # TODO(synk): fuse the tiny P5_2 / P6 / P7 chain into one pallas_call with a
    # VMEM-resident P6 to shave two kernel launches + HBM round trips.

    return [to_nchw(t) for t in (P3, P4, P5, P6, P7)]


# ----------------------------------------------------------------------------
# Pure-JAX reference (NCHW / OIHW, matches the PyTorch forward).
# ----------------------------------------------------------------------------
def _reference(C3, C4, C5, p):
    def conv(x, w, b, stride, pad):
        y = lax.conv_general_dilated(
            x, w, (stride, stride), [(pad, pad), (pad, pad)],
            dimension_numbers=("NCHW", "OIHW", "NCHW"),
            precision=lax.Precision.HIGHEST)
        return y + b[None, :, None, None]

    up = lambda x: jnp.repeat(jnp.repeat(x, 2, axis=2), 2, axis=3)

    p5 = conv(C5, p["P5_1.w"], p["P5_1.b"], 1, 0)
    p5_up = up(p5)
    P5 = conv(p5, p["P5_2.w"], p["P5_2.b"], 1, 1)
    p4 = conv(C4, p["P4_1.w"], p["P4_1.b"], 1, 0) + p5_up
    p4_up = up(p4)
    P4 = conv(p4, p["P5_2.w"], p["P5_2.b"], 1, 1)
    p3 = conv(C3, p["P3_1.w"], p["P3_1.b"], 1, 0) + p4_up
    P3 = conv(p3, p["P5_2.w"], p["P5_2.b"], 1, 1)
    P6 = conv(C5, p["P6_1.w"], p["P6_1.b"], 2, 1)
    P7 = jax.nn.relu(conv(P6, p["P7_1.w"], p["P7_1.b"], 2, 1))
    return [P3, P4, P5, P6, P7]


# ----------------------------------------------------------------------------
if __name__ == "__main__":
    key = jax.random.PRNGKey(0)
    N = 2
    C3c, C4c, C5c, F = 32, 64, 128, 128          # feature_size multiple of 128
    H3 = W3 = 16
    H4 = W4 = 8
    H5 = W5 = 4

    ks = jax.random.split(key, 16)

    C3 = jax.random.normal(ks[0], (N, C3c, H3, W3), jnp.float32)
    C4 = jax.random.normal(ks[1], (N, C4c, H4, W4), jnp.float32)
    C5 = jax.random.normal(ks[2], (N, C5c, H5, W5), jnp.float32)

    def conv_w(k, cout, cin, kk):
        scale = 1.0 / jnp.sqrt(jnp.float32(cin * kk * kk))
        return jax.random.normal(k, (cout, cin, kk, kk), jnp.float32) * scale

    def conv_b(k, cout):
        return 0.1 * jax.random.normal(k, (cout,), jnp.float32)

    params = {
        "P5_1.w": conv_w(ks[3], F, C5c, 1), "P5_1.b": conv_b(ks[4], F),
        "P4_1.w": conv_w(ks[5], F, C4c, 1), "P4_1.b": conv_b(ks[6], F),
        "P3_1.w": conv_w(ks[7], F, C3c, 1), "P3_1.b": conv_b(ks[8], F),
        "P5_2.w": conv_w(ks[9], F, F, 3),   "P5_2.b": conv_b(ks[10], F),
        "P6_1.w": conv_w(ks[11], F, C5c, 3), "P6_1.b": conv_b(ks[12], F),
        "P7_1.w": conv_w(ks[13], F, F, 3),  "P7_1.b": conv_b(ks[14], F),
        # P4_2 / P3_2 exist in the PyTorch module but are never used in forward.
    }

    outs = jax.jit(pyramid_forward)(C3, C4, C5, params)
    outs = jax.block_until_ready(outs)

    refs = _reference(C3, C4, C5, params)

    expected_shapes = [(N, F, 16, 16), (N, F, 8, 8), (N, F, 4, 4),
                       (N, F, 2, 2), (N, F, 1, 1)]
    # bf16 MXU operands vs a Precision.HIGHEST f32 reference -> slightly wider tol.
    for o, r, s in zip(outs, refs, expected_shapes):
        assert o.shape == s, (o.shape, s)
        assert jnp.allclose(o, r, rtol=5e-2, atol=5e-2), float(
            jnp.max(jnp.abs(o - r)))

    print("KERNEL_OK")
</pallas_src>

<mosaic_0001>
module attributes {stable_mosaic.version = 11 : i64} {
  func.func @_pw_kernel(%arg0: i32, %arg1: i32, %arg2: memref<1x4x4x128xf32, #tpu.memory_space<vmem>>, %arg3: memref<128x128xbf16, #tpu.memory_space<vmem>>, %arg4: memref<1x128xf32, #tpu.memory_space<vmem>>, %arg5: memref<1x4x4x128xf32, #tpu.memory_space<vmem>>) attributes {dimension_semantics = [#tpu.dimension_semantics<parallel>, #tpu.dimension_semantics<parallel>], iteration_bounds = array<i64: 2, 1>, scalar_prefetch = 0 : i64, scratch_operands = 0 : i64, tpu.core_type = #tpu.core_type<tc>, window_params = [{transform_indices = @transform_0, window_bounds = array<i64: 1, 4, 4, 128>}, {pipeline_mode = #tpu.pipeline_mode<synchronous>, transform_indices = @transform_1, window_bounds = array<i64: 128, 128>}, {pipeline_mode = #tpu.pipeline_mode<synchronous>, transform_indices = @transform_2, window_bounds = array<i64: 1, 128>}, {transform_indices = @transform_3, window_bounds = array<i64: 1, 4, 4, 128>}]} {
    %c0 = arith.constant 0 : index
    %c0_0 = arith.constant 0 : index
    %c0_1 = arith.constant 0 : index
    %c0_2 = arith.constant 0 : index
    %0 = vector.load %arg2[%c0, %c0_0, %c0_1, %c0_2] : memref<1x4x4x128xf32, #tpu.memory_space<vmem>>, vector<1x4x4x128xf32>
    %1 = vector.shape_cast %0 : vector<1x4x4x128xf32> to vector<16x128xf32>
    %2 = arith.truncf %1 : vector<16x128xf32> to vector<16x128xbf16>
    %c0_3 = arith.constant 0 : index
    %c0_4 = arith.constant 0 : index
    %3 = vector.load %arg3[%c0_3, %c0_4] : memref<128x128xbf16, #tpu.memory_space<vmem>>, vector<128x128xbf16>
    %cst = arith.constant dense<0.000000e+00> : vector<16x128xf32>
    %4 = tpu.matmul %2, %3, %cst {dimension_numbers = #tpu.dot_dimension_numbers<[1], [0], [0], [1], [0, 0, 1, 1], [], []>} : vector<16x128xbf16>, vector<128x128xbf16>, vector<16x128xf32> -> vector<16x128xf32>
    %c0_5 = arith.constant 0 : index
    %c0_6 = arith.constant 0 : index
    %5 = vector.load %arg4[%c0_5, %c0_6] : memref<1x128xf32, #tpu.memory_space<vmem>>, vector<1x128xf32>
    %6 = vector.broadcast %5 : vector<1x128xf32> to vector<16x128xf32>
    %7 = arith.addf %4, %6 : vector<16x128xf32>
    %8 = vector.shape_cast %7 : vector<16x128xf32> to vector<1x4x4x128xf32>
    %c0_7 = arith.constant 0 : index
    %c0_8 = arith.constant 0 : index
    %c0_9 = arith.constant 0 : index
    %c0_10 = arith.constant 0 : index
    %9 = vector.load %arg5[%c0_7, %c0_8, %c0_9, %c0_10] : memref<1x4x4x128xf32, #tpu.memory_space<vmem>>, vector<1x4x4x128xf32>
    tpu.vector_store %arg5[%c0_7, %c0_8, %c0_9, %c0_10], %8 {strides = array<i32>} : memref<1x4x4x128xf32, #tpu.memory_space<vmem>>, vector<1x4x4x128xf32>,
    return
  }
  func.func @transform_0(%arg0: i32, %arg1: i32) -> (i32, i32, i32, i32) {
    %c0_i32 = arith.constant 0 : i32
    %c0_i32_0 = arith.constant 0 : i32
    %c0_i32_1 = arith.constant 0 : i32
    return %arg0, %arg1, %c0_i32, %c0_i32_0 : i32, i32, i32, i32
  }
  func.func @transform_1(%arg0: i32, %arg1: i32) -> (i32, i32) {
    %c0_i32 = arith.constant 0 : i32
    %c0_i32_0 = arith.constant 0 : i32
    %c0_i32_1 = arith.constant 0 : i32
    return %c0_i32, %c0_i32_0 : i32, i32
  }
  func.func @transform_2(%arg0: i32, %arg1: i32) -> (i32, i32) {
    %c0_i32 = arith.constant 0 : i32
    %c0_i32_0 = arith.constant 0 : i32
    %c0_i32_1 = arith.constant 0 : i32
    return %c0_i32, %c0_i32_0 : i32, i32
  }
  func.func @transform_3(%arg0: i32, %arg1: i32) -> (i32, i32, i32, i32) {
    %c0_i32 = arith.constant 0 : i32
    %c0_i32_0 = arith.constant 0 : i32
    %c0_i32_1 = arith.constant 0 : i32
    return %arg0, %arg1, %c0_i32, %c0_i32_0 : i32, i32, i32, i32
  }
}

module attributes {stable_mosaic.version = 11 : i64} {
  func.func @_pw_upadd_kernel(%arg0: i32, %arg1: i32, %arg2: memref<1x8x8x64xf32, #tpu.memory_space<vmem>>, %arg3: memref<1x4x4x128xf32, #tpu.memory_space<vmem>>, %arg4: memref<64x128xbf16, #tpu.memory_space<vmem>>, %arg5: memref<1x128xf32, #tpu.memory_space<vmem>>, %arg6: memref<1x8x8x128xf32, #tpu.memory_space<vmem>>) attributes {dimension_semantics = [#tpu.dimension_semantics<parallel>, #tpu.dimension_semantics<parallel>], iteration_bounds = array<i64: 2, 1>, scalar_prefetch = 0 : i64, scratch_operands = 0 : i64, tpu.core_type = #tpu.core_type<tc>, window_params = [{transform_indices = @transform_0, window_bounds = array<i64: 1, 8, 8, 64>}, {transform_indices = @transform_1, window_bounds = array<i64: 1, 4, 4, 128>}, {pipeline_mode = #tpu.pipeline_mode<synchronous>, transform_indices = @transform_2, window_bounds = array<i64: 64, 128>}, {pipeline_mode = #tpu.pipeline_mode<synchronous>, transform_indices = @transform_3, window_bounds = array<i64: 1, 128>}, {transform_indices = @transform_4, window_bounds = array<i64: 1, 8, 8, 128>}]} {
    %c0 = arith.constant 0 : index
    %c0_0 = arith.constant 0 : index
    %c0_1 = arith.constant 0 : index
    %c0_2 = arith.constant 0 : index
    %0 = vector.load %arg2[%c0, %c0_0, %c0_1, %c0_2] : memref<1x8x8x64xf32, #tpu.memory_space<vmem>>, vector<1x8x8x64xf32>
    %1 = vector.shape_cast %0 : vector<1x8x8x64xf32> to vector<64x64xf32>
    %2 = arith.truncf %1 : vector<64x64xf32> to vector<64x64xbf16>
    %c0_3 = arith.constant 0 : index
    %c0_4 = arith.constant 0 : index
    %3 = vector.load %arg4[%c0_3, %c0_4] : memref<64x128xbf16, #tpu.memory_space<vmem>>, vector<64x128xbf16>
    %cst = arith.constant dense<0.000000e+00> : vector<64x128xf32>
    %4 = tpu.matmul %2, %3, %cst {dimension_numbers = #tpu.dot_dimension_numbers<[1], [0], [0], [1], [0, 0, 1, 1], [], []>} : vector<64x64xbf16>, vector<64x128xbf16>, vector<64x128xf32> -> vector<64x128xf32>
    %c0_5 = arith.constant 0 : index
    %c0_6 = arith.constant 0 : index
    %5 = vector.load %arg5[%c0_5, %c0_6] : memref<1x128xf32, #tpu.memory_space<vmem>>, vector<1x128xf32>
    %6 = vector.broadcast %5 : vector<1x128xf32> to vector<64x128xf32>
    %7 = arith.addf %4, %6 : vector<64x128xf32>
    %8 = vector.shape_cast %7 : vector<64x128xf32> to vector<8x8x128xf32>
    %c0_7 = arith.constant 0 : index
    %c0_8 = arith.constant 0 : index
    %c0_9 = arith.constant 0 : index
    %c0_10 = arith.constant 0 : index
    %9 = vector.load %arg3[%c0_7, %c0_8, %c0_9, %c0_10] : memref<1x4x4x128xf32, #tpu.memory_space<vmem>>, vector<1x4x4x128xf32>
    %10 = vector.shape_cast %9 : vector<1x4x4x128xf32> to vector<4x4x128xf32>
    %11 = vector.shape_cast %10 : vector<4x4x128xf32> to vector<4x4x1x128xf32>
    %12 = vector.shape_cast %11 : vector<4x4x1x128xf32> to vector<4x4x1x128xf32>
    %13 = vector.broadcast %12 : vector<4x4x1x128xf32> to vector<4x4x2x128xf32>
    %14 = vector.shape_cast %13 : vector<4x4x2x128xf32> to vector<4x8x128xf32>
    %15 = vector.shape_cast %14 : vector<4x8x128xf32> to vector<4x1x8x128xf32>
    %16 = vector.shape_cast %15 : vector<4x1x8x128xf32> to vector<4x1x8x128xf32>
    %17 = vector.broadcast %16 : vector<4x1x8x128xf32> to vector<4x2x8x128xf32>
    %18 = vector.shape_cast %17 : vector<4x2x8x128xf32> to vector<8x8x128xf32>
    %19 = arith.addf %8, %18 : vector<8x8x128xf32>
    %20 = vector.shape_cast %19 : vector<8x8x128xf32> to vector<1x8x8x128xf32>
    %c0_11 = arith.constant 0 : index
    %c0_12 = arith.constant 0 : index
    %c0_13 = arith.constant 0 : index
    %c0_14 = arith.constant 0 : index
    %21 = vector.load %arg6[%c0_11, %c0_12, %c0_13, %c0_14] : memref<1x8x8x128xf32, #tpu.memory_space<vmem>>, vector<1x8x8x128xf32>
    tpu.vector_store %arg6[%c0_11, %c0_12, %c0_13, %c0_14], %20 {strides = array<i32>} : memref<1x8x8x128xf32, #tpu.memory_space<vmem>>, vector<1x8x8x128xf32>,
    return
  }
  func.func @transform_0(%arg0: i32, %arg1: i32) -> (i32, i32, i32, i32) {
    %c0_i32 = arith.constant 0 : i32
    %c0_i32_0 = arith.constant 0 : i32
    %c0_i32_1 = arith.constant 0 : i32
    return %arg0, %arg1, %c0_i32, %c0_i32_0 : i32, i32, i32, i32
  }
  func.func @transform_1(%arg0: i32, %arg1: i32) -> (i32, i32, i32, i32) {
    %c0_i32 = arith.constant 0 : i32
    %c0_i32_0 = arith.constant 0 : i32
    %c0_i32_1 = arith.constant 0 : i32
    return %arg0, %arg1, %c0_i32, %c0_i32_0 : i32, i32, i32, i32
  }
  func.func @transform_2(%arg0: i32, %arg1: i32) -> (i32, i32) {
    %c0_i32 = arith.constant 0 : i32
    %c0_i32_0 = arith.constant 0 : i32
    %c0_i32_1 = arith.constant 0 : i32
    return %c0_i32, %c0_i32_0 : i32, i32
  }
  func.func @transform_3(%arg0: i32, %arg1: i32) -> (i32, i32) {
    %c0_i32 = arith.constant 0 : i32
    %c0_i32_0 = arith.constant 0 : i32
    %c0_i32_1 = arith.constant 0 : i32
    return %c0_i32, %c0_i32_0 : i32, i32
  }
  func.func @transform_4(%arg0: i32, %arg1: i32) -> (i32, i32, i32, i32) {
    %c0_i32 = arith.constant 0 : i32
    %c0_i32_0 = arith.constant 0 : i32
    %c0_i32_1 = arith.constant 0 : i32
    return %arg0, %arg1, %c0_i32, %c0_i32_0 : i32, i32, i32, i32
  }
}

module attributes {stable_mosaic.version = 11 : i64} {
  func.func @_pw_upadd_kernel(%arg0: i32, %arg1: i32, %arg2: memref<1x16x16x32xf32, #tpu.memory_space<vmem>>, %arg3: memref<1x8x8x128xf32, #tpu.memory_space<vmem>>, %arg4: memref<32x128xbf16, #tpu.memory_space<vmem>>, %arg5: memref<1x128xf32, #tpu.memory_space<vmem>>, %arg6: memref<1x16x16x128xf32, #tpu.memory_space<vmem>>) attributes {dimension_semantics = [#tpu.dimension_semantics<parallel>, #tpu.dimension_semantics<parallel>], iteration_bounds = array<i64: 2, 1>, scalar_prefetch = 0 : i64, scratch_operands = 0 : i64, tpu.core_type = #tpu.core_type<tc>, window_params = [{transform_indices = @transform_0, window_bounds = array<i64: 1, 16, 16, 32>}, {transform_indices = @transform_1, window_bounds = array<i64: 1, 8, 8, 128>}, {pipeline_mode = #tpu.pipeline_mode<synchronous>, transform_indices = @transform_2, window_bounds = array<i64: 32, 128>}, {pipeline_mode = #tpu.pipeline_mode<synchronous>, transform_indices = @transform_3, window_bounds = array<i64: 1, 128>}, {transform_indices = @transform_4, window_bounds = array<i64: 1, 16, 16, 128>}]} {
    %c0 = arith.constant 0 : index
    %c0_0 = arith.constant 0 : index
    %c0_1 = arith.constant 0 : index
    %c0_2 = arith.constant 0 : index
    %0 = vector.load %arg2[%c0, %c0_0, %c0_1, %c0_2] : memref<1x16x16x32xf32, #tpu.memory_space<vmem>>, vector<1x16x16x32xf32>
    %1 = vector.shape_cast %0 : vector<1x16x16x32xf32> to vector<256x32xf32>
    %2 = arith.truncf %1 : vector<256x32xf32> to vector<256x32xbf16>
    %c0_3 = arith.constant 0 : index
    %c0_4 = arith.constant 0 : index
    %3 = vector.load %arg4[%c0_3, %c0_4] : memref<32x128xbf16, #tpu.memory_space<vmem>>, vector<32x128xbf16>
    %cst = arith.constant dense<0.000000e+00> : vector<256x128xf32>
    %4 = tpu.matmul %2, %3, %cst {dimension_numbers = #tpu.dot_dimension_numbers<[1], [0], [0], [1], [0, 0, 1, 1], [], []>} : vector<256x32xbf16>, vector<32x128xbf16>, vector<256x128xf32> -> vector<256x128xf32>
    %c0_5 = arith.constant 0 : index
    %c0_6 = arith.constant 0 : index
    %5 = vector.load %arg5[%c0_5, %c0_6] : memref<1x128xf32, #tpu.memory_space<vmem>>, vector<1x128xf32>
    %6 = vector.broadcast %5 : vector<1x128xf32> to vector<256x128xf32>
    %7 = arith.addf %4, %6 : vector<256x128xf32>
    %8 = vector.shape_cast %7 : vector<256x128xf32> to vector<16x16x128xf32>
    %c0_7 = arith.constant 0 : index
    %c0_8 = arith.constant 0 : index
    %c0_9 = arith.constant 0 : index
    %c0_10 = arith.constant 0 : index
    %9 = vector.load %arg3[%c0_7, %c0_8, %c0_9, %c0_10] : memref<1x8x8x128xf32, #tpu.memory_space<vmem>>, vector<1x8x8x128xf32>
    %10 = vector.shape_cast %9 : vector<1x8x8x128xf32> to vector<8x8x128xf32>
    %11 = vector.shape_cast %10 : vector<8x8x128xf32> to vector<8x8x1x128xf32>
    %12 = vector.shape_cast %11 : vector<8x8x1x128xf32> to vector<8x8x1x128xf32>
    %13 = vector.broadcast %12 : vector<8x8x1x128xf32> to vector<8x8x2x128xf32>
    %14 = vector.shape_cast %13 : vector<8x8x2x128xf32> to vector<8x16x128xf32>
    %15 = vector.shape_cast %14 : vector<8x16x128xf32> to vector<8x1x16x128xf32>
    %16 = vector.shape_cast %15 : vector<8x1x16x128xf32> to vector<8x1x16x128xf32>
    %17 = vector.broadcast %16 : vector<8x1x16x128xf32> to vector<8x2x16x128xf32>
    %18 = vector.shape_cast %17 : vector<8x2x16x128xf32> to vector<16x16x128xf32>
    %19 = arith.addf %8, %18 : vector<16x16x128xf32>
    %20 = vector.shape_cast %19 : vector<16x16x128xf32> to vector<1x16x16x128xf32>
    %c0_11 = arith.constant 0 : index
    %c0_12 = arith.constant 0 : index
    %c0_13 = arith.constant 0 : index
    %c0_14 = arith.constant 0 : index
    %21 = vector.load %arg6[%c0_11, %c0_12, %c0_13, %c0_14] : memref<1x16x16x128xf32, #tpu.memory_space<vmem>>, vector<1x16x16x128xf32>
    tpu.vector_store %arg6[%c0_11, %c0_12, %c0_13, %c0_14], %20 {strides = array<i32>} : memref<1x16x16x128xf32, #tpu.memory_space<vmem>>, vector<1x16x16x128xf32>,
    return
  }
  func.func @transform_0(%arg0: i32, %arg1: i32) -> (i32, i32, i32, i32) {
    %c0_i32 = arith.constant 0 : i32
    %c0_i32_0 = arith.constant 0 : i32
    %c0_i32_1 = arith.constant 0 : i32
    return %arg0, %arg1, %c0_i32, %c0_i32_0 : i32, i32, i32, i32
  }
  func.func @transform_1(%arg0: i32, %arg1: i32) -> (i32, i32, i32, i32) {
    %c0_i32 = arith.constant 0 : i32
    %c0_i32_0 = arith.constant 0 : i32
    %c0_i32_1 = arith.constant 0 : i32
    return %arg0, %arg1, %c0_i32, %c0_i32_0 : i32, i32, i32, i32
  }
  func.func @transform_2(%arg0: i32, %arg1: i32) -> (i32, i32) {
    %c0_i32 = arith.constant 0 : i32
    %c0_i32_0 = arith.constant 0 : i32
    %c0_i32_1 = arith.constant 0 : i32
    return %c0_i32, %c0_i32_0 : i32, i32
  }
  func.func @transform_3(%arg0: i32, %arg1: i32) -> (i32, i32) {
    %c0_i32 = arith.constant 0 : i32
    %c0_i32_0 = arith.constant 0 : i32
    %c0_i32_1 = arith.constant 0 : i32
    return %c0_i32, %c0_i32_0 : i32, i32
  }
  func.func @transform_4(%arg0: i32, %arg1: i32) -> (i32, i32, i32, i32) {
    %c0_i32 = arith.constant 0 : i32
    %c0_i32_0 = arith.constant 0 : i32
    %c0_i32_1 = arith.constant 0 : i32
    return %arg0, %arg1, %c0_i32, %c0_i32_0 : i32, i32, i32, i32
  }
}

module attributes {stable_mosaic.version = 11 : i64} {
  func.func @kernel(%arg0: i32, %arg1: memref<1x10x10x128xf32, #tpu.memory_space<vmem>>, %arg2: memref<9x128x128xbf16, #tpu.memory_space<vmem>>, %arg3: memref<1x128xf32, #tpu.memory_space<vmem>>, %arg4: memref<1x8x8x128xf32, #tpu.memory_space<vmem>>) attributes {dimension_semantics = [#tpu.dimension_semantics<parallel>], iteration_bounds = array<i64: 2>, scalar_prefetch = 0 : i64, scratch_operands = 0 : i64, tpu.core_type = #tpu.core_type<tc>, window_params = [{transform_indices = @transform_0, window_bounds = array<i64: 1, 10, 10, 128>}, {pipeline_mode = #tpu.pipeline_mode<synchronous>, transform_indices = @transform_1, window_bounds = array<i64: 9, 128, 128>}, {pipeline_mode = #tpu.pipeline_mode<synchronous>, transform_indices = @transform_2, window_bounds = array<i64: 1, 128>}, {transform_indices = @transform_3, window_bounds = array<i64: 1, 8, 8, 128>}]} {
    %c0 = arith.constant 0 : index
    %c0_0 = arith.constant 0 : index
    %c0_1 = arith.constant 0 : index
    %c0_2 = arith.constant 0 : index
    %0 = vector.load %arg1[%c0, %c0_0, %c0_1, %c0_2] : memref<1x10x10x128xf32, #tpu.memory_space<vmem>>, vector<1x10x10x128xf32>
    %1 = vector.shape_cast %0 : vector<1x10x10x128xf32> to vector<10x10x128xf32>
    %c0_3 = arith.constant 0 : index
    %c0_4 = arith.constant 0 : index
    %c0_5 = arith.constant 0 : index
    %2 = vector.load %arg2[%c0_3, %c0_4, %c0_5] : memref<9x128x128xbf16, #tpu.memory_space<vmem>>, vector<9x128x128xbf16>
    %cst = arith.constant 0.000000e+00 : f32
    %3 = vector.broadcast %cst : f32 to vector<64x128xf32>
    %4 = vector.extract_strided_slice %1 {offsets = [0, 0, 0], sizes = [8, 8, 128], strides = [1, 1, 1]} : vector<10x10x128xf32> to vector<8x8x128xf32>
    %5 = vector.shape_cast %4 : vector<8x8x128xf32> to vector<64x128xf32>
    %6 = arith.truncf %5 : vector<64x128xf32> to vector<64x128xbf16>
    %7 = vector.extract_strided_slice %2 {offsets = [0, 0, 0], sizes = [1, 128, 128], strides = [1, 1, 1]} : vector<9x128x128xbf16> to vector<1x128x128xbf16>
    %8 = vector.shape_cast %7 : vector<1x128x128xbf16> to vector<128x128xbf16>
    %cst_6 = arith.constant dense<0.000000e+00> : vector<64x128xf32>
    %9 = tpu.matmul %6, %8, %cst_6 {dimension_numbers = #tpu.dot_dimension_numbers<[1], [0], [0], [1], [0, 0, 1, 1], [], []>} : vector<64x128xbf16>, vector<128x128xbf16>, vector<64x128xf32> -> vector<64x128xf32>
    %10 = arith.addf %3, %9 : vector<64x128xf32>
    %11 = vector.extract_strided_slice %1 {offsets = [0, 1, 0], sizes = [8, 8, 128], strides = [1, 1, 1]} : vector<10x10x128xf32> to vector<8x8x128xf32>
    %12 = vector.shape_cast %11 : vector<8x8x128xf32> to vector<64x128xf32>
    %13 = arith.truncf %12 : vector<64x128xf32> to vector<64x128xbf16>
    %14 = vector.extract_strided_slice %2 {offsets = [1, 0, 0], sizes = [1, 128, 128], strides = [1, 1, 1]} : vector<9x128x128xbf16> to vector<1x128x128xbf16>
    %15 = vector.shape_cast %14 : vector<1x128x128xbf16> to vector<128x128xbf16>
    %cst_7 = arith.constant dense<0.000000e+00> : vector<64x128xf32>
    %16 = tpu.matmul %13, %15, %cst_7 {dimension_numbers = #tpu.dot_dimension_numbers<[1], [0], [0], [1], [0, 0, 1, 1], [], []>} : vector<64x128xbf16>, vector<128x128xbf16>, vector<64x128xf32> -> vector<64x128xf32>
    %17 = arith.addf %10, %16 : vector<64x128xf32>
    %18 = vector.extract_strided_slice %1 {offsets = [0, 2, 0], sizes = [8, 8, 128], strides = [1, 1, 1]} : vector<10x10x128xf32> to vector<8x8x128xf32>
    %19 = vector.shape_cast %18 : vector<8x8x128xf32> to vector<64x128xf32>
    %20 = arith.truncf %19 : vector<64x128xf32> to vector<64x128xbf16>
    %21 = vector.extract_strided_slice %2 {offsets = [2, 0, 0], sizes = [1, 128, 128], strides = [1, 1, 1]} : vector<9x128x128xbf16> to vector<1x128x128xbf16>
    %22 = vector.shape_cast %21 : vector<1x128x128xbf16> to vector<128x128xbf16>
    %cst_8 = arith.constant dense<0.000000e+00> : vector<64x128xf32>
    %23 = tpu.matmul %20, %22, %cst_8 {dimension_numbers = #tpu.dot_dimension_numbers<[1], [0], [0], [1], [0, 0, 1, 1], [], []>} : vector<64x128xbf16>, vector<128x128xbf16>, vector<64x128xf32> -> vector<64x128xf32>
    %24 = arith.addf %17, %23 : vector<64x128xf32>
    %25 = vector.extract_strided_slice %1 {offsets = [1, 0, 0], sizes = [8, 8, 128], strides = [1, 1, 1]} : vector<10x10x128xf32> to vector<8x8x128xf32>
    %26 = vector.shape_cast %25 : vector<8x8x128xf32> to vector<64x128xf32>
    %27 = arith.truncf %26 : vector<64x128xf32> to vector<64x128xbf16>
    %28 = vector.extract_strided_slice %2 {offsets = [3, 0, 0], sizes = [1, 128, 128], strides = [1, 1, 1]} : vector<9x128x128xbf16> to vector<1x128x128xbf16>
    %29 = vector.shape_cast %28 : vector<1x128x128xbf16> to vector<128x128xbf16>
    %cst_9 = arith.constant dense<0.000000e+00> : vector<64x128xf32>
    %30 = tpu.matmul %27, %29, %cst_9 {dimension_numbers = #tpu.dot_dimension_numbers<[1], [0], [0], [1], [0, 0, 1, 1], [], []>} : vector<64x128xbf16>, vector<128x128xbf16>, vector<64x128xf32> -> vector<64x128xf32>
    %31 = arith.addf %24, %30 : vector<64x128xf32>
    %32 = vector.extract_strided_slice %1 {offsets = [1, 1, 0], sizes = [8, 8, 128], strides = [1, 1, 1]} : vector<10x10x128xf32> to vector<8x8x128xf32>
    %33 = vector.shape_cast %32 : vector<8x8x128xf32> to vector<64x128xf32>
    %34 = arith.truncf %33 : vector<64x128xf32> to vector<64x128xbf16>
    %35 = vector.extract_strided_slice %2 {offsets = [4, 0, 0], sizes = [1, 128, 128], strides = [1, 1, 1]} : vector<9x128x128xbf16> to vector<1x128x128xbf16>
    %36 = vector.shape_cast %35 : vector<1x128x128xbf16> to vector<128x128xbf16>
    %cst_10 = arith.constant dense<0.000000e+00> : vector<64x128xf32>
    %37 = tpu.matmul %34, %36, %cst_10 {dimension_numbers = #tpu.dot_dimension_numbers<[1], [0], [0], [1], [0, 0, 1, 1], [], []>} : vector<64x128xbf16>, vector<128x128xbf16>, vector<64x128xf32> -> vector<64x128xf32>
    %38 = arith.addf %31, %37 : vector<64x128xf32>
    %39 = vector.extract_strided_slice %1 {offsets = [1, 2, 0], sizes = [8, 8, 128], strides = [1, 1, 1]} : vector<10x10x128xf32> to vector<8x8x128xf32>
    %40 = vector.shape_cast %39 : vector<8x8x128xf32> to vector<64x128xf32>
    %41 = arith.truncf %40 : vector<64x128xf32> to vector<64x128xbf16>
    %42 = vector.extract_strided_slice %2 {offsets = [5, 0, 0], sizes = [1, 128, 128], strides = [1, 1, 1]} : vector<9x128x128xbf16> to vector<1x128x128xbf16>
    %43 = vector.shape_cast %42 : vector<1x128x128xbf16> to vector<128x128xbf16>
    %cst_11 = arith.constant dense<0.000000e+00> : vector<64x128xf32>
    %44 = tpu.matmul %41, %43, %cst_11 {dimension_numbers = #tpu.dot_dimension_numbers<[1], [0], [0], [1], [0, 0, 1, 1], [], []>} : vector<64x128xbf16>, vector<128x128xbf16>, vector<64x128xf32> -> vector<64x128xf32>
    %45 = arith.addf %38, %44 : vector<64x128xf32>
    %46 = vector.extract_strided_slice %1 {offsets = [2, 0, 0], sizes = [8, 8, 128], strides = [1, 1, 1]} : vector<10x10x128xf32> to vector<8x8x128xf32>
    %47 = vector.shape_cast %46 : vector<8x8x128xf32> to vector<64x128xf32>
    %48 = arith.truncf %47 : vector<64x128xf32> to vector<64x128xbf16>
    %49 = vector.extract_strided_slice %2 {offsets = [6, 0, 0], sizes = [1, 128, 128], strides = [1, 1, 1]} : vector<9x128x128xbf16> to vector<1x128x128xbf16>
    %50 = vector.shape_cast %49 : vector<1x128x128xbf16> to vector<128x128xbf16>
    %cst_12 = arith.constant dense<0.000000e+00> : vector<64x128xf32>
    %51 = tpu.matmul %48, %50, %cst_12 {dimension_numbers = #tpu.dot_dimension_numbers<[1], [0], [0], [1], [0, 0, 1, 1], [], []>} : vector<64x128xbf16>, vector<128x128xbf16>, vector<64x128xf32> -> vector<64x128xf32>
    %52 = arith.addf %45, %51 : vector<64x128xf32>
    %53 = vector.extract_strided_slice %1 {offsets = [2, 1, 0], sizes = [8, 8, 128], strides = [1, 1, 1]} : vector<10x10x128xf32> to vector<8x8x128xf32>
    %54 = vector.shape_cast %53 : vector<8x8x128xf32> to vector<64x128xf32>
    %55 = arith.truncf %54 : vector<64x128xf32> to vector<64x128xbf16>
    %56 = vector.extract_strided_slice %2 {offsets = [7, 0, 0], sizes = [1, 128, 128], strides = [1, 1, 1]} : vector<9x128x128xbf16> to vector<1x128x128xbf16>
    %57 = vector.shape_cast %56 : vector<1x128x128xbf16> to vector<128x128xbf16>
    %cst_13 = arith.constant dense<0.000000e+00> : vector<64x128xf32>
    %58 = tpu.matmul %55, %57, %cst_13 {dimension_numbers = #tpu.dot_dimension_numbers<[1], [0], [0], [1], [0, 0, 1, 1], [], []>} : vector<64x128xbf16>, vector<128x128xbf16>, vector<64x128xf32> -> vector<64x128xf32>
    %59 = arith.addf %52, %58 : vector<64x128xf32>
    %60 = vector.extract_strided_slice %1 {offsets = [2, 2, 0], sizes = [8, 8, 128], strides = [1, 1, 1]} : vector<10x10x128xf32> to vector<8x8x128xf32>
    %61 = vector.shape_cast %60 : vector<8x8x128xf32> to vector<64x128xf32>
    %62 = arith.truncf %61 : vector<64x128xf32> to vector<64x128xbf16>
    %63 = vector.extract_strided_slice %2 {offsets = [8, 0, 0], sizes = [1, 128, 128], strides = [1, 1, 1]} : vector<9x128x128xbf16> to vector<1x128x128xbf16>
    %64 = vector.shape_cast %63 : vector<1x128x128xbf16> to vector<128x128xbf16>
    %cst_14 = arith.constant dense<0.000000e+00> : vector<64x128xf32>
    %65 = tpu.matmul %62, %64, %cst_14 {dimension_numbers = #tpu.dot_dimension_numbers<[1], [0], [0], [1], [0, 0, 1, 1], [], []>} : vector<64x128xbf16>, vector<128x128xbf16>, vector<64x128xf32> -> vector<64x128xf32>
    %66 = arith.addf %59, %65 : vector<64x128xf32>
    %c0_15 = arith.constant 0 : index
    %c0_16 = arith.constant 0 : index
    %67 = vector.load %arg3[%c0_15, %c0_16] : memref<1x128xf32, #tpu.memory_space<vmem>>, vector<1x128xf32>
    %68 = vector.broadcast %67 : vector<1x128xf32> to vector<64x128xf32>
    %69 = arith.addf %66, %68 : vector<64x128xf32>
    %70 = vector.shape_cast %69 : vector<64x128xf32> to vector<1x8x8x128xf32>
    %c0_17 = arith.constant 0 : index
    %c0_18 = arith.constant 0 : index
    %c0_19 = arith.constant 0 : index
    %c0_20 = arith.constant 0 : index
    %71 = vector.load %arg4[%c0_17, %c0_18, %c0_19, %c0_20] : memref<1x8x8x128xf32, #tpu.memory_space<vmem>>, vector<1x8x8x128xf32>
    tpu.vector_store %arg4[%c0_17, %c0_18, %c0_19, %c0_20], %70 {strides = array<i32>} : memref<1x8x8x128xf32, #tpu.memory_space<vmem>>, vector<1x8x8x128xf32>,
    return
  }
  func.func @transform_0(%arg0: i32) -> (i32, i32, i32, i32) {
    %c0_i32 = arith.constant 0 : i32
    %c0_i32_0 = arith.constant 0 : i32
    %c0_i32_1 = arith.constant 0 : i32
    %c0_i32_2 = arith.constant 0 : i32
    return %arg0, %c0_i32, %c0_i32_0, %c0_i32_1 : i32, i32, i32, i32
  }
  func.func @transform_1(%arg0: i32) -> (i32, i32, i32) {
    %c0_i32 = arith.constant 0 : i32
    %c0_i32_0 = arith.constant 0 : i32
    %c0_i32_1 = arith.constant 0 : i32
    %c0_i32_2 = arith.constant 0 : i32
    return %c0_i32, %c0_i32_0, %c0_i32_1 : i32, i32, i32
  }
  func.func @transform_2(%arg0: i32) -> (i32, i32) {
    %c0_i32 = arith.constant 0 : i32
    %c0_i32_0 = arith.constant 0 : i32
    %c0_i32_1 = arith.constant 0 : i32
    return %c0_i32, %c0_i32_0 : i32, i32
  }
  func.func @transform_3(%arg0: i32) -> (i32, i32, i32, i32) {
    %c0_i32 = arith.constant 0 : i32
    %c0_i32_0 = arith.constant 0 : i32
    %c0_i32_1 = arith.constant 0 : i32
    %c0_i32_2 = arith.constant 0 : i32
    return %arg0, %c0_i32, %c0_i32_0, %c0_i32_1 : i32, i32, i32, i32
  }
}

module attributes {stable_mosaic.version = 11 : i64} {
  func.func @kernel(%arg0: i32, %arg1: memref<1x18x18x128xf32, #tpu.memory_space<vmem>>, %arg2: memref<9x128x128xbf16, #tpu.memory_space<vmem>>, %arg3: memref<1x128xf32, #tpu.memory_space<vmem>>, %arg4: memref<1x16x16x128xf32, #tpu.memory_space<vmem>>) attributes {dimension_semantics = [#tpu.dimension_semantics<parallel>], iteration_bounds = array<i64: 2>, scalar_prefetch = 0 : i64, scratch_operands = 0 : i64, tpu.core_type = #tpu.core_type<tc>, window_params = [{transform_indices = @transform_0, window_bounds = array<i64: 1, 18, 18, 128>}, {pipeline_mode = #tpu.pipeline_mode<synchronous>, transform_indices = @transform_1, window_bounds = array<i64: 9, 128, 128>}, {pipeline_mode = #tpu.pipeline_mode<synchronous>, transform_indices = @transform_2, window_bounds = array<i64: 1, 128>}, {transform_indices = @transform_3, window_bounds = array<i64: 1, 16, 16, 128>}]} {
    %c0 = arith.constant 0 : index
    %c0_0 = arith.constant 0 : index
    %c0_1 = arith.constant 0 : index
    %c0_2 = arith.constant 0 : index
    %0 = vector.load %arg1[%c0, %c0_0, %c0_1, %c0_2] : memref<1x18x18x128xf32, #tpu.memory_space<vmem>>, vector<1x18x18x128xf32>
    %1 = vector.shape_cast %0 : vector<1x18x18x128xf32> to vector<18x18x128xf32>
    %c0_3 = arith.constant 0 : index
    %c0_4 = arith.constant 0 : index
    %c0_5 = arith.constant 0 : index
    %2 = vector.load %arg2[%c0_3, %c0_4, %c0_5] : memref<9x128x128xbf16, #tpu.memory_space<vmem>>, vector<9x128x128xbf16>
    %cst = arith.constant 0.000000e+00 : f32
    %3 = vector.broadcast %cst : f32 to vector<256x128xf32>
    %4 = vector.extract_strided_slice %1 {offsets = [0, 0, 0], sizes = [16, 16, 128], strides = [1, 1, 1]} : vector<18x18x128xf32> to vector<16x16x128xf32>
    %5 = vector.shape_cast %4 : vector<16x16x128xf32> to vector<256x128xf32>
    %6 = arith.truncf %5 : vector<256x128xf32> to vector<256x128xbf16>
    %7 = vector.extract_strided_slice %2 {offsets = [0, 0, 0], sizes = [1, 128, 128], strides = [1, 1, 1]} : vector<9x128x128xbf16> to vector<1x128x128xbf16>
    %8 = vector.shape_cast %7 : vector<1x128x128xbf16> to vector<128x128xbf16>
    %cst_6 = arith.constant dense<0.000000e+00> : vector<256x128xf32>
    %9 = tpu.matmul %6, %8, %cst_6 {dimension_numbers = #tpu.dot_dimension_numbers<[1], [0], [0], [1], [0, 0, 1, 1], [], []>} : vector<256x128xbf16>, vector<128x128xbf16>, vector<256x128xf32> -> vector<256x128xf32>
    %10 = arith.addf %3, %9 : vector<256x128xf32>
    %11 = vector.extract_strided_slice %1 {offsets = [0, 1, 0], sizes = [16, 16, 128], strides = [1, 1, 1]} : vector<18x18x128xf32> to vector<16x16x128xf32>
    %12 = vector.shape_cast %11 : vector<16x16x128xf32> to vector<256x128xf32>
    %13 = arith.truncf %12 : vector<256x128xf32> to vector<256x128xbf16>
    %14 = vector.extract_strided_slice %2 {offsets = [1, 0, 0], sizes = [1, 128, 128], strides = [1, 1, 1]} : vector<9x128x128xbf16> to vector<1x128x128xbf16>
    %15 = vector.shape_cast %14 : vector<1x128x128xbf16> to vector<128x128xbf16>
    %cst_7 = arith.constant dense<0.000000e+00> : vector<256x128xf32>
    %16 = tpu.matmul %13, %15, %cst_7 {dimension_numbers = #tpu.dot_dimension_numbers<[1], [0], [0], [1], [0, 0, 1, 1], [], []>} : vector<256x128xbf16>, vector<128x128xbf16>, vector<256x128xf32> -> vector<256x128xf32>
    %17 = arith.addf %10, %16 : vector<256x128xf32>
    %18 = vector.extract_strided_slice %1 {offsets = [0, 2, 0], sizes = [16, 16, 128], strides = [1, 1, 1]} : vector<18x18x128xf32> to vector<16x16x128xf32>
    %19 = vector.shape_cast %18 : vector<16x16x128xf32> to vector<256x128xf32>
    %20 = arith.truncf %19 : vector<256x128xf32> to vector<256x128xbf16>
    %21 = vector.extract_strided_slice %2 {offsets = [2, 0, 0], sizes = [1, 128, 128], strides = [1, 1, 1]} : vector<9x128x128xbf16> to vector<1x128x128xbf16>
    %22 = vector.shape_cast %21 : vector<1x128x128xbf16> to vector<128x128xbf16>
    %cst_8 = arith.constant dense<0.000000e+00> : vector<256x128xf32>
    %23 = tpu.matmul %20, %22, %cst_8 {dimension_numbers = #tpu.dot_dimension_numbers<[1], [0], [0], [1], [0, 0, 1, 1], [], []>} : vector<256x128xbf16>, vector<128x128xbf16>, vector<256x128xf32> -> vector<256x128xf32>
    %24 = arith.addf %17, %23 : vector<256x128xf32>
    %25 = vector.extract_strided_slice %1 {offsets = [1, 0, 0], sizes = [16, 16, 128], strides = [1, 1, 1]} : vector<18x18x128xf32> to vector<16x16x128xf32>
    %26 = vector.shape_cast %25 : vector<16x16x128xf32> to vector<256x128xf32>
    %27 = arith.truncf %26 : vector<256x128xf32> to vector<256x128xbf16>
    %28 = vector.extract_strided_slice %2 {offsets = [3, 0, 0], sizes = [1, 128, 128], strides = [1, 1, 1]} : vector<9x128x128xbf16> to vector<1x128x128xbf16>
    %29 = vector.shape_cast %28 : vector<1x128x128xbf16> to vector<128x128xbf16>
    %cst_9 = arith.constant dense<0.000000e+00> : vector<256x128xf32>
    %30 = tpu.matmul %27, %29, %cst_9 {dimension_numbers = #tpu.dot_dimension_numbers<[1], [0], [0], [1], [0, 0, 1, 1], [], []>} : vector<256x128xbf16>, vector<128x128xbf16>, vector<256x128xf32> -> vector<256x128xf32>
    %31 = arith.addf %24, %30 : vector<256x128xf32>
    %32 = vector.extract_strided_slice %1 {offsets = [1, 1, 0], sizes = [16, 16, 128], strides = [1, 1, 1]} : vector<18x18x128xf32> to vector<16x16x128xf32>
    %33 = vector.shape_cast %32 : vector<16x16x128xf32> to vector<256x128xf32>
    %34 = arith.truncf %33 : vector<256x128xf32> to vector<256x128xbf16>
    %35 = vector.extract_strided_slice %2 {offsets = [4, 0, 0], sizes = [1, 128, 128], strides = [1, 1, 1]} : vector<9x128x128xbf16> to vector<1x128x128xbf16>
    %36 = vector.shape_cast %35 : vector<1x128x128xbf16> to vector<128x128xbf16>
    %cst_10 = arith.constant dense<0.000000e+00> : vector<256x128xf32>
    %37 = tpu.matmul %34, %36, %cst_10 {dimension_numbers = #tpu.dot_dimension_numbers<[1], [0], [0], [1], [0, 0, 1, 1], [], []>} : vector<256x128xbf16>, vector<128x128xbf16>, vector<256x128xf32> -> vector<256x128xf32>
    %38 = arith.addf %31, %37 : vector<256x128xf32>
    %39 = vector.extract_strided_slice %1 {offsets = [1, 2, 0], sizes = [16, 16, 128], strides = [1, 1, 1]} : vector<18x18x128xf32> to vector<16x16x128xf32>
    %40 = vector.shape_cast %39 : vector<16x16x128xf32> to vector<256x128xf32>
    %41 = arith.truncf %40 : vector<256x128xf32> to vector<256x128xbf16>
    %42 = vector.extract_strided_slice %2 {offsets = [5, 0, 0], sizes = [1, 128, 128], strides = [1, 1, 1]} : vector<9x128x128xbf16> to vector<1x128x128xbf16>
    %43 = vector.shape_cast %42 : vector<1x128x128xbf16> to vector<128x128xbf16>
    %cst_11 = arith.constant dense<0.000000e+00> : vector<256x128xf32>
    %44 = tpu.matmul %41, %43, %cst_11 {dimension_numbers = #tpu.dot_dimension_numbers<[1], [0], [0], [1], [0, 0, 1, 1], [], []>} : vector<256x128xbf16>, vector<128x128xbf16>, vector<256x128xf32> -> vector<256x128xf32>
    %45 = arith.addf %38, %44 : vector<256x128xf32>
    %46 = vector.extract_strided_slice %1 {offsets = [2, 0, 0], sizes = [16, 16, 128], strides = [1, 1, 1]} : vector<18x18x128xf32> to vector<16x16x128xf32>
    %47 = vector.shape_cast %46 : vector<16x16x128xf32> to vector<256x128xf32>
    %48 = arith.truncf %47 : vector<256x128xf32> to vector<256x128xbf16>
    %49 = vector.extract_strided_slice %2 {offsets = [6, 0, 0], sizes = [1, 128, 128], strides = [1, 1, 1]} : vector<9x128x128xbf16> to vector<1x128x128xbf16>
    %50 = vector.shape_cast %49 : vector<1x128x128xbf16> to vector<128x128xbf16>
    %cst_12 = arith.constant dense<0.000000e+00> : vector<256x128xf32>
    %51 = tpu.matmul %48, %50, %cst_12 {dimension_numbers = #tpu.dot_dimension_numbers<[1], [0], [0], [1], [0, 0, 1, 1], [], []>} : vector<256x128xbf16>, vector<128x128xbf16>, vector<256x128xf32> -> vector<256x128xf32>
    %52 = arith.addf %45, %51 : vector<256x128xf32>
    %53 = vector.extract_strided_slice %1 {offsets = [2, 1, 0], sizes = [16, 16, 128], strides = [1, 1, 1]} : vector<18x18x128xf32> to vector<16x16x128xf32>
    %54 = vector.shape_cast %53 : vector<16x16x128xf32> to vector<256x128xf32>
    %55 = arith.truncf %54 : vector<256x128xf32> to vector<256x128xbf16>
    %56 = vector.extract_strided_slice %2 {offsets = [7, 0, 0], sizes = [1, 128, 128], strides = [1, 1, 1]} : vector<9x128x128xbf16> to vector<1x128x128xbf16>
    %57 = vector.shape_cast %56 : vector<1x128x128xbf16> to vector<128x128xbf16>
    %cst_13 = arith.constant dense<0.000000e+00> : vector<256x128xf32>
    %58 = tpu.matmul %55, %57, %cst_13 {dimension_numbers = #tpu.dot_dimension_numbers<[1], [0], [0], [1], [0, 0, 1, 1], [], []>} : vector<256x128xbf16>, vector<128x128xbf16>, vector<256x128xf32> -> vector<256x128xf32>
    %59 = arith.addf %52, %58 : vector<256x128xf32>
    %60 = vector.extract_strided_slice %1 {offsets = [2, 2, 0], sizes = [16, 16, 128], strides = [1, 1, 1]} : vector<18x18x128xf32> to vector<16x16x128xf32>
    %61 = vector.shape_cast %60 : vector<16x16x128xf32> to vector<256x128xf32>
    %62 = arith.truncf %61 : vector<256x128xf32> to vector<256x128xbf16>
    %63 = vector.extract_strided_slice %2 {offsets = [8, 0, 0], sizes = [1, 128, 128], strides = [1, 1, 1]} : vector<9x128x128xbf16> to vector<1x128x128xbf16>
    %64 = vector.shape_cast %63 : vector<1x128x128xbf16> to vector<128x128xbf16>
    %cst_14 = arith.constant dense<0.000000e+00> : vector<256x128xf32>
    %65 = tpu.matmul %62, %64, %cst_14 {dimension_numbers = #tpu.dot_dimension_numbers<[1], [0], [0], [1], [0, 0, 1, 1], [], []>} : vector<256x128xbf16>, vector<128x128xbf16>, vector<256x128xf32> -> vector<256x128xf32>
    %66 = arith.addf %59, %65 : vector<256x128xf32>
    %c0_15 = arith.constant 0 : index
    %c0_16 = arith.constant 0 : index
    %67 = vector.load %arg3[%c0_15, %c0_16] : memref<1x128xf32, #tpu.memory_space<vmem>>, vector<1x128xf32>
    %68 = vector.broadcast %67 : vector<1x128xf32> to vector<256x128xf32>
    %69 = arith.addf %66, %68 : vector<256x128xf32>
    %70 = vector.shape_cast %69 : vector<256x128xf32> to vector<1x16x16x128xf32>
    %c0_17 = arith.constant 0 : index
    %c0_18 = arith.constant 0 : index
    %c0_19 = arith.constant 0 : index
    %c0_20 = arith.constant 0 : index
    %71 = vector.load %arg4[%c0_17, %c0_18, %c0_19, %c0_20] : memref<1x16x16x128xf32, #tpu.memory_space<vmem>>, vector<1x16x16x128xf32>
    tpu.vector_store %arg4[%c0_17, %c0_18, %c0_19, %c0_20], %70 {strides = array<i32>} : memref<1x16x16x128xf32, #tpu.memory_space<vmem>>, vector<1x16x16x128xf32>,
    return
  }
  func.func @transform_0(%arg0: i32) -> (i32, i32, i32, i32) {
    %c0_i32 = arith.constant 0 : i32
    %c0_i32_0 = arith.constant 0 : i32
    %c0_i32_1 = arith.constant 0 : i32
    %c0_i32_2 = arith.constant 0 : i32
    return %arg0, %c0_i32, %c0_i32_0, %c0_i32_1 : i32, i32, i32, i32
  }
  func.func @transform_1(%arg0: i32) -> (i32, i32, i32) {
    %c0_i32 = arith.constant 0 : i32
    %c0_i32_0 = arith.constant 0 : i32
    %c0_i32_1 = arith.constant 0 : i32
    %c0_i32_2 = arith.constant 0 : i32
    return %c0_i32, %c0_i32_0, %c0_i32_1 : i32, i32, i32
  }
  func.func @transform_2(%arg0: i32) -> (i32, i32) {
    %c0_i32 = arith.constant 0 : i32
    %c0_i32_0 = arith.constant 0 : i32
    %c0_i32_1 = arith.constant 0 : i32
    return %c0_i32, %c0_i32_0 : i32, i32
  }
  func.func @transform_3(%arg0: i32) -> (i32, i32, i32, i32) {
    %c0_i32 = arith.constant 0 : i32
    %c0_i32_0 = arith.constant 0 : i32
    %c0_i32_1 = arith.constant 0 : i32
    %c0_i32_2 = arith.constant 0 : i32
    return %arg0, %c0_i32, %c0_i32_0, %c0_i32_1 : i32, i32, i32, i32
  }
}

module attributes {stable_mosaic.version = 11 : i64} {
  func.func @kernel(%arg0: i32, %arg1: memref<1x6x6x128xf32, #tpu.memory_space<vmem>>, %arg2: memref<9x128x128xbf16, #tpu.memory_space<vmem>>, %arg3: memref<1x128xf32, #tpu.memory_space<vmem>>, %arg4: memref<1x4x4x128xf32, #tpu.memory_space<vmem>>) attributes {dimension_semantics = [#tpu.dimension_semantics<parallel>], iteration_bounds = array<i64: 2>, scalar_prefetch = 0 : i64, scratch_operands = 0 : i64, tpu.core_type = #tpu.core_type<tc>, window_params = [{transform_indices = @transform_0, window_bounds = array<i64: 1, 6, 6, 128>}, {pipeline_mode = #tpu.pipeline_mode<synchronous>, transform_indices = @transform_1, window_bounds = array<i64: 9, 128, 128>}, {pipeline_mode = #tpu.pipeline_mode<synchronous>, transform_indices = @transform_2, window_bounds = array<i64: 1, 128>}, {transform_indices = @transform_3, window_bounds = array<i64: 1, 4, 4, 128>}]} {
    %c0 = arith.constant 0 : index
    %c0_0 = arith.constant 0 : index
    %c0_1 = arith.constant 0 : index
    %c0_2 = arith.constant 0 : index
    %0 = vector.load %arg1[%c0, %c0_0, %c0_1, %c0_2] : memref<1x6x6x128xf32, #tpu.memory_space<vmem>>, vector<1x6x6x128xf32>
    %1 = vector.shape_cast %0 : vector<1x6x6x128xf32> to vector<6x6x128xf32>
    %c0_3 = arith.constant 0 : index
    %c0_4 = arith.constant 0 : index
    %c0_5 = arith.constant 0 : index
    %2 = vector.load %arg2[%c0_3, %c0_4, %c0_5] : memref<9x128x128xbf16, #tpu.memory_space<vmem>>, vector<9x128x128xbf16>
    %cst = arith.constant 0.000000e+00 : f32
    %3 = vector.broadcast %cst : f32 to vector<16x128xf32>
    %4 = vector.extract_strided_slice %1 {offsets = [0, 0, 0], sizes = [4, 4, 128], strides = [1, 1, 1]} : vector<6x6x128xf32> to vector<4x4x128xf32>
    %5 = vector.shape_cast %4 : vector<4x4x128xf32> to vector<16x128xf32>
    %6 = arith.truncf %5 : vector<16x128xf32> to vector<16x128xbf16>
    %7 = vector.extract_strided_slice %2 {offsets = [0, 0, 0], sizes = [1, 128, 128], strides = [1, 1, 1]} : vector<9x128x128xbf16> to vector<1x128x128xbf16>
    %8 = vector.shape_cast %7 : vector<1x128x128xbf16> to vector<128x128xbf16>
    %cst_6 = arith.constant dense<0.000000e+00> : vector<16x128xf32>
    %9 = tpu.matmul %6, %8, %cst_6 {dimension_numbers = #tpu.dot_dimension_numbers<[1], [0], [0], [1], [0, 0, 1, 1], [], []>} : vector<16x128xbf16>, vector<128x128xbf16>, vector<16x128xf32> -> vector<16x128xf32>
    %10 = arith.addf %3, %9 : vector<16x128xf32>
    %11 = vector.extract_strided_slice %1 {offsets = [0, 1, 0], sizes = [4, 4, 128], strides = [1, 1, 1]} : vector<6x6x128xf32> to vector<4x4x128xf32>
    %12 = vector.shape_cast %11 : vector<4x4x128xf32> to vector<16x128xf32>
    %13 = arith.truncf %12 : vector<16x128xf32> to vector<16x128xbf16>
    %14 = vector.extract_strided_slice %2 {offsets = [1, 0, 0], sizes = [1, 128, 128], strides = [1, 1, 1]} : vector<9x128x128xbf16> to vector<1x128x128xbf16>
    %15 = vector.shape_cast %14 : vector<1x128x128xbf16> to vector<128x128xbf16>
    %cst_7 = arith.constant dense<0.000000e+00> : vector<16x128xf32>
    %16 = tpu.matmul %13, %15, %cst_7 {dimension_numbers = #tpu.dot_dimension_numbers<[1], [0], [0], [1], [0, 0, 1, 1], [], []>} : vector<16x128xbf16>, vector<128x128xbf16>, vector<16x128xf32> -> vector<16x128xf32>
    %17 = arith.addf %10, %16 : vector<16x128xf32>
    %18 = vector.extract_strided_slice %1 {offsets = [0, 2, 0], sizes = [4, 4, 128], strides = [1, 1, 1]} : vector<6x6x128xf32> to vector<4x4x128xf32>
    %19 = vector.shape_cast %18 : vector<4x4x128xf32> to vector<16x128xf32>
    %20 = arith.truncf %19 : vector<16x128xf32> to vector<16x128xbf16>
    %21 = vector.extract_strided_slice %2 {offsets = [2, 0, 0], sizes = [1, 128, 128], strides = [1, 1, 1]} : vector<9x128x128xbf16> to vector<1x128x128xbf16>
    %22 = vector.shape_cast %21 : vector<1x128x128xbf16> to vector<128x128xbf16>
    %cst_8 = arith.constant dense<0.000000e+00> : vector<16x128xf32>
    %23 = tpu.matmul %20, %22, %cst_8 {dimension_numbers = #tpu.dot_dimension_numbers<[1], [0], [0], [1], [0, 0, 1, 1], [], []>} : vector<16x128xbf16>, vector<128x128xbf16>, vector<16x128xf32> -> vector<16x128xf32>
    %24 = arith.addf %17, %23 : vector<16x128xf32>
    %25 = vector.extract_strided_slice %1 {offsets = [1, 0, 0], sizes = [4, 4, 128], strides = [1, 1, 1]} : vector<6x6x128xf32> to vector<4x4x128xf32>
    %26 = vector.shape_cast %25 : vector<4x4x128xf32> to vector<16x128xf32>
    %27 = arith.truncf %26 : vector<16x128xf32> to vector<16x128xbf16>
    %28 = vector.extract_strided_slice %2 {offsets = [3, 0, 0], sizes = [1, 128, 128], strides = [1, 1, 1]} : vector<9x128x128xbf16> to vector<1x128x128xbf16>
    %29 = vector.shape_cast %28 : vector<1x128x128xbf16> to vector<128x128xbf16>
    %cst_9 = arith.constant dense<0.000000e+00> : vector<16x128xf32>
    %30 = tpu.matmul %27, %29, %cst_9 {dimension_numbers = #tpu.dot_dimension_numbers<[1], [0], [0], [1], [0, 0, 1, 1], [], []>} : vector<16x128xbf16>, vector<128x128xbf16>, vector<16x128xf32> -> vector<16x128xf32>
    %31 = arith.addf %24, %30 : vector<16x128xf32>
    %32 = vector.extract_strided_slice %1 {offsets = [1, 1, 0], sizes = [4, 4, 128], strides = [1, 1, 1]} : vector<6x6x128xf32> to vector<4x4x128xf32>
    %33 = vector.shape_cast %32 : vector<4x4x128xf32> to vector<16x128xf32>
    %34 = arith.truncf %33 : vector<16x128xf32> to vector<16x128xbf16>
    %35 = vector.extract_strided_slice %2 {offsets = [4, 0, 0], sizes = [1, 128, 128], strides = [1, 1, 1]} : vector<9x128x128xbf16> to vector<1x128x128xbf16>
    %36 = vector.shape_cast %35 : vector<1x128x128xbf16> to vector<128x128xbf16>
    %cst_10 = arith.constant dense<0.000000e+00> : vector<16x128xf32>
    %37 = tpu.matmul %34, %36, %cst_10 {dimension_numbers = #tpu.dot_dimension_numbers<[1], [0], [0], [1], [0, 0, 1, 1], [], []>} : vector<16x128xbf16>, vector<128x128xbf16>, vector<16x128xf32> -> vector<16x128xf32>
    %38 = arith.addf %31, %37 : vector<16x128xf32>
    %39 = vector.extract_strided_slice %1 {offsets = [1, 2, 0], sizes = [4, 4, 128], strides = [1, 1, 1]} : vector<6x6x128xf32> to vector<4x4x128xf32>
    %40 = vector.shape_cast %39 : vector<4x4x128xf32> to vector<16x128xf32>
    %41 = arith.truncf %40 : vector<16x128xf32> to vector<16x128xbf16>
    %42 = vector.extract_strided_slice %2 {offsets = [5, 0, 0], sizes = [1, 128, 128], strides = [1, 1, 1]} : vector<9x128x128xbf16> to vector<1x128x128xbf16>
    %43 = vector.shape_cast %42 : vector<1x128x128xbf16> to vector<128x128xbf16>
    %cst_11 = arith.constant dense<0.000000e+00> : vector<16x128xf32>
    %44 = tpu.matmul %41, %43, %cst_11 {dimension_numbers = #tpu.dot_dimension_numbers<[1], [0], [0], [1], [0, 0, 1, 1], [], []>} : vector<16x128xbf16>, vector<128x128xbf16>, vector<16x128xf32> -> vector<16x128xf32>
    %45 = arith.addf %38, %44 : vector<16x128xf32>
    %46 = vector.extract_strided_slice %1 {offsets = [2, 0, 0], sizes = [4, 4, 128], strides = [1, 1, 1]} : vector<6x6x128xf32> to vector<4x4x128xf32>
    %47 = vector.shape_cast %46 : vector<4x4x128xf32> to vector<16x128xf32>
    %48 = arith.truncf %47 : vector<16x128xf32> to vector<16x128xbf16>
    %49 = vector.extract_strided_slice %2 {offsets = [6, 0, 0], sizes = [1, 128, 128], strides = [1, 1, 1]} : vector<9x128x128xbf16> to vector<1x128x128xbf16>
    %50 = vector.shape_cast %49 : vector<1x128x128xbf16> to vector<128x128xbf16>
    %cst_12 = arith.constant dense<0.000000e+00> : vector<16x128xf32>
    %51 = tpu.matmul %48, %50, %cst_12 {dimension_numbers = #tpu.dot_dimension_numbers<[1], [0], [0], [1], [0, 0, 1, 1], [], []>} : vector<16x128xbf16>, vector<128x128xbf16>, vector<16x128xf32> -> vector<16x128xf32>
    %52 = arith.addf %45, %51 : vector<16x128xf32>
    %53 = vector.extract_strided_slice %1 {offsets = [2, 1, 0], sizes = [4, 4, 128], strides = [1, 1, 1]} : vector<6x6x128xf32> to vector<4x4x128xf32>
    %54 = vector.shape_cast %53 : vector<4x4x128xf32> to vector<16x128xf32>
    %55 = arith.truncf %54 : vector<16x128xf32> to vector<16x128xbf16>
    %56 = vector.extract_strided_slice %2 {offsets = [7, 0, 0], sizes = [1, 128, 128], strides = [1, 1, 1]} : vector<9x128x128xbf16> to vector<1x128x128xbf16>
    %57 = vector.shape_cast %56 : vector<1x128x128xbf16> to vector<128x128xbf16>
    %cst_13 = arith.constant dense<0.000000e+00> : vector<16x128xf32>
    %58 = tpu.matmul %55, %57, %cst_13 {dimension_numbers = #tpu.dot_dimension_numbers<[1], [0], [0], [1], [0, 0, 1, 1], [], []>} : vector<16x128xbf16>, vector<128x128xbf16>, vector<16x128xf32> -> vector<16x128xf32>
    %59 = arith.addf %52, %58 : vector<16x128xf32>
    %60 = vector.extract_strided_slice %1 {offsets = [2, 2, 0], sizes = [4, 4, 128], strides = [1, 1, 1]} : vector<6x6x128xf32> to vector<4x4x128xf32>
    %61 = vector.shape_cast %60 : vector<4x4x128xf32> to vector<16x128xf32>
    %62 = arith.truncf %61 : vector<16x128xf32> to vector<16x128xbf16>
    %63 = vector.extract_strided_slice %2 {offsets = [8, 0, 0], sizes = [1, 128, 128], strides = [1, 1, 1]} : vector<9x128x128xbf16> to vector<1x128x128xbf16>
    %64 = vector.shape_cast %63 : vector<1x128x128xbf16> to vector<128x128xbf16>
    %cst_14 = arith.constant dense<0.000000e+00> : vector<16x128xf32>
    %65 = tpu.matmul %62, %64, %cst_14 {dimension_numbers = #tpu.dot_dimension_numbers<[1], [0], [0], [1], [0, 0, 1, 1], [], []>} : vector<16x128xbf16>, vector<128x128xbf16>, vector<16x128xf32> -> vector<16x128xf32>
    %66 = arith.addf %59, %65 : vector<16x128xf32>
    %c0_15 = arith.constant 0 : index
    %c0_16 = arith.constant 0 : index
    %67 = vector.load %arg3[%c0_15, %c0_16] : memref<1x128xf32, #tpu.memory_space<vmem>>, vector<1x128xf32>
    %68 = vector.broadcast %67 : vector<1x128xf32> to vector<16x128xf32>
    %69 = arith.addf %66, %68 : vector<16x128xf32>
    %70 = vector.shape_cast %69 : vector<16x128xf32> to vector<1x4x4x128xf32>
    %c0_17 = arith.constant 0 : index
    %c0_18 = arith.constant 0 : index
    %c0_19 = arith.constant 0 : index
    %c0_20 = arith.constant 0 : index
    %71 = vector.load %arg4[%c0_17, %c0_18, %c0_19, %c0_20] : memref<1x4x4x128xf32, #tpu.memory_space<vmem>>, vector<1x4x4x128xf32>
    tpu.vector_store %arg4[%c0_17, %c0_18, %c0_19, %c0_20], %70 {strides = array<i32>} : memref<1x4x4x128xf32, #tpu.memory_space<vmem>>, vector<1x4x4x128xf32>,
    return
  }
  func.func @transform_0(%arg0: i32) -> (i32, i32, i32, i32) {
    %c0_i32 = arith.constant 0 : i32
    %c0_i32_0 = arith.constant 0 : i32
    %c0_i32_1 = arith.constant 0 : i32
    %c0_i32_2 = arith.constant 0 : i32
    return %arg0, %c0_i32, %c0_i32_0, %c0_i32_1 : i32, i32, i32, i32
  }
  func.func @transform_1(%arg0: i32) -> (i32, i32, i32) {
    %c0_i32 = arith.constant 0 : i32
    %c0_i32_0 = arith.constant 0 : i32
    %c0_i32_1 = arith.constant 0 : i32
    %c0_i32_2 = arith.constant 0 : i32
    return %c0_i32, %c0_i32_0, %c0_i32_1 : i32, i32, i32
  }
  func.func @transform_2(%arg0: i32) -> (i32, i32) {
    %c0_i32 = arith.constant 0 : i32
    %c0_i32_0 = arith.constant 0 : i32
    %c0_i32_1 = arith.constant 0 : i32
    return %c0_i32, %c0_i32_0 : i32, i32
  }
  func.func @transform_3(%arg0: i32) -> (i32, i32, i32, i32) {
    %c0_i32 = arith.constant 0 : i32
    %c0_i32_0 = arith.constant 0 : i32
    %c0_i32_1 = arith.constant 0 : i32
    %c0_i32_2 = arith.constant 0 : i32
    return %arg0, %c0_i32, %c0_i32_0, %c0_i32_1 : i32, i32, i32, i32
  }
}

module attributes {stable_mosaic.version = 11 : i64} {
  func.func @kernel(%arg0: i32, %arg1: memref<1x4x3x3x128xf32, #tpu.memory_space<vmem>>, %arg2: memref<9x128x128xbf16, #tpu.memory_space<vmem>>, %arg3: memref<1x128xf32, #tpu.memory_space<vmem>>, %arg4: memref<1x2x2x128xf32, #tpu.memory_space<vmem>>) attributes {dimension_semantics = [#tpu.dimension_semantics<parallel>], iteration_bounds = array<i64: 2>, scalar_prefetch = 0 : i64, scratch_operands = 0 : i64, tpu.core_type = #tpu.core_type<tc>, window_params = [{transform_indices = @transform_0, window_bounds = array<i64: 1, 4, 3, 3, 128>}, {pipeline_mode = #tpu.pipeline_mode<synchronous>, transform_indices = @transform_1, window_bounds = array<i64: 9, 128, 128>}, {pipeline_mode = #tpu.pipeline_mode<synchronous>, transform_indices = @transform_2, window_bounds = array<i64: 1, 128>}, {transform_indices = @transform_3, window_bounds = array<i64: 1, 2, 2, 128>}]} {
    %c0 = arith.constant 0 : index
    %c0_0 = arith.constant 0 : index
    %c0_1 = arith.constant 0 : index
    %c0_2 = arith.constant 0 : index
    %c0_3 = arith.constant 0 : index
    %0 = vector.load %arg1[%c0, %c0_0, %c0_1, %c0_2, %c0_3] : memref<1x4x3x3x128xf32, #tpu.memory_space<vmem>>, vector<1x4x3x3x128xf32>
    %1 = vector.shape_cast %0 : vector<1x4x3x3x128xf32> to vector<4x3x3x128xf32>
    %c0_4 = arith.constant 0 : index
    %c0_5 = arith.constant 0 : index
    %c0_6 = arith.constant 0 : index
    %2 = vector.load %arg2[%c0_4, %c0_5, %c0_6] : memref<9x128x128xbf16, #tpu.memory_space<vmem>>, vector<9x128x128xbf16>
    %cst = arith.constant 0.000000e+00 : f32
    %3 = vector.broadcast %cst : f32 to vector<4x128xf32>
    %4 = vector.extract_strided_slice %1 {offsets = [0, 0, 0, 0], sizes = [1, 2, 2, 128], strides = [1, 1, 1, 1]} : vector<4x3x3x128xf32> to vector<1x2x2x128xf32>
    %5 = vector.shape_cast %4 : vector<1x2x2x128xf32> to vector<2x2x128xf32>
    %6 = vector.shape_cast %5 : vector<2x2x128xf32> to vector<4x128xf32>
    %7 = arith.truncf %6 : vector<4x128xf32> to vector<4x128xbf16>
    %8 = vector.extract_strided_slice %2 {offsets = [0, 0, 0], sizes = [1, 128, 128], strides = [1, 1, 1]} : vector<9x128x128xbf16> to vector<1x128x128xbf16>
    %9 = vector.shape_cast %8 : vector<1x128x128xbf16> to vector<128x128xbf16>
    %cst_7 = arith.constant dense<0.000000e+00> : vector<4x128xf32>
    %10 = tpu.matmul %7, %9, %cst_7 {dimension_numbers = #tpu.dot_dimension_numbers<[1], [0], [0], [1], [0, 0, 1, 1], [], []>} : vector<4x128xbf16>, vector<128x128xbf16>, vector<4x128xf32> -> vector<4x128xf32>
    %11 = arith.addf %3, %10 : vector<4x128xf32>
    %12 = vector.extract_strided_slice %1 {offsets = [1, 0, 0, 0], sizes = [1, 2, 2, 128], strides = [1, 1, 1, 1]} : vector<4x3x3x128xf32> to vector<1x2x2x128xf32>
    %13 = vector.shape_cast %12 : vector<1x2x2x128xf32> to vector<2x2x128xf32>
    %14 = vector.shape_cast %13 : vector<2x2x128xf32> to vector<4x128xf32>
    %15 = arith.truncf %14 : vector<4x128xf32> to vector<4x128xbf16>
    %16 = vector.extract_strided_slice %2 {offsets = [1, 0, 0], sizes = [1, 128, 128], strides = [1, 1, 1]} : vector<9x128x128xbf16> to vector<1x128x128xbf16>
    %17 = vector.shape_cast %16 : vector<1x128x128xbf16> to vector<128x128xbf16>
    %cst_8 = arith.constant dense<0.000000e+00> : vector<4x128xf32>
    %18 = tpu.matmul %15, %17, %cst_8 {dimension_numbers = #tpu.dot_dimension_numbers<[1], [0], [0], [1], [0, 0, 1, 1], [], []>} : vector<4x128xbf16>, vector<128x128xbf16>, vector<4x128xf32> -> vector<4x128xf32>
    %19 = arith.addf %11, %18 : vector<4x128xf32>
    %20 = vector.extract_strided_slice %1 {offsets = [0, 0, 1, 0], sizes = [1, 2, 2, 128], strides = [1, 1, 1, 1]} : vector<4x3x3x128xf32> to vector<1x2x2x128xf32>
    %21 = vector.shape_cast %20 : vector<1x2x2x128xf32> to vector<2x2x128xf32>
    %22 = vector.shape_cast %21 : vector<2x2x128xf32> to vector<4x128xf32>
    %23 = arith.truncf %22 : vector<4x128xf32> to vector<4x128xbf16>
    %24 = vector.extract_strided_slice %2 {offsets = [2, 0, 0], sizes = [1, 128, 128], strides = [1, 1, 1]} : vector<9x128x128xbf16> to vector<1x128x128xbf16>
    %25 = vector.shape_cast %24 : vector<1x128x128xbf16> to vector<128x128xbf16>
    %cst_9 = arith.constant dense<0.000000e+00> : vector<4x128xf32>
    %26 = tpu.matmul %23, %25, %cst_9 {dimension_numbers = #tpu.dot_dimension_numbers<[1], [0], [0], [1], [0, 0, 1, 1], [], []>} : vector<4x128xbf16>, vector<128x128xbf16>, vector<4x128xf32> -> vector<4x128xf32>
    %27 = arith.addf %19, %26 : vector<4x128xf32>
    %28 = vector.extract_strided_slice %1 {offsets = [2, 0, 0, 0], sizes = [1, 2, 2, 128], strides = [1, 1, 1, 1]} : vector<4x3x3x128xf32> to vector<1x2x2x128xf32>
    %29 = vector.shape_cast %28 : vector<1x2x2x128xf32> to vector<2x2x128xf32>
    %30 = vector.shape_cast %29 : vector<2x2x128xf32> to vector<4x128xf32>
    %31 = arith.truncf %30 : vector<4x128xf32> to vector<4x128xbf16>
    %32 = vector.extract_strided_slice %2 {offsets = [3, 0, 0], sizes = [1, 128, 128], strides = [1, 1, 1]} : vector<9x128x128xbf16> to vector<1x128x128xbf16>
    %33 = vector.shape_cast %32 : vector<1x128x128xbf16> to vector<128x128xbf16>
    %cst_10 = arith.constant dense<0.000000e+00> : vector<4x128xf32>
    %34 = tpu.matmul %31, %33, %cst_10 {dimension_numbers = #tpu.dot_dimension_numbers<[1], [0], [0], [1], [0, 0, 1, 1], [], []>} : vector<4x128xbf16>, vector<128x128xbf16>, vector<4x128xf32> -> vector<4x128xf32>
    %35 = arith.addf %27, %34 : vector<4x128xf32>
    %36 = vector.extract_strided_slice %1 {offsets = [3, 0, 0, 0], sizes = [1, 2, 2, 128], strides = [1, 1, 1, 1]} : vector<4x3x3x128xf32> to vector<1x2x2x128xf32>
    %37 = vector.shape_cast %36 : vector<1x2x2x128xf32> to vector<2x2x128xf32>
    %38 = vector.shape_cast %37 : vector<2x2x128xf32> to vector<4x128xf32>
    %39 = arith.truncf %38 : vector<4x128xf32> to vector<4x128xbf16>
    %40 = vector.extract_strided_slice %2 {offsets = [4, 0, 0], sizes = [1, 128, 128], strides = [1, 1, 1]} : vector<9x128x128xbf16> to vector<1x128x128xbf16>
    %41 = vector.shape_cast %40 : vector<1x128x128xbf16> to vector<128x128xbf16>
    %cst_11 = arith.constant dense<0.000000e+00> : vector<4x128xf32>
    %42 = tpu.matmul %39, %41, %cst_11 {dimension_numbers = #tpu.dot_dimension_numbers<[1], [0], [0], [1], [0, 0, 1, 1], [], []>} : vector<4x128xbf16>, vector<128x128xbf16>, vector<4x128xf32> -> vector<4x128xf32>
    %43 = arith.addf %35, %42 : vector<4x128xf32>
    %44 = vector.extract_strided_slice %1 {offsets = [2, 0, 1, 0], sizes = [1, 2, 2, 128], strides = [1, 1, 1, 1]} : vector<4x3x3x128xf32> to vector<1x2x2x128xf32>
    %45 = vector.shape_cast %44 : vector<1x2x2x128xf32> to vector<2x2x128xf32>
    %46 = vector.shape_cast %45 : vector<2x2x128xf32> to vector<4x128xf32>
    %47 = arith.truncf %46 : vector<4x128xf32> to vector<4x128xbf16>
    %48 = vector.extract_strided_slice %2 {offsets = [5, 0, 0], sizes = [1, 128, 128], strides = [1, 1, 1]} : vector<9x128x128xbf16> to vector<1x128x128xbf16>
    %49 = vector.shape_cast %48 : vector<1x128x128xbf16> to vector<128x128xbf16>
    %cst_12 = arith.constant dense<0.000000e+00> : vector<4x128xf32>
    %50 = tpu.matmul %47, %49, %cst_12 {dimension_numbers = #tpu.dot_dimension_numbers<[1], [0], [0], [1], [0, 0, 1, 1], [], []>} : vector<4x128xbf16>, vector<128x128xbf16>, vector<4x128xf32> -> vector<4x128xf32>
    %51 = arith.addf %43, %50 : vector<4x128xf32>
    %52 = vector.extract_strided_slice %1 {offsets = [0, 1, 0, 0], sizes = [1, 2, 2, 128], strides = [1, 1, 1, 1]} : vector<4x3x3x128xf32> to vector<1x2x2x128xf32>
    %53 = vector.shape_cast %52 : vector<1x2x2x128xf32> to vector<2x2x128xf32>
    %54 = vector.shape_cast %53 : vector<2x2x128xf32> to vector<4x128xf32>
    %55 = arith.truncf %54 : vector<4x128xf32> to vector<4x128xbf16>
    %56 = vector.extract_strided_slice %2 {offsets = [6, 0, 0], sizes = [1, 128, 128], strides = [1, 1, 1]} : vector<9x128x128xbf16> to vector<1x128x128xbf16>
    %57 = vector.shape_cast %56 : vector<1x128x128xbf16> to vector<128x128xbf16>
    %cst_13 = arith.constant dense<0.000000e+00> : vector<4x128xf32>
    %58 = tpu.matmul %55, %57, %cst_13 {dimension_numbers = #tpu.dot_dimension_numbers<[1], [0], [0], [1], [0, 0, 1, 1], [], []>} : vector<4x128xbf16>, vector<128x128xbf16>, vector<4x128xf32> -> vector<4x128xf32>
    %59 = arith.addf %51, %58 : vector<4x128xf32>
    %60 = vector.extract_strided_slice %1 {offsets = [1, 1, 0, 0], sizes = [1, 2, 2, 128], strides = [1, 1, 1, 1]} : vector<4x3x3x128xf32> to vector<1x2x2x128xf32>
    %61 = vector.shape_cast %60 : vector<1x2x2x128xf32> to vector<2x2x128xf32>
    %62 = vector.shape_cast %61 : vector<2x2x128xf32> to vector<4x128xf32>
    %63 = arith.truncf %62 : vector<4x128xf32> to vector<4x128xbf16>
    %64 = vector.extract_strided_slice %2 {offsets = [7, 0, 0], sizes = [1, 128, 128], strides = [1, 1, 1]} : vector<9x128x128xbf16> to vector<1x128x128xbf16>
    %65 = vector.shape_cast %64 : vector<1x128x128xbf16> to vector<128x128xbf16>
    %cst_14 = arith.constant dense<0.000000e+00> : vector<4x128xf32>
    %66 = tpu.matmul %63, %65, %cst_14 {dimension_numbers = #tpu.dot_dimension_numbers<[1], [0], [0], [1], [0, 0, 1, 1], [], []>} : vector<4x128xbf16>, vector<128x128xbf16>, vector<4x128xf32> -> vector<4x128xf32>
    %67 = arith.addf %59, %66 : vector<4x128xf32>
    %68 = vector.extract_strided_slice %1 {offsets = [0, 1, 1, 0], sizes = [1, 2, 2, 128], strides = [1, 1, 1, 1]} : vector<4x3x3x128xf32> to vector<1x2x2x128xf32>
    %69 = vector.shape_cast %68 : vector<1x2x2x128xf32> to vector<2x2x128xf32>
    %70 = vector.shape_cast %69 : vector<2x2x128xf32> to vector<4x128xf32>
    %71 = arith.truncf %70 : vector<4x128xf32> to vector<4x128xbf16>
    %72 = vector.extract_strided_slice %2 {offsets = [8, 0, 0], sizes = [1, 128, 128], strides = [1, 1, 1]} : vector<9x128x128xbf16> to vector<1x128x128xbf16>
    %73 = vector.shape_cast %72 : vector<1x128x128xbf16> to vector<128x128xbf16>
    %cst_15 = arith.constant dense<0.000000e+00> : vector<4x128xf32>
    %74 = tpu.matmul %71, %73, %cst_15 {dimension_numbers = #tpu.dot_dimension_numbers<[1], [0], [0], [1], [0, 0, 1, 1], [], []>} : vector<4x128xbf16>, vector<128x128xbf16>, vector<4x128xf32> -> vector<4x128xf32>
    %75 = arith.addf %67, %74 : vector<4x128xf32>
    %c0_16 = arith.constant 0 : index
    %c0_17 = arith.constant 0 : index
    %76 = vector.load %arg3[%c0_16, %c0_17] : memref<1x128xf32, #tpu.memory_space<vmem>>, vector<1x128xf32>
    %77 = vector.broadcast %76 : vector<1x128xf32> to vector<4x128xf32>
    %78 = arith.addf %75, %77 : vector<4x128xf32>
    %79 = vector.shape_cast %78 : vector<4x128xf32> to vector<1x2x2x128xf32>
    %c0_18 = arith.constant 0 : index
    %c0_19 = arith.constant 0 : index
    %c0_20 = arith.constant 0 : index
    %c0_21 = arith.constant 0 : index
    %80 = vector.load %arg4[%c0_18, %c0_19, %c0_20, %c0_21] : memref<1x2x2x128xf32, #tpu.memory_space<vmem>>, vector<1x2x2x128xf32>
    tpu.vector_store %arg4[%c0_18, %c0_19, %c0_20, %c0_21], %79 {strides = array<i32>} : memref<1x2x2x128xf32, #tpu.memory_space<vmem>>, vector<1x2x2x128xf32>,
    return
  }
  func.func @transform_0(%arg0: i32) -> (i32, i32, i32, i32, i32) {
    %c0_i32 = arith.constant 0 : i32
    %c0_i32_0 = arith.constant 0 : i32
    %c0_i32_1 = arith.constant 0 : i32
    %c0_i32_2 = arith.constant 0 : i32
    %c0_i32_3 = arith.constant 0 : i32
    return %arg0, %c0_i32, %c0_i32_0, %c0_i32_1, %c0_i32_2 : i32, i32, i32, i32, i32
  }
  func.func @transform_1(%arg0: i32) -> (i32, i32, i32) {
    %c0_i32 = arith.constant 0 : i32
    %c0_i32_0 = arith.constant 0 : i32
    %c0_i32_1 = arith.constant 0 : i32
    %c0_i32_2 = arith.constant 0 : i32
    return %c0_i32, %c0_i32_0, %c0_i32_1 : i32, i32, i32
  }
  func.func @transform_2(%arg0: i32) -> (i32, i32) {
    %c0_i32 = arith.constant 0 : i32
    %c0_i32_0 = arith.constant 0 : i32
    %c0_i32_1 = arith.constant 0 : i32
    return %c0_i32, %c0_i32_0 : i32, i32
  }
  func.func @transform_3(%arg0: i32) -> (i32, i32, i32, i32) {
    %c0_i32 = arith.constant 0 : i32
    %c0_i32_0 = arith.constant 0 : i32
    %c0_i32_1 = arith.constant 0 : i32
    %c0_i32_2 = arith.constant 0 : i32
    return %arg0, %c0_i32, %c0_i32_0, %c0_i32_1 : i32, i32, i32, i32
  }
}

module attributes {stable_mosaic.version = 11 : i64} {
  func.func @kernel(%arg0: i32, %arg1: memref<1x4x2x2x128xf32, #tpu.memory_space<vmem>>, %arg2: memref<9x128x128xbf16, #tpu.memory_space<vmem>>, %arg3: memref<1x128xf32, #tpu.memory_space<vmem>>, %arg4: memref<1x1x1x128xf32, #tpu.memory_space<vmem>>) attributes {dimension_semantics = [#tpu.dimension_semantics<parallel>], iteration_bounds = array<i64: 2>, scalar_prefetch = 0 : i64, scratch_operands = 0 : i64, tpu.core_type = #tpu.core_type<tc>, window_params = [{transform_indices = @transform_0, window_bounds = array<i64: 1, 4, 2, 2, 128>}, {pipeline_mode = #tpu.pipeline_mode<synchronous>, transform_indices = @transform_1, window_bounds = array<i64: 9, 128, 128>}, {pipeline_mode = #tpu.pipeline_mode<synchronous>, transform_indices = @transform_2, window_bounds = array<i64: 1, 128>}, {transform_indices = @transform_3, window_bounds = array<i64: 1, 1, 1, 128>}]} {
    %c0 = arith.constant 0 : index
    %c0_0 = arith.constant 0 : index
    %c0_1 = arith.constant 0 : index
    %c0_2 = arith.constant 0 : index
    %c0_3 = arith.constant 0 : index
    %0 = vector.load %arg1[%c0, %c0_0, %c0_1, %c0_2, %c0_3] : memref<1x4x2x2x128xf32, #tpu.memory_space<vmem>>, vector<1x4x2x2x128xf32>
    %1 = vector.shape_cast %0 : vector<1x4x2x2x128xf32> to vector<4x2x2x128xf32>
    %c0_4 = arith.constant 0 : index
    %c0_5 = arith.constant 0 : index
    %c0_6 = arith.constant 0 : index
    %2 = vector.load %arg2[%c0_4, %c0_5, %c0_6] : memref<9x128x128xbf16, #tpu.memory_space<vmem>>, vector<9x128x128xbf16>
    %cst = arith.constant 0.000000e+00 : f32
    %3 = vector.broadcast %cst : f32 to vector<1x128xf32>
    %4 = vector.extract_strided_slice %1 {offsets = [0, 0, 0, 0], sizes = [1, 1, 1, 128], strides = [1, 1, 1, 1]} : vector<4x2x2x128xf32> to vector<1x1x1x128xf32>
    %5 = vector.shape_cast %4 : vector<1x1x1x128xf32> to vector<1x1x128xf32>
    %6 = vector.shape_cast %5 : vector<1x1x128xf32> to vector<1x128xf32>
    %7 = arith.truncf %6 : vector<1x128xf32> to vector<1x128xbf16>
    %8 = vector.extract_strided_slice %2 {offsets = [0, 0, 0], sizes = [1, 128, 128], strides = [1, 1, 1]} : vector<9x128x128xbf16> to vector<1x128x128xbf16>
    %9 = vector.shape_cast %8 : vector<1x128x128xbf16> to vector<128x128xbf16>
    %cst_7 = arith.constant dense<0.000000e+00> : vector<1x128xf32>
    %10 = tpu.matmul %7, %9, %cst_7 {dimension_numbers = #tpu.dot_dimension_numbers<[1], [0], [0], [1], [0, 0, 1, 1], [], []>} : vector<1x128xbf16>, vector<128x128xbf16>, vector<1x128xf32> -> vector<1x128xf32>
    %11 = arith.addf %3, %10 : vector<1x128xf32>
    %12 = vector.extract_strided_slice %1 {offsets = [1, 0, 0, 0], sizes = [1, 1, 1, 128], strides = [1, 1, 1, 1]} : vector<4x2x2x128xf32> to vector<1x1x1x128xf32>
    %13 = vector.shape_cast %12 : vector<1x1x1x128xf32> to vector<1x1x128xf32>
    %14 = vector.shape_cast %13 : vector<1x1x128xf32> to vector<1x128xf32>
    %15 = arith.truncf %14 : vector<1x128xf32> to vector<1x128xbf16>
    %16 = vector.extract_strided_slice %2 {offsets = [1, 0, 0], sizes = [1, 128, 128], strides = [1, 1, 1]} : vector<9x128x128xbf16> to vector<1x128x128xbf16>
    %17 = vector.shape_cast %16 : vector<1x128x128xbf16> to vector<128x128xbf16>
    %cst_8 = arith.constant dense<0.000000e+00> : vector<1x128xf32>
    %18 = tpu.matmul %15, %17, %cst_8 {dimension_numbers = #tpu.dot_dimension_numbers<[1], [0], [0], [1], [0, 0, 1, 1], [], []>} : vector<1x128xbf16>, vector<128x128xbf16>, vector<1x128xf32> -> vector<1x128xf32>
    %19 = arith.addf %11, %18 : vector<1x128xf32>
    %20 = vector.extract_strided_slice %1 {offsets = [0, 0, 1, 0], sizes = [1, 1, 1, 128], strides = [1, 1, 1, 1]} : vector<4x2x2x128xf32> to vector<1x1x1x128xf32>
    %21 = vector.shape_cast %20 : vector<1x1x1x128xf32> to vector<1x1x128xf32>
    %22 = vector.shape_cast %21 : vector<1x1x128xf32> to vector<1x128xf32>
    %23 = arith.truncf %22 : vector<1x128xf32> to vector<1x128xbf16>
    %24 = vector.extract_strided_slice %2 {offsets = [2, 0, 0], sizes = [1, 128, 128], strides = [1, 1, 1]} : vector<9x128x128xbf16> to vector<1x128x128xbf16>
    %25 = vector.shape_cast %24 : vector<1x128x128xbf16> to vector<128x128xbf16>
    %cst_9 = arith.constant dense<0.000000e+00> : vector<1x128xf32>
    %26 = tpu.matmul %23, %25, %cst_9 {dimension_numbers = #tpu.dot_dimension_numbers<[1], [0], [0], [1], [0, 0, 1, 1], [], []>} : vector<1x128xbf16>, vector<128x128xbf16>, vector<1x128xf32> -> vector<1x128xf32>
    %27 = arith.addf %19, %26 : vector<1x128xf32>
    %28 = vector.extract_strided_slice %1 {offsets = [2, 0, 0, 0], sizes = [1, 1, 1, 128], strides = [1, 1, 1, 1]} : vector<4x2x2x128xf32> to vector<1x1x1x128xf32>
    %29 = vector.shape_cast %28 : vector<1x1x1x128xf32> to vector<1x1x128xf32>
    %30 = vector.shape_cast %29 : vector<1x1x128xf32> to vector<1x128xf32>
    %31 = arith.truncf %30 : vector<1x128xf32> to vector<1x128xbf16>
    %32 = vector.extract_strided_slice %2 {offsets = [3, 0, 0], sizes = [1, 128, 128], strides = [1, 1, 1]} : vector<9x128x128xbf16> to vector<1x128x128xbf16>
    %33 = vector.shape_cast %32 : vector<1x128x128xbf16> to vector<128x128xbf16>
    %cst_10 = arith.constant dense<0.000000e+00> : vector<1x128xf32>
    %34 = tpu.matmul %31, %33, %cst_10 {dimension_numbers = #tpu.dot_dimension_numbers<[1], [0], [0], [1], [0, 0, 1, 1], [], []>} : vector<1x128xbf16>, vector<128x128xbf16>, vector<1x128xf32> -> vector<1x128xf32>
    %35 = arith.addf %27, %34 : vector<1x128xf32>
    %36 = vector.extract_strided_slice %1 {offsets = [3, 0, 0, 0], sizes = [1, 1, 1, 128], strides = [1, 1, 1, 1]} : vector<4x2x2x128xf32> to vector<1x1x1x128xf32>
    %37 = vector.shape_cast %36 : vector<1x1x1x128xf32> to vector<1x1x128xf32>
    %38 = vector.shape_cast %37 : vector<1x1x128xf32> to vector<1x128xf32>
    %39 = arith.truncf %38 : vector<1x128xf32> to vector<1x128xbf16>
    %40 = vector.extract_strided_slice %2 {offsets = [4, 0, 0], sizes = [1, 128, 128], strides = [1, 1, 1]} : vector<9x128x128xbf16> to vector<1x128x128xbf16>
    %41 = vector.shape_cast %40 : vector<1x128x128xbf16> to vector<128x128xbf16>
    %cst_11 = arith.constant dense<0.000000e+00> : vector<1x128xf32>
    %42 = tpu.matmul %39, %41, %cst_11 {dimension_numbers = #tpu.dot_dimension_numbers<[1], [0], [0], [1], [0, 0, 1, 1], [], []>} : vector<1x128xbf16>, vector<128x128xbf16>, vector<1x128xf32> -> vector<1x128xf32>
    %43 = arith.addf %35, %42 : vector<1x128xf32>
    %44 = vector.extract_strided_slice %1 {offsets = [2, 0, 1, 0], sizes = [1, 1, 1, 128], strides = [1, 1, 1, 1]} : vector<4x2x2x128xf32> to vector<1x1x1x128xf32>
    %45 = vector.shape_cast %44 : vector<1x1x1x128xf32> to vector<1x1x128xf32>
    %46 = vector.shape_cast %45 : vector<1x1x128xf32> to vector<1x128xf32>
    %47 = arith.truncf %46 : vector<1x128xf32> to vector<1x128xbf16>
    %48 = vector.extract_strided_slice %2 {offsets = [5, 0, 0], sizes = [1, 128, 128], strides = [1, 1, 1]} : vector<9x128x128xbf16> to vector<1x128x128xbf16>
    %49 = vector.shape_cast %48 : vector<1x128x128xbf16> to vector<128x128xbf16>
    %cst_12 = arith.constant dense<0.000000e+00> : vector<1x128xf32>
    %50 = tpu.matmul %47, %49, %cst_12 {dimension_numbers = #tpu.dot_dimension_numbers<[1], [0], [0], [1], [0, 0, 1, 1], [], []>} : vector<1x128xbf16>, vector<128x128xbf16>, vector<1x128xf32> -> vector<1x128xf32>
    %51 = arith.addf %43, %50 : vector<1x128xf32>
    %52 = vector.extract_strided_slice %1 {offsets = [0, 1, 0, 0], sizes = [1, 1, 1, 128], strides = [1, 1, 1, 1]} : vector<4x2x2x128xf32> to vector<1x1x1x128xf32>
    %53 = vector.shape_cast %52 : vector<1x1x1x128xf32> to vector<1x1x128xf32>
    %54 = vector.shape_cast %53 : vector<1x1x128xf32> to vector<1x128xf32>
    %55 = arith.truncf %54 : vector<1x128xf32> to vector<1x128xbf16>
    %56 = vector.extract_strided_slice %2 {offsets = [6, 0, 0], sizes = [1, 128, 128], strides = [1, 1, 1]} : vector<9x128x128xbf16> to vector<1x128x128xbf16>
    %57 = vector.shape_cast %56 : vector<1x128x128xbf16> to vector<128x128xbf16>
    %cst_13 = arith.constant dense<0.000000e+00> : vector<1x128xf32>
    %58 = tpu.matmul %55, %57, %cst_13 {dimension_numbers = #tpu.dot_dimension_numbers<[1], [0], [0], [1], [0, 0, 1, 1], [], []>} : vector<1x128xbf16>, vector<128x128xbf16>, vector<1x128xf32> -> vector<1x128xf32>
    %59 = arith.addf %51, %58 : vector<1x128xf32>
    %60 = vector.extract_strided_slice %1 {offsets = [1, 1, 0, 0], sizes = [1, 1, 1, 128], strides = [1, 1, 1, 1]} : vector<4x2x2x128xf32> to vector<1x1x1x128xf32>
    %61 = vector.shape_cast %60 : vector<1x1x1x128xf32> to vector<1x1x128xf32>
    %62 = vector.shape_cast %61 : vector<1x1x128xf32> to vector<1x128xf32>
    %63 = arith.truncf %62 : vector<1x128xf32> to vector<1x128xbf16>
    %64 = vector.extract_strided_slice %2 {offsets = [7, 0, 0], sizes = [1, 128, 128], strides = [1, 1, 1]} : vector<9x128x128xbf16> to vector<1x128x128xbf16>
    %65 = vector.shape_cast %64 : vector<1x128x128xbf16> to vector<128x128xbf16>
    %cst_14 = arith.constant dense<0.000000e+00> : vector<1x128xf32>
    %66 = tpu.matmul %63, %65, %cst_14 {dimension_numbers = #tpu.dot_dimension_numbers<[1], [0], [0], [1], [0, 0, 1, 1], [], []>} : vector<1x128xbf16>, vector<128x128xbf16>, vector<1x128xf32> -> vector<1x128xf32>
    %67 = arith.addf %59, %66 : vector<1x128xf32>
    %68 = vector.extract_strided_slice %1 {offsets = [0, 1, 1, 0], sizes = [1, 1, 1, 128], strides = [1, 1, 1, 1]} : vector<4x2x2x128xf32> to vector<1x1x1x128xf32>
    %69 = vector.shape_cast %68 : vector<1x1x1x128xf32> to vector<1x1x128xf32>
    %70 = vector.shape_cast %69 : vector<1x1x128xf32> to vector<1x128xf32>
    %71 = arith.truncf %70 : vector<1x128xf32> to vector<1x128xbf16>
    %72 = vector.extract_strided_slice %2 {offsets = [8, 0, 0], sizes = [1, 128, 128], strides = [1, 1, 1]} : vector<9x128x128xbf16> to vector<1x128x128xbf16>
    %73 = vector.shape_cast %72 : vector<1x128x128xbf16> to vector<128x128xbf16>
    %cst_15 = arith.constant dense<0.000000e+00> : vector<1x128xf32>
    %74 = tpu.matmul %71, %73, %cst_15 {dimension_numbers = #tpu.dot_dimension_numbers<[1], [0], [0], [1], [0, 0, 1, 1], [], []>} : vector<1x128xbf16>, vector<128x128xbf16>, vector<1x128xf32> -> vector<1x128xf32>
    %75 = arith.addf %67, %74 : vector<1x128xf32>
    %c0_16 = arith.constant 0 : index
    %c0_17 = arith.constant 0 : index
    %76 = vector.load %arg3[%c0_16, %c0_17] : memref<1x128xf32, #tpu.memory_space<vmem>>, vector<1x128xf32>
    %77 = arith.addf %75, %76 : vector<1x128xf32>
    %cst_18 = arith.constant 0.000000e+00 : f32
    %78 = vector.broadcast %cst_18 : f32 to vector<1x128xf32>
    %79 = arith.maximumf %77, %78 : vector<1x128xf32>
    %80 = vector.shape_cast %79 : vector<1x128xf32> to vector<1x1x1x128xf32>
    %c0_19 = arith.constant 0 : index
    %c0_20 = arith.constant 0 : index
    %c0_21 = arith.constant 0 : index
    %c0_22 = arith.constant 0 : index
    %81 = vector.load %arg4[%c0_19, %c0_20, %c0_21, %c0_22] : memref<1x1x1x128xf32, #tpu.memory_space<vmem>>, vector<1x1x1x128xf32>
    tpu.vector_store %arg4[%c0_19, %c0_20, %c0_21, %c0_22], %80 {strides = array<i32>} : memref<1x1x1x128xf32, #tpu.memory_space<vmem>>, vector<1x1x1x128xf32>,
    return
  }
  func.func @transform_0(%arg0: i32) -> (i32, i32, i32, i32, i32) {
    %c0_i32 = arith.constant 0 : i32
    %c0_i32_0 = arith.constant 0 : i32
    %c0_i32_1 = arith.constant 0 : i32
    %c0_i32_2 = arith.constant 0 : i32
    %c0_i32_3 = arith.constant 0 : i32
    return %arg0, %c0_i32, %c0_i32_0, %c0_i32_1, %c0_i32_2 : i32, i32, i32, i32, i32
  }
  func.func @transform_1(%arg0: i32) -> (i32, i32, i32) {
    %c0_i32 = arith.constant 0 : i32
    %c0_i32_0 = arith.constant 0 : i32
    %c0_i32_1 = arith.constant 0 : i32
    %c0_i32_2 = arith.constant 0 : i32
    return %c0_i32, %c0_i32_0, %c0_i32_1 : i32, i32, i32
  }
  func.func @transform_2(%arg0: i32) -> (i32, i32) {
    %c0_i32 = arith.constant 0 : i32
    %c0_i32_0 = arith.constant 0 : i32
    %c0_i32_1 = arith.constant 0 : i32
    return %c0_i32, %c0_i32_0 : i32, i32
  }
  func.func @transform_3(%arg0: i32) -> (i32, i32, i32, i32) {
    %c0_i32 = arith.constant 0 : i32
    %c0_i32_0 = arith.constant 0 : i32
    %c0_i32_1 = arith.constant 0 : i32
    %c0_i32_2 = arith.constant 0 : i32
    return %arg0, %c0_i32, %c0_i32_0, %c0_i32_1 : i32, i32, i32, i32
  }
}

</mosaic_0001>

<llo_original>
// kernel: pyramid_forward.8
$region0: #{pyramid_forward.8}
  #allocation0 [shape = 'u32[]', space=smem, size = 0x4, offset = 0x4, fixed_abs, tag = 'smem constant byte address 0x4 - core index']
  #allocation1 [shape = 'u32[72,128]{1,0:T(1,128)}', space=vmem, size = 0x9000, scoped, tag = 'internal scratch']
  %s0 = inlined_call_operand.vmem [shape: f32[2,4,4,128], index: 0, kind: input, shape index: {}]
  %s1 = inlined_call_operand.vmem [shape: bf16[128,128], index: 1, kind: input, shape index: {}]
  %s2 = inlined_call_operand.vmem [shape: f32[1,128], index: 2, kind: input, shape index: {}]
  %s3 = inlined_call_operand.vmem [shape: f32[2,4,4,128], index: 3, kind: output, shape index: {}]
  %s4 = sld [smem:[#allocation0]]
  $region45: #{pyramid_forward.8} parent=0
    _
  %s6 = ssub.s32 1, %s4
  %s7 = scalar_select 0, %s6, %s4
  loop: start=0, step=1, limit=4
  $region2: #{pyramid_forward.8} parent=0 // loop_pre_header
    _
  $region3: #{pyramid_forward.8} parent=0 // loop_header
    %s9 = sphi 0, %s13
    %p10 = scmp.ge.s32.totalorder %s9, 4
    %s16 = sphi 0, %s28
    %s17 = sphi 0, %s24
    %s18 = sphi 0, %s16
    %s19 = sphi 0, %s17
    %s20 = sphi 0, %s18
    %s21 = sphi 0, %s19
    %s33 = sphi 0, %s35
    %s36 = sphi 0, %s33
    %s37 = sphi 0, %s36
    %s53 = sphi 0, %s37
    %s57 = sphi 0, %s57
    %s59 = sphi 0, %s57
    %s60 = sphi 0, %s59
    %s74 = sphi 0, %s60
    %s78 = sphi 0, %s78
    %s80 = sphi 0, %s78
    %s81 = sphi 0, %s80
    %s95 = sphi 0, %s81
    %s103 = sphi 0, %s105
    %s106 = sphi 0, %s103
    %s107 = sphi 0, %s106
    %s123 = sphi 0, %s107
  $region4: #{pyramid_forward.8} parent=0 // loop_header_branch
    %12 = sbr.rel (%p10) target = $region8
  $region5: #{pyramid_forward.8} parent=0 // loop_body
    %s14 = ssub.s32 %s9, 1
    %s15 = ssub.s32 %s9, 2
    %s22 = sadd.s32 1, %s17
    %p23 = scmp.ge.s32.totalorder %s22, 1
    %s24 = scalar_select %p23, 0, %s22
    %s25 = sadd.s32 1, %s16
    %s26 = scalar_select %p23, %s25, %s16
    %p27 = scmp.ge.s32.totalorder %s26, 2
    %s28 = scalar_select %p27, 0, %s26
    %s29 = ssub.s32 %s16, %s28
    %s30 = ssub.s32 %s17, %s24
    %s31 = sor.u32 %s29, %s30
    %p32 = scmp.eq.s32.totalorder %s31, 0
    %s34 = sadd.s32 %s33, 1
    %s35 = scalar_select %p32, %s33, %s34
    %p38 = pneg %p32
    %p39 = scmp.eq.s32.totalorder %s9, 1
    %p40 = por %p38, %p39
    %p41 = scmp.ne.s32.totalorder %s33, %s36
    %p42 = scmp.eq.s32.totalorder %s9, 0
    %p43 = por %p41, %p42
    %p44 = scmp.ne.s32.totalorder %s33, %s36
    %p45 = scmp.eq.s32.totalorder %s14, 1
    %p46 = por %p44, %p45
    %p47 = scmp.ne.s32.totalorder %s36, %s37
    %p48 = scmp.eq.s32.totalorder %s14, 0
    %p49 = por %p47, %p48
    %p50 = scmp.ne.s32.totalorder %s36, %s37
    %p51 = scmp.eq.s32.totalorder %s15, 1
    %p52 = por %p50, %p51
    %p54 = scmp.ne.s32.totalorder %s37, %s53
    %p55 = scmp.eq.s32.totalorder %s15, 0
    %p56 = por %p54, %p55
    %s58 = sadd.s32 %s57, 1
    %p61 = scmp.eq.s32.totalorder %s9, 1
    %p62 = scmp.ne.s32.totalorder %s57, %s59
    %p63 = scmp.eq.s32.totalorder %s9, 0
    %p64 = por %p62, %p63
    %p65 = scmp.ne.s32.totalorder %s57, %s59
    %p66 = scmp.eq.s32.totalorder %s14, 1
    %p67 = por %p65, %p66
    %p68 = scmp.ne.s32.totalorder %s59, %s60
    %p69 = scmp.eq.s32.totalorder %s14, 0
    %p70 = por %p68, %p69
    %p71 = scmp.ne.s32.totalorder %s59, %s60
    %p72 = scmp.eq.s32.totalorder %s15, 1
    %p73 = por %p71, %p72
    %p75 = scmp.ne.s32.totalorder %s60, %s74
    %p76 = scmp.eq.s32.totalorder %s15, 0
    %p77 = por %p75, %p76
    %s79 = sadd.s32 %s78, 1
    %p82 = scmp.eq.s32.totalorder %s9, 1
    %p83 = scmp.ne.s32.totalorder %s78, %s80
    %p84 = scmp.eq.s32.totalorder %s9, 0
    %p85 = por %p83, %p84
    %p86 = scmp.ne.s32.totalorder %s78, %s80
    %p87 = scmp.eq.s32.totalorder %s14, 1
    %p88 = por %p86, %p87
    %p89 = scmp.ne.s32.totalorder %s80, %s81
    %p90 = scmp.eq.s32.totalorder %s14, 0
    %p91 = por %p89, %p90
    %p92 = scmp.ne.s32.totalorder %s80, %s81
    %p93 = scmp.eq.s32.totalorder %s15, 1
    %p94 = por %p92, %p93
    %p96 = scmp.ne.s32.totalorder %s81, %s95
    %p97 = scmp.eq.s32.totalorder %s15, 0
    %p98 = por %p96, %p97
    %s99 = ssub.s32 %s16, %s28
    %s100 = ssub.s32 %s17, %s24
    %s101 = sor.u32 %s99, %s100
    %p102 = scmp.eq.s32.totalorder %s101, 0
    %s104 = sadd.s32 %s103, 1
    %s105 = scalar_select %p102, %s103, %s104
    %p108 = pneg %p102
    %p109 = scmp.eq.s32.totalorder %s9, 1
    %p110 = por %p108, %p109
    %p111 = scmp.ne.s32.totalorder %s103, %s106
    %p112 = scmp.eq.s32.totalorder %s9, 0
    %p113 = por %p111, %p112
    %p114 = scmp.ne.s32.totalorder %s103, %s106
    %p115 = scmp.eq.s32.totalorder %s14, 1
    %p116 = por %p114, %p115
    %p117 = scmp.ne.s32.totalorder %s106, %s107
    %p118 = scmp.eq.s32.totalorder %s14, 0
    %p119 = por %p117, %p118
    %p120 = scmp.ne.s32.totalorder %s106, %s107
    %p121 = scmp.eq.s32.totalorder %s15, 1
    %p122 = por %p120, %p121
    %p124 = scmp.ne.s32.totalorder %s107, %s123
    %p125 = scmp.eq.s32.totalorder %s15, 0
    %p126 = por %p124, %p125
    %p127 = scmp.le.s32.totalorder 1, %s9
    %p128 = scmp.lt.s32.totalorder %s9, 3
    %p129 = pnand %p127, %p128
    %p130 = pneg %p129
    // Predicated region
    $region9: #{pyramid_forward.8} parent=5 // pred_check
      _
    $region10: #{pyramid_forward.8} parent=5 // pred_check_branch
      %132 = sbr.rel (%p129) target = $region12
    $region11: #{pyramid_forward.8} parent=5 // pred_region
      %s133 = ssub.s32 %s9, 1
      // Predicated region
      $region13: #{pyramid_forward.8} parent=11 // pred_check
        %p134 = pneg %p70
      $region14: #{pyramid_forward.8} parent=11 // pred_check_branch
        %136 = sbr.rel (%p134) target = $region16
      $region15: #{pyramid_forward.8} parent=11 // pred_region
        _
      $region16: #{pyramid_forward.8} parent=11 // pred_fallthru
        _
      // Predicated region
      $region17: #{pyramid_forward.8} parent=11 // pred_check
        %p137 = pneg %p91
      $region18: #{pyramid_forward.8} parent=11 // pred_check_branch
        %139 = sbr.rel (%p137) target = $region20
      $region19: #{pyramid_forward.8} parent=11 // pred_region
        _
      $region20: #{pyramid_forward.8} parent=11 // pred_fallthru
        _
    $region12: #{pyramid_forward.8} parent=5 // pred_fallthru
      _
    %p140 = scmp.lt.s32.totalorder %s9, 2
    // Predicated region
    $region21: #{pyramid_forward.8} parent=5 // pred_check
      %p141 = pneg %p140
    $region22: #{pyramid_forward.8} parent=5 // pred_check_branch
      %143 = sbr.rel (%p141) target = $region24
    $region23: #{pyramid_forward.8} parent=5 // pred_region
      // Predicated region
      $region25: #{pyramid_forward.8} parent=23 // pred_check
        %p144 = pneg %p43
      $region26: #{pyramid_forward.8} parent=23 // pred_check_branch
        %146 = sbr.rel (%p144) target = $region28
      $region27: #{pyramid_forward.8} parent=23 // pred_region
        %s147 = smul.u32 4, %s17
        %p148 = scmp.lt.s32.totalorder %s16, 1
        %s149 = scalar_select %p148, %s16, 1
        %p150 = scmp.lt.s32.totalorder %s147, 3
        %s151 = scalar_select %p150, %s147, 3
        %s152 = smul.addr %s149, 4
        %s153 = sadd.s32 %s151, %s152
        %s154 = smul.addr %s153, 4
        %s155 = scalar_lea.vmem %s0, %s154
        %s156 = smul.u32 4, %s17
      $region28: #{pyramid_forward.8} parent=23 // pred_fallthru
        _
    $region24: #{pyramid_forward.8} parent=5 // pred_fallthru
      _
    %p157 = scmp.le.s32.totalorder 1, %s9
    %p158 = scmp.lt.s32.totalorder %s9, 3
    %p159 = pnand %p157, %p158
    %p160 = pneg %p159
    // Predicated region
    $region29: #{pyramid_forward.8} parent=5 // pred_check
      _
    $region30: #{pyramid_forward.8} parent=5 // pred_check_branch
      %162 = sbr.rel (%p159) target = $region32
    $region31: #{pyramid_forward.8} parent=5 // pred_region
      %s163 = ssub.s32 %s9, 1
      %s164 = smul.u32 4, %s19
      %p165 = scmp.lt.s32.totalorder %s18, 1
      %s166 = scalar_select %p165, %s18, 1
      %p167 = scmp.lt.s32.totalorder %s164, 3
      %s168 = scalar_select %p167, %s164, 3
      %s169 = smul.addr %s166, 4
      %s170 = sadd.s32 %s168, %s169
      %s171 = smul.addr %s170, 4
      %s172 = scalar_lea.vmem %s0, %s171
      %p173 = pneg %p49
      %p174 = pneg %p46
      %p175 = pneg %p70
      %p176 = pneg %p67
      %p177 = pneg %p91
      %p178 = pneg %p88
      %p179 = pneg %p119
      %p180 = pneg %p116
      %s181 = smul.u32 4, %s19
      %p182 = scmp.lt.s32.totalorder %s18, 1
      %s183 = scalar_select %p182, %s18, 1
      %p184 = scmp.lt.s32.totalorder %s181, 3
      %s185 = scalar_select %p184, %s181, 3
      %s186 = smul.addr %s183, 4
      %s187 = sadd.s32 %s185, %s186
      %s188 = smul.addr %s187, 4
      %s189 = scalar_lea.vmem %s3, %s188
      %s190 = smul.u32 4, %s19
      %p191 = scmp.lt.s32.totalorder %s18, 1
      %s192 = scalar_select %p191, %s18, 1
      %p193 = scmp.lt.s32.totalorder %s190, 3
      %s194 = scalar_select %p193, %s190, 3
      %s195 = smul.addr %s192, 4
      %s196 = sadd.s32 %s194, %s195
      %s197 = smul.addr %s196, 4
      %s198 = scalar_lea.vmem %s0, %s197
      %s199 = smul.u32 4, %s19
      %s200 = smul.u32 4, %s19
      %p201 = scmp.lt.s32.totalorder %s18, 1
      %s202 = scalar_select %p201, %s18, 1
      %p203 = scmp.lt.s32.totalorder %s200, 3
      %s204 = scalar_select %p203, %s200, 3
      %s205 = smul.addr %s202, 4
      %s206 = sadd.s32 %s204, %s205
      %s207 = smul.addr %s206, 4
      %s208 = scalar_lea.vmem %s3, %s207
      %s209 = smul.u32 4, %s19
      %v210 = vld [vmem:[%s198] sm:$0xf]
      %v211 = vld [vmem:[%s198 + $0x4] sm:$0xf]
      %v212 = vld [vmem:[%s198 + $0x8] sm:$0xf]
      %v213 = vld [vmem:[%s198 + $0xc] sm:$0xf]
      %218 = vst [vmem:[#allocation1] ss:$2 sm:$0xff] %v210
      %s219 = scalar_lea.vmem [#allocation1], 1
      %220 = vst [vmem:[%s219] ss:$2 sm:$0xff] %v211
      %s221 = scalar_lea.vmem [#allocation1], 16
      %222 = vst [vmem:[%s221] ss:$2 sm:$0xff] %v212
      %s223 = scalar_lea.vmem [#allocation1], 17
      %224 = vst [vmem:[%s223] ss:$2 sm:$0xff] %v213
      %v225 = vld.sshfl [vmem:[#allocation1] sm:$0xff pattern:$0x75316420]
      %v226 = vld.sshfl [vmem:[#allocation1 + $0x10] sm:$0xff pattern:$0x75316420]
      %v229 = vpack.c.bf16 %v226, %v225
      %v230 = vld [vmem:[%s1] sm:$0xf]
      %v231 = vld [vmem:[%s1 + $0x4] sm:$0xf]
      %v232 = vld [vmem:[%s1 + $0x8] sm:$0xf]
      %v233 = vld [vmem:[%s1 + $0xc] sm:$0xf]
      %v234 = vld [vmem:[%s1 + $0x10] sm:$0xf]
      %v235 = vld [vmem:[%s1 + $0x14] sm:$0xf]
      %v236 = vld [vmem:[%s1 + $0x18] sm:$0xf]
      %v237 = vld [vmem:[%s1 + $0x1c] sm:$0xf]
      %v238 = vld [vmem:[%s1 + $0x20] sm:$0xf]
      %v239 = vld [vmem:[%s1 + $0x24] sm:$0xf]
      %v240 = vld [vmem:[%s1 + $0x28] sm:$0xf]
      %v241 = vld [vmem:[%s1 + $0x2c] sm:$0xf]
      %v242 = vld [vmem:[%s1 + $0x30] sm:$0xf]
      %v243 = vld [vmem:[%s1 + $0x34] sm:$0xf]
      %v244 = vld [vmem:[%s1 + $0x38] sm:$0xf]
      %v245 = vld [vmem:[%s1 + $0x3c] sm:$0xf]
      %v246 = vld [vmem:[%s2] sm:$0x1]
      %v248 = vperm.slane %v246, 0
      %v266 = vunpack.c.l.b16 %v230
      %v267 = vunpack.c.l.b16 %v231
      %v268 = vunpack.c.l.b16 %v232
      %v269 = vunpack.c.l.b16 %v233
      %v270 = vunpack.c.l.b16 %v234
      %v271 = vunpack.c.l.b16 %v235
      %v272 = vunpack.c.l.b16 %v236
      %v273 = vunpack.c.l.b16 %v237
      %v274 = vunpack.c.l.b16 %v238
      %v275 = vunpack.c.l.b16 %v239
      %v276 = vunpack.c.l.b16 %v240
      %v277 = vunpack.c.l.b16 %v241
      %v278 = vunpack.c.l.b16 %v242
      %v279 = vunpack.c.l.b16 %v243
      %v280 = vunpack.c.l.b16 %v244
      %v281 = vunpack.c.l.b16 %v245
      %v282 = vpack.c.b16 %v267, %v266
      %v283 = vpack.c.b16 %v269, %v268
      %v284 = vpack.c.b16 %v271, %v270
      %v285 = vpack.c.b16 %v273, %v272
      %v286 = vpack.c.b16 %v275, %v274
      %v287 = vpack.c.b16 %v277, %v276
      %v288 = vpack.c.b16 %v279, %v278
      %v289 = vpack.c.b16 %v281, %v280
      %298 = vmatpush.bf16.msra.mxu0 %v289
      %299 = vmatpush.bf16.msra.mxu0 %v288
      %300 = vmatpush.bf16.msra.mxu0 %v287
      %301 = vmatpush.bf16.msra.mxu0 %v286
      %302 = vmatpush.bf16.msra.mxu0 %v285
      %303 = vmatpush.bf16.msra.mxu0 %v284
      %304 = vmatpush.bf16.msra.mxu0 %v283
      %305 = vmatpush.bf16.msra.mxu0 %v282
      %306 = vmatmul.bf16.gmra.mxu0 %v229
      %v307 = vpop.f32.mrf.mxu0
      %v308 = vadd.f32 %v248, %v307
      %v309 = vpop.f32.mrf.mxu0
      %v310 = vadd.f32 %v248, %v309
      %311 = vdwg.mxu0
      %v314 = vrot.slane %v308, 4
      %v315 = vrot.slane %v310, 4
      %318 = vst [vmem:[%s208] sm:$0xf] %v308
      %319 = vst [vmem:[%s208 + $0x4] sm:$0xf] %v314
      %320 = vst [vmem:[%s208 + $0x8] sm:$0xf] %v310
      %321 = vst [vmem:[%s208 + $0xc] sm:$0xf] %v315
      %s322 = smul.u32 4, %s19
      %p323 = scmp.lt.s32.totalorder %s18, 1
      %s324 = scalar_select %p323, %s18, 1
      %p325 = scmp.lt.s32.totalorder %s322, 3
      %s326 = scalar_select %p325, %s322, 3
      %s327 = smul.addr %s324, 4
      %s328 = sadd.s32 %s326, %s327
      %s329 = smul.addr %s328, 4
      %s330 = scalar_lea.vmem %s3, %s329
      // Predicated region
      $region33: #{pyramid_forward.8} parent=31 // pred_check
        %p331 = pneg %p116
      $region34: #{pyramid_forward.8} parent=31 // pred_check_branch
        %333 = sbr.rel (%p331) target = $region36
      $region35: #{pyramid_forward.8} parent=31 // pred_region
        %s334 = smul.u32 4, %s19
      $region36: #{pyramid_forward.8} parent=31 // pred_fallthru
        _
    $region32: #{pyramid_forward.8} parent=5 // pred_fallthru
      _
    %p335 = scmp.le.s32.totalorder 2, %s9
    // Predicated region
    $region37: #{pyramid_forward.8} parent=5 // pred_check
      %p336 = pneg %p335
    $region38: #{pyramid_forward.8} parent=5 // pred_check_branch
      %338 = sbr.rel (%p336) target = $region40
    $region39: #{pyramid_forward.8} parent=5 // pred_region
      %s339 = ssub.s32 %s9, 2
      // Predicated region
      $region41: #{pyramid_forward.8} parent=39 // pred_check
        %p340 = pneg %p122
      $region42: #{pyramid_forward.8} parent=39 // pred_check_branch
        %342 = sbr.rel (%p340) target = $region44
      $region43: #{pyramid_forward.8} parent=39 // pred_region
        %s343 = smul.u32 4, %s21
        %p344 = scmp.lt.s32.totalorder %s20, 1
        %s345 = scalar_select %p344, %s20, 1
        %p346 = scmp.lt.s32.totalorder %s343, 3
        %s347 = scalar_select %p346, %s343, 3
        %s348 = smul.addr %s345, 4
        %s349 = sadd.s32 %s347, %s348
        %s350 = smul.addr %s349, 4
        %s351 = scalar_lea.vmem %s3, %s350
      $region44: #{pyramid_forward.8} parent=39 // pred_fallthru
        _
    $region40: #{pyramid_forward.8} parent=5 // pred_fallthru
      _
  $region6: #{pyramid_forward.8} parent=0 // loop_footer
    %s13 = sadd.s32 1, %s9
  $region7: #{pyramid_forward.8} parent=0 // loop_footer_branch
    %8 = sbr.rel target = $region3
  $region8: #{pyramid_forward.8} parent=0 // loop_exit
    _

// kernel: pyramid_forward.10
$region0: #{pyramid_forward.10}
  #allocation0 [shape = 'u32[]', space=smem, size = 0x4, offset = 0x4, fixed_abs, tag = 'smem constant byte address 0x4 - core index']
  #allocation1 [shape = 'u32[72,128]{1,0:T(1,128)}', space=vmem, size = 0x9000, scoped, tag = 'internal scratch']
  %s0 = inlined_call_operand.vmem [shape: f32[2,8,8,64], index: 0, kind: input, shape index: {}]
  %s1 = inlined_call_operand.vmem [shape: f32[2,4,4,128], index: 1, kind: input, shape index: {}]
  %s2 = inlined_call_operand.vmem [shape: bf16[64,128], index: 2, kind: input, shape index: {}]
  %s3 = inlined_call_operand.vmem [shape: f32[1,128], index: 3, kind: input, shape index: {}]
  %s4 = inlined_call_operand.vmem [shape: f32[2,8,8,128], index: 4, kind: output, shape index: {}]
  %s5 = sld [smem:[#allocation0]]
  $region49: #{pyramid_forward.10} parent=0
    _
  %s7 = ssub.s32 1, %s5
  %s8 = scalar_select 0, %s7, %s5
  loop: start=0, step=1, limit=4
  $region2: #{pyramid_forward.10} parent=0 // loop_pre_header
    _
  $region3: #{pyramid_forward.10} parent=0 // loop_header
    %s10 = sphi 0, %s14
    %p11 = scmp.ge.s32.totalorder %s10, 4
    %s17 = sphi 0, %s29
    %s18 = sphi 0, %s25
    %s19 = sphi 0, %s17
    %s20 = sphi 0, %s18
    %s21 = sphi 0, %s19
    %s22 = sphi 0, %s20
    %s34 = sphi 0, %s36
    %s37 = sphi 0, %s34
    %s38 = sphi 0, %s37
    %s54 = sphi 0, %s38
    %s62 = sphi 0, %s64
    %s65 = sphi 0, %s62
    %s66 = sphi 0, %s65
    %s82 = sphi 0, %s66
    %s86 = sphi 0, %s86
    %s88 = sphi 0, %s86
    %s89 = sphi 0, %s88
    %s103 = sphi 0, %s89
    %s107 = sphi 0, %s107
    %s109 = sphi 0, %s107
    %s110 = sphi 0, %s109
    %s124 = sphi 0, %s110
    %s132 = sphi 0, %s134
    %s135 = sphi 0, %s132
    %s136 = sphi 0, %s135
    %s152 = sphi 0, %s136
  $region4: #{pyramid_forward.10} parent=0 // loop_header_branch
    %13 = sbr.rel (%p11) target = $region8
  $region5: #{pyramid_forward.10} parent=0 // loop_body
    %s15 = ssub.s32 %s10, 1
    %s16 = ssub.s32 %s10, 2
    %s23 = sadd.s32 1, %s18
    %p24 = scmp.ge.s32.totalorder %s23, 1
    %s25 = scalar_select %p24, 0, %s23
    %s26 = sadd.s32 1, %s17
    %s27 = scalar_select %p24, %s26, %s17
    %p28 = scmp.ge.s32.totalorder %s27, 2
    %s29 = scalar_select %p28, 0, %s27
    %s30 = ssub.s32 %s17, %s29
    %s31 = ssub.s32 %s18, %s25
    %s32 = sor.u32 %s30, %s31
    %p33 = scmp.eq.s32.totalorder %s32, 0
    %s35 = sadd.s32 %s34, 1
    %s36 = scalar_select %p33, %s34, %s35
    %p39 = pneg %p33
    %p40 = scmp.eq.s32.totalorder %s10, 1
    %p41 = por %p39, %p40
    %p42 = scmp.ne.s32.totalorder %s34, %s37
    %p43 = scmp.eq.s32.totalorder %s10, 0
    %p44 = por %p42, %p43
    %p45 = scmp.ne.s32.totalorder %s34, %s37
    %p46 = scmp.eq.s32.totalorder %s15, 1
    %p47 = por %p45, %p46
    %p48 = scmp.ne.s32.totalorder %s37, %s38
    %p49 = scmp.eq.s32.totalorder %s15, 0
    %p50 = por %p48, %p49
    %p51 = scmp.ne.s32.totalorder %s37, %s38
    %p52 = scmp.eq.s32.totalorder %s16, 1
    %p53 = por %p51, %p52
    %p55 = scmp.ne.s32.totalorder %s38, %s54
    %p56 = scmp.eq.s32.totalorder %s16, 0
    %p57 = por %p55, %p56
    %s58 = ssub.s32 %s17, %s29
    %s59 = ssub.s32 %s18, %s25
    %s60 = sor.u32 %s58, %s59
    %p61 = scmp.eq.s32.totalorder %s60, 0
    %s63 = sadd.s32 %s62, 1
    %s64 = scalar_select %p61, %s62, %s63
    %p67 = pneg %p61
    %p68 = scmp.eq.s32.totalorder %s10, 1
    %p69 = por %p67, %p68
    %p70 = scmp.ne.s32.totalorder %s62, %s65
    %p71 = scmp.eq.s32.totalorder %s10, 0
    %p72 = por %p70, %p71
    %p73 = scmp.ne.s32.totalorder %s62, %s65
    %p74 = scmp.eq.s32.totalorder %s15, 1
    %p75 = por %p73, %p74
    %p76 = scmp.ne.s32.totalorder %s65, %s66
    %p77 = scmp.eq.s32.totalorder %s15, 0
    %p78 = por %p76, %p77
    %p79 = scmp.ne.s32.totalorder %s65, %s66
    %p80 = scmp.eq.s32.totalorder %s16, 1
    %p81 = por %p79, %p80
    %p83 = scmp.ne.s32.totalorder %s66, %s82
    %p84 = scmp.eq.s32.totalorder %s16, 0
    %p85 = por %p83, %p84
    %s87 = sadd.s32 %s86, 1
    %p90 = scmp.eq.s32.totalorder %s10, 1
    %p91 = scmp.ne.s32.totalorder %s86, %s88
    %p92 = scmp.eq.s32.totalorder %s10, 0
    %p93 = por %p91, %p92
    %p94 = scmp.ne.s32.totalorder %s86, %s88
    %p95 = scmp.eq.s32.totalorder %s15, 1
    %p96 = por %p94, %p95
    %p97 = scmp.ne.s32.totalorder %s88, %s89
    %p98 = scmp.eq.s32.totalorder %s15, 0
    %p99 = por %p97, %p98
    %p100 = scmp.ne.s32.totalorder %s88, %s89
    %p101 = scmp.eq.s32.totalorder %s16, 1
    %p102 = por %p100, %p101
    %p104 = scmp.ne.s32.totalorder %s89, %s103
    %p105 = scmp.eq.s32.totalorder %s16, 0
    %p106 = por %p104, %p105
    %s108 = sadd.s32 %s107, 1
    %p111 = scmp.eq.s32.totalorder %s10, 1
    %p112 = scmp.ne.s32.totalorder %s107, %s109
    %p113 = scmp.eq.s32.totalorder %s10, 0
    %p114 = por %p112, %p113
    %p115 = scmp.ne.s32.totalorder %s107, %s109
    %p116 = scmp.eq.s32.totalorder %s15, 1
    %p117 = por %p115, %p116
    %p118 = scmp.ne.s32.totalorder %s109, %s110
    %p119 = scmp.eq.s32.totalorder %s15, 0
    %p120 = por %p118, %p119
    %p121 = scmp.ne.s32.totalorder %s109, %s110
    %p122 = scmp.eq.s32.totalorder %s16, 1
    %p123 = por %p121, %p122
    %p125 = scmp.ne.s32.totalorder %s110, %s124
    %p126 = scmp.eq.s32.totalorder %s16, 0
    %p127 = por %p125, %p126
    %s128 = ssub.s32 %s17, %s29
    %s129 = ssub.s32 %s18, %s25
    %s130 = sor.u32 %s128, %s129
    %p131 = scmp.eq.s32.totalorder %s130, 0
    %s133 = sadd.s32 %s132, 1
    %s134 = scalar_select %p131, %s132, %s133
    %p137 = pneg %p131
    %p138 = scmp.eq.s32.totalorder %s10, 1
    %p139 = por %p137, %p138
    %p140 = scmp.ne.s32.totalorder %s132, %s135
    %p141 = scmp.eq.s32.totalorder %s10, 0
    %p142 = por %p140, %p141
    %p143 = scmp.ne.s32.totalorder %s132, %s135
    %p144 = scmp.eq.s32.totalorder %s15, 1
    %p145 = por %p143, %p144
    %p146 = scmp.ne.s32.totalorder %s135, %s136
    %p147 = scmp.eq.s32.totalorder %s15, 0
    %p148 = por %p146, %p147
    %p149 = scmp.ne.s32.totalorder %s135, %s136
    %p150 = scmp.eq.s32.totalorder %s16, 1
    %p151 = por %p149, %p150
    %p153 = scmp.ne.s32.totalorder %s136, %s152
    %p154 = scmp.eq.s32.totalorder %s16, 0
    %p155 = por %p153, %p154
    %p156 = scmp.le.s32.totalorder 1, %s10
    %p157 = scmp.lt.s32.totalorder %s10, 3
    %p158 = pnand %p156, %p157
    %p159 = pneg %p158
    // Predicated region
    $region9: #{pyramid_forward.10} parent=5 // pred_check
      _
    $region10: #{pyramid_forward.10} parent=5 // pred_check_branch
      %161 = sbr.rel (%p158) target = $region12
    $region11: #{pyramid_forward.10} parent=5 // pred_region
      %s162 = ssub.s32 %s10, 1
      // Predicated region
      $region13: #{pyramid_forward.10} parent=11 // pred_check
        %p163 = pneg %p99
      $region14: #{pyramid_forward.10} parent=11 // pred_check_branch
        %165 = sbr.rel (%p163) target = $region16
      $region15: #{pyramid_forward.10} parent=11 // pred_region
        _
      $region16: #{pyramid_forward.10} parent=11 // pred_fallthru
        _
      // Predicated region
      $region17: #{pyramid_forward.10} parent=11 // pred_check
        %p166 = pneg %p120
      $region18: #{pyramid_forward.10} parent=11 // pred_check_branch
        %168 = sbr.rel (%p166) target = $region20
      $region19: #{pyramid_forward.10} parent=11 // pred_region
        _
      $region20: #{pyramid_forward.10} parent=11 // pred_fallthru
        _
    $region12: #{pyramid_forward.10} parent=5 // pred_fallthru
      _
    %p169 = scmp.lt.s32.totalorder %s10, 2
    // Predicated region
    $region21: #{pyramid_forward.10} parent=5 // pred_check
      %p170 = pneg %p169
    $region22: #{pyramid_forward.10} parent=5 // pred_check_branch
      %172 = sbr.rel (%p170) target = $region24
    $region23: #{pyramid_forward.10} parent=5 // pred_region
      // Predicated region
      $region25: #{pyramid_forward.10} parent=23 // pred_check
        %p173 = pneg %p44
      $region26: #{pyramid_forward.10} parent=23 // pred_check_branch
        %175 = sbr.rel (%p173) target = $region28
      $region27: #{pyramid_forward.10} parent=23 // pred_region
        %s176 = smul.u32 8, %s18
        %p177 = scmp.lt.s32.totalorder %s17, 1
        %s178 = scalar_select %p177, %s17, 1
        %p179 = scmp.lt.s32.totalorder %s176, 7
        %s180 = scalar_select %p179, %s176, 7
        %s181 = smul.addr %s178, 8
        %s182 = sadd.s32 %s180, %s181
        %s183 = smul.addr %s182, 8
        %s184 = scalar_lea.vmem %s0, %s183
        %s185 = smul.u32 8, %s18
      $region28: #{pyramid_forward.10} parent=23 // pred_fallthru
        _
      // Predicated region
      $region29: #{pyramid_forward.10} parent=23 // pred_check
        %p186 = pneg %p72
      $region30: #{pyramid_forward.10} parent=23 // pred_check_branch
        %188 = sbr.rel (%p186) target = $region32
      $region31: #{pyramid_forward.10} parent=23 // pred_region
        %s189 = smul.u32 4, %s18
        %p190 = scmp.lt.s32.totalorder %s17, 1
        %s191 = scalar_select %p190, %s17, 1
        %p192 = scmp.lt.s32.totalorder %s189, 3
        %s193 = scalar_select %p192, %s189, 3
        %s194 = smul.addr %s191, 4
        %s195 = sadd.s32 %s193, %s194
        %s196 = smul.addr %s195, 4
        %s197 = scalar_lea.vmem %s1, %s196
        %s198 = smul.u32 4, %s18
      $region32: #{pyramid_forward.10} parent=23 // pred_fallthru
        _
    $region24: #{pyramid_forward.10} parent=5 // pred_fallthru
      _
    %p199 = scmp.le.s32.totalorder 1, %s10
    %p200 = scmp.lt.s32.totalorder %s10, 3
    %p201 = pnand %p199, %p200
    %p202 = pneg %p201
    // Predicated region
    $region33: #{pyramid_forward.10} parent=5 // pred_check
      _
    $region34: #{pyramid_forward.10} parent=5 // pred_check_branch
      %204 = sbr.rel (%p201) target = $region36
    $region35: #{pyramid_forward.10} parent=5 // pred_region
      %s205 = ssub.s32 %s10, 1
      %s206 = smul.u32 8, %s20
      %p207 = scmp.lt.s32.totalorder %s19, 1
      %s208 = scalar_select %p207, %s19, 1
      %p209 = scmp.lt.s32.totalorder %s206, 7
      %s210 = scalar_select %p209, %s206, 7
      %s211 = smul.addr %s208, 8
      %s212 = sadd.s32 %s210, %s211
      %s213 = smul.addr %s212, 8
      %s214 = scalar_lea.vmem %s0, %s213
      %p215 = pneg %p50
      %p216 = pneg %p47
      %s217 = smul.u32 4, %s20
      %p218 = scmp.lt.s32.totalorder %s19, 1
      %s219 = scalar_select %p218, %s19, 1
      %p220 = scmp.lt.s32.totalorder %s217, 3
      %s221 = scalar_select %p220, %s217, 3
      %s222 = smul.addr %s219, 4
      %s223 = sadd.s32 %s221, %s222
      %s224 = smul.addr %s223, 4
      %s225 = scalar_lea.vmem %s1, %s224
      %p226 = pneg %p78
      %p227 = pneg %p75
      %p228 = pneg %p99
      %p229 = pneg %p96
      %p230 = pneg %p120
      %p231 = pneg %p117
      %p232 = pneg %p148
      %p233 = pneg %p145
      %s234 = smul.u32 8, %s20
      %p235 = scmp.lt.s32.totalorder %s19, 1
      %s236 = scalar_select %p235, %s19, 1
      %p237 = scmp.lt.s32.totalorder %s234, 7
      %s238 = scalar_select %p237, %s234, 7
      %s239 = smul.addr %s236, 8
      %s240 = sadd.s32 %s238, %s239
      %s241 = smul.addr %s240, 8
      %s242 = scalar_lea.vmem %s4, %s241
      %s243 = smul.u32 8, %s20
      %p244 = scmp.lt.s32.totalorder %s19, 1
      %s245 = scalar_select %p244, %s19, 1
      %p246 = scmp.lt.s32.totalorder %s243, 7
      %s247 = scalar_select %p246, %s243, 7
      %s248 = smul.addr %s245, 8
      %s249 = sadd.s32 %s247, %s248
      %s250 = smul.addr %s249, 8
      %s251 = scalar_lea.vmem %s0, %s250
      %s252 = smul.u32 8, %s20
      %s253 = smul.u32 4, %s20
      %p254 = scmp.lt.s32.totalorder %s19, 1
      %s255 = scalar_select %p254, %s19, 1
      %p256 = scmp.lt.s32.totalorder %s253, 3
      %s257 = scalar_select %p256, %s253, 3
      %s258 = smul.addr %s255, 4
      %s259 = sadd.s32 %s257, %s258
      %s260 = smul.addr %s259, 4
      %s261 = scalar_lea.vmem %s1, %s260
      %s262 = smul.u32 4, %s20
      %s263 = smul.u32 8, %s20
      %p264 = scmp.lt.s32.totalorder %s19, 1
      %s265 = scalar_select %p264, %s19, 1
      %p266 = scmp.lt.s32.totalorder %s263, 7
      %s267 = scalar_select %p266, %s263, 7
      %s268 = smul.addr %s265, 8
      %s269 = sadd.s32 %s267, %s268
      %s270 = smul.addr %s269, 8
      %s271 = scalar_lea.vmem %s4, %s270
      %s272 = smul.u32 8, %s20
      %v274 = vld [vmem:[%s251] sm:$0xff]
      %v275 = vld [vmem:[%s251 + $0x8] sm:$0xff]
      %v276 = vld [vmem:[%s251 + $0x10] sm:$0xff]
      %v277 = vld [vmem:[%s251 + $0x18] sm:$0xff]
      %v278 = vld [vmem:[%s251 + $0x20] sm:$0xff]
      %v279 = vld [vmem:[%s251 + $0x28] sm:$0xff]
      %v280 = vld [vmem:[%s251 + $0x30] sm:$0xff]
      %v281 = vld [vmem:[%s251 + $0x38] sm:$0xff]
      %v282 = vpack.c.bf16 %v275, %v274
      %v283 = vpack.c.bf16 %v277, %v276
      %v284 = vpack.c.bf16 %v279, %v278
      %v285 = vpack.c.bf16 %v281, %v280
      %v286 = vld [vmem:[%s2] sm:$0xf]
      %v287 = vld [vmem:[%s2 + $0x4] sm:$0xf]
      %v288 = vld [vmem:[%s2 + $0x8] sm:$0xf]
      %v289 = vld [vmem:[%s2 + $0xc] sm:$0xf]
      %v290 = vld [vmem:[%s2 + $0x10] sm:$0xf]
      %v291 = vld [vmem:[%s2 + $0x14] sm:$0xf]
      %v292 = vld [vmem:[%s2 + $0x18] sm:$0xf]
      %v293 = vld [vmem:[%s2 + $0x1c] sm:$0xf]
      %v294 = vld [vmem:[%s3] sm:$0x1]
      %v296 = vperm.slane %v294, 0
      %v306 = vunpack.c.l.b16 %v286
      %v307 = vunpack.c.l.b16 %v287
      %v308 = vunpack.c.l.b16 %v288
      %v309 = vunpack.c.l.b16 %v289
      %v310 = vunpack.c.l.b16 %v290
      %v311 = vunpack.c.l.b16 %v291
      %v312 = vunpack.c.l.b16 %v292
      %v313 = vunpack.c.l.b16 %v293
      %v314 = vpack.c.b16 %v307, %v306
      %v315 = vpack.c.b16 %v309, %v308
      %v316 = vpack.c.b16 %v311, %v310
      %v317 = vpack.c.b16 %v313, %v312
      %vm322 = vcmask 523264
      %v324 = vsel %vm322, %v282, 0
      %v327 = vsel %vm322, %v283, 0
      %v330 = vsel %vm322, %v284, 0
      %v333 = vsel %vm322, %v285, 0
      %335 = vmatpush.bf16.msra.mxu0 0
      %336 = vmatpush.bf16.msra.mxu0 0
      %337 = vmatpush.bf16.msra.mxu0 0
      %338 = vmatpush.bf16.msra.mxu0 0
      %339 = vmatpush.bf16.msra.mxu0 %v317
      %340 = vmatpush.bf16.msra.mxu0 %v316
      %341 = vmatpush.bf16.msra.mxu0 %v315
      %342 = vmatpush.bf16.msra.mxu0 %v314
      %343 = vmatmul.bf16.gmra.mxu0 %v324
      %v344 = vpop.f32.mrf.mxu0
      %v345 = vadd.f32 %v296, %v344
      %v346 = vpop.f32.mrf.mxu0
      %v347 = vadd.f32 %v296, %v346
      %348 = vmatmul.bf16.gmra.mxu0 %v327
      %v349 = vpop.f32.mrf.mxu0
      %v350 = vadd.f32 %v296, %v349
      %v351 = vpop.f32.mrf.mxu0
      %v352 = vadd.f32 %v296, %v351
      %353 = vmatmul.bf16.gmra.mxu0 %v330
      %v354 = vpop.f32.mrf.mxu0
      %v355 = vadd.f32 %v296, %v354
      %v356 = vpop.f32.mrf.mxu0
      %v357 = vadd.f32 %v296, %v356
      %358 = vmatmul.bf16.gmra.mxu0 %v333
      %v359 = vpop.f32.mrf.mxu0
      %v360 = vadd.f32 %v296, %v359
      %v361 = vpop.f32.mrf.mxu0
      %v362 = vadd.f32 %v296, %v361
      %363 = vdwg.mxu0
      %v364 = vld [vmem:[%s261] sm:$0xf]
      %v365 = vld [vmem:[%s261 + $0x4] sm:$0xf]
      %v366 = vld [vmem:[%s261 + $0x8] sm:$0xf]
      %v367 = vld [vmem:[%s261 + $0xc] sm:$0xf]
      %v372 = vrot.slane %v364, 1
      %v373 = vrot.slane %v364, 2
      %v374 = vrot.slane %v364, 3
      %v375 = vrot.slane %v365, 1
      %v376 = vrot.slane %v365, 2
      %v377 = vrot.slane %v365, 3
      %v378 = vrot.slane %v366, 1
      %v379 = vrot.slane %v366, 2
      %v380 = vrot.slane %v366, 3
      %v381 = vrot.slane %v367, 1
      %v382 = vrot.slane %v367, 2
      %v383 = vrot.slane %v367, 3
      %v384 = vperm.slane %v364, 0
      %v385 = vperm.slane %v372, 0
      %v386 = vperm.slane %v373, 0
      %v387 = vperm.slane %v374, 0
      %v388 = vperm.slane %v365, 0
      %v389 = vperm.slane %v375, 0
      %v390 = vperm.slane %v376, 0
      %v391 = vperm.slane %v377, 0
      %v392 = vperm.slane %v366, 0
      %v393 = vperm.slane %v378, 0
      %v394 = vperm.slane %v379, 0
      %v395 = vperm.slane %v380, 0
      %v396 = vperm.slane %v367, 0
      %v397 = vperm.slane %v381, 0
      %v398 = vperm.slane %v382, 0
      %v399 = vperm.slane %v383, 0
      %400 = vst [vmem:[#allocation1] ss:$4 sm:$0xff] %v384
      %s401 = scalar_lea.vmem [#allocation1], 1
      %402 = vst [vmem:[%s401] ss:$4 sm:$0xff] %v385
      %s403 = scalar_lea.vmem [#allocation1], 2
      %404 = vst [vmem:[%s403] ss:$4 sm:$0xff] %v386
      %s405 = scalar_lea.vmem [#allocation1], 3
      %406 = vst [vmem:[%s405] ss:$4 sm:$0xff] %v387
      %v407 = vld.sshfl [vmem:[#allocation1] sm:$0xff pattern:$0x73625140]
      %s408 = scalar_lea.vmem [#allocation1], 32
      %409 = vst [vmem:[%s408] ss:$4 sm:$0xff] %v384
      %s410 = scalar_lea.vmem [#allocation1], 33
      %411 = vst [vmem:[%s410] ss:$4 sm:$0xff] %v385
      %s412 = scalar_lea.vmem [#allocation1], 34
      %413 = vst [vmem:[%s412] ss:$4 sm:$0xff] %v386
      %s414 = scalar_lea.vmem [#allocation1], 35
      %415 = vst [vmem:[%s414] ss:$4 sm:$0xff] %v387
      %v416 = vld.sshfl [vmem:[#allocation1 + $0x20] sm:$0xff pattern:$0x73625140]
      %417 = vst [vmem:[#allocation1] ss:$4 sm:$0xff] %v388
      %418 = vst [vmem:[%s401] ss:$4 sm:$0xff] %v389
      %419 = vst [vmem:[%s403] ss:$4 sm:$0xff] %v390
      %420 = vst [vmem:[%s405] ss:$4 sm:$0xff] %v391
      %v421 = vld.sshfl [vmem:[#allocation1] sm:$0xff pattern:$0x73625140]
      %422 = vst [vmem:[%s408] ss:$4 sm:$0xff] %v388
      %423 = vst [vmem:[%s410] ss:$4 sm:$0xff] %v389
      %424 = vst [vmem:[%s412] ss:$4 sm:$0xff] %v390
      %425 = vst [vmem:[%s414] ss:$4 sm:$0xff] %v391
      %v426 = vld.sshfl [vmem:[#allocation1 + $0x20] sm:$0xff pattern:$0x73625140]
      %427 = vst [vmem:[#allocation1] ss:$4 sm:$0xff] %v392
      %428 = vst [vmem:[%s401] ss:$4 sm:$0xff] %v393
      %429 = vst [vmem:[%s403] ss:$4 sm:$0xff] %v394
      %430 = vst [vmem:[%s405] ss:$4 sm:$0xff] %v395
      %v431 = vld.sshfl [vmem:[#allocation1] sm:$0xff pattern:$0x73625140]
      %432 = vst [vmem:[%s408] ss:$4 sm:$0xff] %v392
      %433 = vst [vmem:[%s410] ss:$4 sm:$0xff] %v393
      %434 = vst [vmem:[%s412] ss:$4 sm:$0xff] %v394
      %435 = vst [vmem:[%s414] ss:$4 sm:$0xff] %v395
      %v436 = vld.sshfl [vmem:[#allocation1 + $0x20] sm:$0xff pattern:$0x73625140]
      %437 = vst [vmem:[#allocation1] ss:$4 sm:$0xff] %v396
      %438 = vst [vmem:[%s401] ss:$4 sm:$0xff] %v397
      %439 = vst [vmem:[%s403] ss:$4 sm:$0xff] %v398
      %440 = vst [vmem:[%s405] ss:$4 sm:$0xff] %v399
      %v441 = vld.sshfl [vmem:[#allocation1] sm:$0xff pattern:$0x73625140]
      %442 = vst [vmem:[%s408] ss:$4 sm:$0xff] %v396
      %443 = vst [vmem:[%s410] ss:$4 sm:$0xff] %v397
      %444 = vst [vmem:[%s412] ss:$4 sm:$0xff] %v398
      %445 = vst [vmem:[%s414] ss:$4 sm:$0xff] %v399
      %v446 = vld.sshfl [vmem:[#allocation1 + $0x20] sm:$0xff pattern:$0x73625140]
      %v455 = vadd.f32 %v345, %v407
      %v456 = vadd.f32 %v347, %v416
      %v457 = vadd.f32 %v350, %v421
      %v458 = vadd.f32 %v352, %v426
      %v459 = vadd.f32 %v355, %v431
      %v460 = vadd.f32 %v357, %v436
      %v461 = vadd.f32 %v360, %v441
      %v462 = vadd.f32 %v362, %v446
      %463 = vst [vmem:[%s271] sm:$0xff] %v455
      %464 = vst [vmem:[%s271 + $0x8] sm:$0xff] %v456
      %465 = vst [vmem:[%s271 + $0x10] sm:$0xff] %v457
      %466 = vst [vmem:[%s271 + $0x18] sm:$0xff] %v458
      %467 = vst [vmem:[%s271 + $0x20] sm:$0xff] %v459
      %468 = vst [vmem:[%s271 + $0x28] sm:$0xff] %v460
      %469 = vst [vmem:[%s271 + $0x30] sm:$0xff] %v461
      %470 = vst [vmem:[%s271 + $0x38] sm:$0xff] %v462
      %s471 = smul.u32 8, %s20
      %p472 = scmp.lt.s32.totalorder %s19, 1
      %s473 = scalar_select %p472, %s19, 1
      %p474 = scmp.lt.s32.totalorder %s471, 7
      %s475 = scalar_select %p474, %s471, 7
      %s476 = smul.addr %s473, 8
      %s477 = sadd.s32 %s475, %s476
      %s478 = smul.addr %s477, 8
      %s479 = scalar_lea.vmem %s4, %s478
      // Predicated region
      $region37: #{pyramid_forward.10} parent=35 // pred_check
        %p480 = pneg %p145
      $region38: #{pyramid_forward.10} parent=35 // pred_check_branch
        %482 = sbr.rel (%p480) target = $region40
      $region39: #{pyramid_forward.10} parent=35 // pred_region
        %s483 = smul.u32 8, %s20
      $region40: #{pyramid_forward.10} parent=35 // pred_fallthru
        _
    $region36: #{pyramid_forward.10} parent=5 // pred_fallthru
      _
    %p484 = scmp.le.s32.totalorder 2, %s10
    // Predicated region
    $region41: #{pyramid_forward.10} parent=5 // pred_check
      %p485 = pneg %p484
    $region42: #{pyramid_forward.10} parent=5 // pred_check_branch
      %487 = sbr.rel (%p485) target = $region44
    $region43: #{pyramid_forward.10} parent=5 // pred_region
      %s488 = ssub.s32 %s10, 2
      // Predicated region
      $region45: #{pyramid_forward.10} parent=43 // pred_check
        %p489 = pneg %p151
      $region46: #{pyramid_forward.10} parent=43 // pred_check_branch
        %491 = sbr.rel (%p489) target = $region48
      $region47: #{pyramid_forward.10} parent=43 // pred_region
        %s492 = smul.u32 8, %s22
        %p493 = scmp.lt.s32.totalorder %s21, 1
        %s494 = scalar_select %p493, %s21, 1
        %p495 = scmp.lt.s32.totalorder %s492, 7
        %s496 = scalar_select %p495, %s492, 7
        %s497 = smul.addr %s494, 8
        %s498 = sadd.s32 %s496, %s497
        %s499 = smul.addr %s498, 8
        %s500 = scalar_lea.vmem %s4, %s499
      $region48: #{pyramid_forward.10} parent=43 // pred_fallthru
        _
    $region44: #{pyramid_forward.10} parent=5 // pred_fallthru
      _
  $region6: #{pyramid_forward.10} parent=0 // loop_footer
    %s14 = sadd.s32 1, %s10
  $region7: #{pyramid_forward.10} parent=0 // loop_footer_branch
    %9 = sbr.rel target = $region3
  $region8: #{pyramid_forward.10} parent=0 // loop_exit
    _

// kernel: pyramid_forward.12
$region0: #{pyramid_forward.12}
  #allocation0 [shape = 'u32[]', space=smem, size = 0x4, offset = 0x4, fixed_abs, tag = 'smem constant byte address 0x4 - core index']
  #allocation1 [shape = 'u32[72,128]{1,0:T(1,128)}', space=vmem, size = 0x9000, scoped, tag = 'internal scratch']
  %s0 = inlined_call_operand.hbm [shape: f32[2,16,16,32], index: 0, kind: input, shape index: {}]
  %s1 = inlined_call_operand.vmem [shape: f32[2,8,8,128], index: 1, kind: input, shape index: {}]
  %s2 = inlined_call_operand.vmem [shape: bf16[32,128], index: 2, kind: input, shape index: {}]
  %s3 = inlined_call_operand.hbm [shape: f32[1,128], index: 3, kind: input, shape index: {}]
  %s4 = inlined_call_operand.vmem [shape: f32[2,16,16,128], index: 4, kind: output, shape index: {}]
  %s5 = sld [smem:[#allocation0]]
  $region57: #{pyramid_forward.12} parent=0
    _
  %s7 = ssub.s32 1, %s5
  %s8 = scalar_select 0, %s7, %s5
  $region1: #{pyramid_forward.12} parent=0
    #allocation2 [shape = 'u8[262144]{0}', space=vmem, size = 0x40000, scoped, tag = 'input window, operand 0']
    #allocation3 [shape = 's32[2]{0}', space=sflag, size = 0x8, scoped, tag = 'scoped memory for pyramid_forward.12']
    #allocation4 [shape = 'u8[512]{0}', space=vmem, size = 0x400, scoped, tag = 'input window, operand 3, single buffered']
    #allocation5 [shape = 's32[1]{0}', space=sflag, size = 0x4, scoped, tag = 'scoped memory for pyramid_forward.12']
    %9 = vsyncpa [#allocation3], 0
    %s10 = scalar_lea.sflag [#allocation3], 1
    %11 = vsyncpa %s10, 0
    %12 = vsyncpa [#allocation5], 0
    loop: start=0, step=1, limit=4
    $region2: #{pyramid_forward.12} parent=1 // loop_pre_header
      _
    $region3: #{pyramid_forward.12} parent=1 // loop_header
      %s14 = sphi 0, %s18
      %p15 = scmp.ge.s32.totalorder %s14, 4
      %s21 = sphi 0, %s33
      %s22 = sphi 0, %s29
      %s23 = sphi 0, %s21
      %s24 = sphi 0, %s22
      %s25 = sphi 0, %s23
      %s26 = sphi 0, %s24
      %s38 = sphi 0, %s40
      %s41 = sphi 0, %s38
      %s42 = sphi 0, %s41
      %s58 = sphi 0, %s42
      %s66 = sphi 0, %s68
      %s69 = sphi 0, %s66
      %s70 = sphi 0, %s69
      %s86 = sphi 0, %s70
      %s90 = sphi 0, %s90
      %s92 = sphi 0, %s90
      %s93 = sphi 0, %s92
      %s107 = sphi 0, %s93
      %s111 = sphi 0, %s111
      %s113 = sphi 0, %s111
      %s114 = sphi 0, %s113
      %s128 = sphi 0, %s114
      %s136 = sphi 0, %s138
      %s139 = sphi 0, %s136
      %s140 = sphi 0, %s139
      %s156 = sphi 0, %s140
    $region4: #{pyramid_forward.12} parent=1 // loop_header_branch
      %17 = sbr.rel (%p15) target = $region8
    $region5: #{pyramid_forward.12} parent=1 // loop_body
      %s19 = ssub.s32 %s14, 1
      %s20 = ssub.s32 %s14, 2
      %s27 = sadd.s32 1, %s22
      %p28 = scmp.ge.s32.totalorder %s27, 1
      %s29 = scalar_select %p28, 0, %s27
      %s30 = sadd.s32 1, %s21
      %s31 = scalar_select %p28, %s30, %s21
      %p32 = scmp.ge.s32.totalorder %s31, 2
      %s33 = scalar_select %p32, 0, %s31
      %s34 = ssub.s32 %s21, %s33
      %s35 = ssub.s32 %s22, %s29
      %s36 = sor.u32 %s34, %s35
      %p37 = scmp.eq.s32.totalorder %s36, 0
      %s39 = sadd.s32 %s38, 1
      %s40 = scalar_select %p37, %s38, %s39
      %p43 = pneg %p37
      %p44 = scmp.eq.s32.totalorder %s14, 1
      %p45 = por %p43, %p44
      %p46 = scmp.ne.s32.totalorder %s38, %s41
      %p47 = scmp.eq.s32.totalorder %s14, 0
      %p48 = por %p46, %p47
      %p49 = scmp.ne.s32.totalorder %s38, %s41
      %p50 = scmp.eq.s32.totalorder %s19, 1
      %p51 = por %p49, %p50
      %p52 = scmp.ne.s32.totalorder %s41, %s42
      %p53 = scmp.eq.s32.totalorder %s19, 0
      %p54 = por %p52, %p53
      %p55 = scmp.ne.s32.totalorder %s41, %s42
      %p56 = scmp.eq.s32.totalorder %s20, 1
      %p57 = por %p55, %p56
      %p59 = scmp.ne.s32.totalorder %s42, %s58
      %p60 = scmp.eq.s32.totalorder %s20, 0
      %p61 = por %p59, %p60
      %s62 = ssub.s32 %s21, %s33
      %s63 = ssub.s32 %s22, %s29
      %s64 = sor.u32 %s62, %s63
      %p65 = scmp.eq.s32.totalorder %s64, 0
      %s67 = sadd.s32 %s66, 1
      %s68 = scalar_select %p65, %s66, %s67
      %p71 = pneg %p65
      %p72 = scmp.eq.s32.totalorder %s14, 1
      %p73 = por %p71, %p72
      %p74 = scmp.ne.s32.totalorder %s66, %s69
      %p75 = scmp.eq.s32.totalorder %s14, 0
      %p76 = por %p74, %p75
      %p77 = scmp.ne.s32.totalorder %s66, %s69
      %p78 = scmp.eq.s32.totalorder %s19, 1
      %p79 = por %p77, %p78
      %p80 = scmp.ne.s32.totalorder %s69, %s70
      %p81 = scmp.eq.s32.totalorder %s19, 0
      %p82 = por %p80, %p81
      %p83 = scmp.ne.s32.totalorder %s69, %s70
      %p84 = scmp.eq.s32.totalorder %s20, 1
      %p85 = por %p83, %p84
      %p87 = scmp.ne.s32.totalorder %s70, %s86
      %p88 = scmp.eq.s32.totalorder %s20, 0
      %p89 = por %p87, %p88
      %s91 = sadd.s32 %s90, 1
      %p94 = scmp.eq.s32.totalorder %s14, 1
      %p95 = scmp.ne.s32.totalorder %s90, %s92
      %p96 = scmp.eq.s32.totalorder %s14, 0
      %p97 = por %p95, %p96
      %p98 = scmp.ne.s32.totalorder %s90, %s92
      %p99 = scmp.eq.s32.totalorder %s19, 1
      %p100 = por %p98, %p99
      %p101 = scmp.ne.s32.totalorder %s92, %s93
      %p102 = scmp.eq.s32.totalorder %s19, 0
      %p103 = por %p101, %p102
      %p104 = scmp.ne.s32.totalorder %s92, %s93
      %p105 = scmp.eq.s32.totalorder %s20, 1
      %p106 = por %p104, %p105
      %p108 = scmp.ne.s32.totalorder %s93, %s107
      %p109 = scmp.eq.s32.totalorder %s20, 0
      %p110 = por %p108, %p109
      %s112 = sadd.s32 %s111, 1
      %p115 = scmp.eq.s32.totalorder %s14, 1
      %p116 = scmp.ne.s32.totalorder %s111, %s113
      %p117 = scmp.eq.s32.totalorder %s14, 0
      %p118 = por %p116, %p117
      %p119 = scmp.ne.s32.totalorder %s111, %s113
      %p120 = scmp.eq.s32.totalorder %s19, 1
      %p121 = por %p119, %p120
      %p122 = scmp.ne.s32.totalorder %s113, %s114
      %p123 = scmp.eq.s32.totalorder %s19, 0
      %p124 = por %p122, %p123
      %p125 = scmp.ne.s32.totalorder %s113, %s114
      %p126 = scmp.eq.s32.totalorder %s20, 1
      %p127 = por %p125, %p126
      %p129 = scmp.ne.s32.totalorder %s114, %s128
      %p130 = scmp.eq.s32.totalorder %s20, 0
      %p131 = por %p129, %p130
      %s132 = ssub.s32 %s21, %s33
      %s133 = ssub.s32 %s22, %s29
      %s134 = sor.u32 %s132, %s133
      %p135 = scmp.eq.s32.totalorder %s134, 0
      %s137 = sadd.s32 %s136, 1
      %s138 = scalar_select %p135, %s136, %s137
      %p141 = pneg %p135
      %p142 = scmp.eq.s32.totalorder %s14, 1
      %p143 = por %p141, %p142
      %p144 = scmp.ne.s32.totalorder %s136, %s139
      %p145 = scmp.eq.s32.totalorder %s14, 0
      %p146 = por %p144, %p145
      %p147 = scmp.ne.s32.totalorder %s136, %s139
      %p148 = scmp.eq.s32.totalorder %s19, 1
      %p149 = por %p147, %p148
      %p150 = scmp.ne.s32.totalorder %s139, %s140
      %p151 = scmp.eq.s32.totalorder %s19, 0
      %p152 = por %p150, %p151
      %p153 = scmp.ne.s32.totalorder %s139, %s140
      %p154 = scmp.eq.s32.totalorder %s20, 1
      %p155 = por %p153, %p154
      %p157 = scmp.ne.s32.totalorder %s140, %s156
      %p158 = scmp.eq.s32.totalorder %s20, 0
      %p159 = por %p157, %p158
      %p160 = scmp.le.s32.totalorder 1, %s14
      %p161 = scmp.lt.s32.totalorder %s14, 3
      %p162 = pnand %p160, %p161
      %p163 = pneg %p162
      // Predicated region
      $region9: #{pyramid_forward.12} parent=5 // pred_check
        _
      $region10: #{pyramid_forward.12} parent=5 // pred_check_branch
        %165 = sbr.rel (%p162) target = $region12
      $region11: #{pyramid_forward.12} parent=5 // pred_region
        %s166 = ssub.s32 %s14, 1
        // Predicated region
        $region13: #{pyramid_forward.12} parent=11 // pred_check
          %p167 = pneg %p103
        $region14: #{pyramid_forward.12} parent=11 // pred_check_branch
          %169 = sbr.rel (%p167) target = $region16
        $region15: #{pyramid_forward.12} parent=11 // pred_region
          _
        $region16: #{pyramid_forward.12} parent=11 // pred_fallthru
          _
        // Predicated region
        $region17: #{pyramid_forward.12} parent=11 // pred_check
          %p170 = pneg %p124
        $region18: #{pyramid_forward.12} parent=11 // pred_check_branch
          %172 = sbr.rel (%p170) target = $region20
        $region19: #{pyramid_forward.12} parent=11 // pred_region
          %174 = vsyncadd [#allocation5], 0
          %s176 = sshll.u32 %s3, 4
          %s177 = int_to_ptr.hbm [resolvable:$true] %s176
          %s178 = sshll.u32 [#allocation4], 4
          %s179 = int_to_ptr.vmem [resolvable:$true] %s178
          %181 = dma.hbm_to_vmem [thread:$0]  %s177, 16, %s179, [#allocation5]
        $region20: #{pyramid_forward.12} parent=11 // pred_fallthru
          _
      $region12: #{pyramid_forward.12} parent=5 // pred_fallthru
        _
      %p182 = scmp.lt.s32.totalorder %s14, 2
      // Predicated region
      $region21: #{pyramid_forward.12} parent=5 // pred_check
        %p183 = pneg %p182
      $region22: #{pyramid_forward.12} parent=5 // pred_check_branch
        %185 = sbr.rel (%p183) target = $region24
      $region23: #{pyramid_forward.12} parent=5 // pred_region
        // Predicated region
        $region25: #{pyramid_forward.12} parent=23 // pred_check
          %p186 = pneg %p48
        $region26: #{pyramid_forward.12} parent=23 // pred_check_branch
          %188 = sbr.rel (%p186) target = $region28
        $region27: #{pyramid_forward.12} parent=23 // pred_region
          %s189 = sand.u32 %s38, 1
          %s190 = scalar_lea.sflag [#allocation3], %s189
          %s191 = sand.u32 %s38, 1
          %s192 = smul.addr %s191, 256
          %s193 = scalar_lea.vmem [#allocation2], %s192
          %s194 = smul.u32 16, %s22
          %196 = vsyncadd %s190, 0
          %s197 = smul.addr %s194, 2
          %s198 = smul.addr %s21, 32
          %s199 = sadd.s32 %s197, %s198
          %s200 = smul.addr %s199, 8
          %s201 = scalar_lea.hbm %s0, %s200
          %s202 = sshll.u32 %s201, 4
          %s203 = int_to_ptr.hbm [resolvable:$true] %s202
          %s204 = sshll.u32 %s193, 4
          %s205 = int_to_ptr.vmem [resolvable:$true] %s204
          %210 = dma.hbm_to_vmem [thread:$0]  %s203, 4096, %s205, %s190, 128, 128, 8
        $region28: #{pyramid_forward.12} parent=23 // pred_fallthru
          _
        // Predicated region
        $region29: #{pyramid_forward.12} parent=23 // pred_check
          %p211 = pneg %p76
        $region30: #{pyramid_forward.12} parent=23 // pred_check_branch
          %213 = sbr.rel (%p211) target = $region32
        $region31: #{pyramid_forward.12} parent=23 // pred_region
          %s214 = smul.u32 8, %s22
          %p215 = scmp.lt.s32.totalorder %s21, 1
          %s216 = scalar_select %p215, %s21, 1
          %p217 = scmp.lt.s32.totalorder %s214, 7
          %s218 = scalar_select %p217, %s214, 7
          %s219 = smul.addr %s216, 8
          %s220 = sadd.s32 %s218, %s219
          %s221 = smul.addr %s220, 8
          %s222 = scalar_lea.vmem %s1, %s221
          %s223 = smul.u32 8, %s22
        $region32: #{pyramid_forward.12} parent=23 // pred_fallthru
          _
      $region24: #{pyramid_forward.12} parent=5 // pred_fallthru
        _
      %p224 = scmp.le.s32.totalorder 1, %s14
      %p225 = scmp.lt.s32.totalorder %s14, 3
      %p226 = pnand %p224, %p225
      %p227 = pneg %p226
      // Predicated region
      $region33: #{pyramid_forward.12} parent=5 // pred_check
        _
      $region34: #{pyramid_forward.12} parent=5 // pred_check_branch
        %229 = sbr.rel (%p226) target = $region36
      $region35: #{pyramid_forward.12} parent=5 // pred_region
        %s230 = ssub.s32 %s14, 1
        %s231 = sand.u32 %s41, 1
        %s232 = scalar_lea.sflag [#allocation3], %s231
        %s233 = sand.u32 %s41, 1
        %s234 = smul.addr %s233, 256
        %s235 = scalar_lea.vmem [#allocation2], %s234
        // Predicated region
        $region37: #{pyramid_forward.12} parent=35 // pred_check
          %p236 = pneg %p54
        $region38: #{pyramid_forward.12} parent=35 // pred_check_branch
          %238 = sbr.rel (%p236) target = $region40
        $region39: #{pyramid_forward.12} parent=35 // pred_region
          %240 = dma.done %s232, 4096
        $region40: #{pyramid_forward.12} parent=35 // pred_fallthru
          _
        // Predicated region
        $region41: #{pyramid_forward.12} parent=35 // pred_check
          %p241 = pneg %p124
        $region42: #{pyramid_forward.12} parent=35 // pred_check_branch
          %243 = sbr.rel (%p241) target = $region44
        $region43: #{pyramid_forward.12} parent=35 // pred_region
          %245 = dma.done [#allocation5], 16
        $region44: #{pyramid_forward.12} parent=35 // pred_fallthru
          _
        %s246 = sand.u32 %s41, 1
        %s247 = scalar_lea.sflag [#allocation3], %s246
        %s248 = sand.u32 %s41, 1
        %s249 = smul.addr %s248, 256
        %s250 = scalar_lea.vmem [#allocation2], %s249
        %p251 = pneg %p54
        %p252 = pneg %p51
        %s253 = smul.u32 8, %s24
        %p254 = scmp.lt.s32.totalorder %s23, 1
        %s255 = scalar_select %p254, %s23, 1
        %p256 = scmp.lt.s32.totalorder %s253, 7
        %s257 = scalar_select %p256, %s253, 7
        %s258 = smul.addr %s255, 8
        %s259 = sadd.s32 %s257, %s258
        %s260 = smul.addr %s259, 8
        %s261 = scalar_lea.vmem %s1, %s260
        %p262 = pneg %p82
        %p263 = pneg %p79
        %p264 = pneg %p103
        %p265 = pneg %p100
        %p266 = pneg %p124
        %p267 = pneg %p121
        %p268 = pneg %p152
        %p269 = pneg %p149
        %s270 = smul.u32 16, %s24
        %p271 = scmp.lt.s32.totalorder %s23, 1
        %s272 = scalar_select %p271, %s23, 1
        %p273 = scmp.lt.s32.totalorder %s270, 15
        %s274 = scalar_select %p273, %s270, 15
        %s275 = smul.addr %s274, 2
        %s276 = smul.addr %s272, 32
        %s277 = sadd.s32 %s275, %s276
        %s278 = smul.addr %s277, 8
        %s279 = scalar_lea.vmem %s4, %s278
        %s280 = smul.u32 16, %s24
        %s281 = smul.u32 8, %s24
        %p282 = scmp.lt.s32.totalorder %s23, 1
        %s283 = scalar_select %p282, %s23, 1
        %p284 = scmp.lt.s32.totalorder %s281, 7
        %s285 = scalar_select %p284, %s281, 7
        %s286 = smul.addr %s283, 8
        %s287 = sadd.s32 %s285, %s286
        %s288 = smul.addr %s287, 8
        %s289 = scalar_lea.vmem %s1, %s288
        %s290 = smul.u32 8, %s24
        %s291 = smul.u32 16, %s24
        %p292 = scmp.lt.s32.totalorder %s23, 1
        %s293 = scalar_select %p292, %s23, 1
        %p294 = scmp.lt.s32.totalorder %s291, 15
        %s295 = scalar_select %p294, %s291, 15
        %s296 = smul.addr %s295, 2
        %s297 = smul.addr %s293, 32
        %s298 = sadd.s32 %s296, %s297
        %s299 = smul.addr %s298, 8
        %s300 = scalar_lea.vmem %s4, %s299
        %s301 = smul.u32 16, %s24
        %v303 = vld [vmem:[%s235] sm:$0xff]
        %v304 = vld [vmem:[%s235 + $0x8] sm:$0xff]
        %v305 = vld [vmem:[%s235 + $0x10] sm:$0xff]
        %v306 = vld [vmem:[%s235 + $0x18] sm:$0xff]
        %v307 = vld [vmem:[%s235 + $0x20] sm:$0xff]
        %v308 = vld [vmem:[%s235 + $0x28] sm:$0xff]
        %v309 = vld [vmem:[%s235 + $0x30] sm:$0xff]
        %v310 = vld [vmem:[%s235 + $0x38] sm:$0xff]
        %v311 = vld [vmem:[%s235 + $0x40] sm:$0xff]
        %v312 = vld [vmem:[%s235 + $0x48] sm:$0xff]
        %v313 = vld [vmem:[%s235 + $0x50] sm:$0xff]
        %v314 = vld [vmem:[%s235 + $0x58] sm:$0xff]
        %v315 = vld [vmem:[%s235 + $0x60] sm:$0xff]
        %v316 = vld [vmem:[%s235 + $0x68] sm:$0xff]
        %v317 = vld [vmem:[%s235 + $0x70] sm:$0xff]
        %v318 = vld [vmem:[%s235 + $0x78] sm:$0xff]
        %v319 = vld [vmem:[%s235 + $0x80] sm:$0xff]
        %v320 = vld [vmem:[%s235 + $0x88] sm:$0xff]
        %v321 = vld [vmem:[%s235 + $0x90] sm:$0xff]
        %v322 = vld [vmem:[%s235 + $0x98] sm:$0xff]
        %v323 = vld [vmem:[%s235 + $0xa0] sm:$0xff]
        %v324 = vld [vmem:[%s235 + $0xa8] sm:$0xff]
        %v325 = vld [vmem:[%s235 + $0xb0] sm:$0xff]
        %v326 = vld [vmem:[%s235 + $0xb8] sm:$0xff]
        %v327 = vld [vmem:[%s235 + $0xc0] sm:$0xff]
        %v328 = vld [vmem:[%s235 + $0xc8] sm:$0xff]
        %v329 = vld [vmem:[%s235 + $0xd0] sm:$0xff]
        %v330 = vld [vmem:[%s235 + $0xd8] sm:$0xff]
        %v331 = vld [vmem:[%s235 + $0xe0] sm:$0xff]
        %v332 = vld [vmem:[%s235 + $0xe8] sm:$0xff]
        %v333 = vld [vmem:[%s235 + $0xf0] sm:$0xff]
        %v334 = vld [vmem:[%s235 + $0xf8] sm:$0xff]
        %v335 = vpack.c.bf16 %v304, %v303
        %v336 = vpack.c.bf16 %v306, %v305
        %v337 = vpack.c.bf16 %v308, %v307
        %v338 = vpack.c.bf16 %v310, %v309
        %v339 = vpack.c.bf16 %v312, %v311
        %v340 = vpack.c.bf16 %v314, %v313
        %v341 = vpack.c.bf16 %v316, %v315
        %v342 = vpack.c.bf16 %v318, %v317
        %v343 = vpack.c.bf16 %v320, %v319
        %v344 = vpack.c.bf16 %v322, %v321
        %v345 = vpack.c.bf16 %v324, %v323
        %v346 = vpack.c.bf16 %v326, %v325
        %v347 = vpack.c.bf16 %v328, %v327
        %v348 = vpack.c.bf16 %v330, %v329
        %v349 = vpack.c.bf16 %v332, %v331
        %v350 = vpack.c.bf16 %v334, %v333
        %v351 = vld [vmem:[%s2] sm:$0xf]
        %v352 = vld [vmem:[%s2 + $0x4] sm:$0xf]
        %v353 = vld [vmem:[%s2 + $0x8] sm:$0xf]
        %v354 = vld [vmem:[%s2 + $0xc] sm:$0xf]
        %v355 = vld [vmem:[#allocation4] sm:$0x1]
        %v357 = vperm.slane %v355, 0
        %v363 = vunpack.c.l.b16 %v351
        %v364 = vunpack.c.l.b16 %v352
        %v365 = vunpack.c.l.b16 %v353
        %v366 = vunpack.c.l.b16 %v354
        %v367 = vpack.c.b16 %v364, %v363
        %v368 = vpack.c.b16 %v366, %v365
        %vm371 = vcmask 261120
        %v373 = vsel %vm371, %v335, 0
        %v376 = vsel %vm371, %v336, 0
        %v379 = vsel %vm371, %v337, 0
        %v382 = vsel %vm371, %v338, 0
        %v385 = vsel %vm371, %v339, 0
        %v388 = vsel %vm371, %v340, 0
        %v391 = vsel %vm371, %v341, 0
        %v394 = vsel %vm371, %v342, 0
        %v397 = vsel %vm371, %v343, 0
        %v400 = vsel %vm371, %v344, 0
        %v403 = vsel %vm371, %v345, 0
        %v406 = vsel %vm371, %v346, 0
        %v409 = vsel %vm371, %v347, 0
        %v412 = vsel %vm371, %v348, 0
        %v415 = vsel %vm371, %v349, 0
        %v418 = vsel %vm371, %v350, 0
        %420 = vmatpush.bf16.msra.mxu0 0
        %421 = vmatpush.bf16.msra.mxu0 0
        %422 = vmatpush.bf16.msra.mxu0 0
        %423 = vmatpush.bf16.msra.mxu0 0
        %424 = vmatpush.bf16.msra.mxu0 0
        %425 = vmatpush.bf16.msra.mxu0 0
        %426 = vmatpush.bf16.msra.mxu0 %v368
        %427 = vmatpush.bf16.msra.mxu0 %v367
        %428 = vmatmul.bf16.gmra.mxu0 %v373
        %v429 = vpop.f32.mrf.mxu0
        %v430 = vadd.f32 %v357, %v429
        %v431 = vpop.f32.mrf.mxu0
        %v432 = vadd.f32 %v357, %v431
        %433 = vmatmul.bf16.gmra.mxu0 %v376
        %v434 = vpop.f32.mrf.mxu0
        %v435 = vadd.f32 %v357, %v434
        %v436 = vpop.f32.mrf.mxu0
        %v437 = vadd.f32 %v357, %v436
        %438 = vmatmul.bf16.gmra.mxu0 %v379
        %v439 = vpop.f32.mrf.mxu0
        %v440 = vadd.f32 %v357, %v439
        %v441 = vpop.f32.mrf.mxu0
        %v442 = vadd.f32 %v357, %v441
        %443 = vmatmul.bf16.gmra.mxu0 %v382
        %v444 = vpop.f32.mrf.mxu0
        %v445 = vadd.f32 %v357, %v444
        %v446 = vpop.f32.mrf.mxu0
        %v447 = vadd.f32 %v357, %v446
        %448 = vmatmul.bf16.gmra.mxu0 %v385
        %v449 = vpop.f32.mrf.mxu0
        %v450 = vadd.f32 %v357, %v449
        %v451 = vpop.f32.mrf.mxu0
        %v452 = vadd.f32 %v357, %v451
        %453 = vmatmul.bf16.gmra.mxu0 %v388
        %v454 = vpop.f32.mrf.mxu0
        %v455 = vadd.f32 %v357, %v454
        %v456 = vpop.f32.mrf.mxu0
        %v457 = vadd.f32 %v357, %v456
        %458 = vmatmul.bf16.gmra.mxu0 %v391
        %v459 = vpop.f32.mrf.mxu0
        %v460 = vadd.f32 %v357, %v459
        %v461 = vpop.f32.mrf.mxu0
        %v462 = vadd.f32 %v357, %v461
        %463 = vmatmul.bf16.gmra.mxu0 %v394
        %v464 = vpop.f32.mrf.mxu0
        %v465 = vadd.f32 %v357, %v464
        %v466 = vpop.f32.mrf.mxu0
        %v467 = vadd.f32 %v357, %v466
        %468 = vmatmul.bf16.gmra.mxu0 %v397
        %v469 = vpop.f32.mrf.mxu0
        %v470 = vadd.f32 %v357, %v469
        %v471 = vpop.f32.mrf.mxu0
        %v472 = vadd.f32 %v357, %v471
        %473 = vmatmul.bf16.gmra.mxu0 %v400
        %v474 = vpop.f32.mrf.mxu0
        %v475 = vadd.f32 %v357, %v474
        %v476 = vpop.f32.mrf.mxu0
        %v477 = vadd.f32 %v357, %v476
        %478 = vmatmul.bf16.gmra.mxu0 %v403
        %v479 = vpop.f32.mrf.mxu0
        %v480 = vadd.f32 %v357, %v479
        %v481 = vpop.f32.mrf.mxu0
        %v482 = vadd.f32 %v357, %v481
        %483 = vmatmul.bf16.gmra.mxu0 %v406
        %v484 = vpop.f32.mrf.mxu0
        %v485 = vadd.f32 %v357, %v484
        %v486 = vpop.f32.mrf.mxu0
        %v487 = vadd.f32 %v357, %v486
        %488 = vmatmul.bf16.gmra.mxu0 %v409
        %v489 = vpop.f32.mrf.mxu0
        %v490 = vadd.f32 %v357, %v489
        %v491 = vpop.f32.mrf.mxu0
        %v492 = vadd.f32 %v357, %v491
        %493 = vmatmul.bf16.gmra.mxu0 %v412
        %v494 = vpop.f32.mrf.mxu0
        %v495 = vadd.f32 %v357, %v494
        %v496 = vpop.f32.mrf.mxu0
        %v497 = vadd.f32 %v357, %v496
        %498 = vmatmul.bf16.gmra.mxu0 %v415
        %v499 = vpop.f32.mrf.mxu0
        %v500 = vadd.f32 %v357, %v499
        %v501 = vpop.f32.mrf.mxu0
        %v502 = vadd.f32 %v357, %v501
        %503 = vmatmul.bf16.gmra.mxu0 %v418
        %v504 = vpop.f32.mrf.mxu0
        %v505 = vadd.f32 %v357, %v504
        %v506 = vpop.f32.mrf.mxu0
        %v507 = vadd.f32 %v357, %v506
        %508 = vdwg.mxu0
        %v509 = vld [vmem:[%s289] sm:$0xff]
        %v510 = vld [vmem:[%s289 + $0x8] sm:$0xff]
        %v511 = vld [vmem:[%s289 + $0x10] sm:$0xff]
        %v512 = vld [vmem:[%s289 + $0x18] sm:$0xff]
        %v513 = vld [vmem:[%s289 + $0x20] sm:$0xff]
        %v514 = vld [vmem:[%s289 + $0x28] sm:$0xff]
        %v515 = vld [vmem:[%s289 + $0x30] sm:$0xff]
        %v516 = vld [vmem:[%s289 + $0x38] sm:$0xff]
        %v525 = vrot.slane %v509, 1
        %v526 = vrot.slane %v509, 2
        %v527 = vrot.slane %v509, 3
        %v528 = vrot.slane %v509, 4
        %v529 = vrot.slane %v509, 5
        %v530 = vrot.slane %v509, 6
        %v531 = vrot.slane %v509, 7
        %v532 = vrot.slane %v510, 1
        %v533 = vrot.slane %v510, 2
        %v534 = vrot.slane %v510, 3
        %v535 = vrot.slane %v510, 4
        %v536 = vrot.slane %v510, 5
        %v537 = vrot.slane %v510, 6
        %v538 = vrot.slane %v510, 7
        %v539 = vrot.slane %v511, 1
        %v540 = vrot.slane %v511, 2
        %v541 = vrot.slane %v511, 3
        %v542 = vrot.slane %v511, 4
        %v543 = vrot.slane %v511, 5
        %v544 = vrot.slane %v511, 6
        %v545 = vrot.slane %v511, 7
        %v546 = vrot.slane %v512, 1
        %v547 = vrot.slane %v512, 2
        %v548 = vrot.slane %v512, 3
        %v549 = vrot.slane %v512, 4
        %v550 = vrot.slane %v512, 5
        %v551 = vrot.slane %v512, 6
        %v552 = vrot.slane %v512, 7
        %v553 = vrot.slane %v513, 1
        %v554 = vrot.slane %v513, 2
        %v555 = vrot.slane %v513, 3
        %v556 = vrot.slane %v513, 4
        %v557 = vrot.slane %v513, 5
        %v558 = vrot.slane %v513, 6
        %v559 = vrot.slane %v513, 7
        %v560 = vrot.slane %v514, 1
        %v561 = vrot.slane %v514, 2
        %v562 = vrot.slane %v514, 3
        %v563 = vrot.slane %v514, 4
        %v564 = vrot.slane %v514, 5
        %v565 = vrot.slane %v514, 6
        %v566 = vrot.slane %v514, 7
        %v567 = vrot.slane %v515, 1
        %v568 = vrot.slane %v515, 2
        %v569 = vrot.slane %v515, 3
        %v570 = vrot.slane %v515, 4
        %v571 = vrot.slane %v515, 5
        %v572 = vrot.slane %v515, 6
        %v573 = vrot.slane %v515, 7
        %v574 = vrot.slane %v516, 1
        %v575 = vrot.slane %v516, 2
        %v576 = vrot.slane %v516, 3
        %v577 = vrot.slane %v516, 4
        %v578 = vrot.slane %v516, 5
        %v579 = vrot.slane %v516, 6
        %v580 = vrot.slane %v516, 7
        %v581 = vperm.slane %v509, 0
        %v582 = vperm.slane %v525, 0
        %v583 = vperm.slane %v526, 0
        %v584 = vperm.slane %v527, 0
        %v585 = vperm.slane %v528, 0
        %v586 = vperm.slane %v529, 0
        %v587 = vperm.slane %v530, 0
        %v588 = vperm.slane %v531, 0
        %v589 = vperm.slane %v510, 0
        %v590 = vperm.slane %v532, 0
        %v591 = vperm.slane %v533, 0
        %v592 = vperm.slane %v534, 0
        %v593 = vperm.slane %v535, 0
        %v594 = vperm.slane %v536, 0
        %v595 = vperm.slane %v537, 0
        %v596 = vperm.slane %v538, 0
        %v597 = vperm.slane %v511, 0
        %v598 = vperm.slane %v539, 0
        %v599 = vperm.slane %v540, 0
        %v600 = vperm.slane %v541, 0
        %v601 = vperm.slane %v542, 0
        %v602 = vperm.slane %v543, 0
        %v603 = vperm.slane %v544, 0
        %v604 = vperm.slane %v545, 0
        %v605 = vperm.slane %v512, 0
        %v606 = vperm.slane %v546, 0
        %v607 = vperm.slane %v547, 0
        %v608 = vperm.slane %v548, 0
        %v609 = vperm.slane %v549, 0
        %v610 = vperm.slane %v550, 0
        %v611 = vperm.slane %v551, 0
        %v612 = vperm.slane %v552, 0
        %v613 = vperm.slane %v513, 0
        %v614 = vperm.slane %v553, 0
        %v615 = vperm.slane %v554, 0
        %v616 = vperm.slane %v555, 0
        %v617 = vperm.slane %v556, 0
        %v618 = vperm.slane %v557, 0
        %v619 = vperm.slane %v558, 0
        %v620 = vperm.slane %v559, 0
        %v621 = vperm.slane %v514, 0
        %v622 = vperm.slane %v560, 0
        %v623 = vperm.slane %v561, 0
        %v624 = vperm.slane %v562, 0
        %v625 = vperm.slane %v563, 0
        %v626 = vperm.slane %v564, 0
        %v627 = vperm.slane %v565, 0
        %v628 = vperm.slane %v566, 0
        %v629 = vperm.slane %v515, 0
        %v630 = vperm.slane %v567, 0
        %v631 = vperm.slane %v568, 0
        %v632 = vperm.slane %v569, 0
        %v633 = vperm.slane %v570, 0
        %v634 = vperm.slane %v571, 0
        %v635 = vperm.slane %v572, 0
        %v636 = vperm.slane %v573, 0
        %v637 = vperm.slane %v516, 0
        %v638 = vperm.slane %v574, 0
        %v639 = vperm.slane %v575, 0
        %v640 = vperm.slane %v576, 0
        %v641 = vperm.slane %v577, 0
        %v642 = vperm.slane %v578, 0
        %v643 = vperm.slane %v579, 0
        %v644 = vperm.slane %v580, 0
        %645 = vst [vmem:[#allocation1] ss:$4 sm:$0xff] %v581
        %s646 = scalar_lea.vmem [#allocation1], 1
        %647 = vst [vmem:[%s646] ss:$4 sm:$0xff] %v582
        %s648 = scalar_lea.vmem [#allocation1], 2
        %649 = vst [vmem:[%s648] ss:$4 sm:$0xff] %v583
        %s650 = scalar_lea.vmem [#allocation1], 3
        %651 = vst [vmem:[%s650] ss:$4 sm:$0xff] %v584
        %s652 = scalar_lea.vmem [#allocation1], 32
        %653 = vst [vmem:[%s652] ss:$4 sm:$0xff] %v585
        %s654 = scalar_lea.vmem [#allocation1], 33
        %655 = vst [vmem:[%s654] ss:$4 sm:$0xff] %v586
        %s656 = scalar_lea.vmem [#allocation1], 34
        %657 = vst [vmem:[%s656] ss:$4 sm:$0xff] %v587
        %s658 = scalar_lea.vmem [#allocation1], 35
        %659 = vst [vmem:[%s658] ss:$4 sm:$0xff] %v588
        %v660 = vld.sshfl [vmem:[#allocation1] sm:$0xff pattern:$0x73625140]
        %v661 = vld.sshfl [vmem:[#allocation1 + $0x20] sm:$0xff pattern:$0x73625140]
        %662 = vst [vmem:[#allocation1] ss:$4 sm:$0xff] %v581
        %663 = vst [vmem:[%s646] ss:$4 sm:$0xff] %v582
        %664 = vst [vmem:[%s648] ss:$4 sm:$0xff] %v583
        %665 = vst [vmem:[%s650] ss:$4 sm:$0xff] %v584
        %666 = vst [vmem:[%s652] ss:$4 sm:$0xff] %v585
        %667 = vst [vmem:[%s654] ss:$4 sm:$0xff] %v586
        %668 = vst [vmem:[%s656] ss:$4 sm:$0xff] %v587
        %669 = vst [vmem:[%s658] ss:$4 sm:$0xff] %v588
        %v670 = vld.sshfl [vmem:[#allocation1] sm:$0xff pattern:$0x73625140]
        %v671 = vld.sshfl [vmem:[#allocation1 + $0x20] sm:$0xff pattern:$0x73625140]
        %672 = vst [vmem:[#allocation1] ss:$4 sm:$0xff] %v589
        %673 = vst [vmem:[%s646] ss:$4 sm:$0xff] %v590
        %674 = vst [vmem:[%s648] ss:$4 sm:$0xff] %v591
        %675 = vst [vmem:[%s650] ss:$4 sm:$0xff] %v592
        %676 = vst [vmem:[%s652] ss:$4 sm:$0xff] %v593
        %677 = vst [vmem:[%s654] ss:$4 sm:$0xff] %v594
        %678 = vst [vmem:[%s656] ss:$4 sm:$0xff] %v595
        %679 = vst [vmem:[%s658] ss:$4 sm:$0xff] %v596
        %v680 = vld.sshfl [vmem:[#allocation1] sm:$0xff pattern:$0x73625140]
        %v681 = vld.sshfl [vmem:[#allocation1 + $0x20] sm:$0xff pattern:$0x73625140]
        %682 = vst [vmem:[#allocation1] ss:$4 sm:$0xff] %v589
        %683 = vst [vmem:[%s646] ss:$4 sm:$0xff] %v590
        %684 = vst [vmem:[%s648] ss:$4 sm:$0xff] %v591
        %685 = vst [vmem:[%s650] ss:$4 sm:$0xff] %v592
        %686 = vst [vmem:[%s652] ss:$4 sm:$0xff] %v593
        %687 = vst [vmem:[%s654] ss:$4 sm:$0xff] %v594
        %688 = vst [vmem:[%s656] ss:$4 sm:$0xff] %v595
        %689 = vst [vmem:[%s658] ss:$4 sm:$0xff] %v596
        %v690 = vld.sshfl [vmem:[#allocation1] sm:$0xff pattern:$0x73625140]
        %v691 = vld.sshfl [vmem:[#allocation1 + $0x20] sm:$0xff pattern:$0x73625140]
        %692 = vst [vmem:[#allocation1] ss:$4 sm:$0xff] %v597
        %693 = vst [vmem:[%s646] ss:$4 sm:$0xff] %v598
        %694 = vst [vmem:[%s648] ss:$4 sm:$0xff] %v599
        %695 = vst [vmem:[%s650] ss:$4 sm:$0xff] %v600
        %696 = vst [vmem:[%s652] ss:$4 sm:$0xff] %v601
        %697 = vst [vmem:[%s654] ss:$4 sm:$0xff] %v602
        %698 = vst [vmem:[%s656] ss:$4 sm:$0xff] %v603
        %699 = vst [vmem:[%s658] ss:$4 sm:$0xff] %v604
        %v700 = vld.sshfl [vmem:[#allocation1] sm:$0xff pattern:$0x73625140]
        %v701 = vld.sshfl [vmem:[#allocation1 + $0x20] sm:$0xff pattern:$0x73625140]
        %702 = vst [vmem:[#allocation1] ss:$4 sm:$0xff] %v597
        %703 = vst [vmem:[%s646] ss:$4 sm:$0xff] %v598
        %704 = vst [vmem:[%s648] ss:$4 sm:$0xff] %v599
        %705 = vst [vmem:[%s650] ss:$4 sm:$0xff] %v600
        %706 = vst [vmem:[%s652] ss:$4 sm:$0xff] %v601
        %707 = vst [vmem:[%s654] ss:$4 sm:$0xff] %v602
        %708 = vst [vmem:[%s656] ss:$4 sm:$0xff] %v603
        %709 = vst [vmem:[%s658] ss:$4 sm:$0xff] %v604
        %v710 = vld.sshfl [vmem:[#allocation1] sm:$0xff pattern:$0x73625140]
        %v711 = vld.sshfl [vmem:[#allocation1 + $0x20] sm:$0xff pattern:$0x73625140]
        %712 = vst [vmem:[#allocation1] ss:$4 sm:$0xff] %v605
        %713 = vst [vmem:[%s646] ss:$4 sm:$0xff] %v606
        %714 = vst [vmem:[%s648] ss:$4 sm:$0xff] %v607
        %715 = vst [vmem:[%s650] ss:$4 sm:$0xff] %v608
        %716 = vst [vmem:[%s652] ss:$4 sm:$0xff] %v609
        %717 = vst [vmem:[%s654] ss:$4 sm:$0xff] %v610
        %718 = vst [vmem:[%s656] ss:$4 sm:$0xff] %v611
        %719 = vst [vmem:[%s658] ss:$4 sm:$0xff] %v612
        %v720 = vld.sshfl [vmem:[#allocation1] sm:$0xff pattern:$0x73625140]
        %v721 = vld.sshfl [vmem:[#allocation1 + $0x20] sm:$0xff pattern:$0x73625140]
        %722 = vst [vmem:[#allocation1] ss:$4 sm:$0xff] %v605
        %723 = vst [vmem:[%s646] ss:$4 sm:$0xff] %v606
        %724 = vst [vmem:[%s648] ss:$4 sm:$0xff] %v607
        %725 = vst [vmem:[%s650] ss:$4 sm:$0xff] %v608
        %726 = vst [vmem:[%s652] ss:$4 sm:$0xff] %v609
        %727 = vst [vmem:[%s654] ss:$4 sm:$0xff] %v610
        %728 = vst [vmem:[%s656] ss:$4 sm:$0xff] %v611
        %729 = vst [vmem:[%s658] ss:$4 sm:$0xff] %v612
        %v730 = vld.sshfl [vmem:[#allocation1] sm:$0xff pattern:$0x73625140]
        %v731 = vld.sshfl [vmem:[#allocation1 + $0x20] sm:$0xff pattern:$0x73625140]
        %732 = vst [vmem:[#allocation1] ss:$4 sm:$0xff] %v613
        %733 = vst [vmem:[%s646] ss:$4 sm:$0xff] %v614
        %734 = vst [vmem:[%s648] ss:$4 sm:$0xff] %v615
        %735 = vst [vmem:[%s650] ss:$4 sm:$0xff] %v616
        %736 = vst [vmem:[%s652] ss:$4 sm:$0xff] %v617
        %737 = vst [vmem:[%s654] ss:$4 sm:$0xff] %v618
        %738 = vst [vmem:[%s656] ss:$4 sm:$0xff] %v619
        %739 = vst [vmem:[%s658] ss:$4 sm:$0xff] %v620
        %v740 = vld.sshfl [vmem:[#allocation1] sm:$0xff pattern:$0x73625140]
        %v741 = vld.sshfl [vmem:[#allocation1 + $0x20] sm:$0xff pattern:$0x73625140]
        %742 = vst [vmem:[#allocation1] ss:$4 sm:$0xff] %v613
        %743 = vst [vmem:[%s646] ss:$4 sm:$0xff] %v614
        %744 = vst [vmem:[%s648] ss:$4 sm:$0xff] %v615
        %745 = vst [vmem:[%s650] ss:$4 sm:$0xff] %v616
        %746 = vst [vmem:[%s652] ss:$4 sm:$0xff] %v617
        %747 = vst [vmem:[%s654] ss:$4 sm:$0xff] %v618
        %748 = vst [vmem:[%s656] ss:$4 sm:$0xff] %v619
        %749 = vst [vmem:[%s658] ss:$4 sm:$0xff] %v620
        %v750 = vld.sshfl [vmem:[#allocation1] sm:$0xff pattern:$0x73625140]
        %v751 = vld.sshfl [vmem:[#allocation1 + $0x20] sm:$0xff pattern:$0x73625140]
        %752 = vst [vmem:[#allocation1] ss:$4 sm:$0xff] %v621
        %753 = vst [vmem:[%s646] ss:$4 sm:$0xff] %v622
        %754 = vst [vmem:[%s648] ss:$4 sm:$0xff] %v623
        %755 = vst [vmem:[%s650] ss:$4 sm:$0xff] %v624
        %756 = vst [vmem:[%s652] ss:$4 sm:$0xff] %v625
        %757 = vst [vmem:[%s654] ss:$4 sm:$0xff] %v626
        %758 = vst [vmem:[%s656] ss:$4 sm:$0xff] %v627
        %759 = vst [vmem:[%s658] ss:$4 sm:$0xff] %v628
        %v760 = vld.sshfl [vmem:[#allocation1] sm:$0xff pattern:$0x73625140]
        %v761 = vld.sshfl [vmem:[#allocation1 + $0x20] sm:$0xff pattern:$0x73625140]
        %762 = vst [vmem:[#allocation1] ss:$4 sm:$0xff] %v621
        %763 = vst [vmem:[%s646] ss:$4 sm:$0xff] %v622
        %764 = vst [vmem:[%s648] ss:$4 sm:$0xff] %v623
        %765 = vst [vmem:[%s650] ss:$4 sm:$0xff] %v624
        %766 = vst [vmem:[%s652] ss:$4 sm:$0xff] %v625
        %767 = vst [vmem:[%s654] ss:$4 sm:$0xff] %v626
        %768 = vst [vmem:[%s656] ss:$4 sm:$0xff] %v627
        %769 = vst [vmem:[%s658] ss:$4 sm:$0xff] %v628
        %v770 = vld.sshfl [vmem:[#allocation1] sm:$0xff pattern:$0x73625140]
        %v771 = vld.sshfl [vmem:[#allocation1 + $0x20] sm:$0xff pattern:$0x73625140]
        %772 = vst [vmem:[#allocation1] ss:$4 sm:$0xff] %v629
        %773 = vst [vmem:[%s646] ss:$4 sm:$0xff] %v630
        %774 = vst [vmem:[%s648] ss:$4 sm:$0xff] %v631
        %775 = vst [vmem:[%s650] ss:$4 sm:$0xff] %v632
        %776 = vst [vmem:[%s652] ss:$4 sm:$0xff] %v633
        %777 = vst [vmem:[%s654] ss:$4 sm:$0xff] %v634
        %778 = vst [vmem:[%s656] ss:$4 sm:$0xff] %v635
        %779 = vst [vmem:[%s658] ss:$4 sm:$0xff] %v636
        %v780 = vld.sshfl [vmem:[#allocation1] sm:$0xff pattern:$0x73625140]
        %v781 = vld.sshfl [vmem:[#allocation1 + $0x20] sm:$0xff pattern:$0x73625140]
        %782 = vst [vmem:[#allocation1] ss:$4 sm:$0xff] %v629
        %783 = vst [vmem:[%s646] ss:$4 sm:$0xff] %v630
        %784 = vst [vmem:[%s648] ss:$4 sm:$0xff] %v631
        %785 = vst [vmem:[%s650] ss:$4 sm:$0xff] %v632
        %786 = vst [vmem:[%s652] ss:$4 sm:$0xff] %v633
        %787 = vst [vmem:[%s654] ss:$4 sm:$0xff] %v634
        %788 = vst [vmem:[%s656] ss:$4 sm:$0xff] %v635
        %789 = vst [vmem:[%s658] ss:$4 sm:$0xff] %v636
        %v790 = vld.sshfl [vmem:[#allocation1] sm:$0xff pattern:$0x73625140]
        %v791 = vld.sshfl [vmem:[#allocation1 + $0x20] sm:$0xff pattern:$0x73625140]
        %792 = vst [vmem:[#allocation1] ss:$4 sm:$0xff] %v637
        %793 = vst [vmem:[%s646] ss:$4 sm:$0xff] %v638
        %794 = vst [vmem:[%s648] ss:$4 sm:$0xff] %v639
        %795 = vst [vmem:[%s650] ss:$4 sm:$0xff] %v640
        %796 = vst [vmem:[%s652] ss:$4 sm:$0xff] %v641
        %797 = vst [vmem:[%s654] ss:$4 sm:$0xff] %v642
        %798 = vst [vmem:[%s656] ss:$4 sm:$0xff] %v643
        %799 = vst [vmem:[%s658] ss:$4 sm:$0xff] %v644
        %v800 = vld.sshfl [vmem:[#allocation1] sm:$0xff pattern:$0x73625140]
        %v801 = vld.sshfl [vmem:[#allocation1 + $0x20] sm:$0xff pattern:$0x73625140]
        %802 = vst [vmem:[#allocation1] ss:$4 sm:$0xff] %v637
        %803 = vst [vmem:[%s646] ss:$4 sm:$0xff] %v638
        %804 = vst [vmem:[%s648] ss:$4 sm:$0xff] %v639
        %805 = vst [vmem:[%s650] ss:$4 sm:$0xff] %v640
        %806 = vst [vmem:[%s652] ss:$4 sm:$0xff] %v641
        %807 = vst [vmem:[%s654] ss:$4 sm:$0xff] %v642
        %808 = vst [vmem:[%s656] ss:$4 sm:$0xff] %v643
        %809 = vst [vmem:[%s658] ss:$4 sm:$0xff] %v644
        %v810 = vld.sshfl [vmem:[#allocation1] sm:$0xff pattern:$0x73625140]
        %v811 = vld.sshfl [vmem:[#allocation1 + $0x20] sm:$0xff pattern:$0x73625140]
        %v844 = vadd.f32 %v430, %v660
        %v845 = vadd.f32 %v432, %v661
        %v846 = vadd.f32 %v435, %v670
        %v847 = vadd.f32 %v437, %v671
        %v848 = vadd.f32 %v440, %v680
        %v849 = vadd.f32 %v442, %v681
        %v850 = vadd.f32 %v445, %v690
        %v851 = vadd.f32 %v447, %v691
        %v852 = vadd.f32 %v450, %v700
        %v853 = vadd.f32 %v452, %v701
        %v854 = vadd.f32 %v455, %v710
        %v855 = vadd.f32 %v457, %v711
        %v856 = vadd.f32 %v460, %v720
        %v857 = vadd.f32 %v462, %v721
        %v858 = vadd.f32 %v465, %v730
        %v859 = vadd.f32 %v467, %v731
        %v860 = vadd.f32 %v470, %v740
        %v861 = vadd.f32 %v472, %v741
        %v862 = vadd.f32 %v475, %v750
        %v863 = vadd.f32 %v477, %v751
        %v864 = vadd.f32 %v480, %v760
        %v865 = vadd.f32 %v482, %v761
        %v866 = vadd.f32 %v485, %v770
        %v867 = vadd.f32 %v487, %v771
        %v868 = vadd.f32 %v490, %v780
        %v869 = vadd.f32 %v492, %v781
        %v870 = vadd.f32 %v495, %v790
        %v871 = vadd.f32 %v497, %v791
        %v872 = vadd.f32 %v500, %v800
        %v873 = vadd.f32 %v502, %v801
        %v874 = vadd.f32 %v505, %v810
        %v875 = vadd.f32 %v507, %v811
        %876 = vst [vmem:[%s300] sm:$0xff] %v844
        %877 = vst [vmem:[%s300 + $0x8] sm:$0xff] %v845
        %878 = vst [vmem:[%s300 + $0x10] sm:$0xff] %v846
        %879 = vst [vmem:[%s300 + $0x18] sm:$0xff] %v847
        %880 = vst [vmem:[%s300 + $0x20] sm:$0xff] %v848
        %881 = vst [vmem:[%s300 + $0x28] sm:$0xff] %v849
        %882 = vst [vmem:[%s300 + $0x30] sm:$0xff] %v850
        %883 = vst [vmem:[%s300 + $0x38] sm:$0xff] %v851
        %884 = vst [vmem:[%s300 + $0x40] sm:$0xff] %v852
        %885 = vst [vmem:[%s300 + $0x48] sm:$0xff] %v853
        %886 = vst [vmem:[%s300 + $0x50] sm:$0xff] %v854
        %887 = vst [vmem:[%s300 + $0x58] sm:$0xff] %v855
        %888 = vst [vmem:[%s300 + $0x60] sm:$0xff] %v856
        %889 = vst [vmem:[%s300 + $0x68] sm:$0xff] %v857
        %890 = vst [vmem:[%s300 + $0x70] sm:$0xff] %v858
        %891 = vst [vmem:[%s300 + $0x78] sm:$0xff] %v859
        %892 = vst [vmem:[%s300 + $0x80] sm:$0xff] %v860
        %893 = vst [vmem:[%s300 + $0x88] sm:$0xff] %v861
        %894 = vst [vmem:[%s300 + $0x90] sm:$0xff] %v862
        %895 = vst [vmem:[%s300 + $0x98] sm:$0xff] %v863
        %896 = vst [vmem:[%s300 + $0xa0] sm:$0xff] %v864
        %897 = vst [vmem:[%s300 + $0xa8] sm:$0xff] %v865
        %898 = vst [vmem:[%s300 + $0xb0] sm:$0xff] %v866
        %899 = vst [vmem:[%s300 + $0xb8] sm:$0xff] %v867
        %900 = vst [vmem:[%s300 + $0xc0] sm:$0xff] %v868
        %901 = vst [vmem:[%s300 + $0xc8] sm:$0xff] %v869
        %902 = vst [vmem:[%s300 + $0xd0] sm:$0xff] %v870
        %903 = vst [vmem:[%s300 + $0xd8] sm:$0xff] %v871
        %904 = vst [vmem:[%s300 + $0xe0] sm:$0xff] %v872
        %905 = vst [vmem:[%s300 + $0xe8] sm:$0xff] %v873
        %906 = vst [vmem:[%s300 + $0xf0] sm:$0xff] %v874
        %907 = vst [vmem:[%s300 + $0xf8] sm:$0xff] %v875
        %s908 = smul.u32 16, %s24
        %p909 = scmp.lt.s32.totalorder %s23, 1
        %s910 = scalar_select %p909, %s23, 1
        %p911 = scmp.lt.s32.totalorder %s908, 15
        %s912 = scalar_select %p911, %s908, 15
        %s913 = smul.addr %s912, 2
        %s914 = smul.addr %s910, 32
        %s915 = sadd.s32 %s913, %s914
        %s916 = smul.addr %s915, 8
        %s917 = scalar_lea.vmem %s4, %s916
        // Predicated region
        $region45: #{pyramid_forward.12} parent=35 // pred_check
          %p918 = pneg %p149
        $region46: #{pyramid_forward.12} parent=35 // pred_check_branch
          %920 = sbr.rel (%p918) target = $region48
        $region47: #{pyramid_forward.12} parent=35 // pred_region
          %s921 = smul.u32 16, %s24
        $region48: #{pyramid_forward.12} parent=35 // pred_fallthru
          _
      $region36: #{pyramid_forward.12} parent=5 // pred_fallthru
        _
      %p922 = scmp.le.s32.totalorder 2, %s14
      // Predicated region
      $region49: #{pyramid_forward.12} parent=5 // pred_check
        %p923 = pneg %p922
      $region50: #{pyramid_forward.12} parent=5 // pred_check_branch
        %925 = sbr.rel (%p923) target = $region52
      $region51: #{pyramid_forward.12} parent=5 // pred_region
        %s926 = ssub.s32 %s14, 2
        // Predicated region
        $region53: #{pyramid_forward.12} parent=51 // pred_check
          %p927 = pneg %p155
        $region54: #{pyramid_forward.12} parent=51 // pred_check_branch
          %929 = sbr.rel (%p927) target = $region56
        $region55: #{pyramid_forward.12} parent=51 // pred_region
          %s930 = smul.u32 16, %s26
          %p931 = scmp.lt.s32.totalorder %s25, 1
          %s932 = scalar_select %p931, %s25, 1
          %p933 = scmp.lt.s32.totalorder %s930, 15
          %s934 = scalar_select %p933, %s930, 15
          %s935 = smul.addr %s934, 2
          %s936 = smul.addr %s932, 32
          %s937 = sadd.s32 %s935, %s936
          %s938 = smul.addr %s937, 8
          %s939 = scalar_lea.vmem %s4, %s938
        $region56: #{pyramid_forward.12} parent=51 // pred_fallthru
          _
      $region52: #{pyramid_forward.12} parent=5 // pred_fallthru
        _
    $region6: #{pyramid_forward.12} parent=1 // loop_footer
      %s18 = sadd.s32 1, %s14
    $region7: #{pyramid_forward.12} parent=1 // loop_footer_branch
      %13 = sbr.rel target = $region3
    $region8: #{pyramid_forward.12} parent=1 // loop_exit
      _
    %940 = vsyncpa [#allocation3], 1
    %s941 = scalar_lea.sflag [#allocation3], 1
    %942 = vsyncpa %s941, 1
    %943 = vsyncpa [#allocation5], 1

// kernel: pyramid_forward.11
$region0: #{pyramid_forward.11}
  #allocation0 [shape = 'u32[]', space=smem, size = 0x4, offset = 0x4, fixed_abs, tag = 'smem constant byte address 0x4 - core index']
  #allocation1 [shape = 'u32[72,128]{1,0:T(1,128)}', space=vmem, size = 0x9000, scoped, tag = 'internal scratch']
  %s0 = inlined_call_operand.vmem [shape: f32[2,10,10,128], index: 0, kind: input, shape index: {}]
  %s1 = inlined_call_operand.vmem [shape: bf16[9,128,128], index: 1, kind: input, shape index: {}]
  %s2 = inlined_call_operand.vmem [shape: f32[1,128], index: 2, kind: input, shape index: {}]
  %s3 = inlined_call_operand.hbm [shape: f32[2,8,8,128], index: 3, kind: output, shape index: {}]
  %s4 = sld [smem:[#allocation0]]
  $region45: #{pyramid_forward.11} parent=0
    _
  %s6 = ssub.s32 1, %s4
  %s7 = scalar_select 0, %s6, %s4
  $region1: #{pyramid_forward.11} parent=0
    #allocation2 [shape = 'u8[65536]{0}', space=vmem, size = 0x10000, scoped, tag = 'output window, operand 0']
    #allocation3 [shape = 's32[2]{0}', space=sflag, size = 0x8, scoped, tag = 'scoped memory for pyramid_forward.11']
    %8 = vsyncpa [#allocation3], 0
    %s9 = scalar_lea.sflag [#allocation3], 1
    %10 = vsyncpa %s9, 0
    loop: start=0, step=1, limit=4
    $region2: #{pyramid_forward.11} parent=1 // loop_pre_header
      _
    $region3: #{pyramid_forward.11} parent=1 // loop_header
      %s12 = sphi 0, %s16
      %p13 = scmp.ge.s32.totalorder %s12, 4
      %s22 = sphi 0, %s24
      %s25 = sphi 0, %s22
      %s26 = sphi 0, %s25
      %s42 = sphi 0, %s26
      %s46 = sphi 0, %s46
      %s48 = sphi 0, %s46
      %s49 = sphi 0, %s48
      %s63 = sphi 0, %s49
      %s67 = sphi 0, %s67
      %s69 = sphi 0, %s67
      %s70 = sphi 0, %s69
      %s84 = sphi 0, %s70
      %s90 = sphi 0, %s92
      %s93 = sphi 0, %s90
      %s94 = sphi 0, %s93
      %s110 = sphi 0, %s94
    $region4: #{pyramid_forward.11} parent=1 // loop_header_branch
      %15 = sbr.rel (%p13) target = $region8
    $region5: #{pyramid_forward.11} parent=1 // loop_body
      %s17 = ssub.s32 %s12, 1
      %s18 = ssub.s32 %s12, 2
      %s19 = sadd.s32 %s12, 1
      %s20 = ssub.s32 %s12, %s19
      %p21 = scmp.eq.s32.totalorder %s20, 0
      %s23 = sadd.s32 %s22, 1
      %s24 = scalar_select %p21, %s22, %s23
      %p27 = pneg %p21
      %p28 = scmp.eq.s32.totalorder %s12, 1
      %p29 = por %p27, %p28
      %p30 = scmp.ne.s32.totalorder %s22, %s25
      %p31 = scmp.eq.s32.totalorder %s12, 0
      %p32 = por %p30, %p31
      %p33 = scmp.ne.s32.totalorder %s22, %s25
      %p34 = scmp.eq.s32.totalorder %s17, 1
      %p35 = por %p33, %p34
      %p36 = scmp.ne.s32.totalorder %s25, %s26
      %p37 = scmp.eq.s32.totalorder %s17, 0
      %p38 = por %p36, %p37
      %p39 = scmp.ne.s32.totalorder %s25, %s26
      %p40 = scmp.eq.s32.totalorder %s18, 1
      %p41 = por %p39, %p40
      %p43 = scmp.ne.s32.totalorder %s26, %s42
      %p44 = scmp.eq.s32.totalorder %s18, 0
      %p45 = por %p43, %p44
      %s47 = sadd.s32 %s46, 1
      %p50 = scmp.eq.s32.totalorder %s12, 1
      %p51 = scmp.ne.s32.totalorder %s46, %s48
      %p52 = scmp.eq.s32.totalorder %s12, 0
      %p53 = por %p51, %p52
      %p54 = scmp.ne.s32.totalorder %s46, %s48
      %p55 = scmp.eq.s32.totalorder %s17, 1
      %p56 = por %p54, %p55
      %p57 = scmp.ne.s32.totalorder %s48, %s49
      %p58 = scmp.eq.s32.totalorder %s17, 0
      %p59 = por %p57, %p58
      %p60 = scmp.ne.s32.totalorder %s48, %s49
      %p61 = scmp.eq.s32.totalorder %s18, 1
      %p62 = por %p60, %p61
      %p64 = scmp.ne.s32.totalorder %s49, %s63
      %p65 = scmp.eq.s32.totalorder %s18, 0
      %p66 = por %p64, %p65
      %s68 = sadd.s32 %s67, 1
      %p71 = scmp.eq.s32.totalorder %s12, 1
      %p72 = scmp.ne.s32.totalorder %s67, %s69
      %p73 = scmp.eq.s32.totalorder %s12, 0
      %p74 = por %p72, %p73
      %p75 = scmp.ne.s32.totalorder %s67, %s69
      %p76 = scmp.eq.s32.totalorder %s17, 1
      %p77 = por %p75, %p76
      %p78 = scmp.ne.s32.totalorder %s69, %s70
      %p79 = scmp.eq.s32.totalorder %s17, 0
      %p80 = por %p78, %p79
      %p81 = scmp.ne.s32.totalorder %s69, %s70
      %p82 = scmp.eq.s32.totalorder %s18, 1
      %p83 = por %p81, %p82
      %p85 = scmp.ne.s32.totalorder %s70, %s84
      %p86 = scmp.eq.s32.totalorder %s18, 0
      %p87 = por %p85, %p86
      %s88 = ssub.s32 %s12, %s19
      %p89 = scmp.eq.s32.totalorder %s88, 0
      %s91 = sadd.s32 %s90, 1
      %s92 = scalar_select %p89, %s90, %s91
      %p95 = pneg %p89
      %p96 = scmp.eq.s32.totalorder %s12, 1
      %p97 = por %p95, %p96
      %p98 = scmp.ne.s32.totalorder %s90, %s93
      %p99 = scmp.eq.s32.totalorder %s12, 0
      %p100 = por %p98, %p99
      %p101 = scmp.ne.s32.totalorder %s90, %s93
      %p102 = scmp.eq.s32.totalorder %s17, 1
      %p103 = por %p101, %p102
      %p104 = scmp.ne.s32.totalorder %s93, %s94
      %p105 = scmp.eq.s32.totalorder %s17, 0
      %p106 = por %p104, %p105
      %p107 = scmp.ne.s32.totalorder %s93, %s94
      %p108 = scmp.eq.s32.totalorder %s18, 1
      %p109 = por %p107, %p108
      %p111 = scmp.ne.s32.totalorder %s94, %s110
      %p112 = scmp.eq.s32.totalorder %s18, 0
      %p113 = por %p111, %p112
      %p114 = scmp.le.s32.totalorder 1, %s12
      %p115 = scmp.lt.s32.totalorder %s12, 3
      %p116 = pnand %p114, %p115
      %p117 = pneg %p116
      // Predicated region
      $region9: #{pyramid_forward.11} parent=5 // pred_check
        _
      $region10: #{pyramid_forward.11} parent=5 // pred_check_branch
        %119 = sbr.rel (%p116) target = $region12
      $region11: #{pyramid_forward.11} parent=5 // pred_region
        %s120 = ssub.s32 %s12, 1
        // Predicated region
        $region13: #{pyramid_forward.11} parent=11 // pred_check
          %p121 = pneg %p59
        $region14: #{pyramid_forward.11} parent=11 // pred_check_branch
          %123 = sbr.rel (%p121) target = $region16
        $region15: #{pyramid_forward.11} parent=11 // pred_region
          _
        $region16: #{pyramid_forward.11} parent=11 // pred_fallthru
          _
        // Predicated region
        $region17: #{pyramid_forward.11} parent=11 // pred_check
          %p124 = pneg %p80
        $region18: #{pyramid_forward.11} parent=11 // pred_check_branch
          %126 = sbr.rel (%p124) target = $region20
        $region19: #{pyramid_forward.11} parent=11 // pred_region
          _
        $region20: #{pyramid_forward.11} parent=11 // pred_fallthru
          _
      $region12: #{pyramid_forward.11} parent=5 // pred_fallthru
        _
      %p127 = scmp.lt.s32.totalorder %s12, 2
      // Predicated region
      $region21: #{pyramid_forward.11} parent=5 // pred_check
        %p128 = pneg %p127
      $region22: #{pyramid_forward.11} parent=5 // pred_check_branch
        %130 = sbr.rel (%p128) target = $region24
      $region23: #{pyramid_forward.11} parent=5 // pred_region
        // Predicated region
        $region25: #{pyramid_forward.11} parent=23 // pred_check
          %p131 = pneg %p32
        $region26: #{pyramid_forward.11} parent=23 // pred_check_branch
          %133 = sbr.rel (%p131) target = $region28
        $region27: #{pyramid_forward.11} parent=23 // pred_region
          %p134 = scmp.lt.s32.totalorder %s12, 1
          %s135 = scalar_select %p134, %s12, 1
          %s136 = smul.addr %s135, 20
          %s137 = smul.addr %s136, 8
          %s138 = scalar_lea.vmem %s0, %s137
        $region28: #{pyramid_forward.11} parent=23 // pred_fallthru
          _
      $region24: #{pyramid_forward.11} parent=5 // pred_fallthru
        _
      %p139 = scmp.le.s32.totalorder 1, %s12
      %p140 = scmp.lt.s32.totalorder %s12, 3
      %p141 = pnand %p139, %p140
      %p142 = pneg %p141
      // Predicated region
      $region29: #{pyramid_forward.11} parent=5 // pred_check
        _
      $region30: #{pyramid_forward.11} parent=5 // pred_check_branch
        %144 = sbr.rel (%p141) target = $region32
      $region31: #{pyramid_forward.11} parent=5 // pred_region
        %s145 = ssub.s32 %s12, 1
        %p146 = scmp.lt.s32.totalorder %s17, 1
        %s147 = scalar_select %p146, %s17, 1
        %s148 = smul.addr %s147, 20
        %s149 = smul.addr %s148, 8
        %s150 = scalar_lea.vmem %s0, %s149
        %p151 = pneg %p38
        %p152 = pneg %p35
        %p153 = pneg %p59
        %p154 = pneg %p56
        %p155 = pneg %p80
        %p156 = pneg %p77
        %p157 = pneg %p106
        %p158 = pneg %p103
        %s159 = sand.u32 %s93, 1
        %s160 = scalar_lea.sflag [#allocation3], %s159
        %s161 = sand.u32 %s93, 1
        %s162 = smul.addr %s161, 64
        %s163 = scalar_lea.vmem [#allocation2], %s162
        %p164 = scmp.lt.s32.totalorder %s17, 1
        %s165 = scalar_select %p164, %s17, 1
        %s166 = smul.addr %s165, 20
        %s167 = smul.addr %s166, 8
        %s168 = scalar_lea.vmem %s0, %s167
        %v169 = vld [vmem:[%s168] sm:$0xff]
        %v170 = vld [vmem:[%s168 + $0x8] sm:$0x3]
        %v171 = vld [vmem:[%s168 + $0x10] sm:$0xff]
        %v172 = vld [vmem:[%s168 + $0x18] sm:$0x3]
        %v173 = vld [vmem:[%s168 + $0x20] sm:$0xff]
        %v174 = vld [vmem:[%s168 + $0x28] sm:$0x3]
        %v175 = vld [vmem:[%s168 + $0x30] sm:$0xff]
        %v176 = vld [vmem:[%s168 + $0x38] sm:$0x3]
        %v177 = vld [vmem:[%s168 + $0x40] sm:$0xff]
        %v178 = vld [vmem:[%s168 + $0x48] sm:$0x3]
        %v179 = vld [vmem:[%s168 + $0x50] sm:$0xff]
        %v180 = vld [vmem:[%s168 + $0x58] sm:$0x3]
        %v181 = vld [vmem:[%s168 + $0x60] sm:$0xff]
        %v182 = vld [vmem:[%s168 + $0x68] sm:$0x3]
        %v183 = vld [vmem:[%s168 + $0x70] sm:$0xff]
        %v184 = vld [vmem:[%s168 + $0x78] sm:$0x3]
        %v185 = vld [vmem:[%s168 + $0x80] sm:$0xff]
        %v186 = vld [vmem:[%s168 + $0x88] sm:$0x3]
        %v187 = vld [vmem:[%s168 + $0x90] sm:$0xff]
        %v188 = vld [vmem:[%s168 + $0x98] sm:$0x3]
        %v189 = vld [vmem:[%s1] sm:$0xf]
        %v190 = vld [vmem:[%s1 + $0x4] sm:$0xf]
        %v191 = vld [vmem:[%s1 + $0x8] sm:$0xf]
        %v192 = vld [vmem:[%s1 + $0xc] sm:$0xf]
        %v193 = vld [vmem:[%s1 + $0x10] sm:$0xf]
        %v194 = vld [vmem:[%s1 + $0x14] sm:$0xf]
        %v195 = vld [vmem:[%s1 + $0x18] sm:$0xf]
        %v196 = vld [vmem:[%s1 + $0x1c] sm:$0xf]
        %v197 = vld [vmem:[%s1 + $0x20] sm:$0xf]
        %v198 = vld [vmem:[%s1 + $0x24] sm:$0xf]
        %v199 = vld [vmem:[%s1 + $0x28] sm:$0xf]
        %v200 = vld [vmem:[%s1 + $0x2c] sm:$0xf]
        %v201 = vld [vmem:[%s1 + $0x30] sm:$0xf]
        %v202 = vld [vmem:[%s1 + $0x34] sm:$0xf]
        %v203 = vld [vmem:[%s1 + $0x38] sm:$0xf]
        %v204 = vld [vmem:[%s1 + $0x3c] sm:$0xf]
        %v205 = vld [vmem:[%s1 + $0x40] sm:$0xf]
        %v206 = vld [vmem:[%s1 + $0x44] sm:$0xf]
        %v207 = vld [vmem:[%s1 + $0x48] sm:$0xf]
        %v208 = vld [vmem:[%s1 + $0x4c] sm:$0xf]
        %v209 = vld [vmem:[%s1 + $0x50] sm:$0xf]
        %v210 = vld [vmem:[%s1 + $0x54] sm:$0xf]
        %v211 = vld [vmem:[%s1 + $0x58] sm:$0xf]
        %v212 = vld [vmem:[%s1 + $0x5c] sm:$0xf]
        %v213 = vld [vmem:[%s1 + $0x60] sm:$0xf]
        %v214 = vld [vmem:[%s1 + $0x64] sm:$0xf]
        %v215 = vld [vmem:[%s1 + $0x68] sm:$0xf]
        %v216 = vld [vmem:[%s1 + $0x6c] sm:$0xf]
        %v217 = vld [vmem:[%s1 + $0x70] sm:$0xf]
        %v218 = vld [vmem:[%s1 + $0x74] sm:$0xf]
        %v219 = vld [vmem:[%s1 + $0x78] sm:$0xf]
        %v220 = vld [vmem:[%s1 + $0x7c] sm:$0xf]
        %v221 = vld [vmem:[%s1 + $0x80] sm:$0xf]
        %v222 = vld [vmem:[%s1 + $0x84] sm:$0xf]
        %v223 = vld [vmem:[%s1 + $0x88] sm:$0xf]
        %v224 = vld [vmem:[%s1 + $0x8c] sm:$0xf]
        %v225 = vld [vmem:[%s1 + $0x90] sm:$0xf]
        %v226 = vld [vmem:[%s1 + $0x94] sm:$0xf]
        %v227 = vld [vmem:[%s1 + $0x98] sm:$0xf]
        %v228 = vld [vmem:[%s1 + $0x9c] sm:$0xf]
        %v229 = vld [vmem:[%s1 + $0xa0] sm:$0xf]
        %v230 = vld [vmem:[%s1 + $0xa4] sm:$0xf]
        %v231 = vld [vmem:[%s1 + $0xa8] sm:$0xf]
        %v232 = vld [vmem:[%s1 + $0xac] sm:$0xf]
        %v233 = vld [vmem:[%s1 + $0xb0] sm:$0xf]
        %v234 = vld [vmem:[%s1 + $0xb4] sm:$0xf]
        %v235 = vld [vmem:[%s1 + $0xb8] sm:$0xf]
        %v236 = vld [vmem:[%s1 + $0xbc] sm:$0xf]
        %v237 = vld [vmem:[%s1 + $0xc0] sm:$0xf]
        %v238 = vld [vmem:[%s1 + $0xc4] sm:$0xf]
        %v239 = vld [vmem:[%s1 + $0xc8] sm:$0xf]
        %v240 = vld [vmem:[%s1 + $0xcc] sm:$0xf]
        %v241 = vld [vmem:[%s1 + $0xd0] sm:$0xf]
        %v242 = vld [vmem:[%s1 + $0xd4] sm:$0xf]
        %v243 = vld [vmem:[%s1 + $0xd8] sm:$0xf]
        %v244 = vld [vmem:[%s1 + $0xdc] sm:$0xf]
        %v245 = vld [vmem:[%s1 + $0xe0] sm:$0xf]
        %v246 = vld [vmem:[%s1 + $0xe4] sm:$0xf]
        %v247 = vld [vmem:[%s1 + $0xe8] sm:$0xf]
        %v248 = vld [vmem:[%s1 + $0xec] sm:$0xf]
        %v249 = vld [vmem:[%s1 + $0xf0] sm:$0xf]
        %v250 = vld [vmem:[%s1 + $0xf4] sm:$0xf]
        %v251 = vld [vmem:[%s1 + $0xf8] sm:$0xf]
        %v252 = vld [vmem:[%s1 + $0xfc] sm:$0xf]
        %v253 = vld [vmem:[%s1 + $0x100] sm:$0xf]
        %v254 = vld [vmem:[%s1 + $0x104] sm:$0xf]
        %v255 = vld [vmem:[%s1 + $0x108] sm:$0xf]
        %v256 = vld [vmem:[%s1 + $0x10c] sm:$0xf]
        %v257 = vld [vmem:[%s1 + $0x110] sm:$0xf]
        %v258 = vld [vmem:[%s1 + $0x114] sm:$0xf]
        %v259 = vld [vmem:[%s1 + $0x118] sm:$0xf]
        %v260 = vld [vmem:[%s1 + $0x11c] sm:$0xf]
        %v261 = vld [vmem:[%s1 + $0x120] sm:$0xf]
        %v262 = vld [vmem:[%s1 + $0x124] sm:$0xf]
        %v263 = vld [vmem:[%s1 + $0x128] sm:$0xf]
        %v264 = vld [vmem:[%s1 + $0x12c] sm:$0xf]
        %v265 = vld [vmem:[%s1 + $0x130] sm:$0xf]
        %v266 = vld [vmem:[%s1 + $0x134] sm:$0xf]
        %v267 = vld [vmem:[%s1 + $0x138] sm:$0xf]
        %v268 = vld [vmem:[%s1 + $0x13c] sm:$0xf]
        %v269 = vld [vmem:[%s1 + $0x140] sm:$0xf]
        %v270 = vld [vmem:[%s1 + $0x144] sm:$0xf]
        %v271 = vld [vmem:[%s1 + $0x148] sm:$0xf]
        %v272 = vld [vmem:[%s1 + $0x14c] sm:$0xf]
        %v273 = vld [vmem:[%s1 + $0x150] sm:$0xf]
        %v274 = vld [vmem:[%s1 + $0x154] sm:$0xf]
        %v275 = vld [vmem:[%s1 + $0x158] sm:$0xf]
        %v276 = vld [vmem:[%s1 + $0x15c] sm:$0xf]
        %v277 = vld [vmem:[%s1 + $0x160] sm:$0xf]
        %v278 = vld [vmem:[%s1 + $0x164] sm:$0xf]
        %v279 = vld [vmem:[%s1 + $0x168] sm:$0xf]
        %v280 = vld [vmem:[%s1 + $0x16c] sm:$0xf]
        %v281 = vld [vmem:[%s1 + $0x170] sm:$0xf]
        %v282 = vld [vmem:[%s1 + $0x174] sm:$0xf]
        %v283 = vld [vmem:[%s1 + $0x178] sm:$0xf]
        %v284 = vld [vmem:[%s1 + $0x17c] sm:$0xf]
        %v285 = vld [vmem:[%s1 + $0x180] sm:$0xf]
        %v286 = vld [vmem:[%s1 + $0x184] sm:$0xf]
        %v287 = vld [vmem:[%s1 + $0x188] sm:$0xf]
        %v288 = vld [vmem:[%s1 + $0x18c] sm:$0xf]
        %v289 = vld [vmem:[%s1 + $0x190] sm:$0xf]
        %v290 = vld [vmem:[%s1 + $0x194] sm:$0xf]
        %v291 = vld [vmem:[%s1 + $0x198] sm:$0xf]
        %v292 = vld [vmem:[%s1 + $0x19c] sm:$0xf]
        %v293 = vld [vmem:[%s1 + $0x1a0] sm:$0xf]
        %v294 = vld [vmem:[%s1 + $0x1a4] sm:$0xf]
        %v295 = vld [vmem:[%s1 + $0x1a8] sm:$0xf]
        %v296 = vld [vmem:[%s1 + $0x1ac] sm:$0xf]
        %v297 = vld [vmem:[%s1 + $0x1b0] sm:$0xf]
        %v298 = vld [vmem:[%s1 + $0x1b4] sm:$0xf]
        %v299 = vld [vmem:[%s1 + $0x1b8] sm:$0xf]
        %v300 = vld [vmem:[%s1 + $0x1bc] sm:$0xf]
        %v301 = vld [vmem:[%s1 + $0x1c0] sm:$0xf]
        %v302 = vld [vmem:[%s1 + $0x1c4] sm:$0xf]
        %v303 = vld [vmem:[%s1 + $0x1c8] sm:$0xf]
        %v304 = vld [vmem:[%s1 + $0x1cc] sm:$0xf]
        %v305 = vld [vmem:[%s1 + $0x1d0] sm:$0xf]
        %v306 = vld [vmem:[%s1 + $0x1d4] sm:$0xf]
        %v307 = vld [vmem:[%s1 + $0x1d8] sm:$0xf]
        %v308 = vld [vmem:[%s1 + $0x1dc] sm:$0xf]
        %v309 = vld [vmem:[%s1 + $0x1e0] sm:$0xf]
        %v310 = vld [vmem:[%s1 + $0x1e4] sm:$0xf]
        %v311 = vld [vmem:[%s1 + $0x1e8] sm:$0xf]
        %v312 = vld [vmem:[%s1 + $0x1ec] sm:$0xf]
        %v313 = vld [vmem:[%s1 + $0x1f0] sm:$0xf]
        %v314 = vld [vmem:[%s1 + $0x1f4] sm:$0xf]
        %v315 = vld [vmem:[%s1 + $0x1f8] sm:$0xf]
        %v316 = vld [vmem:[%s1 + $0x1fc] sm:$0xf]
        %v317 = vld [vmem:[%s1 + $0x200] sm:$0xf]
        %v318 = vld [vmem:[%s1 + $0x204] sm:$0xf]
        %v319 = vld [vmem:[%s1 + $0x208] sm:$0xf]
        %v320 = vld [vmem:[%s1 + $0x20c] sm:$0xf]
        %v321 = vld [vmem:[%s1 + $0x210] sm:$0xf]
        %v322 = vld [vmem:[%s1 + $0x214] sm:$0xf]
        %v323 = vld [vmem:[%s1 + $0x218] sm:$0xf]
        %v324 = vld [vmem:[%s1 + $0x21c] sm:$0xf]
        %v325 = vld [vmem:[%s1 + $0x220] sm:$0xf]
        %v326 = vld [vmem:[%s1 + $0x224] sm:$0xf]
        %v327 = vld [vmem:[%s1 + $0x228] sm:$0xf]
        %v328 = vld [vmem:[%s1 + $0x22c] sm:$0xf]
        %v329 = vld [vmem:[%s1 + $0x230] sm:$0xf]
        %v330 = vld [vmem:[%s1 + $0x234] sm:$0xf]
        %v331 = vld [vmem:[%s1 + $0x238] sm:$0xf]
        %v332 = vld [vmem:[%s1 + $0x23c] sm:$0xf]
        %v333 = vpack.c.bf16 %v171, %v169
        %v334 = vpack.c.bf16 %v175, %v173
        %v335 = vpack.c.bf16 %v179, %v177
        %v336 = vpack.c.bf16 %v183, %v181
        %vm353 = vcmask 1046528
        %v354 = vrot.slane %v169, 1
        %v355 = vrot.slane %v170, 1
        %v356 = vsel %vm353, %v354, %v355
        %v357 = vrot.slane %v171, 1
        %v358 = vrot.slane %v172, 1
        %v359 = vsel %vm353, %v357, %v358
        %v360 = vrot.slane %v173, 1
        %v361 = vrot.slane %v174, 1
        %v362 = vsel %vm353, %v360, %v361
        %v363 = vrot.slane %v175, 1
        %v364 = vrot.slane %v176, 1
        %v365 = vsel %vm353, %v363, %v364
        %v366 = vrot.slane %v177, 1
        %v367 = vrot.slane %v178, 1
        %v368 = vsel %vm353, %v366, %v367
        %v369 = vrot.slane %v179, 1
        %v370 = vrot.slane %v180, 1
        %v371 = vsel %vm353, %v369, %v370
        %v372 = vrot.slane %v181, 1
        %v373 = vrot.slane %v182, 1
        %v374 = vsel %vm353, %v372, %v373
        %v375 = vrot.slane %v183, 1
        %v376 = vrot.slane %v184, 1
        %v377 = vsel %vm353, %v375, %v376
        %v386 = vpack.c.bf16 %v359, %v356
        %v387 = vpack.c.bf16 %v365, %v362
        %v388 = vpack.c.bf16 %v371, %v368
        %v389 = vpack.c.bf16 %v377, %v374
        %v406 = vunpack.c.l.b16 %v205
        %v407 = vunpack.c.l.b16 %v206
        %v408 = vunpack.c.l.b16 %v207
        %v409 = vunpack.c.l.b16 %v208
        %v410 = vunpack.c.l.b16 %v209
        %v411 = vunpack.c.l.b16 %v210
        %v412 = vunpack.c.l.b16 %v211
        %v413 = vunpack.c.l.b16 %v212
        %v414 = vunpack.c.l.b16 %v213
        %v415 = vunpack.c.l.b16 %v214
        %v416 = vunpack.c.l.b16 %v215
        %v417 = vunpack.c.l.b16 %v216
        %v418 = vunpack.c.l.b16 %v217
        %v419 = vunpack.c.l.b16 %v218
        %v420 = vunpack.c.l.b16 %v219
        %v421 = vunpack.c.l.b16 %v220
        %v422 = vpack.c.b16 %v407, %v406
        %v423 = vpack.c.b16 %v409, %v408
        %v424 = vpack.c.b16 %v411, %v410
        %v425 = vpack.c.b16 %v413, %v412
        %v426 = vpack.c.b16 %v415, %v414
        %v427 = vpack.c.b16 %v417, %v416
        %v428 = vpack.c.b16 %v419, %v418
        %v429 = vpack.c.b16 %v421, %v420
        %438 = vmatpush.bf16.msra.mxu0 %v429
        %439 = vmatpush.bf16.msra.mxu0 %v428
        %440 = vmatpush.bf16.msra.mxu0 %v427
        %441 = vmatpush.bf16.msra.mxu0 %v426
        %442 = vmatpush.bf16.msra.mxu0 %v425
        %443 = vmatpush.bf16.msra.mxu0 %v424
        %444 = vmatpush.bf16.msra.mxu0 %v423
        %445 = vmatpush.bf16.msra.mxu0 %v422
        %446 = vmatmul.bf16.gmra.mxu0 %v386
        %v447 = vpop.f32.mrf.mxu0
        %v448 = vadd.f32 0.0, %v447
        %v449 = vpop.f32.mrf.mxu0
        %v450 = vadd.f32 0.0, %v449
        %451 = vmatmul.bf16.gmra.mxu0 %v387
        %v452 = vpop.f32.mrf.mxu0
        %v453 = vadd.f32 0.0, %v452
        %v454 = vpop.f32.mrf.mxu0
        %v455 = vadd.f32 0.0, %v454
        %456 = vmatmul.bf16.gmra.mxu0 %v388
        %v457 = vpop.f32.mrf.mxu0
        %v458 = vadd.f32 0.0, %v457
        %v459 = vpop.f32.mrf.mxu0
        %v460 = vadd.f32 0.0, %v459
        %461 = vmatmul.bf16.gmra.mxu0 %v389
        %v462 = vpop.f32.mrf.mxu0
        %v463 = vadd.f32 0.0, %v462
        %v464 = vpop.f32.mrf.mxu0
        %v465 = vadd.f32 0.0, %v464
        %466 = vdwg.mxu0
        %v483 = vunpack.c.l.b16 %v189
        %v484 = vunpack.c.l.b16 %v190
        %v485 = vunpack.c.l.b16 %v191
        %v486 = vunpack.c.l.b16 %v192
        %v487 = vunpack.c.l.b16 %v193
        %v488 = vunpack.c.l.b16 %v194
        %v489 = vunpack.c.l.b16 %v195
        %v490 = vunpack.c.l.b16 %v196
        %v491 = vunpack.c.l.b16 %v197
        %v492 = vunpack.c.l.b16 %v198
        %v493 = vunpack.c.l.b16 %v199
        %v494 = vunpack.c.l.b16 %v200
        %v495 = vunpack.c.l.b16 %v201
        %v496 = vunpack.c.l.b16 %v202
        %v497 = vunpack.c.l.b16 %v203
        %v498 = vunpack.c.l.b16 %v204
        %v499 = vpack.c.b16 %v484, %v483
        %v500 = vpack.c.b16 %v486, %v485
        %v501 = vpack.c.b16 %v488, %v487
        %v502 = vpack.c.b16 %v490, %v489
        %v503 = vpack.c.b16 %v492, %v491
        %v504 = vpack.c.b16 %v494, %v493
        %v505 = vpack.c.b16 %v496, %v495
        %v506 = vpack.c.b16 %v498, %v497
        %515 = vmatpush.bf16.msra.mxu0 %v506
        %516 = vmatpush.bf16.msra.mxu0 %v505
        %517 = vmatpush.bf16.msra.mxu0 %v504
        %518 = vmatpush.bf16.msra.mxu0 %v503
        %519 = vmatpush.bf16.msra.mxu0 %v502
        %520 = vmatpush.bf16.msra.mxu0 %v501
        %521 = vmatpush.bf16.msra.mxu0 %v500
        %522 = vmatpush.bf16.msra.mxu0 %v499
        %523 = vmatmul.bf16.gmra.mxu0 %v333
        %v524 = vpop.f32.mrf.mxu0
        %v525 = vadd.f32 %v448, %v524
        %v526 = vpop.f32.mrf.mxu0
        %v527 = vadd.f32 %v450, %v526
        %528 = vmatmul.bf16.gmra.mxu0 %v334
        %v529 = vpop.f32.mrf.mxu0
        %v530 = vadd.f32 %v453, %v529
        %v531 = vpop.f32.mrf.mxu0
        %v532 = vadd.f32 %v455, %v531
        %533 = vmatmul.bf16.gmra.mxu0 %v335
        %v534 = vpop.f32.mrf.mxu0
        %v535 = vadd.f32 %v458, %v534
        %v536 = vpop.f32.mrf.mxu0
        %v537 = vadd.f32 %v460, %v536
        %538 = vmatmul.bf16.gmra.mxu0 %v336
        %v539 = vpop.f32.mrf.mxu0
        %v540 = vadd.f32 %v463, %v539
        %v541 = vpop.f32.mrf.mxu0
        %v542 = vadd.f32 %v465, %v541
        %543 = vdwg.mxu0
        %vm544 = vcmask 1045504
        %v545 = vrot.slane %v169, 2
        %v546 = vrot.slane %v170, 2
        %v547 = vsel %vm544, %v545, %v546
        %v548 = vrot.slane %v171, 2
        %v549 = vrot.slane %v172, 2
        %v550 = vsel %vm544, %v548, %v549
        %v551 = vrot.slane %v173, 2
        %v552 = vrot.slane %v174, 2
        %v553 = vsel %vm544, %v551, %v552
        %v554 = vrot.slane %v175, 2
        %v555 = vrot.slane %v176, 2
        %v556 = vsel %vm544, %v554, %v555
        %v557 = vrot.slane %v177, 2
        %v558 = vrot.slane %v178, 2
        %v559 = vsel %vm544, %v557, %v558
        %v560 = vrot.slane %v179, 2
        %v561 = vrot.slane %v180, 2
        %v562 = vsel %vm544, %v560, %v561
        %v563 = vrot.slane %v181, 2
        %v564 = vrot.slane %v182, 2
        %v565 = vsel %vm544, %v563, %v564
        %v566 = vrot.slane %v183, 2
        %v567 = vrot.slane %v184, 2
        %v568 = vsel %vm544, %v566, %v567
        %v577 = vpack.c.bf16 %v550, %v547
        %v578 = vpack.c.bf16 %v556, %v553
        %v579 = vpack.c.bf16 %v562, %v559
        %v580 = vpack.c.bf16 %v568, %v565
        %v597 = vunpack.c.l.b16 %v221
        %v598 = vunpack.c.l.b16 %v222
        %v599 = vunpack.c.l.b16 %v223
        %v600 = vunpack.c.l.b16 %v224
        %v601 = vunpack.c.l.b16 %v225
        %v602 = vunpack.c.l.b16 %v226
        %v603 = vunpack.c.l.b16 %v227
        %v604 = vunpack.c.l.b16 %v228
        %v605 = vunpack.c.l.b16 %v229
        %v606 = vunpack.c.l.b16 %v230
        %v607 = vunpack.c.l.b16 %v231
        %v608 = vunpack.c.l.b16 %v232
        %v609 = vunpack.c.l.b16 %v233
        %v610 = vunpack.c.l.b16 %v234
        %v611 = vunpack.c.l.b16 %v235
        %v612 = vunpack.c.l.b16 %v236
        %v613 = vpack.c.b16 %v598, %v597
        %v614 = vpack.c.b16 %v600, %v599
        %v615 = vpack.c.b16 %v602, %v601
        %v616 = vpack.c.b16 %v604, %v603
        %v617 = vpack.c.b16 %v606, %v605
        %v618 = vpack.c.b16 %v608, %v607
        %v619 = vpack.c.b16 %v610, %v609
        %v620 = vpack.c.b16 %v612, %v611
        %629 = vmatpush.bf16.msra.mxu0 %v620
        %630 = vmatpush.bf16.msra.mxu0 %v619
        %631 = vmatpush.bf16.msra.mxu0 %v618
        %632 = vmatpush.bf16.msra.mxu0 %v617
        %633 = vmatpush.bf16.msra.mxu0 %v616
        %634 = vmatpush.bf16.msra.mxu0 %v615
        %635 = vmatpush.bf16.msra.mxu0 %v614
        %636 = vmatpush.bf16.msra.mxu0 %v613
        %637 = vmatmul.bf16.gmra.mxu0 %v577
        %v638 = vpop.f32.mrf.mxu0
        %v639 = vadd.f32 0.0, %v638
        %v640 = vpop.f32.mrf.mxu0
        %v641 = vadd.f32 0.0, %v640
        %642 = vmatmul.bf16.gmra.mxu0 %v578
        %v643 = vpop.f32.mrf.mxu0
        %v644 = vadd.f32 0.0, %v643
        %v645 = vpop.f32.mrf.mxu0
        %v646 = vadd.f32 0.0, %v645
        %647 = vmatmul.bf16.gmra.mxu0 %v579
        %v648 = vpop.f32.mrf.mxu0
        %v649 = vadd.f32 0.0, %v648
        %v650 = vpop.f32.mrf.mxu0
        %v651 = vadd.f32 0.0, %v650
        %652 = vmatmul.bf16.gmra.mxu0 %v580
        %v653 = vpop.f32.mrf.mxu0
        %v654 = vadd.f32 0.0, %v653
        %v655 = vpop.f32.mrf.mxu0
        %v656 = vadd.f32 0.0, %v655
        %657 = vdwg.mxu0
        %v658 = vadd.f32 %v525, %v639
        %v659 = vadd.f32 %v527, %v641
        %v660 = vadd.f32 %v530, %v644
        %v661 = vadd.f32 %v532, %v646
        %v662 = vadd.f32 %v535, %v649
        %v663 = vadd.f32 %v537, %v651
        %v664 = vadd.f32 %v540, %v654
        %v665 = vadd.f32 %v542, %v656
        %v666 = vpack.c.bf16 %v173, %v171
        %v667 = vpack.c.bf16 %v177, %v175
        %v668 = vpack.c.bf16 %v181, %v179
        %v669 = vpack.c.bf16 %v185, %v183
        %v686 = vunpack.c.l.b16 %v237
        %v687 = vunpack.c.l.b16 %v238
        %v688 = vunpack.c.l.b16 %v239
        %v689 = vunpack.c.l.b16 %v240
        %v690 = vunpack.c.l.b16 %v241
        %v691 = vunpack.c.l.b16 %v242
        %v692 = vunpack.c.l.b16 %v243
        %v693 = vunpack.c.l.b16 %v244
        %v694 = vunpack.c.l.b16 %v245
        %v695 = vunpack.c.l.b16 %v246
        %v696 = vunpack.c.l.b16 %v247
        %v697 = vunpack.c.l.b16 %v248
        %v698 = vunpack.c.l.b16 %v249
        %v699 = vunpack.c.l.b16 %v250
        %v700 = vunpack.c.l.b16 %v251
        %v701 = vunpack.c.l.b16 %v252
        %v702 = vpack.c.b16 %v687, %v686
        %v703 = vpack.c.b16 %v689, %v688
        %v704 = vpack.c.b16 %v691, %v690
        %v705 = vpack.c.b16 %v693, %v692
        %v706 = vpack.c.b16 %v695, %v694
        %v707 = vpack.c.b16 %v697, %v696
        %v708 = vpack.c.b16 %v699, %v698
        %v709 = vpack.c.b16 %v701, %v700
        %718 = vmatpush.bf16.msra.mxu0 %v709
        %719 = vmatpush.bf16.msra.mxu0 %v708
        %720 = vmatpush.bf16.msra.mxu0 %v707
        %721 = vmatpush.bf16.msra.mxu0 %v706
        %722 = vmatpush.bf16.msra.mxu0 %v705
        %723 = vmatpush.bf16.msra.mxu0 %v704
        %724 = vmatpush.bf16.msra.mxu0 %v703
        %725 = vmatpush.bf16.msra.mxu0 %v702
        %726 = vmatmul.bf16.gmra.mxu0 %v666
        %v727 = vpop.f32.mrf.mxu0
        %v728 = vadd.f32 0.0, %v727
        %v729 = vpop.f32.mrf.mxu0
        %v730 = vadd.f32 0.0, %v729
        %731 = vmatmul.bf16.gmra.mxu0 %v667
        %v732 = vpop.f32.mrf.mxu0
        %v733 = vadd.f32 0.0, %v732
        %v734 = vpop.f32.mrf.mxu0
        %v735 = vadd.f32 0.0, %v734
        %736 = vmatmul.bf16.gmra.mxu0 %v668
        %v737 = vpop.f32.mrf.mxu0
        %v738 = vadd.f32 0.0, %v737
        %v739 = vpop.f32.mrf.mxu0
        %v740 = vadd.f32 0.0, %v739
        %741 = vmatmul.bf16.gmra.mxu0 %v669
        %v742 = vpop.f32.mrf.mxu0
        %v743 = vadd.f32 0.0, %v742
        %v744 = vpop.f32.mrf.mxu0
        %v745 = vadd.f32 0.0, %v744
        %746 = vdwg.mxu0
        %v747 = vadd.f32 %v658, %v728
        %v748 = vadd.f32 %v659, %v730
        %v749 = vadd.f32 %v660, %v733
        %v750 = vadd.f32 %v661, %v735
        %v751 = vadd.f32 %v662, %v738
        %v752 = vadd.f32 %v663, %v740
        %v753 = vadd.f32 %v664, %v743
        %v754 = vadd.f32 %v665, %v745
        %v757 = vrot.slane %v185, 1
        %v758 = vrot.slane %v186, 1
        %v759 = vsel %vm353, %v757, %v758
        %v761 = vpack.c.bf16 %v362, %v359
        %v762 = vpack.c.bf16 %v368, %v365
        %v763 = vpack.c.bf16 %v374, %v371
        %v764 = vpack.c.bf16 %v759, %v377
        %v781 = vunpack.c.l.b16 %v253
        %v782 = vunpack.c.l.b16 %v254
        %v783 = vunpack.c.l.b16 %v255
        %v784 = vunpack.c.l.b16 %v256
        %v785 = vunpack.c.l.b16 %v257
        %v786 = vunpack.c.l.b16 %v258
        %v787 = vunpack.c.l.b16 %v259
        %v788 = vunpack.c.l.b16 %v260
        %v789 = vunpack.c.l.b16 %v261
        %v790 = vunpack.c.l.b16 %v262
        %v791 = vunpack.c.l.b16 %v263
        %v792 = vunpack.c.l.b16 %v264
        %v793 = vunpack.c.l.b16 %v265
        %v794 = vunpack.c.l.b16 %v266
        %v795 = vunpack.c.l.b16 %v267
        %v796 = vunpack.c.l.b16 %v268
        %v797 = vpack.c.b16 %v782, %v781
        %v798 = vpack.c.b16 %v784, %v783
        %v799 = vpack.c.b16 %v786, %v785
        %v800 = vpack.c.b16 %v788, %v787
        %v801 = vpack.c.b16 %v790, %v789
        %v802 = vpack.c.b16 %v792, %v791
        %v803 = vpack.c.b16 %v794, %v793
        %v804 = vpack.c.b16 %v796, %v795
        %813 = vmatpush.bf16.msra.mxu0 %v804
        %814 = vmatpush.bf16.msra.mxu0 %v803
        %815 = vmatpush.bf16.msra.mxu0 %v802
        %816 = vmatpush.bf16.msra.mxu0 %v801
        %817 = vmatpush.bf16.msra.mxu0 %v800
        %818 = vmatpush.bf16.msra.mxu0 %v799
        %819 = vmatpush.bf16.msra.mxu0 %v798
        %820 = vmatpush.bf16.msra.mxu0 %v797
        %821 = vmatmul.bf16.gmra.mxu0 %v761
        %v822 = vpop.f32.mrf.mxu0
        %v823 = vadd.f32 0.0, %v822
        %v824 = vpop.f32.mrf.mxu0
        %v825 = vadd.f32 0.0, %v824
        %826 = vmatmul.bf16.gmra.mxu0 %v762
        %v827 = vpop.f32.mrf.mxu0
        %v828 = vadd.f32 0.0, %v827
        %v829 = vpop.f32.mrf.mxu0
        %v830 = vadd.f32 0.0, %v829
        %831 = vmatmul.bf16.gmra.mxu0 %v763
        %v832 = vpop.f32.mrf.mxu0
        %v833 = vadd.f32 0.0, %v832
        %v834 = vpop.f32.mrf.mxu0
        %v835 = vadd.f32 0.0, %v834
        %836 = vmatmul.bf16.gmra.mxu0 %v764
        %v837 = vpop.f32.mrf.mxu0
        %v838 = vadd.f32 0.0, %v837
        %v839 = vpop.f32.mrf.mxu0
        %v840 = vadd.f32 0.0, %v839
        %841 = vdwg.mxu0
        %v842 = vadd.f32 %v747, %v823
        %v843 = vadd.f32 %v748, %v825
        %v844 = vadd.f32 %v749, %v828
        %v845 = vadd.f32 %v750, %v830
        %v846 = vadd.f32 %v751, %v833
        %v847 = vadd.f32 %v752, %v835
        %v848 = vadd.f32 %v753, %v838
        %v849 = vadd.f32 %v754, %v840
        %v850 = vrot.slane %v185, 2
        %v851 = vrot.slane %v186, 2
        %v852 = vsel %vm544, %v850, %v851
        %v854 = vpack.c.bf16 %v553, %v550
        %v855 = vpack.c.bf16 %v559, %v556
        %v856 = vpack.c.bf16 %v565, %v562
        %v857 = vpack.c.bf16 %v852, %v568
        %v874 = vunpack.c.l.b16 %v269
        %v875 = vunpack.c.l.b16 %v270
        %v876 = vunpack.c.l.b16 %v271
        %v877 = vunpack.c.l.b16 %v272
        %v878 = vunpack.c.l.b16 %v273
        %v879 = vunpack.c.l.b16 %v274
        %v880 = vunpack.c.l.b16 %v275
        %v881 = vunpack.c.l.b16 %v276
        %v882 = vunpack.c.l.b16 %v277
        %v883 = vunpack.c.l.b16 %v278
        %v884 = vunpack.c.l.b16 %v279
        %v885 = vunpack.c.l.b16 %v280
        %v886 = vunpack.c.l.b16 %v281
        %v887 = vunpack.c.l.b16 %v282
        %v888 = vunpack.c.l.b16 %v283
        %v889 = vunpack.c.l.b16 %v284
        %v890 = vpack.c.b16 %v875, %v874
        %v891 = vpack.c.b16 %v877, %v876
        %v892 = vpack.c.b16 %v879, %v878
        %v893 = vpack.c.b16 %v881, %v880
        %v894 = vpack.c.b16 %v883, %v882
        %v895 = vpack.c.b16 %v885, %v884
        %v896 = vpack.c.b16 %v887, %v886
        %v897 = vpack.c.b16 %v889, %v888
        %906 = vmatpush.bf16.msra.mxu0 %v897
        %907 = vmatpush.bf16.msra.mxu0 %v896
        %908 = vmatpush.bf16.msra.mxu0 %v895
        %909 = vmatpush.bf16.msra.mxu0 %v894
        %910 = vmatpush.bf16.msra.mxu0 %v893
        %911 = vmatpush.bf16.msra.mxu0 %v892
        %912 = vmatpush.bf16.msra.mxu0 %v891
        %913 = vmatpush.bf16.msra.mxu0 %v890
        %914 = vmatmul.bf16.gmra.mxu0 %v854
        %v915 = vpop.f32.mrf.mxu0
        %v916 = vadd.f32 0.0, %v915
        %v917 = vpop.f32.mrf.mxu0
        %v918 = vadd.f32 0.0, %v917
        %919 = vmatmul.bf16.gmra.mxu0 %v855
        %v920 = vpop.f32.mrf.mxu0
        %v921 = vadd.f32 0.0, %v920
        %v922 = vpop.f32.mrf.mxu0
        %v923 = vadd.f32 0.0, %v922
        %924 = vmatmul.bf16.gmra.mxu0 %v856
        %v925 = vpop.f32.mrf.mxu0
        %v926 = vadd.f32 0.0, %v925
        %v927 = vpop.f32.mrf.mxu0
        %v928 = vadd.f32 0.0, %v927
        %929 = vmatmul.bf16.gmra.mxu0 %v857
        %v930 = vpop.f32.mrf.mxu0
        %v931 = vadd.f32 0.0, %v930
        %v932 = vpop.f32.mrf.mxu0
        %v933 = vadd.f32 0.0, %v932
        %934 = vdwg.mxu0
        %v935 = vadd.f32 %v842, %v916
        %v936 = vadd.f32 %v843, %v918
        %v937 = vadd.f32 %v844, %v921
        %v938 = vadd.f32 %v845, %v923
        %v939 = vadd.f32 %v846, %v926
        %v940 = vadd.f32 %v847, %v928
        %v941 = vadd.f32 %v848, %v931
        %v942 = vadd.f32 %v849, %v933
        %v943 = vpack.c.bf16 %v187, %v185
        %v960 = vunpack.c.l.b16 %v285
        %v961 = vunpack.c.l.b16 %v286
        %v962 = vunpack.c.l.b16 %v287
        %v963 = vunpack.c.l.b16 %v288
        %v964 = vunpack.c.l.b16 %v289
        %v965 = vunpack.c.l.b16 %v290
        %v966 = vunpack.c.l.b16 %v291
        %v967 = vunpack.c.l.b16 %v292
        %v968 = vunpack.c.l.b16 %v293
        %v969 = vunpack.c.l.b16 %v294
        %v970 = vunpack.c.l.b16 %v295
        %v971 = vunpack.c.l.b16 %v296
        %v972 = vunpack.c.l.b16 %v297
        %v973 = vunpack.c.l.b16 %v298
        %v974 = vunpack.c.l.b16 %v299
        %v975 = vunpack.c.l.b16 %v300
        %v976 = vpack.c.b16 %v961, %v960
        %v977 = vpack.c.b16 %v963, %v962
        %v978 = vpack.c.b16 %v965, %v964
        %v979 = vpack.c.b16 %v967, %v966
        %v980 = vpack.c.b16 %v969, %v968
        %v981 = vpack.c.b16 %v971, %v970
        %v982 = vpack.c.b16 %v973, %v972
        %v983 = vpack.c.b16 %v975, %v974
        %992 = vmatpush.bf16.msra.mxu0 %v983
        %993 = vmatpush.bf16.msra.mxu0 %v982
        %994 = vmatpush.bf16.msra.mxu0 %v981
        %995 = vmatpush.bf16.msra.mxu0 %v980
        %996 = vmatpush.bf16.msra.mxu0 %v979
        %997 = vmatpush.bf16.msra.mxu0 %v978
        %998 = vmatpush.bf16.msra.mxu0 %v977
        %999 = vmatpush.bf16.msra.mxu0 %v976
        %1000 = vmatmul.bf16.gmra.mxu0 %v334
        %v1001 = vpop.f32.mrf.mxu0
        %v1002 = vadd.f32 0.0, %v1001
        %v1003 = vpop.f32.mrf.mxu0
        %v1004 = vadd.f32 0.0, %v1003
        %1005 = vmatmul.bf16.gmra.mxu0 %v335
        %v1006 = vpop.f32.mrf.mxu0
        %v1007 = vadd.f32 0.0, %v1006
        %v1008 = vpop.f32.mrf.mxu0
        %v1009 = vadd.f32 0.0, %v1008
        %1010 = vmatmul.bf16.gmra.mxu0 %v336
        %v1011 = vpop.f32.mrf.mxu0
        %v1012 = vadd.f32 0.0, %v1011
        %v1013 = vpop.f32.mrf.mxu0
        %v1014 = vadd.f32 0.0, %v1013
        %1015 = vmatmul.bf16.gmra.mxu0 %v943
        %v1016 = vpop.f32.mrf.mxu0
        %v1017 = vadd.f32 0.0, %v1016
        %v1018 = vpop.f32.mrf.mxu0
        %v1019 = vadd.f32 0.0, %v1018
        %1020 = vdwg.mxu0
        %v1021 = vadd.f32 %v935, %v1002
        %v1022 = vadd.f32 %v936, %v1004
        %v1023 = vadd.f32 %v937, %v1007
        %v1024 = vadd.f32 %v938, %v1009
        %v1025 = vadd.f32 %v939, %v1012
        %v1026 = vadd.f32 %v940, %v1014
        %v1027 = vadd.f32 %v941, %v1017
        %v1028 = vadd.f32 %v942, %v1019
        %v1031 = vrot.slane %v187, 1
        %v1032 = vrot.slane %v188, 1
        %v1033 = vsel %vm353, %v1031, %v1032
        %v1035 = vpack.c.bf16 %v1033, %v759
        %v1052 = vunpack.c.l.b16 %v301
        %v1053 = vunpack.c.l.b16 %v302
        %v1054 = vunpack.c.l.b16 %v303
        %v1055 = vunpack.c.l.b16 %v304
        %v1056 = vunpack.c.l.b16 %v305
        %v1057 = vunpack.c.l.b16 %v306
        %v1058 = vunpack.c.l.b16 %v307
        %v1059 = vunpack.c.l.b16 %v308
        %v1060 = vunpack.c.l.b16 %v309
        %v1061 = vunpack.c.l.b16 %v310
        %v1062 = vunpack.c.l.b16 %v311
        %v1063 = vunpack.c.l.b16 %v312
        %v1064 = vunpack.c.l.b16 %v313
        %v1065 = vunpack.c.l.b16 %v314
        %v1066 = vunpack.c.l.b16 %v315
        %v1067 = vunpack.c.l.b16 %v316
        %v1068 = vpack.c.b16 %v1053, %v1052
        %v1069 = vpack.c.b16 %v1055, %v1054
        %v1070 = vpack.c.b16 %v1057, %v1056
        %v1071 = vpack.c.b16 %v1059, %v1058
        %v1072 = vpack.c.b16 %v1061, %v1060
        %v1073 = vpack.c.b16 %v1063, %v1062
        %v1074 = vpack.c.b16 %v1065, %v1064
        %v1075 = vpack.c.b16 %v1067, %v1066
        %1084 = vmatpush.bf16.msra.mxu0 %v1075
        %1085 = vmatpush.bf16.msra.mxu0 %v1074
        %1086 = vmatpush.bf16.msra.mxu0 %v1073
        %1087 = vmatpush.bf16.msra.mxu0 %v1072
        %1088 = vmatpush.bf16.msra.mxu0 %v1071
        %1089 = vmatpush.bf16.msra.mxu0 %v1070
        %1090 = vmatpush.bf16.msra.mxu0 %v1069
        %1091 = vmatpush.bf16.msra.mxu0 %v1068
        %1092 = vmatmul.bf16.gmra.mxu0 %v387
        %v1093 = vpop.f32.mrf.mxu0
        %v1094 = vadd.f32 0.0, %v1093
        %v1095 = vpop.f32.mrf.mxu0
        %v1096 = vadd.f32 0.0, %v1095
        %1097 = vmatmul.bf16.gmra.mxu0 %v388
        %v1098 = vpop.f32.mrf.mxu0
        %v1099 = vadd.f32 0.0, %v1098
        %v1100 = vpop.f32.mrf.mxu0
        %v1101 = vadd.f32 0.0, %v1100
        %1102 = vmatmul.bf16.gmra.mxu0 %v389
        %v1103 = vpop.f32.mrf.mxu0
        %v1104 = vadd.f32 0.0, %v1103
        %v1105 = vpop.f32.mrf.mxu0
        %v1106 = vadd.f32 0.0, %v1105
        %1107 = vmatmul.bf16.gmra.mxu0 %v1035
        %v1108 = vpop.f32.mrf.mxu0
        %v1109 = vadd.f32 0.0, %v1108
        %v1110 = vpop.f32.mrf.mxu0
        %v1111 = vadd.f32 0.0, %v1110
        %1112 = vdwg.mxu0
        %v1113 = vadd.f32 %v1021, %v1094
        %v1114 = vadd.f32 %v1022, %v1096
        %v1115 = vadd.f32 %v1023, %v1099
        %v1116 = vadd.f32 %v1024, %v1101
        %v1117 = vadd.f32 %v1025, %v1104
        %v1118 = vadd.f32 %v1026, %v1106
        %v1119 = vadd.f32 %v1027, %v1109
        %v1120 = vadd.f32 %v1028, %v1111
        %v1121 = vrot.slane %v187, 2
        %v1122 = vrot.slane %v188, 2
        %v1123 = vsel %vm544, %v1121, %v1122
        %v1125 = vpack.c.bf16 %v1123, %v852
        %v1142 = vunpack.c.l.b16 %v317
        %v1143 = vunpack.c.l.b16 %v318
        %v1144 = vunpack.c.l.b16 %v319
        %v1145 = vunpack.c.l.b16 %v320
        %v1146 = vunpack.c.l.b16 %v321
        %v1147 = vunpack.c.l.b16 %v322
        %v1148 = vunpack.c.l.b16 %v323
        %v1149 = vunpack.c.l.b16 %v324
        %v1150 = vunpack.c.l.b16 %v325
        %v1151 = vunpack.c.l.b16 %v326
        %v1152 = vunpack.c.l.b16 %v327
        %v1153 = vunpack.c.l.b16 %v328
        %v1154 = vunpack.c.l.b16 %v329
        %v1155 = vunpack.c.l.b16 %v330
        %v1156 = vunpack.c.l.b16 %v331
        %v1157 = vunpack.c.l.b16 %v332
        %v1158 = vpack.c.b16 %v1143, %v1142
        %v1159 = vpack.c.b16 %v1145, %v1144
        %v1160 = vpack.c.b16 %v1147, %v1146
        %v1161 = vpack.c.b16 %v1149, %v1148
        %v1162 = vpack.c.b16 %v1151, %v1150
        %v1163 = vpack.c.b16 %v1153, %v1152
        %v1164 = vpack.c.b16 %v1155, %v1154
        %v1165 = vpack.c.b16 %v1157, %v1156
        %1174 = vmatpush.bf16.msra.mxu0 %v1165
        %1175 = vmatpush.bf16.msra.mxu0 %v1164
        %1176 = vmatpush.bf16.msra.mxu0 %v1163
        %1177 = vmatpush.bf16.msra.mxu0 %v1162
        %1178 = vmatpush.bf16.msra.mxu0 %v1161
        %1179 = vmatpush.bf16.msra.mxu0 %v1160
        %1180 = vmatpush.bf16.msra.mxu0 %v1159
        %1181 = vmatpush.bf16.msra.mxu0 %v1158
        %1182 = vmatmul.bf16.gmra.mxu0 %v578
        %v1183 = vpop.f32.mrf.mxu0
        %v1184 = vadd.f32 0.0, %v1183
        %v1185 = vpop.f32.mrf.mxu0
        %v1186 = vadd.f32 0.0, %v1185
        %1187 = vmatmul.bf16.gmra.mxu0 %v579
        %v1188 = vpop.f32.mrf.mxu0
        %v1189 = vadd.f32 0.0, %v1188
        %v1190 = vpop.f32.mrf.mxu0
        %v1191 = vadd.f32 0.0, %v1190
        %1192 = vmatmul.bf16.gmra.mxu0 %v580
        %v1193 = vpop.f32.mrf.mxu0
        %v1194 = vadd.f32 0.0, %v1193
        %v1195 = vpop.f32.mrf.mxu0
        %v1196 = vadd.f32 0.0, %v1195
        %1197 = vmatmul.bf16.gmra.mxu0 %v1125
        %v1198 = vpop.f32.mrf.mxu0
        %v1199 = vadd.f32 0.0, %v1198
        %v1200 = vpop.f32.mrf.mxu0
        %v1201 = vadd.f32 0.0, %v1200
        %1202 = vdwg.mxu0
        %v1203 = vadd.f32 %v1113, %v1184
        %v1204 = vadd.f32 %v1114, %v1186
        %v1205 = vadd.f32 %v1115, %v1189
        %v1206 = vadd.f32 %v1116, %v1191
        %v1207 = vadd.f32 %v1117, %v1194
        %v1208 = vadd.f32 %v1118, %v1196
        %v1209 = vadd.f32 %v1119, %v1199
        %v1210 = vadd.f32 %v1120, %v1201
        %v1211 = vld [vmem:[%s2] sm:$0x1]
        %v1213 = vperm.slane %v1211, 0
        %v1215 = vadd.f32 %v1203, %v1213
        %v1216 = vadd.f32 %v1204, %v1213
        %v1217 = vadd.f32 %v1205, %v1213
        %v1218 = vadd.f32 %v1206, %v1213
        %v1219 = vadd.f32 %v1207, %v1213
        %v1220 = vadd.f32 %v1208, %v1213
        %v1221 = vadd.f32 %v1209, %v1213
        %v1222 = vadd.f32 %v1210, %v1213
        %1223 = vst [vmem:[%s163] sm:$0xff] %v1215
        %1224 = vst [vmem:[%s163 + $0x8] sm:$0xff] %v1216
        %1225 = vst [vmem:[%s163 + $0x10] sm:$0xff] %v1217
        %1226 = vst [vmem:[%s163 + $0x18] sm:$0xff] %v1218
        %1227 = vst [vmem:[%s163 + $0x20] sm:$0xff] %v1219
        %1228 = vst [vmem:[%s163 + $0x28] sm:$0xff] %v1220
        %1229 = vst [vmem:[%s163 + $0x30] sm:$0xff] %v1221
        %1230 = vst [vmem:[%s163 + $0x38] sm:$0xff] %v1222
        %s1231 = sand.u32 %s93, 1
        %s1232 = scalar_lea.sflag [#allocation3], %s1231
        %s1233 = sand.u32 %s93, 1
        %s1234 = smul.addr %s1233, 64
        %s1235 = scalar_lea.vmem [#allocation2], %s1234
        // Predicated region
        $region33: #{pyramid_forward.11} parent=31 // pred_check
          %p1236 = pneg %p103
        $region34: #{pyramid_forward.11} parent=31 // pred_check_branch
          %1238 = sbr.rel (%p1236) target = $region36
        $region35: #{pyramid_forward.11} parent=31 // pred_region
          %1240 = vsyncadd %s1232, 0
          %s1241 = smul.addr %s17, 8
          %s1242 = smul.addr %s1241, 8
          %s1243 = scalar_lea.hbm %s3, %s1242
          %s1244 = sshll.u32 %s1235, 4
          %s1245 = int_to_ptr.vmem [resolvable:$true] %s1244
          %s1246 = sshll.u32 %s1243, 4
          %s1247 = int_to_ptr.hbm [resolvable:$true] %s1246
          %1252 = dma.vmem_to_hbm [thread:$0]  %s1245, 1024, %s1247, %s1232, 128, 128, 8
        $region36: #{pyramid_forward.11} parent=31 // pred_fallthru
          _
      $region32: #{pyramid_forward.11} parent=5 // pred_fallthru
        _
      %p1253 = scmp.le.s32.totalorder 2, %s12
      // Predicated region
      $region37: #{pyramid_forward.11} parent=5 // pred_check
        %p1254 = pneg %p1253
      $region38: #{pyramid_forward.11} parent=5 // pred_check_branch
        %1256 = sbr.rel (%p1254) target = $region40
      $region39: #{pyramid_forward.11} parent=5 // pred_region
        %s1257 = ssub.s32 %s12, 2
        // Predicated region
        $region41: #{pyramid_forward.11} parent=39 // pred_check
          %p1258 = pneg %p109
        $region42: #{pyramid_forward.11} parent=39 // pred_check_branch
          %1260 = sbr.rel (%p1258) target = $region44
        $region43: #{pyramid_forward.11} parent=39 // pred_region
          %s1261 = sand.u32 %s94, 1
          %s1262 = scalar_lea.sflag [#allocation3], %s1261
          %s1263 = sand.u32 %s94, 1
          %s1264 = smul.addr %s1263, 64
          %s1265 = scalar_lea.vmem [#allocation2], %s1264
          %1267 = dma.done %s1262, 1024
        $region44: #{pyramid_forward.11} parent=39 // pred_fallthru
          _
      $region40: #{pyramid_forward.11} parent=5 // pred_fallthru
        _
    $region6: #{pyramid_forward.11} parent=1 // loop_footer
      %s16 = sadd.s32 1, %s12
    $region7: #{pyramid_forward.11} parent=1 // loop_footer_branch
      %11 = sbr.rel target = $region3
    $region8: #{pyramid_forward.11} parent=1 // loop_exit
      _
    %1268 = vsyncpa [#allocation3], 1
    %s1269 = scalar_lea.sflag [#allocation3], 1
    %1270 = vsyncpa %s1269, 1

// kernel: pyramid_forward.9
$region0: #{pyramid_forward.9}
  #allocation0 [shape = 'u32[]', space=smem, size = 0x4, offset = 0x4, fixed_abs, tag = 'smem constant byte address 0x4 - core index']
  #allocation1 [shape = 'u32[72,128]{1,0:T(1,128)}', space=vmem, size = 0x9000, scoped, tag = 'internal scratch']
  %s0 = inlined_call_operand.vmem [shape: f32[2,6,6,128], index: 0, kind: input, shape index: {}]
  %s1 = inlined_call_operand.vmem [shape: bf16[9,128,128], index: 1, kind: input, shape index: {}]
  %s2 = inlined_call_operand.vmem [shape: f32[1,128], index: 2, kind: input, shape index: {}]
  %s3 = inlined_call_operand.hbm [shape: f32[2,4,4,128], index: 3, kind: output, shape index: {}]
  %s4 = sld [smem:[#allocation0]]
  $region45: #{pyramid_forward.9} parent=0
    _
  %s6 = ssub.s32 1, %s4
  %s7 = scalar_select 0, %s6, %s4
  $region1: #{pyramid_forward.9} parent=0
    #allocation2 [shape = 'u8[16384]{0}', space=vmem, size = 0x4000, scoped, tag = 'output window, operand 0']
    #allocation3 [shape = 's32[2]{0}', space=sflag, size = 0x8, scoped, tag = 'scoped memory for pyramid_forward.9']
    %8 = vsyncpa [#allocation3], 0
    %s9 = scalar_lea.sflag [#allocation3], 1
    %10 = vsyncpa %s9, 0
    loop: start=0, step=1, limit=4
    $region2: #{pyramid_forward.9} parent=1 // loop_pre_header
      _
    $region3: #{pyramid_forward.9} parent=1 // loop_header
      %s12 = sphi 0, %s16
      %p13 = scmp.ge.s32.totalorder %s12, 4
      %s22 = sphi 0, %s24
      %s25 = sphi 0, %s22
      %s26 = sphi 0, %s25
      %s42 = sphi 0, %s26
      %s46 = sphi 0, %s46
      %s48 = sphi 0, %s46
      %s49 = sphi 0, %s48
      %s63 = sphi 0, %s49
      %s67 = sphi 0, %s67
      %s69 = sphi 0, %s67
      %s70 = sphi 0, %s69
      %s84 = sphi 0, %s70
      %s90 = sphi 0, %s92
      %s93 = sphi 0, %s90
      %s94 = sphi 0, %s93
      %s110 = sphi 0, %s94
    $region4: #{pyramid_forward.9} parent=1 // loop_header_branch
      %15 = sbr.rel (%p13) target = $region8
    $region5: #{pyramid_forward.9} parent=1 // loop_body
      %s17 = ssub.s32 %s12, 1
      %s18 = ssub.s32 %s12, 2
      %s19 = sadd.s32 %s12, 1
      %s20 = ssub.s32 %s12, %s19
      %p21 = scmp.eq.s32.totalorder %s20, 0
      %s23 = sadd.s32 %s22, 1
      %s24 = scalar_select %p21, %s22, %s23
      %p27 = pneg %p21
      %p28 = scmp.eq.s32.totalorder %s12, 1
      %p29 = por %p27, %p28
      %p30 = scmp.ne.s32.totalorder %s22, %s25
      %p31 = scmp.eq.s32.totalorder %s12, 0
      %p32 = por %p30, %p31
      %p33 = scmp.ne.s32.totalorder %s22, %s25
      %p34 = scmp.eq.s32.totalorder %s17, 1
      %p35 = por %p33, %p34
      %p36 = scmp.ne.s32.totalorder %s25, %s26
      %p37 = scmp.eq.s32.totalorder %s17, 0
      %p38 = por %p36, %p37
      %p39 = scmp.ne.s32.totalorder %s25, %s26
      %p40 = scmp.eq.s32.totalorder %s18, 1
      %p41 = por %p39, %p40
      %p43 = scmp.ne.s32.totalorder %s26, %s42
      %p44 = scmp.eq.s32.totalorder %s18, 0
      %p45 = por %p43, %p44
      %s47 = sadd.s32 %s46, 1
      %p50 = scmp.eq.s32.totalorder %s12, 1
      %p51 = scmp.ne.s32.totalorder %s46, %s48
      %p52 = scmp.eq.s32.totalorder %s12, 0
      %p53 = por %p51, %p52
      %p54 = scmp.ne.s32.totalorder %s46, %s48
      %p55 = scmp.eq.s32.totalorder %s17, 1
      %p56 = por %p54, %p55
      %p57 = scmp.ne.s32.totalorder %s48, %s49
      %p58 = scmp.eq.s32.totalorder %s17, 0
      %p59 = por %p57, %p58
      %p60 = scmp.ne.s32.totalorder %s48, %s49
      %p61 = scmp.eq.s32.totalorder %s18, 1
      %p62 = por %p60, %p61
      %p64 = scmp.ne.s32.totalorder %s49, %s63
      %p65 = scmp.eq.s32.totalorder %s18, 0
      %p66 = por %p64, %p65
      %s68 = sadd.s32 %s67, 1
      %p71 = scmp.eq.s32.totalorder %s12, 1
      %p72 = scmp.ne.s32.totalorder %s67, %s69
      %p73 = scmp.eq.s32.totalorder %s12, 0
      %p74 = por %p72, %p73
      %p75 = scmp.ne.s32.totalorder %s67, %s69
      %p76 = scmp.eq.s32.totalorder %s17, 1
      %p77 = por %p75, %p76
      %p78 = scmp.ne.s32.totalorder %s69, %s70
      %p79 = scmp.eq.s32.totalorder %s17, 0
      %p80 = por %p78, %p79
      %p81 = scmp.ne.s32.totalorder %s69, %s70
      %p82 = scmp.eq.s32.totalorder %s18, 1
      %p83 = por %p81, %p82
      %p85 = scmp.ne.s32.totalorder %s70, %s84
      %p86 = scmp.eq.s32.totalorder %s18, 0
      %p87 = por %p85, %p86
      %s88 = ssub.s32 %s12, %s19
      %p89 = scmp.eq.s32.totalorder %s88, 0
      %s91 = sadd.s32 %s90, 1
      %s92 = scalar_select %p89, %s90, %s91
      %p95 = pneg %p89
      %p96 = scmp.eq.s32.totalorder %s12, 1
      %p97 = por %p95, %p96
      %p98 = scmp.ne.s32.totalorder %s90, %s93
      %p99 = scmp.eq.s32.totalorder %s12, 0
      %p100 = por %p98, %p99
      %p101 = scmp.ne.s32.totalorder %s90, %s93
      %p102 = scmp.eq.s32.totalorder %s17, 1
      %p103 = por %p101, %p102
      %p104 = scmp.ne.s32.totalorder %s93, %s94
      %p105 = scmp.eq.s32.totalorder %s17, 0
      %p106 = por %p104, %p105
      %p107 = scmp.ne.s32.totalorder %s93, %s94
      %p108 = scmp.eq.s32.totalorder %s18, 1
      %p109 = por %p107, %p108
      %p111 = scmp.ne.s32.totalorder %s94, %s110
      %p112 = scmp.eq.s32.totalorder %s18, 0
      %p113 = por %p111, %p112
      %p114 = scmp.le.s32.totalorder 1, %s12
      %p115 = scmp.lt.s32.totalorder %s12, 3
      %p116 = pnand %p114, %p115
      %p117 = pneg %p116
      // Predicated region
      $region9: #{pyramid_forward.9} parent=5 // pred_check
        _
      $region10: #{pyramid_forward.9} parent=5 // pred_check_branch
        %119 = sbr.rel (%p116) target = $region12
      $region11: #{pyramid_forward.9} parent=5 // pred_region
        %s120 = ssub.s32 %s12, 1
        // Predicated region
        $region13: #{pyramid_forward.9} parent=11 // pred_check
          %p121 = pneg %p59
        $region14: #{pyramid_forward.9} parent=11 // pred_check_branch
          %123 = sbr.rel (%p121) target = $region16
        $region15: #{pyramid_forward.9} parent=11 // pred_region
          _
        $region16: #{pyramid_forward.9} parent=11 // pred_fallthru
          _
        // Predicated region
        $region17: #{pyramid_forward.9} parent=11 // pred_check
          %p124 = pneg %p80
        $region18: #{pyramid_forward.9} parent=11 // pred_check_branch
          %126 = sbr.rel (%p124) target = $region20
        $region19: #{pyramid_forward.9} parent=11 // pred_region
          _
        $region20: #{pyramid_forward.9} parent=11 // pred_fallthru
          _
      $region12: #{pyramid_forward.9} parent=5 // pred_fallthru
        _
      %p127 = scmp.lt.s32.totalorder %s12, 2
      // Predicated region
      $region21: #{pyramid_forward.9} parent=5 // pred_check
        %p128 = pneg %p127
      $region22: #{pyramid_forward.9} parent=5 // pred_check_branch
        %130 = sbr.rel (%p128) target = $region24
      $region23: #{pyramid_forward.9} parent=5 // pred_region
        // Predicated region
        $region25: #{pyramid_forward.9} parent=23 // pred_check
          %p131 = pneg %p32
        $region26: #{pyramid_forward.9} parent=23 // pred_check_branch
          %133 = sbr.rel (%p131) target = $region28
        $region27: #{pyramid_forward.9} parent=23 // pred_region
          %p134 = scmp.lt.s32.totalorder %s12, 1
          %s135 = scalar_select %p134, %s12, 1
          %s136 = smul.addr %s135, 6
          %s137 = smul.addr %s136, 8
          %s138 = scalar_lea.vmem %s0, %s137
        $region28: #{pyramid_forward.9} parent=23 // pred_fallthru
          _
      $region24: #{pyramid_forward.9} parent=5 // pred_fallthru
        _
      %p139 = scmp.le.s32.totalorder 1, %s12
      %p140 = scmp.lt.s32.totalorder %s12, 3
      %p141 = pnand %p139, %p140
      %p142 = pneg %p141
      // Predicated region
      $region29: #{pyramid_forward.9} parent=5 // pred_check
        _
      $region30: #{pyramid_forward.9} parent=5 // pred_check_branch
        %144 = sbr.rel (%p141) target = $region32
      $region31: #{pyramid_forward.9} parent=5 // pred_region
        %s145 = ssub.s32 %s12, 1
        %p146 = scmp.lt.s32.totalorder %s17, 1
        %s147 = scalar_select %p146, %s17, 1
        %s148 = smul.addr %s147, 6
        %s149 = smul.addr %s148, 8
        %s150 = scalar_lea.vmem %s0, %s149
        %p151 = pneg %p38
        %p152 = pneg %p35
        %p153 = pneg %p59
        %p154 = pneg %p56
        %p155 = pneg %p80
        %p156 = pneg %p77
        %p157 = pneg %p106
        %p158 = pneg %p103
        %s159 = sand.u32 %s93, 1
        %s160 = scalar_lea.sflag [#allocation3], %s159
        %s161 = sand.u32 %s93, 1
        %s162 = smul.addr %s161, 16
        %s163 = scalar_lea.vmem [#allocation2], %s162
        %p164 = scmp.lt.s32.totalorder %s17, 1
        %s165 = scalar_select %p164, %s17, 1
        %s166 = smul.addr %s165, 6
        %s167 = smul.addr %s166, 8
        %s168 = scalar_lea.vmem %s0, %s167
        %v169 = vld [vmem:[%s168] sm:$0x3f]
        %v170 = vld [vmem:[%s168 + $0x8] sm:$0x3f]
        %v171 = vld [vmem:[%s168 + $0x10] sm:$0x3f]
        %v172 = vld [vmem:[%s168 + $0x18] sm:$0x3f]
        %v173 = vld [vmem:[%s168 + $0x20] sm:$0x3f]
        %v174 = vld [vmem:[%s168 + $0x28] sm:$0x3f]
        %v175 = vld [vmem:[%s1] sm:$0xf]
        %v176 = vld [vmem:[%s1 + $0x4] sm:$0xf]
        %v177 = vld [vmem:[%s1 + $0x8] sm:$0xf]
        %v178 = vld [vmem:[%s1 + $0xc] sm:$0xf]
        %v179 = vld [vmem:[%s1 + $0x10] sm:$0xf]
        %v180 = vld [vmem:[%s1 + $0x14] sm:$0xf]
        %v181 = vld [vmem:[%s1 + $0x18] sm:$0xf]
        %v182 = vld [vmem:[%s1 + $0x1c] sm:$0xf]
        %v183 = vld [vmem:[%s1 + $0x20] sm:$0xf]
        %v184 = vld [vmem:[%s1 + $0x24] sm:$0xf]
        %v185 = vld [vmem:[%s1 + $0x28] sm:$0xf]
        %v186 = vld [vmem:[%s1 + $0x2c] sm:$0xf]
        %v187 = vld [vmem:[%s1 + $0x30] sm:$0xf]
        %v188 = vld [vmem:[%s1 + $0x34] sm:$0xf]
        %v189 = vld [vmem:[%s1 + $0x38] sm:$0xf]
        %v190 = vld [vmem:[%s1 + $0x3c] sm:$0xf]
        %v191 = vld [vmem:[%s1 + $0x40] sm:$0xf]
        %v192 = vld [vmem:[%s1 + $0x44] sm:$0xf]
        %v193 = vld [vmem:[%s1 + $0x48] sm:$0xf]
        %v194 = vld [vmem:[%s1 + $0x4c] sm:$0xf]
        %v195 = vld [vmem:[%s1 + $0x50] sm:$0xf]
        %v196 = vld [vmem:[%s1 + $0x54] sm:$0xf]
        %v197 = vld [vmem:[%s1 + $0x58] sm:$0xf]
        %v198 = vld [vmem:[%s1 + $0x5c] sm:$0xf]
        %v199 = vld [vmem:[%s1 + $0x60] sm:$0xf]
        %v200 = vld [vmem:[%s1 + $0x64] sm:$0xf]
        %v201 = vld [vmem:[%s1 + $0x68] sm:$0xf]
        %v202 = vld [vmem:[%s1 + $0x6c] sm:$0xf]
        %v203 = vld [vmem:[%s1 + $0x70] sm:$0xf]
        %v204 = vld [vmem:[%s1 + $0x74] sm:$0xf]
        %v205 = vld [vmem:[%s1 + $0x78] sm:$0xf]
        %v206 = vld [vmem:[%s1 + $0x7c] sm:$0xf]
        %v207 = vld [vmem:[%s1 + $0x80] sm:$0xf]
        %v208 = vld [vmem:[%s1 + $0x84] sm:$0xf]
        %v209 = vld [vmem:[%s1 + $0x88] sm:$0xf]
        %v210 = vld [vmem:[%s1 + $0x8c] sm:$0xf]
        %v211 = vld [vmem:[%s1 + $0x90] sm:$0xf]
        %v212 = vld [vmem:[%s1 + $0x94] sm:$0xf]
        %v213 = vld [vmem:[%s1 + $0x98] sm:$0xf]
        %v214 = vld [vmem:[%s1 + $0x9c] sm:$0xf]
        %v215 = vld [vmem:[%s1 + $0xa0] sm:$0xf]
        %v216 = vld [vmem:[%s1 + $0xa4] sm:$0xf]
        %v217 = vld [vmem:[%s1 + $0xa8] sm:$0xf]
        %v218 = vld [vmem:[%s1 + $0xac] sm:$0xf]
        %v219 = vld [vmem:[%s1 + $0xb0] sm:$0xf]
        %v220 = vld [vmem:[%s1 + $0xb4] sm:$0xf]
        %v221 = vld [vmem:[%s1 + $0xb8] sm:$0xf]
        %v222 = vld [vmem:[%s1 + $0xbc] sm:$0xf]
        %v223 = vld [vmem:[%s1 + $0xc0] sm:$0xf]
        %v224 = vld [vmem:[%s1 + $0xc4] sm:$0xf]
        %v225 = vld [vmem:[%s1 + $0xc8] sm:$0xf]
        %v226 = vld [vmem:[%s1 + $0xcc] sm:$0xf]
        %v227 = vld [vmem:[%s1 + $0xd0] sm:$0xf]
        %v228 = vld [vmem:[%s1 + $0xd4] sm:$0xf]
        %v229 = vld [vmem:[%s1 + $0xd8] sm:$0xf]
        %v230 = vld [vmem:[%s1 + $0xdc] sm:$0xf]
        %v231 = vld [vmem:[%s1 + $0xe0] sm:$0xf]
        %v232 = vld [vmem:[%s1 + $0xe4] sm:$0xf]
        %v233 = vld [vmem:[%s1 + $0xe8] sm:$0xf]
        %v234 = vld [vmem:[%s1 + $0xec] sm:$0xf]
        %v235 = vld [vmem:[%s1 + $0xf0] sm:$0xf]
        %v236 = vld [vmem:[%s1 + $0xf4] sm:$0xf]
        %v237 = vld [vmem:[%s1 + $0xf8] sm:$0xf]
        %v238 = vld [vmem:[%s1 + $0xfc] sm:$0xf]
        %v239 = vld [vmem:[%s1 + $0x100] sm:$0xf]
        %v240 = vld [vmem:[%s1 + $0x104] sm:$0xf]
        %v241 = vld [vmem:[%s1 + $0x108] sm:$0xf]
        %v242 = vld [vmem:[%s1 + $0x10c] sm:$0xf]
        %v243 = vld [vmem:[%s1 + $0x110] sm:$0xf]
        %v244 = vld [vmem:[%s1 + $0x114] sm:$0xf]
        %v245 = vld [vmem:[%s1 + $0x118] sm:$0xf]
        %v246 = vld [vmem:[%s1 + $0x11c] sm:$0xf]
        %v247 = vld [vmem:[%s1 + $0x120] sm:$0xf]
        %v248 = vld [vmem:[%s1 + $0x124] sm:$0xf]
        %v249 = vld [vmem:[%s1 + $0x128] sm:$0xf]
        %v250 = vld [vmem:[%s1 + $0x12c] sm:$0xf]
        %v251 = vld [vmem:[%s1 + $0x130] sm:$0xf]
        %v252 = vld [vmem:[%s1 + $0x134] sm:$0xf]
        %v253 = vld [vmem:[%s1 + $0x138] sm:$0xf]
        %v254 = vld [vmem:[%s1 + $0x13c] sm:$0xf]
        %v255 = vld [vmem:[%s1 + $0x140] sm:$0xf]
        %v256 = vld [vmem:[%s1 + $0x144] sm:$0xf]
        %v257 = vld [vmem:[%s1 + $0x148] sm:$0xf]
        %v258 = vld [vmem:[%s1 + $0x14c] sm:$0xf]
        %v259 = vld [vmem:[%s1 + $0x150] sm:$0xf]
        %v260 = vld [vmem:[%s1 + $0x154] sm:$0xf]
        %v261 = vld [vmem:[%s1 + $0x158] sm:$0xf]
        %v262 = vld [vmem:[%s1 + $0x15c] sm:$0xf]
        %v263 = vld [vmem:[%s1 + $0x160] sm:$0xf]
        %v264 = vld [vmem:[%s1 + $0x164] sm:$0xf]
        %v265 = vld [vmem:[%s1 + $0x168] sm:$0xf]
        %v266 = vld [vmem:[%s1 + $0x16c] sm:$0xf]
        %v267 = vld [vmem:[%s1 + $0x170] sm:$0xf]
        %v268 = vld [vmem:[%s1 + $0x174] sm:$0xf]
        %v269 = vld [vmem:[%s1 + $0x178] sm:$0xf]
        %v270 = vld [vmem:[%s1 + $0x17c] sm:$0xf]
        %v271 = vld [vmem:[%s1 + $0x180] sm:$0xf]
        %v272 = vld [vmem:[%s1 + $0x184] sm:$0xf]
        %v273 = vld [vmem:[%s1 + $0x188] sm:$0xf]
        %v274 = vld [vmem:[%s1 + $0x18c] sm:$0xf]
        %v275 = vld [vmem:[%s1 + $0x190] sm:$0xf]
        %v276 = vld [vmem:[%s1 + $0x194] sm:$0xf]
        %v277 = vld [vmem:[%s1 + $0x198] sm:$0xf]
        %v278 = vld [vmem:[%s1 + $0x19c] sm:$0xf]
        %v279 = vld [vmem:[%s1 + $0x1a0] sm:$0xf]
        %v280 = vld [vmem:[%s1 + $0x1a4] sm:$0xf]
        %v281 = vld [vmem:[%s1 + $0x1a8] sm:$0xf]
        %v282 = vld [vmem:[%s1 + $0x1ac] sm:$0xf]
        %v283 = vld [vmem:[%s1 + $0x1b0] sm:$0xf]
        %v284 = vld [vmem:[%s1 + $0x1b4] sm:$0xf]
        %v285 = vld [vmem:[%s1 + $0x1b8] sm:$0xf]
        %v286 = vld [vmem:[%s1 + $0x1bc] sm:$0xf]
        %v287 = vld [vmem:[%s1 + $0x1c0] sm:$0xf]
        %v288 = vld [vmem:[%s1 + $0x1c4] sm:$0xf]
        %v289 = vld [vmem:[%s1 + $0x1c8] sm:$0xf]
        %v290 = vld [vmem:[%s1 + $0x1cc] sm:$0xf]
        %v291 = vld [vmem:[%s1 + $0x1d0] sm:$0xf]
        %v292 = vld [vmem:[%s1 + $0x1d4] sm:$0xf]
        %v293 = vld [vmem:[%s1 + $0x1d8] sm:$0xf]
        %v294 = vld [vmem:[%s1 + $0x1dc] sm:$0xf]
        %v295 = vld [vmem:[%s1 + $0x1e0] sm:$0xf]
        %v296 = vld [vmem:[%s1 + $0x1e4] sm:$0xf]
        %v297 = vld [vmem:[%s1 + $0x1e8] sm:$0xf]
        %v298 = vld [vmem:[%s1 + $0x1ec] sm:$0xf]
        %v299 = vld [vmem:[%s1 + $0x1f0] sm:$0xf]
        %v300 = vld [vmem:[%s1 + $0x1f4] sm:$0xf]
        %v301 = vld [vmem:[%s1 + $0x1f8] sm:$0xf]
        %v302 = vld [vmem:[%s1 + $0x1fc] sm:$0xf]
        %v303 = vld [vmem:[%s1 + $0x200] sm:$0xf]
        %v304 = vld [vmem:[%s1 + $0x204] sm:$0xf]
        %v305 = vld [vmem:[%s1 + $0x208] sm:$0xf]
        %v306 = vld [vmem:[%s1 + $0x20c] sm:$0xf]
        %v307 = vld [vmem:[%s1 + $0x210] sm:$0xf]
        %v308 = vld [vmem:[%s1 + $0x214] sm:$0xf]
        %v309 = vld [vmem:[%s1 + $0x218] sm:$0xf]
        %v310 = vld [vmem:[%s1 + $0x21c] sm:$0xf]
        %v311 = vld [vmem:[%s1 + $0x220] sm:$0xf]
        %v312 = vld [vmem:[%s1 + $0x224] sm:$0xf]
        %v313 = vld [vmem:[%s1 + $0x228] sm:$0xf]
        %v314 = vld [vmem:[%s1 + $0x22c] sm:$0xf]
        %v315 = vld [vmem:[%s1 + $0x230] sm:$0xf]
        %v316 = vld [vmem:[%s1 + $0x234] sm:$0xf]
        %v317 = vld [vmem:[%s1 + $0x238] sm:$0xf]
        %v318 = vld [vmem:[%s1 + $0x23c] sm:$0xf]
        %323 = vst [vmem:[#allocation1] ss:$2 sm:$0xff] %v169
        %s324 = scalar_lea.vmem [#allocation1], 1
        %325 = vst [vmem:[%s324] ss:$2 sm:$0xff] %v170
        %s326 = scalar_lea.vmem [#allocation1], 16
        %327 = vst [vmem:[%s326] ss:$2 sm:$0xff] %v171
        %s328 = scalar_lea.vmem [#allocation1], 17
        %329 = vst [vmem:[%s328] ss:$2 sm:$0xff] %v172
        %v330 = vld.sshfl [vmem:[#allocation1] sm:$0xff pattern:$0x75316420]
        %v331 = vld.sshfl [vmem:[#allocation1 + $0x10] sm:$0xff pattern:$0x75316420]
        %v334 = vpack.c.bf16 %v331, %v330
        %v335 = vrot.slane %v169, 4
        %v336 = vrot.slane %v170, 4
        %v337 = vrot.slane %v171, 4
        %v338 = vrot.slane %v172, 4
        %vm339 = vcmask 1042432
        %vm340 = vcmask 1046532
        %vm341 = vmor %vm339, %vm340
        %v342 = vrot.slane %v169, 5
        %v343 = vrot.slane %v342, 4
        %v344 = vrot.slane %v335, 5
        %v345 = vsel %vm341, %v343, %v344
        %v346 = vrot.slane %v170, 5
        %v347 = vrot.slane %v346, 4
        %v348 = vrot.slane %v336, 5
        %v349 = vsel %vm341, %v347, %v348
        %v350 = vrot.slane %v171, 5
        %v351 = vrot.slane %v350, 4
        %v352 = vrot.slane %v337, 5
        %v353 = vsel %vm341, %v351, %v352
        %v354 = vrot.slane %v172, 5
        %v355 = vrot.slane %v354, 4
        %v356 = vrot.slane %v338, 5
        %v357 = vsel %vm341, %v355, %v356
        %358 = vst [vmem:[#allocation1] ss:$2 sm:$0xff] %v345
        %s359 = scalar_lea.vmem [#allocation1], 1
        %360 = vst [vmem:[%s359] ss:$2 sm:$0xff] %v349
        %s361 = scalar_lea.vmem [#allocation1], 16
        %362 = vst [vmem:[%s361] ss:$2 sm:$0xff] %v353
        %s363 = scalar_lea.vmem [#allocation1], 17
        %364 = vst [vmem:[%s363] ss:$2 sm:$0xff] %v357
        %v365 = vld.sshfl [vmem:[#allocation1] sm:$0xff pattern:$0x75316420]
        %v366 = vld.sshfl [vmem:[#allocation1 + $0x10] sm:$0xff pattern:$0x75316420]
        %v369 = vpack.c.bf16 %v366, %v365
        %v386 = vunpack.c.l.b16 %v191
        %v387 = vunpack.c.l.b16 %v192
        %v388 = vunpack.c.l.b16 %v193
        %v389 = vunpack.c.l.b16 %v194
        %v390 = vunpack.c.l.b16 %v195
        %v391 = vunpack.c.l.b16 %v196
        %v392 = vunpack.c.l.b16 %v197
        %v393 = vunpack.c.l.b16 %v198
        %v394 = vunpack.c.l.b16 %v199
        %v395 = vunpack.c.l.b16 %v200
        %v396 = vunpack.c.l.b16 %v201
        %v397 = vunpack.c.l.b16 %v202
        %v398 = vunpack.c.l.b16 %v203
        %v399 = vunpack.c.l.b16 %v204
        %v400 = vunpack.c.l.b16 %v205
        %v401 = vunpack.c.l.b16 %v206
        %v402 = vpack.c.b16 %v387, %v386
        %v403 = vpack.c.b16 %v389, %v388
        %v404 = vpack.c.b16 %v391, %v390
        %v405 = vpack.c.b16 %v393, %v392
        %v406 = vpack.c.b16 %v395, %v394
        %v407 = vpack.c.b16 %v397, %v396
        %v408 = vpack.c.b16 %v399, %v398
        %v409 = vpack.c.b16 %v401, %v400
        %418 = vmatpush.bf16.msra.mxu0 %v409
        %419 = vmatpush.bf16.msra.mxu0 %v408
        %420 = vmatpush.bf16.msra.mxu0 %v407
        %421 = vmatpush.bf16.msra.mxu0 %v406
        %422 = vmatpush.bf16.msra.mxu0 %v405
        %423 = vmatpush.bf16.msra.mxu0 %v404
        %424 = vmatpush.bf16.msra.mxu0 %v403
        %425 = vmatpush.bf16.msra.mxu0 %v402
        %426 = vmatmul.bf16.gmra.mxu0 %v369
        %v427 = vpop.f32.mrf.mxu0
        %v428 = vadd.f32 0.0, %v427
        %v429 = vpop.f32.mrf.mxu0
        %v430 = vadd.f32 0.0, %v429
        %431 = vdwg.mxu0
        %v448 = vunpack.c.l.b16 %v175
        %v449 = vunpack.c.l.b16 %v176
        %v450 = vunpack.c.l.b16 %v177
        %v451 = vunpack.c.l.b16 %v178
        %v452 = vunpack.c.l.b16 %v179
        %v453 = vunpack.c.l.b16 %v180
        %v454 = vunpack.c.l.b16 %v181
        %v455 = vunpack.c.l.b16 %v182
        %v456 = vunpack.c.l.b16 %v183
        %v457 = vunpack.c.l.b16 %v184
        %v458 = vunpack.c.l.b16 %v185
        %v459 = vunpack.c.l.b16 %v186
        %v460 = vunpack.c.l.b16 %v187
        %v461 = vunpack.c.l.b16 %v188
        %v462 = vunpack.c.l.b16 %v189
        %v463 = vunpack.c.l.b16 %v190
        %v464 = vpack.c.b16 %v449, %v448
        %v465 = vpack.c.b16 %v451, %v450
        %v466 = vpack.c.b16 %v453, %v452
        %v467 = vpack.c.b16 %v455, %v454
        %v468 = vpack.c.b16 %v457, %v456
        %v469 = vpack.c.b16 %v459, %v458
        %v470 = vpack.c.b16 %v461, %v460
        %v471 = vpack.c.b16 %v463, %v462
        %480 = vmatpush.bf16.msra.mxu0 %v471
        %481 = vmatpush.bf16.msra.mxu0 %v470
        %482 = vmatpush.bf16.msra.mxu0 %v469
        %483 = vmatpush.bf16.msra.mxu0 %v468
        %484 = vmatpush.bf16.msra.mxu0 %v467
        %485 = vmatpush.bf16.msra.mxu0 %v466
        %486 = vmatpush.bf16.msra.mxu0 %v465
        %487 = vmatpush.bf16.msra.mxu0 %v464
        %488 = vmatmul.bf16.gmra.mxu0 %v334
        %v489 = vpop.f32.mrf.mxu0
        %v490 = vadd.f32 %v428, %v489
        %v491 = vpop.f32.mrf.mxu0
        %v492 = vadd.f32 %v430, %v491
        %493 = vdwg.mxu0
        %vm494 = vcmask 1041408
        %vm495 = vcmask 1045508
        %vm496 = vmor %vm494, %vm495
        %v497 = vrot.slane %v169, 6
        %v498 = vrot.slane %v497, 4
        %v499 = vrot.slane %v335, 6
        %v500 = vsel %vm496, %v498, %v499
        %v501 = vrot.slane %v170, 6
        %v502 = vrot.slane %v501, 4
        %v503 = vrot.slane %v336, 6
        %v504 = vsel %vm496, %v502, %v503
        %v505 = vrot.slane %v171, 6
        %v506 = vrot.slane %v505, 4
        %v507 = vrot.slane %v337, 6
        %v508 = vsel %vm496, %v506, %v507
        %v509 = vrot.slane %v172, 6
        %v510 = vrot.slane %v509, 4
        %v511 = vrot.slane %v338, 6
        %v512 = vsel %vm496, %v510, %v511
        %513 = vst [vmem:[#allocation1] ss:$2 sm:$0xff] %v500
        %s514 = scalar_lea.vmem [#allocation1], 1
        %515 = vst [vmem:[%s514] ss:$2 sm:$0xff] %v504
        %s516 = scalar_lea.vmem [#allocation1], 16
        %517 = vst [vmem:[%s516] ss:$2 sm:$0xff] %v508
        %s518 = scalar_lea.vmem [#allocation1], 17
        %519 = vst [vmem:[%s518] ss:$2 sm:$0xff] %v512
        %v520 = vld.sshfl [vmem:[#allocation1] sm:$0xff pattern:$0x75316420]
        %v521 = vld.sshfl [vmem:[#allocation1 + $0x10] sm:$0xff pattern:$0x75316420]
        %v524 = vpack.c.bf16 %v521, %v520
        %v541 = vunpack.c.l.b16 %v207
        %v542 = vunpack.c.l.b16 %v208
        %v543 = vunpack.c.l.b16 %v209
        %v544 = vunpack.c.l.b16 %v210
        %v545 = vunpack.c.l.b16 %v211
        %v546 = vunpack.c.l.b16 %v212
        %v547 = vunpack.c.l.b16 %v213
        %v548 = vunpack.c.l.b16 %v214
        %v549 = vunpack.c.l.b16 %v215
        %v550 = vunpack.c.l.b16 %v216
        %v551 = vunpack.c.l.b16 %v217
        %v552 = vunpack.c.l.b16 %v218
        %v553 = vunpack.c.l.b16 %v219
        %v554 = vunpack.c.l.b16 %v220
        %v555 = vunpack.c.l.b16 %v221
        %v556 = vunpack.c.l.b16 %v222
        %v557 = vpack.c.b16 %v542, %v541
        %v558 = vpack.c.b16 %v544, %v543
        %v559 = vpack.c.b16 %v546, %v545
        %v560 = vpack.c.b16 %v548, %v547
        %v561 = vpack.c.b16 %v550, %v549
        %v562 = vpack.c.b16 %v552, %v551
        %v563 = vpack.c.b16 %v554, %v553
        %v564 = vpack.c.b16 %v556, %v555
        %573 = vmatpush.bf16.msra.mxu0 %v564
        %574 = vmatpush.bf16.msra.mxu0 %v563
        %575 = vmatpush.bf16.msra.mxu0 %v562
        %576 = vmatpush.bf16.msra.mxu0 %v561
        %577 = vmatpush.bf16.msra.mxu0 %v560
        %578 = vmatpush.bf16.msra.mxu0 %v559
        %579 = vmatpush.bf16.msra.mxu0 %v558
        %580 = vmatpush.bf16.msra.mxu0 %v557
        %581 = vmatmul.bf16.gmra.mxu0 %v524
        %v582 = vpop.f32.mrf.mxu0
        %v583 = vadd.f32 0.0, %v582
        %v584 = vpop.f32.mrf.mxu0
        %v585 = vadd.f32 0.0, %v584
        %586 = vdwg.mxu0
        %v587 = vadd.f32 %v490, %v583
        %v588 = vadd.f32 %v492, %v585
        %590 = vst [vmem:[#allocation1] ss:$2 sm:$0xff] %v170
        %s591 = scalar_lea.vmem [#allocation1], 1
        %592 = vst [vmem:[%s591] ss:$2 sm:$0xff] %v171
        %s593 = scalar_lea.vmem [#allocation1], 16
        %594 = vst [vmem:[%s593] ss:$2 sm:$0xff] %v172
        %s595 = scalar_lea.vmem [#allocation1], 17
        %596 = vst [vmem:[%s595] ss:$2 sm:$0xff] %v173
        %v597 = vld.sshfl [vmem:[#allocation1] sm:$0xff pattern:$0x75316420]
        %v598 = vld.sshfl [vmem:[#allocation1 + $0x10] sm:$0xff pattern:$0x75316420]
        %v601 = vpack.c.bf16 %v598, %v597
        %v618 = vunpack.c.l.b16 %v223
        %v619 = vunpack.c.l.b16 %v224
        %v620 = vunpack.c.l.b16 %v225
        %v621 = vunpack.c.l.b16 %v226
        %v622 = vunpack.c.l.b16 %v227
        %v623 = vunpack.c.l.b16 %v228
        %v624 = vunpack.c.l.b16 %v229
        %v625 = vunpack.c.l.b16 %v230
        %v626 = vunpack.c.l.b16 %v231
        %v627 = vunpack.c.l.b16 %v232
        %v628 = vunpack.c.l.b16 %v233
        %v629 = vunpack.c.l.b16 %v234
        %v630 = vunpack.c.l.b16 %v235
        %v631 = vunpack.c.l.b16 %v236
        %v632 = vunpack.c.l.b16 %v237
        %v633 = vunpack.c.l.b16 %v238
        %v634 = vpack.c.b16 %v619, %v618
        %v635 = vpack.c.b16 %v621, %v620
        %v636 = vpack.c.b16 %v623, %v622
        %v637 = vpack.c.b16 %v625, %v624
        %v638 = vpack.c.b16 %v627, %v626
        %v639 = vpack.c.b16 %v629, %v628
        %v640 = vpack.c.b16 %v631, %v630
        %v641 = vpack.c.b16 %v633, %v632
        %650 = vmatpush.bf16.msra.mxu0 %v641
        %651 = vmatpush.bf16.msra.mxu0 %v640
        %652 = vmatpush.bf16.msra.mxu0 %v639
        %653 = vmatpush.bf16.msra.mxu0 %v638
        %654 = vmatpush.bf16.msra.mxu0 %v637
        %655 = vmatpush.bf16.msra.mxu0 %v636
        %656 = vmatpush.bf16.msra.mxu0 %v635
        %657 = vmatpush.bf16.msra.mxu0 %v634
        %658 = vmatmul.bf16.gmra.mxu0 %v601
        %v659 = vpop.f32.mrf.mxu0
        %v660 = vadd.f32 0.0, %v659
        %v661 = vpop.f32.mrf.mxu0
        %v662 = vadd.f32 0.0, %v661
        %663 = vdwg.mxu0
        %v664 = vadd.f32 %v587, %v660
        %v665 = vadd.f32 %v588, %v662
        %v666 = vrot.slane %v173, 4
        %v667 = vrot.slane %v173, 5
        %v668 = vrot.slane %v667, 4
        %v669 = vrot.slane %v666, 5
        %v670 = vsel %vm341, %v668, %v669
        %671 = vst [vmem:[#allocation1] ss:$2 sm:$0xff] %v349
        %s672 = scalar_lea.vmem [#allocation1], 1
        %673 = vst [vmem:[%s672] ss:$2 sm:$0xff] %v353
        %s674 = scalar_lea.vmem [#allocation1], 16
        %675 = vst [vmem:[%s674] ss:$2 sm:$0xff] %v357
        %s676 = scalar_lea.vmem [#allocation1], 17
        %677 = vst [vmem:[%s676] ss:$2 sm:$0xff] %v670
        %v678 = vld.sshfl [vmem:[#allocation1] sm:$0xff pattern:$0x75316420]
        %v679 = vld.sshfl [vmem:[#allocation1 + $0x10] sm:$0xff pattern:$0x75316420]
        %v682 = vpack.c.bf16 %v679, %v678
        %v699 = vunpack.c.l.b16 %v239
        %v700 = vunpack.c.l.b16 %v240
        %v701 = vunpack.c.l.b16 %v241
        %v702 = vunpack.c.l.b16 %v242
        %v703 = vunpack.c.l.b16 %v243
        %v704 = vunpack.c.l.b16 %v244
        %v705 = vunpack.c.l.b16 %v245
        %v706 = vunpack.c.l.b16 %v246
        %v707 = vunpack.c.l.b16 %v247
        %v708 = vunpack.c.l.b16 %v248
        %v709 = vunpack.c.l.b16 %v249
        %v710 = vunpack.c.l.b16 %v250
        %v711 = vunpack.c.l.b16 %v251
        %v712 = vunpack.c.l.b16 %v252
        %v713 = vunpack.c.l.b16 %v253
        %v714 = vunpack.c.l.b16 %v254
        %v715 = vpack.c.b16 %v700, %v699
        %v716 = vpack.c.b16 %v702, %v701
        %v717 = vpack.c.b16 %v704, %v703
        %v718 = vpack.c.b16 %v706, %v705
        %v719 = vpack.c.b16 %v708, %v707
        %v720 = vpack.c.b16 %v710, %v709
        %v721 = vpack.c.b16 %v712, %v711
        %v722 = vpack.c.b16 %v714, %v713
        %731 = vmatpush.bf16.msra.mxu0 %v722
        %732 = vmatpush.bf16.msra.mxu0 %v721
        %733 = vmatpush.bf16.msra.mxu0 %v720
        %734 = vmatpush.bf16.msra.mxu0 %v719
        %735 = vmatpush.bf16.msra.mxu0 %v718
        %736 = vmatpush.bf16.msra.mxu0 %v717
        %737 = vmatpush.bf16.msra.mxu0 %v716
        %738 = vmatpush.bf16.msra.mxu0 %v715
        %739 = vmatmul.bf16.gmra.mxu0 %v682
        %v740 = vpop.f32.mrf.mxu0
        %v741 = vadd.f32 0.0, %v740
        %v742 = vpop.f32.mrf.mxu0
        %v743 = vadd.f32 0.0, %v742
        %744 = vdwg.mxu0
        %v745 = vadd.f32 %v664, %v741
        %v746 = vadd.f32 %v665, %v743
        %v747 = vrot.slane %v173, 6
        %v748 = vrot.slane %v747, 4
        %v749 = vrot.slane %v666, 6
        %v750 = vsel %vm496, %v748, %v749
        %751 = vst [vmem:[#allocation1] ss:$2 sm:$0xff] %v504
        %s752 = scalar_lea.vmem [#allocation1], 1
        %753 = vst [vmem:[%s752] ss:$2 sm:$0xff] %v508
        %s754 = scalar_lea.vmem [#allocation1], 16
        %755 = vst [vmem:[%s754] ss:$2 sm:$0xff] %v512
        %s756 = scalar_lea.vmem [#allocation1], 17
        %757 = vst [vmem:[%s756] ss:$2 sm:$0xff] %v750
        %v758 = vld.sshfl [vmem:[#allocation1] sm:$0xff pattern:$0x75316420]
        %v759 = vld.sshfl [vmem:[#allocation1 + $0x10] sm:$0xff pattern:$0x75316420]
        %v762 = vpack.c.bf16 %v759, %v758
        %v779 = vunpack.c.l.b16 %v255
        %v780 = vunpack.c.l.b16 %v256
        %v781 = vunpack.c.l.b16 %v257
        %v782 = vunpack.c.l.b16 %v258
        %v783 = vunpack.c.l.b16 %v259
        %v784 = vunpack.c.l.b16 %v260
        %v785 = vunpack.c.l.b16 %v261
        %v786 = vunpack.c.l.b16 %v262
        %v787 = vunpack.c.l.b16 %v263
        %v788 = vunpack.c.l.b16 %v264
        %v789 = vunpack.c.l.b16 %v265
        %v790 = vunpack.c.l.b16 %v266
        %v791 = vunpack.c.l.b16 %v267
        %v792 = vunpack.c.l.b16 %v268
        %v793 = vunpack.c.l.b16 %v269
        %v794 = vunpack.c.l.b16 %v270
        %v795 = vpack.c.b16 %v780, %v779
        %v796 = vpack.c.b16 %v782, %v781
        %v797 = vpack.c.b16 %v784, %v783
        %v798 = vpack.c.b16 %v786, %v785
        %v799 = vpack.c.b16 %v788, %v787
        %v800 = vpack.c.b16 %v790, %v789
        %v801 = vpack.c.b16 %v792, %v791
        %v802 = vpack.c.b16 %v794, %v793
        %811 = vmatpush.bf16.msra.mxu0 %v802
        %812 = vmatpush.bf16.msra.mxu0 %v801
        %813 = vmatpush.bf16.msra.mxu0 %v800
        %814 = vmatpush.bf16.msra.mxu0 %v799
        %815 = vmatpush.bf16.msra.mxu0 %v798
        %816 = vmatpush.bf16.msra.mxu0 %v797
        %817 = vmatpush.bf16.msra.mxu0 %v796
        %818 = vmatpush.bf16.msra.mxu0 %v795
        %819 = vmatmul.bf16.gmra.mxu0 %v762
        %v820 = vpop.f32.mrf.mxu0
        %v821 = vadd.f32 0.0, %v820
        %v822 = vpop.f32.mrf.mxu0
        %v823 = vadd.f32 0.0, %v822
        %824 = vdwg.mxu0
        %v825 = vadd.f32 %v745, %v821
        %v826 = vadd.f32 %v746, %v823
        %828 = vst [vmem:[#allocation1] ss:$2 sm:$0xff] %v171
        %s829 = scalar_lea.vmem [#allocation1], 1
        %830 = vst [vmem:[%s829] ss:$2 sm:$0xff] %v172
        %s831 = scalar_lea.vmem [#allocation1], 16
        %832 = vst [vmem:[%s831] ss:$2 sm:$0xff] %v173
        %s833 = scalar_lea.vmem [#allocation1], 17
        %834 = vst [vmem:[%s833] ss:$2 sm:$0xff] %v174
        %v835 = vld.sshfl [vmem:[#allocation1] sm:$0xff pattern:$0x75316420]
        %v836 = vld.sshfl [vmem:[#allocation1 + $0x10] sm:$0xff pattern:$0x75316420]
        %v839 = vpack.c.bf16 %v836, %v835
        %v856 = vunpack.c.l.b16 %v271
        %v857 = vunpack.c.l.b16 %v272
        %v858 = vunpack.c.l.b16 %v273
        %v859 = vunpack.c.l.b16 %v274
        %v860 = vunpack.c.l.b16 %v275
        %v861 = vunpack.c.l.b16 %v276
        %v862 = vunpack.c.l.b16 %v277
        %v863 = vunpack.c.l.b16 %v278
        %v864 = vunpack.c.l.b16 %v279
        %v865 = vunpack.c.l.b16 %v280
        %v866 = vunpack.c.l.b16 %v281
        %v867 = vunpack.c.l.b16 %v282
        %v868 = vunpack.c.l.b16 %v283
        %v869 = vunpack.c.l.b16 %v284
        %v870 = vunpack.c.l.b16 %v285
        %v871 = vunpack.c.l.b16 %v286
        %v872 = vpack.c.b16 %v857, %v856
        %v873 = vpack.c.b16 %v859, %v858
        %v874 = vpack.c.b16 %v861, %v860
        %v875 = vpack.c.b16 %v863, %v862
        %v876 = vpack.c.b16 %v865, %v864
        %v877 = vpack.c.b16 %v867, %v866
        %v878 = vpack.c.b16 %v869, %v868
        %v879 = vpack.c.b16 %v871, %v870
        %888 = vmatpush.bf16.msra.mxu0 %v879
        %889 = vmatpush.bf16.msra.mxu0 %v878
        %890 = vmatpush.bf16.msra.mxu0 %v877
        %891 = vmatpush.bf16.msra.mxu0 %v876
        %892 = vmatpush.bf16.msra.mxu0 %v875
        %893 = vmatpush.bf16.msra.mxu0 %v874
        %894 = vmatpush.bf16.msra.mxu0 %v873
        %895 = vmatpush.bf16.msra.mxu0 %v872
        %896 = vmatmul.bf16.gmra.mxu0 %v839
        %v897 = vpop.f32.mrf.mxu0
        %v898 = vadd.f32 0.0, %v897
        %v899 = vpop.f32.mrf.mxu0
        %v900 = vadd.f32 0.0, %v899
        %901 = vdwg.mxu0
        %v902 = vadd.f32 %v825, %v898
        %v903 = vadd.f32 %v826, %v900
        %v904 = vrot.slane %v174, 4
        %v905 = vrot.slane %v174, 5
        %v906 = vrot.slane %v905, 4
        %v907 = vrot.slane %v904, 5
        %v908 = vsel %vm341, %v906, %v907
        %909 = vst [vmem:[#allocation1] ss:$2 sm:$0xff] %v353
        %s910 = scalar_lea.vmem [#allocation1], 1
        %911 = vst [vmem:[%s910] ss:$2 sm:$0xff] %v357
        %s912 = scalar_lea.vmem [#allocation1], 16
        %913 = vst [vmem:[%s912] ss:$2 sm:$0xff] %v670
        %s914 = scalar_lea.vmem [#allocation1], 17
        %915 = vst [vmem:[%s914] ss:$2 sm:$0xff] %v908
        %v916 = vld.sshfl [vmem:[#allocation1] sm:$0xff pattern:$0x75316420]
        %v917 = vld.sshfl [vmem:[#allocation1 + $0x10] sm:$0xff pattern:$0x75316420]
        %v920 = vpack.c.bf16 %v917, %v916
        %v937 = vunpack.c.l.b16 %v287
        %v938 = vunpack.c.l.b16 %v288
        %v939 = vunpack.c.l.b16 %v289
        %v940 = vunpack.c.l.b16 %v290
        %v941 = vunpack.c.l.b16 %v291
        %v942 = vunpack.c.l.b16 %v292
        %v943 = vunpack.c.l.b16 %v293
        %v944 = vunpack.c.l.b16 %v294
        %v945 = vunpack.c.l.b16 %v295
        %v946 = vunpack.c.l.b16 %v296
        %v947 = vunpack.c.l.b16 %v297
        %v948 = vunpack.c.l.b16 %v298
        %v949 = vunpack.c.l.b16 %v299
        %v950 = vunpack.c.l.b16 %v300
        %v951 = vunpack.c.l.b16 %v301
        %v952 = vunpack.c.l.b16 %v302
        %v953 = vpack.c.b16 %v938, %v937
        %v954 = vpack.c.b16 %v940, %v939
        %v955 = vpack.c.b16 %v942, %v941
        %v956 = vpack.c.b16 %v944, %v943
        %v957 = vpack.c.b16 %v946, %v945
        %v958 = vpack.c.b16 %v948, %v947
        %v959 = vpack.c.b16 %v950, %v949
        %v960 = vpack.c.b16 %v952, %v951
        %969 = vmatpush.bf16.msra.mxu0 %v960
        %970 = vmatpush.bf16.msra.mxu0 %v959
        %971 = vmatpush.bf16.msra.mxu0 %v958
        %972 = vmatpush.bf16.msra.mxu0 %v957
        %973 = vmatpush.bf16.msra.mxu0 %v956
        %974 = vmatpush.bf16.msra.mxu0 %v955
        %975 = vmatpush.bf16.msra.mxu0 %v954
        %976 = vmatpush.bf16.msra.mxu0 %v953
        %977 = vmatmul.bf16.gmra.mxu0 %v920
        %v978 = vpop.f32.mrf.mxu0
        %v979 = vadd.f32 0.0, %v978
        %v980 = vpop.f32.mrf.mxu0
        %v981 = vadd.f32 0.0, %v980
        %982 = vdwg.mxu0
        %v983 = vadd.f32 %v902, %v979
        %v984 = vadd.f32 %v903, %v981
        %v985 = vrot.slane %v174, 6
        %v986 = vrot.slane %v985, 4
        %v987 = vrot.slane %v904, 6
        %v988 = vsel %vm496, %v986, %v987
        %989 = vst [vmem:[#allocation1] ss:$2 sm:$0xff] %v508
        %s990 = scalar_lea.vmem [#allocation1], 1
        %991 = vst [vmem:[%s990] ss:$2 sm:$0xff] %v512
        %s992 = scalar_lea.vmem [#allocation1], 16
        %993 = vst [vmem:[%s992] ss:$2 sm:$0xff] %v750
        %s994 = scalar_lea.vmem [#allocation1], 17
        %995 = vst [vmem:[%s994] ss:$2 sm:$0xff] %v988
        %v996 = vld.sshfl [vmem:[#allocation1] sm:$0xff pattern:$0x75316420]
        %v997 = vld.sshfl [vmem:[#allocation1 + $0x10] sm:$0xff pattern:$0x75316420]
        %v1000 = vpack.c.bf16 %v997, %v996
        %v1017 = vunpack.c.l.b16 %v303
        %v1018 = vunpack.c.l.b16 %v304
        %v1019 = vunpack.c.l.b16 %v305
        %v1020 = vunpack.c.l.b16 %v306
        %v1021 = vunpack.c.l.b16 %v307
        %v1022 = vunpack.c.l.b16 %v308
        %v1023 = vunpack.c.l.b16 %v309
        %v1024 = vunpack.c.l.b16 %v310
        %v1025 = vunpack.c.l.b16 %v311
        %v1026 = vunpack.c.l.b16 %v312
        %v1027 = vunpack.c.l.b16 %v313
        %v1028 = vunpack.c.l.b16 %v314
        %v1029 = vunpack.c.l.b16 %v315
        %v1030 = vunpack.c.l.b16 %v316
        %v1031 = vunpack.c.l.b16 %v317
        %v1032 = vunpack.c.l.b16 %v318
        %v1033 = vpack.c.b16 %v1018, %v1017
        %v1034 = vpack.c.b16 %v1020, %v1019
        %v1035 = vpack.c.b16 %v1022, %v1021
        %v1036 = vpack.c.b16 %v1024, %v1023
        %v1037 = vpack.c.b16 %v1026, %v1025
        %v1038 = vpack.c.b16 %v1028, %v1027
        %v1039 = vpack.c.b16 %v1030, %v1029
        %v1040 = vpack.c.b16 %v1032, %v1031
        %1049 = vmatpush.bf16.msra.mxu0 %v1040
        %1050 = vmatpush.bf16.msra.mxu0 %v1039
        %1051 = vmatpush.bf16.msra.mxu0 %v1038
        %1052 = vmatpush.bf16.msra.mxu0 %v1037
        %1053 = vmatpush.bf16.msra.mxu0 %v1036
        %1054 = vmatpush.bf16.msra.mxu0 %v1035
        %1055 = vmatpush.bf16.msra.mxu0 %v1034
        %1056 = vmatpush.bf16.msra.mxu0 %v1033
        %1057 = vmatmul.bf16.gmra.mxu0 %v1000
        %v1058 = vpop.f32.mrf.mxu0
        %v1059 = vadd.f32 0.0, %v1058
        %v1060 = vpop.f32.mrf.mxu0
        %v1061 = vadd.f32 0.0, %v1060
        %1062 = vdwg.mxu0
        %v1063 = vadd.f32 %v983, %v1059
        %v1064 = vadd.f32 %v984, %v1061
        %v1065 = vld [vmem:[%s2] sm:$0x1]
        %v1067 = vperm.slane %v1065, 0
        %v1069 = vadd.f32 %v1063, %v1067
        %v1070 = vadd.f32 %v1064, %v1067
        %v1073 = vrot.slane %v1069, 4
        %v1074 = vrot.slane %v1070, 4
        %1077 = vst [vmem:[%s163] sm:$0xf] %v1069
        %1078 = vst [vmem:[%s163 + $0x4] sm:$0xf] %v1073
        %1079 = vst [vmem:[%s163 + $0x8] sm:$0xf] %v1070
        %1080 = vst [vmem:[%s163 + $0xc] sm:$0xf] %v1074
        %s1081 = sand.u32 %s93, 1
        %s1082 = scalar_lea.sflag [#allocation3], %s1081
        %s1083 = sand.u32 %s93, 1
        %s1084 = smul.addr %s1083, 16
        %s1085 = scalar_lea.vmem [#allocation2], %s1084
        // Predicated region
        $region33: #{pyramid_forward.9} parent=31 // pred_check
          %p1086 = pneg %p103
        $region34: #{pyramid_forward.9} parent=31 // pred_check_branch
          %1088 = sbr.rel (%p1086) target = $region36
        $region35: #{pyramid_forward.9} parent=31 // pred_region
          %1090 = vsyncadd %s1082, 0
          %s1091 = smul.addr %s17, 4
          %s1092 = smul.addr %s1091, 4
          %s1093 = scalar_lea.hbm %s3, %s1092
          %s1094 = sshll.u32 %s1085, 4
          %s1095 = int_to_ptr.vmem [resolvable:$true] %s1094
          %s1096 = sshll.u32 %s1093, 4
          %s1097 = int_to_ptr.hbm [resolvable:$true] %s1096
          %1102 = dma.vmem_to_hbm [thread:$0]  %s1095, 256, %s1097, %s1082, 64, 64, 4
        $region36: #{pyramid_forward.9} parent=31 // pred_fallthru
          _
      $region32: #{pyramid_forward.9} parent=5 // pred_fallthru
        _
      %p1103 = scmp.le.s32.totalorder 2, %s12
      // Predicated region
      $region37: #{pyramid_forward.9} parent=5 // pred_check
        %p1104 = pneg %p1103
      $region38: #{pyramid_forward.9} parent=5 // pred_check_branch
        %1106 = sbr.rel (%p1104) target = $region40
      $region39: #{pyramid_forward.9} parent=5 // pred_region
        %s1107 = ssub.s32 %s12, 2
        // Predicated region
        $region41: #{pyramid_forward.9} parent=39 // pred_check
          %p1108 = pneg %p109
        $region42: #{pyramid_forward.9} parent=39 // pred_check_branch
          %1110 = sbr.rel (%p1108) target = $region44
        $region43: #{pyramid_forward.9} parent=39 // pred_region
          %s1111 = sand.u32 %s94, 1
          %s1112 = scalar_lea.sflag [#allocation3], %s1111
          %s1113 = sand.u32 %s94, 1
          %s1114 = smul.addr %s1113, 16
          %s1115 = scalar_lea.vmem [#allocation2], %s1114
          %1117 = dma.done %s1112, 256
        $region44: #{pyramid_forward.9} parent=39 // pred_fallthru
          _
      $region40: #{pyramid_forward.9} parent=5 // pred_fallthru
        _
    $region6: #{pyramid_forward.9} parent=1 // loop_footer
      %s16 = sadd.s32 1, %s12
    $region7: #{pyramid_forward.9} parent=1 // loop_footer_branch
      %11 = sbr.rel target = $region3
    $region8: #{pyramid_forward.9} parent=1 // loop_exit
      _
    %1118 = vsyncpa [#allocation3], 1
    %s1119 = scalar_lea.sflag [#allocation3], 1
    %1120 = vsyncpa %s1119, 1

// kernel: pyramid_forward.13
$region0: #{pyramid_forward.13}
  #allocation0 [shape = 'u32[]', space=smem, size = 0x4, offset = 0x4, fixed_abs, tag = 'smem constant byte address 0x4 - core index']
  #allocation1 [shape = 'u32[72,128]{1,0:T(1,128)}', space=vmem, size = 0x9000, scoped, tag = 'internal scratch']
  %s0 = inlined_call_operand.vmem [shape: f32[2,18,18,128], index: 0, kind: input, shape index: {}]
  %s1 = inlined_call_operand.vmem [shape: bf16[9,128,128], index: 1, kind: input, shape index: {}]
  %s2 = inlined_call_operand.vmem [shape: f32[1,128], index: 2, kind: input, shape index: {}]
  %s3 = inlined_call_operand.hbm [shape: f32[2,16,16,128], index: 3, kind: output, shape index: {}]
  %s4 = sld [smem:[#allocation0]]
  $region45: #{pyramid_forward.13} parent=0
    _
  %s6 = ssub.s32 1, %s4
  %s7 = scalar_select 0, %s6, %s4
  $region1: #{pyramid_forward.13} parent=0
    #allocation2 [shape = 'u8[262144]{0}', space=vmem, size = 0x40000, scoped, tag = 'output window, operand 0']
    #allocation3 [shape = 's32[2]{0}', space=sflag, size = 0x8, scoped, tag = 'scoped memory for pyramid_forward.13']
    %8 = vsyncpa [#allocation3], 0
    %s9 = scalar_lea.sflag [#allocation3], 1
    %10 = vsyncpa %s9, 0
    loop: start=0, step=1, limit=4
    $region2: #{pyramid_forward.13} parent=1 // loop_pre_header
      _
    $region3: #{pyramid_forward.13} parent=1 // loop_header
      %s12 = sphi 0, %s16
      %p13 = scmp.ge.s32.totalorder %s12, 4
      %s22 = sphi 0, %s24
      %s25 = sphi 0, %s22
      %s26 = sphi 0, %s25
      %s42 = sphi 0, %s26
      %s46 = sphi 0, %s46
      %s48 = sphi 0, %s46
      %s49 = sphi 0, %s48
      %s63 = sphi 0, %s49
      %s67 = sphi 0, %s67
      %s69 = sphi 0, %s67
      %s70 = sphi 0, %s69
      %s84 = sphi 0, %s70
      %s90 = sphi 0, %s92
      %s93 = sphi 0, %s90
      %s94 = sphi 0, %s93
      %s110 = sphi 0, %s94
    $region4: #{pyramid_forward.13} parent=1 // loop_header_branch
      %15 = sbr.rel (%p13) target = $region8
    $region5: #{pyramid_forward.13} parent=1 // loop_body
      %s17 = ssub.s32 %s12, 1
      %s18 = ssub.s32 %s12, 2
      %s19 = sadd.s32 %s12, 1
      %s20 = ssub.s32 %s12, %s19
      %p21 = scmp.eq.s32.totalorder %s20, 0
      %s23 = sadd.s32 %s22, 1
      %s24 = scalar_select %p21, %s22, %s23
      %p27 = pneg %p21
      %p28 = scmp.eq.s32.totalorder %s12, 1
      %p29 = por %p27, %p28
      %p30 = scmp.ne.s32.totalorder %s22, %s25
      %p31 = scmp.eq.s32.totalorder %s12, 0
      %p32 = por %p30, %p31
      %p33 = scmp.ne.s32.totalorder %s22, %s25
      %p34 = scmp.eq.s32.totalorder %s17, 1
      %p35 = por %p33, %p34
      %p36 = scmp.ne.s32.totalorder %s25, %s26
      %p37 = scmp.eq.s32.totalorder %s17, 0
      %p38 = por %p36, %p37
      %p39 = scmp.ne.s32.totalorder %s25, %s26
      %p40 = scmp.eq.s32.totalorder %s18, 1
      %p41 = por %p39, %p40
      %p43 = scmp.ne.s32.totalorder %s26, %s42
      %p44 = scmp.eq.s32.totalorder %s18, 0
      %p45 = por %p43, %p44
      %s47 = sadd.s32 %s46, 1
      %p50 = scmp.eq.s32.totalorder %s12, 1
      %p51 = scmp.ne.s32.totalorder %s46, %s48
      %p52 = scmp.eq.s32.totalorder %s12, 0
      %p53 = por %p51, %p52
      %p54 = scmp.ne.s32.totalorder %s46, %s48
      %p55 = scmp.eq.s32.totalorder %s17, 1
      %p56 = por %p54, %p55
      %p57 = scmp.ne.s32.totalorder %s48, %s49
      %p58 = scmp.eq.s32.totalorder %s17, 0
      %p59 = por %p57, %p58
      %p60 = scmp.ne.s32.totalorder %s48, %s49
      %p61 = scmp.eq.s32.totalorder %s18, 1
      %p62 = por %p60, %p61
      %p64 = scmp.ne.s32.totalorder %s49, %s63
      %p65 = scmp.eq.s32.totalorder %s18, 0
      %p66 = por %p64, %p65
      %s68 = sadd.s32 %s67, 1
      %p71 = scmp.eq.s32.totalorder %s12, 1
      %p72 = scmp.ne.s32.totalorder %s67, %s69
      %p73 = scmp.eq.s32.totalorder %s12, 0
      %p74 = por %p72, %p73
      %p75 = scmp.ne.s32.totalorder %s67, %s69
      %p76 = scmp.eq.s32.totalorder %s17, 1
      %p77 = por %p75, %p76
      %p78 = scmp.ne.s32.totalorder %s69, %s70
      %p79 = scmp.eq.s32.totalorder %s17, 0
      %p80 = por %p78, %p79
      %p81 = scmp.ne.s32.totalorder %s69, %s70
      %p82 = scmp.eq.s32.totalorder %s18, 1
      %p83 = por %p81, %p82
      %p85 = scmp.ne.s32.totalorder %s70, %s84
      %p86 = scmp.eq.s32.totalorder %s18, 0
      %p87 = por %p85, %p86
      %s88 = ssub.s32 %s12, %s19
      %p89 = scmp.eq.s32.totalorder %s88, 0
      %s91 = sadd.s32 %s90, 1
      %s92 = scalar_select %p89, %s90, %s91
      %p95 = pneg %p89
      %p96 = scmp.eq.s32.totalorder %s12, 1
      %p97 = por %p95, %p96
      %p98 = scmp.ne.s32.totalorder %s90, %s93
      %p99 = scmp.eq.s32.totalorder %s12, 0
      %p100 = por %p98, %p99
      %p101 = scmp.ne.s32.totalorder %s90, %s93
      %p102 = scmp.eq.s32.totalorder %s17, 1
      %p103 = por %p101, %p102
      %p104 = scmp.ne.s32.totalorder %s93, %s94
      %p105 = scmp.eq.s32.totalorder %s17, 0
      %p106 = por %p104, %p105
      %p107 = scmp.ne.s32.totalorder %s93, %s94
      %p108 = scmp.eq.s32.totalorder %s18, 1
      %p109 = por %p107, %p108
      %p111 = scmp.ne.s32.totalorder %s94, %s110
      %p112 = scmp.eq.s32.totalorder %s18, 0
      %p113 = por %p111, %p112
      %p114 = scmp.le.s32.totalorder 1, %s12
      %p115 = scmp.lt.s32.totalorder %s12, 3
      %p116 = pnand %p114, %p115
      %p117 = pneg %p116
      // Predicated region
      $region9: #{pyramid_forward.13} parent=5 // pred_check
        _
      $region10: #{pyramid_forward.13} parent=5 // pred_check_branch
        %119 = sbr.rel (%p116) target = $region12
      $region11: #{pyramid_forward.13} parent=5 // pred_region
        %s120 = ssub.s32 %s12, 1
        // Predicated region
        $region13: #{pyramid_forward.13} parent=11 // pred_check
          %p121 = pneg %p59
        $region14: #{pyramid_forward.13} parent=11 // pred_check_branch
          %123 = sbr.rel (%p121) target = $region16
        $region15: #{pyramid_forward.13} parent=11 // pred_region
          _
        $region16: #{pyramid_forward.13} parent=11 // pred_fallthru
          _
        // Predicated region
        $region17: #{pyramid_forward.13} parent=11 // pred_check
          %p124 = pneg %p80
        $region18: #{pyramid_forward.13} parent=11 // pred_check_branch
          %126 = sbr.rel (%p124) target = $region20
        $region19: #{pyramid_forward.13} parent=11 // pred_region
          _
        $region20: #{pyramid_forward.13} parent=11 // pred_fallthru
          _
      $region12: #{pyramid_forward.13} parent=5 // pred_fallthru
        _
      %p127 = scmp.lt.s32.totalorder %s12, 2
      // Predicated region
      $region21: #{pyramid_forward.13} parent=5 // pred_check
        %p128 = pneg %p127
      $region22: #{pyramid_forward.13} parent=5 // pred_check_branch
        %130 = sbr.rel (%p128) target = $region24
      $region23: #{pyramid_forward.13} parent=5 // pred_region
        // Predicated region
        $region25: #{pyramid_forward.13} parent=23 // pred_check
          %p131 = pneg %p32
        $region26: #{pyramid_forward.13} parent=23 // pred_check_branch
          %133 = sbr.rel (%p131) target = $region28
        $region27: #{pyramid_forward.13} parent=23 // pred_region
          %p134 = scmp.lt.s32.totalorder %s12, 1
          %s135 = scalar_select %p134, %s12, 1
          %s136 = smul.addr %s135, 54
          %s137 = smul.addr %s136, 8
          %s138 = scalar_lea.vmem %s0, %s137
        $region28: #{pyramid_forward.13} parent=23 // pred_fallthru
          _
      $region24: #{pyramid_forward.13} parent=5 // pred_fallthru
        _
      %p139 = scmp.le.s32.totalorder 1, %s12
      %p140 = scmp.lt.s32.totalorder %s12, 3
      %p141 = pnand %p139, %p140
      %p142 = pneg %p141
      // Predicated region
      $region29: #{pyramid_forward.13} parent=5 // pred_check
        _
      $region30: #{pyramid_forward.13} parent=5 // pred_check_branch
        %144 = sbr.rel (%p141) target = $region32
      $region31: #{pyramid_forward.13} parent=5 // pred_region
        %s145 = ssub.s32 %s12, 1
        %p146 = scmp.lt.s32.totalorder %s17, 1
        %s147 = scalar_select %p146, %s17, 1
        %s148 = smul.addr %s147, 54
        %s149 = smul.addr %s148, 8
        %s150 = scalar_lea.vmem %s0, %s149
        %p151 = pneg %p38
        %p152 = pneg %p35
        %p153 = pneg %p59
        %p154 = pneg %p56
        %p155 = pneg %p80
        %p156 = pneg %p77
        %p157 = pneg %p106
        %p158 = pneg %p103
        %s159 = sand.u32 %s93, 1
        %s160 = scalar_lea.sflag [#allocation3], %s159
        %s161 = sand.u32 %s93, 1
        %s162 = smul.addr %s161, 256
        %s163 = scalar_lea.vmem [#allocation2], %s162
        %p164 = scmp.lt.s32.totalorder %s17, 1
        %s165 = scalar_select %p164, %s17, 1
        %s166 = smul.addr %s165, 54
        %s167 = smul.addr %s166, 8
        %s168 = scalar_lea.vmem %s0, %s167
        %v169 = vld [vmem:[%s168] sm:$0xff]
        %v170 = vld [vmem:[%s168 + $0x8] sm:$0xff]
        %v171 = vld [vmem:[%s168 + $0x10] sm:$0x3]
        %v172 = vld [vmem:[%s168 + $0x18] sm:$0xff]
        %v173 = vld [vmem:[%s168 + $0x20] sm:$0xff]
        %v174 = vld [vmem:[%s168 + $0x28] sm:$0x3]
        %v175 = vld [vmem:[%s168 + $0x30] sm:$0xff]
        %v176 = vld [vmem:[%s168 + $0x38] sm:$0xff]
        %v177 = vld [vmem:[%s168 + $0x40] sm:$0x3]
        %v178 = vld [vmem:[%s168 + $0x48] sm:$0xff]
        %v179 = vld [vmem:[%s168 + $0x50] sm:$0xff]
        %v180 = vld [vmem:[%s168 + $0x58] sm:$0x3]
        %v181 = vld [vmem:[%s168 + $0x60] sm:$0xff]
        %v182 = vld [vmem:[%s168 + $0x68] sm:$0xff]
        %v183 = vld [vmem:[%s168 + $0x70] sm:$0x3]
        %v184 = vld [vmem:[%s168 + $0x78] sm:$0xff]
        %v185 = vld [vmem:[%s168 + $0x80] sm:$0xff]
        %v186 = vld [vmem:[%s168 + $0x88] sm:$0x3]
        %v187 = vld [vmem:[%s168 + $0x90] sm:$0xff]
        %v188 = vld [vmem:[%s168 + $0x98] sm:$0xff]
        %v189 = vld [vmem:[%s168 + $0xa0] sm:$0x3]
        %v190 = vld [vmem:[%s168 + $0xa8] sm:$0xff]
        %v191 = vld [vmem:[%s168 + $0xb0] sm:$0xff]
        %v192 = vld [vmem:[%s168 + $0xb8] sm:$0x3]
        %v193 = vld [vmem:[%s168 + $0xc0] sm:$0xff]
        %v194 = vld [vmem:[%s168 + $0xc8] sm:$0xff]
        %v195 = vld [vmem:[%s168 + $0xd0] sm:$0x3]
        %v196 = vld [vmem:[%s168 + $0xd8] sm:$0xff]
        %v197 = vld [vmem:[%s168 + $0xe0] sm:$0xff]
        %v198 = vld [vmem:[%s168 + $0xe8] sm:$0x3]
        %v199 = vld [vmem:[%s168 + $0xf0] sm:$0xff]
        %v200 = vld [vmem:[%s168 + $0xf8] sm:$0xff]
        %v201 = vld [vmem:[%s168 + $0x100] sm:$0x3]
        %v202 = vld [vmem:[%s168 + $0x108] sm:$0xff]
        %v203 = vld [vmem:[%s168 + $0x110] sm:$0xff]
        %v204 = vld [vmem:[%s168 + $0x118] sm:$0x3]
        %v205 = vld [vmem:[%s168 + $0x120] sm:$0xff]
        %v206 = vld [vmem:[%s168 + $0x128] sm:$0xff]
        %v207 = vld [vmem:[%s168 + $0x130] sm:$0x3]
        %v208 = vld [vmem:[%s168 + $0x138] sm:$0xff]
        %v209 = vld [vmem:[%s168 + $0x140] sm:$0xff]
        %v210 = vld [vmem:[%s168 + $0x148] sm:$0x3]
        %v211 = vld [vmem:[%s168 + $0x150] sm:$0xff]
        %v212 = vld [vmem:[%s168 + $0x158] sm:$0xff]
        %v213 = vld [vmem:[%s168 + $0x160] sm:$0x3]
        %v214 = vld [vmem:[%s168 + $0x168] sm:$0xff]
        %v215 = vld [vmem:[%s168 + $0x170] sm:$0xff]
        %v216 = vld [vmem:[%s168 + $0x178] sm:$0x3]
        %v217 = vld [vmem:[%s168 + $0x180] sm:$0xff]
        %v218 = vld [vmem:[%s168 + $0x188] sm:$0xff]
        %v219 = vld [vmem:[%s168 + $0x190] sm:$0x3]
        %v220 = vld [vmem:[%s168 + $0x198] sm:$0xff]
        %v221 = vld [vmem:[%s168 + $0x1a0] sm:$0xff]
        %v222 = vld [vmem:[%s168 + $0x1a8] sm:$0x3]
        %v223 = vld [vmem:[%s1] sm:$0xf]
        %v224 = vld [vmem:[%s1 + $0x4] sm:$0xf]
        %v225 = vld [vmem:[%s1 + $0x8] sm:$0xf]
        %v226 = vld [vmem:[%s1 + $0xc] sm:$0xf]
        %v227 = vld [vmem:[%s1 + $0x10] sm:$0xf]
        %v228 = vld [vmem:[%s1 + $0x14] sm:$0xf]
        %v229 = vld [vmem:[%s1 + $0x18] sm:$0xf]
        %v230 = vld [vmem:[%s1 + $0x1c] sm:$0xf]
        %v231 = vld [vmem:[%s1 + $0x20] sm:$0xf]
        %v232 = vld [vmem:[%s1 + $0x24] sm:$0xf]
        %v233 = vld [vmem:[%s1 + $0x28] sm:$0xf]
        %v234 = vld [vmem:[%s1 + $0x2c] sm:$0xf]
        %v235 = vld [vmem:[%s1 + $0x30] sm:$0xf]
        %v236 = vld [vmem:[%s1 + $0x34] sm:$0xf]
        %v237 = vld [vmem:[%s1 + $0x38] sm:$0xf]
        %v238 = vld [vmem:[%s1 + $0x3c] sm:$0xf]
        %v239 = vld [vmem:[%s1 + $0x40] sm:$0xf]
        %v240 = vld [vmem:[%s1 + $0x44] sm:$0xf]
        %v241 = vld [vmem:[%s1 + $0x48] sm:$0xf]
        %v242 = vld [vmem:[%s1 + $0x4c] sm:$0xf]
        %v243 = vld [vmem:[%s1 + $0x50] sm:$0xf]
        %v244 = vld [vmem:[%s1 + $0x54] sm:$0xf]
        %v245 = vld [vmem:[%s1 + $0x58] sm:$0xf]
        %v246 = vld [vmem:[%s1 + $0x5c] sm:$0xf]
        %v247 = vld [vmem:[%s1 + $0x60] sm:$0xf]
        %v248 = vld [vmem:[%s1 + $0x64] sm:$0xf]
        %v249 = vld [vmem:[%s1 + $0x68] sm:$0xf]
        %v250 = vld [vmem:[%s1 + $0x6c] sm:$0xf]
        %v251 = vld [vmem:[%s1 + $0x70] sm:$0xf]
        %v252 = vld [vmem:[%s1 + $0x74] sm:$0xf]
        %v253 = vld [vmem:[%s1 + $0x78] sm:$0xf]
        %v254 = vld [vmem:[%s1 + $0x7c] sm:$0xf]
        %v255 = vld [vmem:[%s1 + $0x80] sm:$0xf]
        %v256 = vld [vmem:[%s1 + $0x84] sm:$0xf]
        %v257 = vld [vmem:[%s1 + $0x88] sm:$0xf]
        %v258 = vld [vmem:[%s1 + $0x8c] sm:$0xf]
        %v259 = vld [vmem:[%s1 + $0x90] sm:$0xf]
        %v260 = vld [vmem:[%s1 + $0x94] sm:$0xf]
        %v261 = vld [vmem:[%s1 + $0x98] sm:$0xf]
        %v262 = vld [vmem:[%s1 + $0x9c] sm:$0xf]
        %v263 = vld [vmem:[%s1 + $0xa0] sm:$0xf]
        %v264 = vld [vmem:[%s1 + $0xa4] sm:$0xf]
        %v265 = vld [vmem:[%s1 + $0xa8] sm:$0xf]
        %v266 = vld [vmem:[%s1 + $0xac] sm:$0xf]
        %v267 = vld [vmem:[%s1 + $0xb0] sm:$0xf]
        %v268 = vld [vmem:[%s1 + $0xb4] sm:$0xf]
        %v269 = vld [vmem:[%s1 + $0xb8] sm:$0xf]
        %v270 = vld [vmem:[%s1 + $0xbc] sm:$0xf]
        %v271 = vld [vmem:[%s1 + $0xc0] sm:$0xf]
        %v272 = vld [vmem:[%s1 + $0xc4] sm:$0xf]
        %v273 = vld [vmem:[%s1 + $0xc8] sm:$0xf]
        %v274 = vld [vmem:[%s1 + $0xcc] sm:$0xf]
        %v275 = vld [vmem:[%s1 + $0xd0] sm:$0xf]
        %v276 = vld [vmem:[%s1 + $0xd4] sm:$0xf]
        %v277 = vld [vmem:[%s1 + $0xd8] sm:$0xf]
        %v278 = vld [vmem:[%s1 + $0xdc] sm:$0xf]
        %v279 = vld [vmem:[%s1 + $0xe0] sm:$0xf]
        %v280 = vld [vmem:[%s1 + $0xe4] sm:$0xf]
        %v281 = vld [vmem:[%s1 + $0xe8] sm:$0xf]
        %v282 = vld [vmem:[%s1 + $0xec] sm:$0xf]
        %v283 = vld [vmem:[%s1 + $0xf0] sm:$0xf]
        %v284 = vld [vmem:[%s1 + $0xf4] sm:$0xf]
        %v285 = vld [vmem:[%s1 + $0xf8] sm:$0xf]
        %v286 = vld [vmem:[%s1 + $0xfc] sm:$0xf]
        %v287 = vld [vmem:[%s1 + $0x100] sm:$0xf]
        %v288 = vld [vmem:[%s1 + $0x104] sm:$0xf]
        %v289 = vld [vmem:[%s1 + $0x108] sm:$0xf]
        %v290 = vld [vmem:[%s1 + $0x10c] sm:$0xf]
        %v291 = vld [vmem:[%s1 + $0x110] sm:$0xf]
        %v292 = vld [vmem:[%s1 + $0x114] sm:$0xf]
        %v293 = vld [vmem:[%s1 + $0x118] sm:$0xf]
        %v294 = vld [vmem:[%s1 + $0x11c] sm:$0xf]
        %v295 = vld [vmem:[%s1 + $0x120] sm:$0xf]
        %v296 = vld [vmem:[%s1 + $0x124] sm:$0xf]
        %v297 = vld [vmem:[%s1 + $0x128] sm:$0xf]
        %v298 = vld [vmem:[%s1 + $0x12c] sm:$0xf]
        %v299 = vld [vmem:[%s1 + $0x130] sm:$0xf]
        %v300 = vld [vmem:[%s1 + $0x134] sm:$0xf]
        %v301 = vld [vmem:[%s1 + $0x138] sm:$0xf]
        %v302 = vld [vmem:[%s1 + $0x13c] sm:$0xf]
        %v303 = vld [vmem:[%s1 + $0x140] sm:$0xf]
        %v304 = vld [vmem:[%s1 + $0x144] sm:$0xf]
        %v305 = vld [vmem:[%s1 + $0x148] sm:$0xf]
        %v306 = vld [vmem:[%s1 + $0x14c] sm:$0xf]
        %v307 = vld [vmem:[%s1 + $0x150] sm:$0xf]
        %v308 = vld [vmem:[%s1 + $0x154] sm:$0xf]
        %v309 = vld [vmem:[%s1 + $0x158] sm:$0xf]
        %v310 = vld [vmem:[%s1 + $0x15c] sm:$0xf]
        %v311 = vld [vmem:[%s1 + $0x160] sm:$0xf]
        %v312 = vld [vmem:[%s1 + $0x164] sm:$0xf]
        %v313 = vld [vmem:[%s1 + $0x168] sm:$0xf]
        %v314 = vld [vmem:[%s1 + $0x16c] sm:$0xf]
        %v315 = vld [vmem:[%s1 + $0x170] sm:$0xf]
        %v316 = vld [vmem:[%s1 + $0x174] sm:$0xf]
        %v317 = vld [vmem:[%s1 + $0x178] sm:$0xf]
        %v318 = vld [vmem:[%s1 + $0x17c] sm:$0xf]
        %v319 = vld [vmem:[%s1 + $0x180] sm:$0xf]
        %v320 = vld [vmem:[%s1 + $0x184] sm:$0xf]
        %v321 = vld [vmem:[%s1 + $0x188] sm:$0xf]
        %v322 = vld [vmem:[%s1 + $0x18c] sm:$0xf]
        %v323 = vld [vmem:[%s1 + $0x190] sm:$0xf]
        %v324 = vld [vmem:[%s1 + $0x194] sm:$0xf]
        %v325 = vld [vmem:[%s1 + $0x198] sm:$0xf]
        %v326 = vld [vmem:[%s1 + $0x19c] sm:$0xf]
        %v327 = vld [vmem:[%s1 + $0x1a0] sm:$0xf]
        %v328 = vld [vmem:[%s1 + $0x1a4] sm:$0xf]
        %v329 = vld [vmem:[%s1 + $0x1a8] sm:$0xf]
        %v330 = vld [vmem:[%s1 + $0x1ac] sm:$0xf]
        %v331 = vld [vmem:[%s1 + $0x1b0] sm:$0xf]
        %v332 = vld [vmem:[%s1 + $0x1b4] sm:$0xf]
        %v333 = vld [vmem:[%s1 + $0x1b8] sm:$0xf]
        %v334 = vld [vmem:[%s1 + $0x1bc] sm:$0xf]
        %v335 = vld [vmem:[%s1 + $0x1c0] sm:$0xf]
        %v336 = vld [vmem:[%s1 + $0x1c4] sm:$0xf]
        %v337 = vld [vmem:[%s1 + $0x1c8] sm:$0xf]
        %v338 = vld [vmem:[%s1 + $0x1cc] sm:$0xf]
        %v339 = vld [vmem:[%s1 + $0x1d0] sm:$0xf]
        %v340 = vld [vmem:[%s1 + $0x1d4] sm:$0xf]
        %v341 = vld [vmem:[%s1 + $0x1d8] sm:$0xf]
        %v342 = vld [vmem:[%s1 + $0x1dc] sm:$0xf]
        %v343 = vld [vmem:[%s1 + $0x1e0] sm:$0xf]
        %v344 = vld [vmem:[%s1 + $0x1e4] sm:$0xf]
        %v345 = vld [vmem:[%s1 + $0x1e8] sm:$0xf]
        %v346 = vld [vmem:[%s1 + $0x1ec] sm:$0xf]
        %v347 = vld [vmem:[%s1 + $0x1f0] sm:$0xf]
        %v348 = vld [vmem:[%s1 + $0x1f4] sm:$0xf]
        %v349 = vld [vmem:[%s1 + $0x1f8] sm:$0xf]
        %v350 = vld [vmem:[%s1 + $0x1fc] sm:$0xf]
        %v351 = vld [vmem:[%s1 + $0x200] sm:$0xf]
        %v352 = vld [vmem:[%s1 + $0x204] sm:$0xf]
        %v353 = vld [vmem:[%s1 + $0x208] sm:$0xf]
        %v354 = vld [vmem:[%s1 + $0x20c] sm:$0xf]
        %v355 = vld [vmem:[%s1 + $0x210] sm:$0xf]
        %v356 = vld [vmem:[%s1 + $0x214] sm:$0xf]
        %v357 = vld [vmem:[%s1 + $0x218] sm:$0xf]
        %v358 = vld [vmem:[%s1 + $0x21c] sm:$0xf]
        %v359 = vld [vmem:[%s1 + $0x220] sm:$0xf]
        %v360 = vld [vmem:[%s1 + $0x224] sm:$0xf]
        %v361 = vld [vmem:[%s1 + $0x228] sm:$0xf]
        %v362 = vld [vmem:[%s1 + $0x22c] sm:$0xf]
        %v363 = vld [vmem:[%s1 + $0x230] sm:$0xf]
        %v364 = vld [vmem:[%s1 + $0x234] sm:$0xf]
        %v365 = vld [vmem:[%s1 + $0x238] sm:$0xf]
        %v366 = vld [vmem:[%s1 + $0x23c] sm:$0xf]
        %v367 = vpack.c.bf16 %v170, %v169
        %v368 = vpack.c.bf16 %v173, %v172
        %v369 = vpack.c.bf16 %v176, %v175
        %v370 = vpack.c.bf16 %v179, %v178
        %v371 = vpack.c.bf16 %v182, %v181
        %v372 = vpack.c.bf16 %v185, %v184
        %v373 = vpack.c.bf16 %v188, %v187
        %v374 = vpack.c.bf16 %v191, %v190
        %v375 = vpack.c.bf16 %v194, %v193
        %v376 = vpack.c.bf16 %v197, %v196
        %v377 = vpack.c.bf16 %v200, %v199
        %v378 = vpack.c.bf16 %v203, %v202
        %v379 = vpack.c.bf16 %v206, %v205
        %v380 = vpack.c.bf16 %v209, %v208
        %v381 = vpack.c.bf16 %v212, %v211
        %v382 = vpack.c.bf16 %v215, %v214
        %vm431 = vcmask 1046528
        %v432 = vrot.slane %v169, 1
        %v433 = vrot.slane %v170, 1
        %v434 = vsel %vm431, %v432, %v433
        %v435 = vrot.slane %v171, 1
        %v436 = vsel %vm431, %v433, %v435
        %v437 = vrot.slane %v172, 1
        %v438 = vrot.slane %v173, 1
        %v439 = vsel %vm431, %v437, %v438
        %v440 = vrot.slane %v174, 1
        %v441 = vsel %vm431, %v438, %v440
        %v442 = vrot.slane %v175, 1
        %v443 = vrot.slane %v176, 1
        %v444 = vsel %vm431, %v442, %v443
        %v445 = vrot.slane %v177, 1
        %v446 = vsel %vm431, %v443, %v445
        %v447 = vrot.slane %v178, 1
        %v448 = vrot.slane %v179, 1
        %v449 = vsel %vm431, %v447, %v448
        %v450 = vrot.slane %v180, 1
        %v451 = vsel %vm431, %v448, %v450
        %v452 = vrot.slane %v181, 1
        %v453 = vrot.slane %v182, 1
        %v454 = vsel %vm431, %v452, %v453
        %v455 = vrot.slane %v183, 1
        %v456 = vsel %vm431, %v453, %v455
        %v457 = vrot.slane %v184, 1
        %v458 = vrot.slane %v185, 1
        %v459 = vsel %vm431, %v457, %v458
        %v460 = vrot.slane %v186, 1
        %v461 = vsel %vm431, %v458, %v460
        %v462 = vrot.slane %v187, 1
        %v463 = vrot.slane %v188, 1
        %v464 = vsel %vm431, %v462, %v463
        %v465 = vrot.slane %v189, 1
        %v466 = vsel %vm431, %v463, %v465
        %v467 = vrot.slane %v190, 1
        %v468 = vrot.slane %v191, 1
        %v469 = vsel %vm431, %v467, %v468
        %v470 = vrot.slane %v192, 1
        %v471 = vsel %vm431, %v468, %v470
        %v472 = vrot.slane %v193, 1
        %v473 = vrot.slane %v194, 1
        %v474 = vsel %vm431, %v472, %v473
        %v475 = vrot.slane %v195, 1
        %v476 = vsel %vm431, %v473, %v475
        %v477 = vrot.slane %v196, 1
        %v478 = vrot.slane %v197, 1
        %v479 = vsel %vm431, %v477, %v478
        %v480 = vrot.slane %v198, 1
        %v481 = vsel %vm431, %v478, %v480
        %v482 = vrot.slane %v199, 1
        %v483 = vrot.slane %v200, 1
        %v484 = vsel %vm431, %v482, %v483
        %v485 = vrot.slane %v201, 1
        %v486 = vsel %vm431, %v483, %v485
        %v487 = vrot.slane %v202, 1
        %v488 = vrot.slane %v203, 1
        %v489 = vsel %vm431, %v487, %v488
        %v490 = vrot.slane %v204, 1
        %v491 = vsel %vm431, %v488, %v490
        %v492 = vrot.slane %v205, 1
        %v493 = vrot.slane %v206, 1
        %v494 = vsel %vm431, %v492, %v493
        %v495 = vrot.slane %v207, 1
        %v496 = vsel %vm431, %v493, %v495
        %v497 = vrot.slane %v208, 1
        %v498 = vrot.slane %v209, 1
        %v499 = vsel %vm431, %v497, %v498
        %v500 = vrot.slane %v210, 1
        %v501 = vsel %vm431, %v498, %v500
        %v502 = vrot.slane %v211, 1
        %v503 = vrot.slane %v212, 1
        %v504 = vsel %vm431, %v502, %v503
        %v505 = vrot.slane %v213, 1
        %v506 = vsel %vm431, %v503, %v505
        %v507 = vrot.slane %v214, 1
        %v508 = vrot.slane %v215, 1
        %v509 = vsel %vm431, %v507, %v508
        %v510 = vrot.slane %v216, 1
        %v511 = vsel %vm431, %v508, %v510
        %v544 = vpack.c.bf16 %v436, %v434
        %v545 = vpack.c.bf16 %v441, %v439
        %v546 = vpack.c.bf16 %v446, %v444
        %v547 = vpack.c.bf16 %v451, %v449
        %v548 = vpack.c.bf16 %v456, %v454
        %v549 = vpack.c.bf16 %v461, %v459
        %v550 = vpack.c.bf16 %v466, %v464
        %v551 = vpack.c.bf16 %v471, %v469
        %v552 = vpack.c.bf16 %v476, %v474
        %v553 = vpack.c.bf16 %v481, %v479
        %v554 = vpack.c.bf16 %v486, %v484
        %v555 = vpack.c.bf16 %v491, %v489
        %v556 = vpack.c.bf16 %v496, %v494
        %v557 = vpack.c.bf16 %v501, %v499
        %v558 = vpack.c.bf16 %v506, %v504
        %v559 = vpack.c.bf16 %v511, %v509
        %v576 = vunpack.c.l.b16 %v239
        %v577 = vunpack.c.l.b16 %v240
        %v578 = vunpack.c.l.b16 %v241
        %v579 = vunpack.c.l.b16 %v242
        %v580 = vunpack.c.l.b16 %v243
        %v581 = vunpack.c.l.b16 %v244
        %v582 = vunpack.c.l.b16 %v245
        %v583 = vunpack.c.l.b16 %v246
        %v584 = vunpack.c.l.b16 %v247
        %v585 = vunpack.c.l.b16 %v248
        %v586 = vunpack.c.l.b16 %v249
        %v587 = vunpack.c.l.b16 %v250
        %v588 = vunpack.c.l.b16 %v251
        %v589 = vunpack.c.l.b16 %v252
        %v590 = vunpack.c.l.b16 %v253
        %v591 = vunpack.c.l.b16 %v254
        %v592 = vpack.c.b16 %v577, %v576
        %v593 = vpack.c.b16 %v579, %v578
        %v594 = vpack.c.b16 %v581, %v580
        %v595 = vpack.c.b16 %v583, %v582
        %v596 = vpack.c.b16 %v585, %v584
        %v597 = vpack.c.b16 %v587, %v586
        %v598 = vpack.c.b16 %v589, %v588
        %v599 = vpack.c.b16 %v591, %v590
        %608 = vmatpush.bf16.msra.mxu0 %v599
        %609 = vmatpush.bf16.msra.mxu0 %v598
        %610 = vmatpush.bf16.msra.mxu0 %v597
        %611 = vmatpush.bf16.msra.mxu0 %v596
        %612 = vmatpush.bf16.msra.mxu0 %v595
        %613 = vmatpush.bf16.msra.mxu0 %v594
        %614 = vmatpush.bf16.msra.mxu0 %v593
        %615 = vmatpush.bf16.msra.mxu0 %v592
        %616 = vmatmul.bf16.gmra.mxu0 %v544
        %v617 = vpop.f32.mrf.mxu0
        %v618 = vadd.f32 0.0, %v617
        %v619 = vpop.f32.mrf.mxu0
        %v620 = vadd.f32 0.0, %v619
        %621 = vmatmul.bf16.gmra.mxu0 %v545
        %v622 = vpop.f32.mrf.mxu0
        %v623 = vadd.f32 0.0, %v622
        %v624 = vpop.f32.mrf.mxu0
        %v625 = vadd.f32 0.0, %v624
        %626 = vmatmul.bf16.gmra.mxu0 %v546
        %v627 = vpop.f32.mrf.mxu0
        %v628 = vadd.f32 0.0, %v627
        %v629 = vpop.f32.mrf.mxu0
        %v630 = vadd.f32 0.0, %v629
        %631 = vmatmul.bf16.gmra.mxu0 %v547
        %v632 = vpop.f32.mrf.mxu0
        %v633 = vadd.f32 0.0, %v632
        %v634 = vpop.f32.mrf.mxu0
        %v635 = vadd.f32 0.0, %v634
        %636 = vmatmul.bf16.gmra.mxu0 %v548
        %v637 = vpop.f32.mrf.mxu0
        %v638 = vadd.f32 0.0, %v637
        %v639 = vpop.f32.mrf.mxu0
        %v640 = vadd.f32 0.0, %v639
        %641 = vmatmul.bf16.gmra.mxu0 %v549
        %v642 = vpop.f32.mrf.mxu0
        %v643 = vadd.f32 0.0, %v642
        %v644 = vpop.f32.mrf.mxu0
        %v645 = vadd.f32 0.0, %v644
        %646 = vmatmul.bf16.gmra.mxu0 %v550
        %v647 = vpop.f32.mrf.mxu0
        %v648 = vadd.f32 0.0, %v647
        %v649 = vpop.f32.mrf.mxu0
        %v650 = vadd.f32 0.0, %v649
        %651 = vmatmul.bf16.gmra.mxu0 %v551
        %v652 = vpop.f32.mrf.mxu0
        %v653 = vadd.f32 0.0, %v652
        %v654 = vpop.f32.mrf.mxu0
        %v655 = vadd.f32 0.0, %v654
        %656 = vmatmul.bf16.gmra.mxu0 %v552
        %v657 = vpop.f32.mrf.mxu0
        %v658 = vadd.f32 0.0, %v657
        %v659 = vpop.f32.mrf.mxu0
        %v660 = vadd.f32 0.0, %v659
        %661 = vmatmul.bf16.gmra.mxu0 %v553
        %v662 = vpop.f32.mrf.mxu0
        %v663 = vadd.f32 0.0, %v662
        %v664 = vpop.f32.mrf.mxu0
        %v665 = vadd.f32 0.0, %v664
        %666 = vmatmul.bf16.gmra.mxu0 %v554
        %v667 = vpop.f32.mrf.mxu0
        %v668 = vadd.f32 0.0, %v667
        %v669 = vpop.f32.mrf.mxu0
        %v670 = vadd.f32 0.0, %v669
        %671 = vmatmul.bf16.gmra.mxu0 %v555
        %v672 = vpop.f32.mrf.mxu0
        %v673 = vadd.f32 0.0, %v672
        %v674 = vpop.f32.mrf.mxu0
        %v675 = vadd.f32 0.0, %v674
        %676 = vmatmul.bf16.gmra.mxu0 %v556
        %v677 = vpop.f32.mrf.mxu0
        %v678 = vadd.f32 0.0, %v677
        %v679 = vpop.f32.mrf.mxu0
        %v680 = vadd.f32 0.0, %v679
        %681 = vmatmul.bf16.gmra.mxu0 %v557
        %v682 = vpop.f32.mrf.mxu0
        %v683 = vadd.f32 0.0, %v682
        %v684 = vpop.f32.mrf.mxu0
        %v685 = vadd.f32 0.0, %v684
        %686 = vmatmul.bf16.gmra.mxu0 %v558
        %v687 = vpop.f32.mrf.mxu0
        %v688 = vadd.f32 0.0, %v687
        %v689 = vpop.f32.mrf.mxu0
        %v690 = vadd.f32 0.0, %v689
        %691 = vmatmul.bf16.gmra.mxu0 %v559
        %v692 = vpop.f32.mrf.mxu0
        %v693 = vadd.f32 0.0, %v692
        %v694 = vpop.f32.mrf.mxu0
        %v695 = vadd.f32 0.0, %v694
        %696 = vdwg.mxu0
        %v713 = vunpack.c.l.b16 %v223
        %v714 = vunpack.c.l.b16 %v224
        %v715 = vunpack.c.l.b16 %v225
        %v716 = vunpack.c.l.b16 %v226
        %v717 = vunpack.c.l.b16 %v227
        %v718 = vunpack.c.l.b16 %v228
        %v719 = vunpack.c.l.b16 %v229
        %v720 = vunpack.c.l.b16 %v230
        %v721 = vunpack.c.l.b16 %v231
        %v722 = vunpack.c.l.b16 %v232
        %v723 = vunpack.c.l.b16 %v233
        %v724 = vunpack.c.l.b16 %v234
        %v725 = vunpack.c.l.b16 %v235
        %v726 = vunpack.c.l.b16 %v236
        %v727 = vunpack.c.l.b16 %v237
        %v728 = vunpack.c.l.b16 %v238
        %v729 = vpack.c.b16 %v714, %v713
        %v730 = vpack.c.b16 %v716, %v715
        %v731 = vpack.c.b16 %v718, %v717
        %v732 = vpack.c.b16 %v720, %v719
        %v733 = vpack.c.b16 %v722, %v721
        %v734 = vpack.c.b16 %v724, %v723
        %v735 = vpack.c.b16 %v726, %v725
        %v736 = vpack.c.b16 %v728, %v727
        %745 = vmatpush.bf16.msra.mxu0 %v736
        %746 = vmatpush.bf16.msra.mxu0 %v735
        %747 = vmatpush.bf16.msra.mxu0 %v734
        %748 = vmatpush.bf16.msra.mxu0 %v733
        %749 = vmatpush.bf16.msra.mxu0 %v732
        %750 = vmatpush.bf16.msra.mxu0 %v731
        %751 = vmatpush.bf16.msra.mxu0 %v730
        %752 = vmatpush.bf16.msra.mxu0 %v729
        %753 = vmatmul.bf16.gmra.mxu0 %v367
        %v754 = vpop.f32.mrf.mxu0
        %v755 = vadd.f32 %v618, %v754
        %v756 = vpop.f32.mrf.mxu0
        %v757 = vadd.f32 %v620, %v756
        %758 = vmatmul.bf16.gmra.mxu0 %v368
        %v759 = vpop.f32.mrf.mxu0
        %v760 = vadd.f32 %v623, %v759
        %v761 = vpop.f32.mrf.mxu0
        %v762 = vadd.f32 %v625, %v761
        %763 = vmatmul.bf16.gmra.mxu0 %v369
        %v764 = vpop.f32.mrf.mxu0
        %v765 = vadd.f32 %v628, %v764
        %v766 = vpop.f32.mrf.mxu0
        %v767 = vadd.f32 %v630, %v766
        %768 = vmatmul.bf16.gmra.mxu0 %v370
        %v769 = vpop.f32.mrf.mxu0
        %v770 = vadd.f32 %v633, %v769
        %v771 = vpop.f32.mrf.mxu0
        %v772 = vadd.f32 %v635, %v771
        %773 = vmatmul.bf16.gmra.mxu0 %v371
        %v774 = vpop.f32.mrf.mxu0
        %v775 = vadd.f32 %v638, %v774
        %v776 = vpop.f32.mrf.mxu0
        %v777 = vadd.f32 %v640, %v776
        %778 = vmatmul.bf16.gmra.mxu0 %v372
        %v779 = vpop.f32.mrf.mxu0
        %v780 = vadd.f32 %v643, %v779
        %v781 = vpop.f32.mrf.mxu0
        %v782 = vadd.f32 %v645, %v781
        %783 = vmatmul.bf16.gmra.mxu0 %v373
        %v784 = vpop.f32.mrf.mxu0
        %v785 = vadd.f32 %v648, %v784
        %v786 = vpop.f32.mrf.mxu0
        %v787 = vadd.f32 %v650, %v786
        %788 = vmatmul.bf16.gmra.mxu0 %v374
        %v789 = vpop.f32.mrf.mxu0
        %v790 = vadd.f32 %v653, %v789
        %v791 = vpop.f32.mrf.mxu0
        %v792 = vadd.f32 %v655, %v791
        %793 = vmatmul.bf16.gmra.mxu0 %v375
        %v794 = vpop.f32.mrf.mxu0
        %v795 = vadd.f32 %v658, %v794
        %v796 = vpop.f32.mrf.mxu0
        %v797 = vadd.f32 %v660, %v796
        %798 = vmatmul.bf16.gmra.mxu0 %v376
        %v799 = vpop.f32.mrf.mxu0
        %v800 = vadd.f32 %v663, %v799
        %v801 = vpop.f32.mrf.mxu0
        %v802 = vadd.f32 %v665, %v801
        %803 = vmatmul.bf16.gmra.mxu0 %v377
        %v804 = vpop.f32.mrf.mxu0
        %v805 = vadd.f32 %v668, %v804
        %v806 = vpop.f32.mrf.mxu0
        %v807 = vadd.f32 %v670, %v806
        %808 = vmatmul.bf16.gmra.mxu0 %v378
        %v809 = vpop.f32.mrf.mxu0
        %v810 = vadd.f32 %v673, %v809
        %v811 = vpop.f32.mrf.mxu0
        %v812 = vadd.f32 %v675, %v811
        %813 = vmatmul.bf16.gmra.mxu0 %v379
        %v814 = vpop.f32.mrf.mxu0
        %v815 = vadd.f32 %v678, %v814
        %v816 = vpop.f32.mrf.mxu0
        %v817 = vadd.f32 %v680, %v816
        %818 = vmatmul.bf16.gmra.mxu0 %v380
        %v819 = vpop.f32.mrf.mxu0
        %v820 = vadd.f32 %v683, %v819
        %v821 = vpop.f32.mrf.mxu0
        %v822 = vadd.f32 %v685, %v821
        %823 = vmatmul.bf16.gmra.mxu0 %v381
        %v824 = vpop.f32.mrf.mxu0
        %v825 = vadd.f32 %v688, %v824
        %v826 = vpop.f32.mrf.mxu0
        %v827 = vadd.f32 %v690, %v826
        %828 = vmatmul.bf16.gmra.mxu0 %v382
        %v829 = vpop.f32.mrf.mxu0
        %v830 = vadd.f32 %v693, %v829
        %v831 = vpop.f32.mrf.mxu0
        %v832 = vadd.f32 %v695, %v831
        %833 = vdwg.mxu0
        %vm834 = vcmask 1045504
        %v835 = vrot.slane %v169, 2
        %v836 = vrot.slane %v170, 2
        %v837 = vsel %vm834, %v835, %v836
        %v838 = vrot.slane %v171, 2
        %v839 = vsel %vm834, %v836, %v838
        %v840 = vrot.slane %v172, 2
        %v841 = vrot.slane %v173, 2
        %v842 = vsel %vm834, %v840, %v841
        %v843 = vrot.slane %v174, 2
        %v844 = vsel %vm834, %v841, %v843
        %v845 = vrot.slane %v175, 2
        %v846 = vrot.slane %v176, 2
        %v847 = vsel %vm834, %v845, %v846
        %v848 = vrot.slane %v177, 2
        %v849 = vsel %vm834, %v846, %v848
        %v850 = vrot.slane %v178, 2
        %v851 = vrot.slane %v179, 2
        %v852 = vsel %vm834, %v850, %v851
        %v853 = vrot.slane %v180, 2
        %v854 = vsel %vm834, %v851, %v853
        %v855 = vrot.slane %v181, 2
        %v856 = vrot.slane %v182, 2
        %v857 = vsel %vm834, %v855, %v856
        %v858 = vrot.slane %v183, 2
        %v859 = vsel %vm834, %v856, %v858
        %v860 = vrot.slane %v184, 2
        %v861 = vrot.slane %v185, 2
        %v862 = vsel %vm834, %v860, %v861
        %v863 = vrot.slane %v186, 2
        %v864 = vsel %vm834, %v861, %v863
        %v865 = vrot.slane %v187, 2
        %v866 = vrot.slane %v188, 2
        %v867 = vsel %vm834, %v865, %v866
        %v868 = vrot.slane %v189, 2
        %v869 = vsel %vm834, %v866, %v868
        %v870 = vrot.slane %v190, 2
        %v871 = vrot.slane %v191, 2
        %v872 = vsel %vm834, %v870, %v871
        %v873 = vrot.slane %v192, 2
        %v874 = vsel %vm834, %v871, %v873
        %v875 = vrot.slane %v193, 2
        %v876 = vrot.slane %v194, 2
        %v877 = vsel %vm834, %v875, %v876
        %v878 = vrot.slane %v195, 2
        %v879 = vsel %vm834, %v876, %v878
        %v880 = vrot.slane %v196, 2
        %v881 = vrot.slane %v197, 2
        %v882 = vsel %vm834, %v880, %v881
        %v883 = vrot.slane %v198, 2
        %v884 = vsel %vm834, %v881, %v883
        %v885 = vrot.slane %v199, 2
        %v886 = vrot.slane %v200, 2
        %v887 = vsel %vm834, %v885, %v886
        %v888 = vrot.slane %v201, 2
        %v889 = vsel %vm834, %v886, %v888
        %v890 = vrot.slane %v202, 2
        %v891 = vrot.slane %v203, 2
        %v892 = vsel %vm834, %v890, %v891
        %v893 = vrot.slane %v204, 2
        %v894 = vsel %vm834, %v891, %v893
        %v895 = vrot.slane %v205, 2
        %v896 = vrot.slane %v206, 2
        %v897 = vsel %vm834, %v895, %v896
        %v898 = vrot.slane %v207, 2
        %v899 = vsel %vm834, %v896, %v898
        %v900 = vrot.slane %v208, 2
        %v901 = vrot.slane %v209, 2
        %v902 = vsel %vm834, %v900, %v901
        %v903 = vrot.slane %v210, 2
        %v904 = vsel %vm834, %v901, %v903
        %v905 = vrot.slane %v211, 2
        %v906 = vrot.slane %v212, 2
        %v907 = vsel %vm834, %v905, %v906
        %v908 = vrot.slane %v213, 2
        %v909 = vsel %vm834, %v906, %v908
        %v910 = vrot.slane %v214, 2
        %v911 = vrot.slane %v215, 2
        %v912 = vsel %vm834, %v910, %v911
        %v913 = vrot.slane %v216, 2
        %v914 = vsel %vm834, %v911, %v913
        %v947 = vpack.c.bf16 %v839, %v837
        %v948 = vpack.c.bf16 %v844, %v842
        %v949 = vpack.c.bf16 %v849, %v847
        %v950 = vpack.c.bf16 %v854, %v852
        %v951 = vpack.c.bf16 %v859, %v857
        %v952 = vpack.c.bf16 %v864, %v862
        %v953 = vpack.c.bf16 %v869, %v867
        %v954 = vpack.c.bf16 %v874, %v872
        %v955 = vpack.c.bf16 %v879, %v877
        %v956 = vpack.c.bf16 %v884, %v882
        %v957 = vpack.c.bf16 %v889, %v887
        %v958 = vpack.c.bf16 %v894, %v892
        %v959 = vpack.c.bf16 %v899, %v897
        %v960 = vpack.c.bf16 %v904, %v902
        %v961 = vpack.c.bf16 %v909, %v907
        %v962 = vpack.c.bf16 %v914, %v912
        %v979 = vunpack.c.l.b16 %v255
        %v980 = vunpack.c.l.b16 %v256
        %v981 = vunpack.c.l.b16 %v257
        %v982 = vunpack.c.l.b16 %v258
        %v983 = vunpack.c.l.b16 %v259
        %v984 = vunpack.c.l.b16 %v260
        %v985 = vunpack.c.l.b16 %v261
        %v986 = vunpack.c.l.b16 %v262
        %v987 = vunpack.c.l.b16 %v263
        %v988 = vunpack.c.l.b16 %v264
        %v989 = vunpack.c.l.b16 %v265
        %v990 = vunpack.c.l.b16 %v266
        %v991 = vunpack.c.l.b16 %v267
        %v992 = vunpack.c.l.b16 %v268
        %v993 = vunpack.c.l.b16 %v269
        %v994 = vunpack.c.l.b16 %v270
        %v995 = vpack.c.b16 %v980, %v979
        %v996 = vpack.c.b16 %v982, %v981
        %v997 = vpack.c.b16 %v984, %v983
        %v998 = vpack.c.b16 %v986, %v985
        %v999 = vpack.c.b16 %v988, %v987
        %v1000 = vpack.c.b16 %v990, %v989
        %v1001 = vpack.c.b16 %v992, %v991
        %v1002 = vpack.c.b16 %v994, %v993
        %1011 = vmatpush.bf16.msra.mxu0 %v1002
        %1012 = vmatpush.bf16.msra.mxu0 %v1001
        %1013 = vmatpush.bf16.msra.mxu0 %v1000
        %1014 = vmatpush.bf16.msra.mxu0 %v999
        %1015 = vmatpush.bf16.msra.mxu0 %v998
        %1016 = vmatpush.bf16.msra.mxu0 %v997
        %1017 = vmatpush.bf16.msra.mxu0 %v996
        %1018 = vmatpush.bf16.msra.mxu0 %v995
        %1019 = vmatmul.bf16.gmra.mxu0 %v947
        %v1020 = vpop.f32.mrf.mxu0
        %v1021 = vadd.f32 0.0, %v1020
        %v1022 = vpop.f32.mrf.mxu0
        %v1023 = vadd.f32 0.0, %v1022
        %1024 = vmatmul.bf16.gmra.mxu0 %v948
        %v1025 = vpop.f32.mrf.mxu0
        %v1026 = vadd.f32 0.0, %v1025
        %v1027 = vpop.f32.mrf.mxu0
        %v1028 = vadd.f32 0.0, %v1027
        %1029 = vmatmul.bf16.gmra.mxu0 %v949
        %v1030 = vpop.f32.mrf.mxu0
        %v1031 = vadd.f32 0.0, %v1030
        %v1032 = vpop.f32.mrf.mxu0
        %v1033 = vadd.f32 0.0, %v1032
        %1034 = vmatmul.bf16.gmra.mxu0 %v950
        %v1035 = vpop.f32.mrf.mxu0
        %v1036 = vadd.f32 0.0, %v1035
        %v1037 = vpop.f32.mrf.mxu0
        %v1038 = vadd.f32 0.0, %v1037
        %1039 = vmatmul.bf16.gmra.mxu0 %v951
        %v1040 = vpop.f32.mrf.mxu0
        %v1041 = vadd.f32 0.0, %v1040
        %v1042 = vpop.f32.mrf.mxu0
        %v1043 = vadd.f32 0.0, %v1042
        %1044 = vmatmul.bf16.gmra.mxu0 %v952
        %v1045 = vpop.f32.mrf.mxu0
        %v1046 = vadd.f32 0.0, %v1045
        %v1047 = vpop.f32.mrf.mxu0
        %v1048 = vadd.f32 0.0, %v1047
        %1049 = vmatmul.bf16.gmra.mxu0 %v953
        %v1050 = vpop.f32.mrf.mxu0
        %v1051 = vadd.f32 0.0, %v1050
        %v1052 = vpop.f32.mrf.mxu0
        %v1053 = vadd.f32 0.0, %v1052
        %1054 = vmatmul.bf16.gmra.mxu0 %v954
        %v1055 = vpop.f32.mrf.mxu0
        %v1056 = vadd.f32 0.0, %v1055
        %v1057 = vpop.f32.mrf.mxu0
        %v1058 = vadd.f32 0.0, %v1057
        %1059 = vmatmul.bf16.gmra.mxu0 %v955
        %v1060 = vpop.f32.mrf.mxu0
        %v1061 = vadd.f32 0.0, %v1060
        %v1062 = vpop.f32.mrf.mxu0
        %v1063 = vadd.f32 0.0, %v1062
        %1064 = vmatmul.bf16.gmra.mxu0 %v956
        %v1065 = vpop.f32.mrf.mxu0
        %v1066 = vadd.f32 0.0, %v1065
        %v1067 = vpop.f32.mrf.mxu0
        %v1068 = vadd.f32 0.0, %v1067
        %1069 = vmatmul.bf16.gmra.mxu0 %v957
        %v1070 = vpop.f32.mrf.mxu0
        %v1071 = vadd.f32 0.0, %v1070
        %v1072 = vpop.f32.mrf.mxu0
        %v1073 = vadd.f32 0.0, %v1072
        %1074 = vmatmul.bf16.gmra.mxu0 %v958
        %v1075 = vpop.f32.mrf.mxu0
        %v1076 = vadd.f32 0.0, %v1075
        %v1077 = vpop.f32.mrf.mxu0
        %v1078 = vadd.f32 0.0, %v1077
        %1079 = vmatmul.bf16.gmra.mxu0 %v959
        %v1080 = vpop.f32.mrf.mxu0
        %v1081 = vadd.f32 0.0, %v1080
        %v1082 = vpop.f32.mrf.mxu0
        %v1083 = vadd.f32 0.0, %v1082
        %1084 = vmatmul.bf16.gmra.mxu0 %v960
        %v1085 = vpop.f32.mrf.mxu0
        %v1086 = vadd.f32 0.0, %v1085
        %v1087 = vpop.f32.mrf.mxu0
        %v1088 = vadd.f32 0.0, %v1087
        %1089 = vmatmul.bf16.gmra.mxu0 %v961
        %v1090 = vpop.f32.mrf.mxu0
        %v1091 = vadd.f32 0.0, %v1090
        %v1092 = vpop.f32.mrf.mxu0
        %v1093 = vadd.f32 0.0, %v1092
        %1094 = vmatmul.bf16.gmra.mxu0 %v962
        %v1095 = vpop.f32.mrf.mxu0
        %v1096 = vadd.f32 0.0, %v1095
        %v1097 = vpop.f32.mrf.mxu0
        %v1098 = vadd.f32 0.0, %v1097
        %1099 = vdwg.mxu0
        %v1100 = vadd.f32 %v755, %v1021
        %v1101 = vadd.f32 %v757, %v1023
        %v1102 = vadd.f32 %v760, %v1026
        %v1103 = vadd.f32 %v762, %v1028
        %v1104 = vadd.f32 %v765, %v1031
        %v1105 = vadd.f32 %v767, %v1033
        %v1106 = vadd.f32 %v770, %v1036
        %v1107 = vadd.f32 %v772, %v1038
        %v1108 = vadd.f32 %v775, %v1041
        %v1109 = vadd.f32 %v777, %v1043
        %v1110 = vadd.f32 %v780, %v1046
        %v1111 = vadd.f32 %v782, %v1048
        %v1112 = vadd.f32 %v785, %v1051
        %v1113 = vadd.f32 %v787, %v1053
        %v1114 = vadd.f32 %v790, %v1056
        %v1115 = vadd.f32 %v792, %v1058
        %v1116 = vadd.f32 %v795, %v1061
        %v1117 = vadd.f32 %v797, %v1063
        %v1118 = vadd.f32 %v800, %v1066
        %v1119 = vadd.f32 %v802, %v1068
        %v1120 = vadd.f32 %v805, %v1071
        %v1121 = vadd.f32 %v807, %v1073
        %v1122 = vadd.f32 %v810, %v1076
        %v1123 = vadd.f32 %v812, %v1078
        %v1124 = vadd.f32 %v815, %v1081
        %v1125 = vadd.f32 %v817, %v1083
        %v1126 = vadd.f32 %v820, %v1086
        %v1127 = vadd.f32 %v822, %v1088
        %v1128 = vadd.f32 %v825, %v1091
        %v1129 = vadd.f32 %v827, %v1093
        %v1130 = vadd.f32 %v830, %v1096
        %v1131 = vadd.f32 %v832, %v1098
        %v1132 = vpack.c.bf16 %v218, %v217
        %v1149 = vunpack.c.l.b16 %v271
        %v1150 = vunpack.c.l.b16 %v272
        %v1151 = vunpack.c.l.b16 %v273
        %v1152 = vunpack.c.l.b16 %v274
        %v1153 = vunpack.c.l.b16 %v275
        %v1154 = vunpack.c.l.b16 %v276
        %v1155 = vunpack.c.l.b16 %v277
        %v1156 = vunpack.c.l.b16 %v278
        %v1157 = vunpack.c.l.b16 %v279
        %v1158 = vunpack.c.l.b16 %v280
        %v1159 = vunpack.c.l.b16 %v281
        %v1160 = vunpack.c.l.b16 %v282
        %v1161 = vunpack.c.l.b16 %v283
        %v1162 = vunpack.c.l.b16 %v284
        %v1163 = vunpack.c.l.b16 %v285
        %v1164 = vunpack.c.l.b16 %v286
        %v1165 = vpack.c.b16 %v1150, %v1149
        %v1166 = vpack.c.b16 %v1152, %v1151
        %v1167 = vpack.c.b16 %v1154, %v1153
        %v1168 = vpack.c.b16 %v1156, %v1155
        %v1169 = vpack.c.b16 %v1158, %v1157
        %v1170 = vpack.c.b16 %v1160, %v1159
        %v1171 = vpack.c.b16 %v1162, %v1161
        %v1172 = vpack.c.b16 %v1164, %v1163
        %1181 = vmatpush.bf16.msra.mxu0 %v1172
        %1182 = vmatpush.bf16.msra.mxu0 %v1171
        %1183 = vmatpush.bf16.msra.mxu0 %v1170
        %1184 = vmatpush.bf16.msra.mxu0 %v1169
        %1185 = vmatpush.bf16.msra.mxu0 %v1168
        %1186 = vmatpush.bf16.msra.mxu0 %v1167
        %1187 = vmatpush.bf16.msra.mxu0 %v1166
        %1188 = vmatpush.bf16.msra.mxu0 %v1165
        %1189 = vmatmul.bf16.gmra.mxu0 %v368
        %v1190 = vpop.f32.mrf.mxu0
        %v1191 = vadd.f32 0.0, %v1190
        %v1192 = vpop.f32.mrf.mxu0
        %v1193 = vadd.f32 0.0, %v1192
        %1194 = vmatmul.bf16.gmra.mxu0 %v369
        %v1195 = vpop.f32.mrf.mxu0
        %v1196 = vadd.f32 0.0, %v1195
        %v1197 = vpop.f32.mrf.mxu0
        %v1198 = vadd.f32 0.0, %v1197
        %1199 = vmatmul.bf16.gmra.mxu0 %v370
        %v1200 = vpop.f32.mrf.mxu0
        %v1201 = vadd.f32 0.0, %v1200
        %v1202 = vpop.f32.mrf.mxu0
        %v1203 = vadd.f32 0.0, %v1202
        %1204 = vmatmul.bf16.gmra.mxu0 %v371
        %v1205 = vpop.f32.mrf.mxu0
        %v1206 = vadd.f32 0.0, %v1205
        %v1207 = vpop.f32.mrf.mxu0
        %v1208 = vadd.f32 0.0, %v1207
        %1209 = vmatmul.bf16.gmra.mxu0 %v372
        %v1210 = vpop.f32.mrf.mxu0
        %v1211 = vadd.f32 0.0, %v1210
        %v1212 = vpop.f32.mrf.mxu0
        %v1213 = vadd.f32 0.0, %v1212
        %1214 = vmatmul.bf16.gmra.mxu0 %v373
        %v1215 = vpop.f32.mrf.mxu0
        %v1216 = vadd.f32 0.0, %v1215
        %v1217 = vpop.f32.mrf.mxu0
        %v1218 = vadd.f32 0.0, %v1217
        %1219 = vmatmul.bf16.gmra.mxu0 %v374
        %v1220 = vpop.f32.mrf.mxu0
        %v1221 = vadd.f32 0.0, %v1220
        %v1222 = vpop.f32.mrf.mxu0
        %v1223 = vadd.f32 0.0, %v1222
        %1224 = vmatmul.bf16.gmra.mxu0 %v375
        %v1225 = vpop.f32.mrf.mxu0
        %v1226 = vadd.f32 0.0, %v1225
        %v1227 = vpop.f32.mrf.mxu0
        %v1228 = vadd.f32 0.0, %v1227
        %1229 = vmatmul.bf16.gmra.mxu0 %v376
        %v1230 = vpop.f32.mrf.mxu0
        %v1231 = vadd.f32 0.0, %v1230
        %v1232 = vpop.f32.mrf.mxu0
        %v1233 = vadd.f32 0.0, %v1232
        %1234 = vmatmul.bf16.gmra.mxu0 %v377
        %v1235 = vpop.f32.mrf.mxu0
        %v1236 = vadd.f32 0.0, %v1235
        %v1237 = vpop.f32.mrf.mxu0
        %v1238 = vadd.f32 0.0, %v1237
        %1239 = vmatmul.bf16.gmra.mxu0 %v378
        %v1240 = vpop.f32.mrf.mxu0
        %v1241 = vadd.f32 0.0, %v1240
        %v1242 = vpop.f32.mrf.mxu0
        %v1243 = vadd.f32 0.0, %v1242
        %1244 = vmatmul.bf16.gmra.mxu0 %v379
        %v1245 = vpop.f32.mrf.mxu0
        %v1246 = vadd.f32 0.0, %v1245
        %v1247 = vpop.f32.mrf.mxu0
        %v1248 = vadd.f32 0.0, %v1247
        %1249 = vmatmul.bf16.gmra.mxu0 %v380
        %v1250 = vpop.f32.mrf.mxu0
        %v1251 = vadd.f32 0.0, %v1250
        %v1252 = vpop.f32.mrf.mxu0
        %v1253 = vadd.f32 0.0, %v1252
        %1254 = vmatmul.bf16.gmra.mxu0 %v381
        %v1255 = vpop.f32.mrf.mxu0
        %v1256 = vadd.f32 0.0, %v1255
        %v1257 = vpop.f32.mrf.mxu0
        %v1258 = vadd.f32 0.0, %v1257
        %1259 = vmatmul.bf16.gmra.mxu0 %v382
        %v1260 = vpop.f32.mrf.mxu0
        %v1261 = vadd.f32 0.0, %v1260
        %v1262 = vpop.f32.mrf.mxu0
        %v1263 = vadd.f32 0.0, %v1262
        %1264 = vmatmul.bf16.gmra.mxu0 %v1132
        %v1265 = vpop.f32.mrf.mxu0
        %v1266 = vadd.f32 0.0, %v1265
        %v1267 = vpop.f32.mrf.mxu0
        %v1268 = vadd.f32 0.0, %v1267
        %1269 = vdwg.mxu0
        %v1270 = vadd.f32 %v1100, %v1191
        %v1271 = vadd.f32 %v1101, %v1193
        %v1272 = vadd.f32 %v1102, %v1196
        %v1273 = vadd.f32 %v1103, %v1198
        %v1274 = vadd.f32 %v1104, %v1201
        %v1275 = vadd.f32 %v1105, %v1203
        %v1276 = vadd.f32 %v1106, %v1206
        %v1277 = vadd.f32 %v1107, %v1208
        %v1278 = vadd.f32 %v1108, %v1211
        %v1279 = vadd.f32 %v1109, %v1213
        %v1280 = vadd.f32 %v1110, %v1216
        %v1281 = vadd.f32 %v1111, %v1218
        %v1282 = vadd.f32 %v1112, %v1221
        %v1283 = vadd.f32 %v1113, %v1223
        %v1284 = vadd.f32 %v1114, %v1226
        %v1285 = vadd.f32 %v1115, %v1228
        %v1286 = vadd.f32 %v1116, %v1231
        %v1287 = vadd.f32 %v1117, %v1233
        %v1288 = vadd.f32 %v1118, %v1236
        %v1289 = vadd.f32 %v1119, %v1238
        %v1290 = vadd.f32 %v1120, %v1241
        %v1291 = vadd.f32 %v1121, %v1243
        %v1292 = vadd.f32 %v1122, %v1246
        %v1293 = vadd.f32 %v1123, %v1248
        %v1294 = vadd.f32 %v1124, %v1251
        %v1295 = vadd.f32 %v1125, %v1253
        %v1296 = vadd.f32 %v1126, %v1256
        %v1297 = vadd.f32 %v1127, %v1258
        %v1298 = vadd.f32 %v1128, %v1261
        %v1299 = vadd.f32 %v1129, %v1263
        %v1300 = vadd.f32 %v1130, %v1266
        %v1301 = vadd.f32 %v1131, %v1268
        %v1305 = vrot.slane %v217, 1
        %v1306 = vrot.slane %v218, 1
        %v1307 = vsel %vm431, %v1305, %v1306
        %v1308 = vrot.slane %v219, 1
        %v1309 = vsel %vm431, %v1306, %v1308
        %v1312 = vpack.c.bf16 %v1309, %v1307
        %v1329 = vunpack.c.l.b16 %v287
        %v1330 = vunpack.c.l.b16 %v288
        %v1331 = vunpack.c.l.b16 %v289
        %v1332 = vunpack.c.l.b16 %v290
        %v1333 = vunpack.c.l.b16 %v291
        %v1334 = vunpack.c.l.b16 %v292
        %v1335 = vunpack.c.l.b16 %v293
        %v1336 = vunpack.c.l.b16 %v294
        %v1337 = vunpack.c.l.b16 %v295
        %v1338 = vunpack.c.l.b16 %v296
        %v1339 = vunpack.c.l.b16 %v297
        %v1340 = vunpack.c.l.b16 %v298
        %v1341 = vunpack.c.l.b16 %v299
        %v1342 = vunpack.c.l.b16 %v300
        %v1343 = vunpack.c.l.b16 %v301
        %v1344 = vunpack.c.l.b16 %v302
        %v1345 = vpack.c.b16 %v1330, %v1329
        %v1346 = vpack.c.b16 %v1332, %v1331
        %v1347 = vpack.c.b16 %v1334, %v1333
        %v1348 = vpack.c.b16 %v1336, %v1335
        %v1349 = vpack.c.b16 %v1338, %v1337
        %v1350 = vpack.c.b16 %v1340, %v1339
        %v1351 = vpack.c.b16 %v1342, %v1341
        %v1352 = vpack.c.b16 %v1344, %v1343
        %1361 = vmatpush.bf16.msra.mxu0 %v1352
        %1362 = vmatpush.bf16.msra.mxu0 %v1351
        %1363 = vmatpush.bf16.msra.mxu0 %v1350
        %1364 = vmatpush.bf16.msra.mxu0 %v1349
        %1365 = vmatpush.bf16.msra.mxu0 %v1348
        %1366 = vmatpush.bf16.msra.mxu0 %v1347
        %1367 = vmatpush.bf16.msra.mxu0 %v1346
        %1368 = vmatpush.bf16.msra.mxu0 %v1345
        %1369 = vmatmul.bf16.gmra.mxu0 %v545
        %v1370 = vpop.f32.mrf.mxu0
        %v1371 = vadd.f32 0.0, %v1370
        %v1372 = vpop.f32.mrf.mxu0
        %v1373 = vadd.f32 0.0, %v1372
        %1374 = vmatmul.bf16.gmra.mxu0 %v546
        %v1375 = vpop.f32.mrf.mxu0
        %v1376 = vadd.f32 0.0, %v1375
        %v1377 = vpop.f32.mrf.mxu0
        %v1378 = vadd.f32 0.0, %v1377
        %1379 = vmatmul.bf16.gmra.mxu0 %v547
        %v1380 = vpop.f32.mrf.mxu0
        %v1381 = vadd.f32 0.0, %v1380
        %v1382 = vpop.f32.mrf.mxu0
        %v1383 = vadd.f32 0.0, %v1382
        %1384 = vmatmul.bf16.gmra.mxu0 %v548
        %v1385 = vpop.f32.mrf.mxu0
        %v1386 = vadd.f32 0.0, %v1385
        %v1387 = vpop.f32.mrf.mxu0
        %v1388 = vadd.f32 0.0, %v1387
        %1389 = vmatmul.bf16.gmra.mxu0 %v549
        %v1390 = vpop.f32.mrf.mxu0
        %v1391 = vadd.f32 0.0, %v1390
        %v1392 = vpop.f32.mrf.mxu0
        %v1393 = vadd.f32 0.0, %v1392
        %1394 = vmatmul.bf16.gmra.mxu0 %v550
        %v1395 = vpop.f32.mrf.mxu0
        %v1396 = vadd.f32 0.0, %v1395
        %v1397 = vpop.f32.mrf.mxu0
        %v1398 = vadd.f32 0.0, %v1397
        %1399 = vmatmul.bf16.gmra.mxu0 %v551
        %v1400 = vpop.f32.mrf.mxu0
        %v1401 = vadd.f32 0.0, %v1400
        %v1402 = vpop.f32.mrf.mxu0
        %v1403 = vadd.f32 0.0, %v1402
        %1404 = vmatmul.bf16.gmra.mxu0 %v552
        %v1405 = vpop.f32.mrf.mxu0
        %v1406 = vadd.f32 0.0, %v1405
        %v1407 = vpop.f32.mrf.mxu0
        %v1408 = vadd.f32 0.0, %v1407
        %1409 = vmatmul.bf16.gmra.mxu0 %v553
        %v1410 = vpop.f32.mrf.mxu0
        %v1411 = vadd.f32 0.0, %v1410
        %v1412 = vpop.f32.mrf.mxu0
        %v1413 = vadd.f32 0.0, %v1412
        %1414 = vmatmul.bf16.gmra.mxu0 %v554
        %v1415 = vpop.f32.mrf.mxu0
        %v1416 = vadd.f32 0.0, %v1415
        %v1417 = vpop.f32.mrf.mxu0
        %v1418 = vadd.f32 0.0, %v1417
        %1419 = vmatmul.bf16.gmra.mxu0 %v555
        %v1420 = vpop.f32.mrf.mxu0
        %v1421 = vadd.f32 0.0, %v1420
        %v1422 = vpop.f32.mrf.mxu0
        %v1423 = vadd.f32 0.0, %v1422
        %1424 = vmatmul.bf16.gmra.mxu0 %v556
        %v1425 = vpop.f32.mrf.mxu0
        %v1426 = vadd.f32 0.0, %v1425
        %v1427 = vpop.f32.mrf.mxu0
        %v1428 = vadd.f32 0.0, %v1427
        %1429 = vmatmul.bf16.gmra.mxu0 %v557
        %v1430 = vpop.f32.mrf.mxu0
        %v1431 = vadd.f32 0.0, %v1430
        %v1432 = vpop.f32.mrf.mxu0
        %v1433 = vadd.f32 0.0, %v1432
        %1434 = vmatmul.bf16.gmra.mxu0 %v558
        %v1435 = vpop.f32.mrf.mxu0
        %v1436 = vadd.f32 0.0, %v1435
        %v1437 = vpop.f32.mrf.mxu0
        %v1438 = vadd.f32 0.0, %v1437
        %1439 = vmatmul.bf16.gmra.mxu0 %v559
        %v1440 = vpop.f32.mrf.mxu0
        %v1441 = vadd.f32 0.0, %v1440
        %v1442 = vpop.f32.mrf.mxu0
        %v1443 = vadd.f32 0.0, %v1442
        %1444 = vmatmul.bf16.gmra.mxu0 %v1312
        %v1445 = vpop.f32.mrf.mxu0
        %v1446 = vadd.f32 0.0, %v1445
        %v1447 = vpop.f32.mrf.mxu0
        %v1448 = vadd.f32 0.0, %v1447
        %1449 = vdwg.mxu0
        %v1450 = vadd.f32 %v1270, %v1371
        %v1451 = vadd.f32 %v1271, %v1373
        %v1452 = vadd.f32 %v1272, %v1376
        %v1453 = vadd.f32 %v1273, %v1378
        %v1454 = vadd.f32 %v1274, %v1381
        %v1455 = vadd.f32 %v1275, %v1383
        %v1456 = vadd.f32 %v1276, %v1386
        %v1457 = vadd.f32 %v1277, %v1388
        %v1458 = vadd.f32 %v1278, %v1391
        %v1459 = vadd.f32 %v1279, %v1393
        %v1460 = vadd.f32 %v1280, %v1396
        %v1461 = vadd.f32 %v1281, %v1398
        %v1462 = vadd.f32 %v1282, %v1401
        %v1463 = vadd.f32 %v1283, %v1403
        %v1464 = vadd.f32 %v1284, %v1406
        %v1465 = vadd.f32 %v1285, %v1408
        %v1466 = vadd.f32 %v1286, %v1411
        %v1467 = vadd.f32 %v1287, %v1413
        %v1468 = vadd.f32 %v1288, %v1416
        %v1469 = vadd.f32 %v1289, %v1418
        %v1470 = vadd.f32 %v1290, %v1421
        %v1471 = vadd.f32 %v1291, %v1423
        %v1472 = vadd.f32 %v1292, %v1426
        %v1473 = vadd.f32 %v1293, %v1428
        %v1474 = vadd.f32 %v1294, %v1431
        %v1475 = vadd.f32 %v1295, %v1433
        %v1476 = vadd.f32 %v1296, %v1436
        %v1477 = vadd.f32 %v1297, %v1438
        %v1478 = vadd.f32 %v1298, %v1441
        %v1479 = vadd.f32 %v1299, %v1443
        %v1480 = vadd.f32 %v1300, %v1446
        %v1481 = vadd.f32 %v1301, %v1448
        %v1482 = vrot.slane %v217, 2
        %v1483 = vrot.slane %v218, 2
        %v1484 = vsel %vm834, %v1482, %v1483
        %v1485 = vrot.slane %v219, 2
        %v1486 = vsel %vm834, %v1483, %v1485
        %v1489 = vpack.c.bf16 %v1486, %v1484
        %v1506 = vunpack.c.l.b16 %v303
        %v1507 = vunpack.c.l.b16 %v304
        %v1508 = vunpack.c.l.b16 %v305
        %v1509 = vunpack.c.l.b16 %v306
        %v1510 = vunpack.c.l.b16 %v307
        %v1511 = vunpack.c.l.b16 %v308
        %v1512 = vunpack.c.l.b16 %v309
        %v1513 = vunpack.c.l.b16 %v310
        %v1514 = vunpack.c.l.b16 %v311
        %v1515 = vunpack.c.l.b16 %v312
        %v1516 = vunpack.c.l.b16 %v313
        %v1517 = vunpack.c.l.b16 %v314
        %v1518 = vunpack.c.l.b16 %v315
        %v1519 = vunpack.c.l.b16 %v316
        %v1520 = vunpack.c.l.b16 %v317
        %v1521 = vunpack.c.l.b16 %v318
        %v1522 = vpack.c.b16 %v1507, %v1506
        %v1523 = vpack.c.b16 %v1509, %v1508
        %v1524 = vpack.c.b16 %v1511, %v1510
        %v1525 = vpack.c.b16 %v1513, %v1512
        %v1526 = vpack.c.b16 %v1515, %v1514
        %v1527 = vpack.c.b16 %v1517, %v1516
        %v1528 = vpack.c.b16 %v1519, %v1518
        %v1529 = vpack.c.b16 %v1521, %v1520
        %1538 = vmatpush.bf16.msra.mxu0 %v1529
        %1539 = vmatpush.bf16.msra.mxu0 %v1528
        %1540 = vmatpush.bf16.msra.mxu0 %v1527
        %1541 = vmatpush.bf16.msra.mxu0 %v1526
        %1542 = vmatpush.bf16.msra.mxu0 %v1525
        %1543 = vmatpush.bf16.msra.mxu0 %v1524
        %1544 = vmatpush.bf16.msra.mxu0 %v1523
        %1545 = vmatpush.bf16.msra.mxu0 %v1522
        %1546 = vmatmul.bf16.gmra.mxu0 %v948
        %v1547 = vpop.f32.mrf.mxu0
        %v1548 = vadd.f32 0.0, %v1547
        %v1549 = vpop.f32.mrf.mxu0
        %v1550 = vadd.f32 0.0, %v1549
        %1551 = vmatmul.bf16.gmra.mxu0 %v949
        %v1552 = vpop.f32.mrf.mxu0
        %v1553 = vadd.f32 0.0, %v1552
        %v1554 = vpop.f32.mrf.mxu0
        %v1555 = vadd.f32 0.0, %v1554
        %1556 = vmatmul.bf16.gmra.mxu0 %v950
        %v1557 = vpop.f32.mrf.mxu0
        %v1558 = vadd.f32 0.0, %v1557
        %v1559 = vpop.f32.mrf.mxu0
        %v1560 = vadd.f32 0.0, %v1559
        %1561 = vmatmul.bf16.gmra.mxu0 %v951
        %v1562 = vpop.f32.mrf.mxu0
        %v1563 = vadd.f32 0.0, %v1562
        %v1564 = vpop.f32.mrf.mxu0
        %v1565 = vadd.f32 0.0, %v1564
        %1566 = vmatmul.bf16.gmra.mxu0 %v952
        %v1567 = vpop.f32.mrf.mxu0
        %v1568 = vadd.f32 0.0, %v1567
        %v1569 = vpop.f32.mrf.mxu0
        %v1570 = vadd.f32 0.0, %v1569
        %1571 = vmatmul.bf16.gmra.mxu0 %v953
        %v1572 = vpop.f32.mrf.mxu0
        %v1573 = vadd.f32 0.0, %v1572
        %v1574 = vpop.f32.mrf.mxu0
        %v1575 = vadd.f32 0.0, %v1574
        %1576 = vmatmul.bf16.gmra.mxu0 %v954
        %v1577 = vpop.f32.mrf.mxu0
        %v1578 = vadd.f32 0.0, %v1577
        %v1579 = vpop.f32.mrf.mxu0
        %v1580 = vadd.f32 0.0, %v1579
        %1581 = vmatmul.bf16.gmra.mxu0 %v955
        %v1582 = vpop.f32.mrf.mxu0
        %v1583 = vadd.f32 0.0, %v1582
        %v1584 = vpop.f32.mrf.mxu0
        %v1585 = vadd.f32 0.0, %v1584
        %1586 = vmatmul.bf16.gmra.mxu0 %v956
        %v1587 = vpop.f32.mrf.mxu0
        %v1588 = vadd.f32 0.0, %v1587
        %v1589 = vpop.f32.mrf.mxu0
        %v1590 = vadd.f32 0.0, %v1589
        %1591 = vmatmul.bf16.gmra.mxu0 %v957
        %v1592 = vpop.f32.mrf.mxu0
        %v1593 = vadd.f32 0.0, %v1592
        %v1594 = vpop.f32.mrf.mxu0
        %v1595 = vadd.f32 0.0, %v1594
        %1596 = vmatmul.bf16.gmra.mxu0 %v958
        %v1597 = vpop.f32.mrf.mxu0
        %v1598 = vadd.f32 0.0, %v1597
        %v1599 = vpop.f32.mrf.mxu0
        %v1600 = vadd.f32 0.0, %v1599
        %1601 = vmatmul.bf16.gmra.mxu0 %v959
        %v1602 = vpop.f32.mrf.mxu0
        %v1603 = vadd.f32 0.0, %v1602
        %v1604 = vpop.f32.mrf.mxu0
        %v1605 = vadd.f32 0.0, %v1604
        %1606 = vmatmul.bf16.gmra.mxu0 %v960
        %v1607 = vpop.f32.mrf.mxu0
        %v1608 = vadd.f32 0.0, %v1607
        %v1609 = vpop.f32.mrf.mxu0
        %v1610 = vadd.f32 0.0, %v1609
        %1611 = vmatmul.bf16.gmra.mxu0 %v961
        %v1612 = vpop.f32.mrf.mxu0
        %v1613 = vadd.f32 0.0, %v1612
        %v1614 = vpop.f32.mrf.mxu0
        %v1615 = vadd.f32 0.0, %v1614
        %1616 = vmatmul.bf16.gmra.mxu0 %v962
        %v1617 = vpop.f32.mrf.mxu0
        %v1618 = vadd.f32 0.0, %v1617
        %v1619 = vpop.f32.mrf.mxu0
        %v1620 = vadd.f32 0.0, %v1619
        %1621 = vmatmul.bf16.gmra.mxu0 %v1489
        %v1622 = vpop.f32.mrf.mxu0
        %v1623 = vadd.f32 0.0, %v1622
        %v1624 = vpop.f32.mrf.mxu0
        %v1625 = vadd.f32 0.0, %v1624
        %1626 = vdwg.mxu0
        %v1627 = vadd.f32 %v1450, %v1548
        %v1628 = vadd.f32 %v1451, %v1550
        %v1629 = vadd.f32 %v1452, %v1553
        %v1630 = vadd.f32 %v1453, %v1555
        %v1631 = vadd.f32 %v1454, %v1558
        %v1632 = vadd.f32 %v1455, %v1560
        %v1633 = vadd.f32 %v1456, %v1563
        %v1634 = vadd.f32 %v1457, %v1565
        %v1635 = vadd.f32 %v1458, %v1568
        %v1636 = vadd.f32 %v1459, %v1570
        %v1637 = vadd.f32 %v1460, %v1573
        %v1638 = vadd.f32 %v1461, %v1575
        %v1639 = vadd.f32 %v1462, %v1578
        %v1640 = vadd.f32 %v1463, %v1580
        %v1641 = vadd.f32 %v1464, %v1583
        %v1642 = vadd.f32 %v1465, %v1585
        %v1643 = vadd.f32 %v1466, %v1588
        %v1644 = vadd.f32 %v1467, %v1590
        %v1645 = vadd.f32 %v1468, %v1593
        %v1646 = vadd.f32 %v1469, %v1595
        %v1647 = vadd.f32 %v1470, %v1598
        %v1648 = vadd.f32 %v1471, %v1600
        %v1649 = vadd.f32 %v1472, %v1603
        %v1650 = vadd.f32 %v1473, %v1605
        %v1651 = vadd.f32 %v1474, %v1608
        %v1652 = vadd.f32 %v1475, %v1610
        %v1653 = vadd.f32 %v1476, %v1613
        %v1654 = vadd.f32 %v1477, %v1615
        %v1655 = vadd.f32 %v1478, %v1618
        %v1656 = vadd.f32 %v1479, %v1620
        %v1657 = vadd.f32 %v1480, %v1623
        %v1658 = vadd.f32 %v1481, %v1625
        %v1659 = vpack.c.bf16 %v221, %v220
        %v1676 = vunpack.c.l.b16 %v319
        %v1677 = vunpack.c.l.b16 %v320
        %v1678 = vunpack.c.l.b16 %v321
        %v1679 = vunpack.c.l.b16 %v322
        %v1680 = vunpack.c.l.b16 %v323
        %v1681 = vunpack.c.l.b16 %v324
        %v1682 = vunpack.c.l.b16 %v325
        %v1683 = vunpack.c.l.b16 %v326
        %v1684 = vunpack.c.l.b16 %v327
        %v1685 = vunpack.c.l.b16 %v328
        %v1686 = vunpack.c.l.b16 %v329
        %v1687 = vunpack.c.l.b16 %v330
        %v1688 = vunpack.c.l.b16 %v331
        %v1689 = vunpack.c.l.b16 %v332
        %v1690 = vunpack.c.l.b16 %v333
        %v1691 = vunpack.c.l.b16 %v334
        %v1692 = vpack.c.b16 %v1677, %v1676
        %v1693 = vpack.c.b16 %v1679, %v1678
        %v1694 = vpack.c.b16 %v1681, %v1680
        %v1695 = vpack.c.b16 %v1683, %v1682
        %v1696 = vpack.c.b16 %v1685, %v1684
        %v1697 = vpack.c.b16 %v1687, %v1686
        %v1698 = vpack.c.b16 %v1689, %v1688
        %v1699 = vpack.c.b16 %v1691, %v1690
        %1708 = vmatpush.bf16.msra.mxu0 %v1699
        %1709 = vmatpush.bf16.msra.mxu0 %v1698
        %1710 = vmatpush.bf16.msra.mxu0 %v1697
        %1711 = vmatpush.bf16.msra.mxu0 %v1696
        %1712 = vmatpush.bf16.msra.mxu0 %v1695
        %1713 = vmatpush.bf16.msra.mxu0 %v1694
        %1714 = vmatpush.bf16.msra.mxu0 %v1693
        %1715 = vmatpush.bf16.msra.mxu0 %v1692
        %1716 = vmatmul.bf16.gmra.mxu0 %v369
        %v1717 = vpop.f32.mrf.mxu0
        %v1718 = vadd.f32 0.0, %v1717
        %v1719 = vpop.f32.mrf.mxu0
        %v1720 = vadd.f32 0.0, %v1719
        %1721 = vmatmul.bf16.gmra.mxu0 %v370
        %v1722 = vpop.f32.mrf.mxu0
        %v1723 = vadd.f32 0.0, %v1722
        %v1724 = vpop.f32.mrf.mxu0
        %v1725 = vadd.f32 0.0, %v1724
        %1726 = vmatmul.bf16.gmra.mxu0 %v371
        %v1727 = vpop.f32.mrf.mxu0
        %v1728 = vadd.f32 0.0, %v1727
        %v1729 = vpop.f32.mrf.mxu0
        %v1730 = vadd.f32 0.0, %v1729
        %1731 = vmatmul.bf16.gmra.mxu0 %v372
        %v1732 = vpop.f32.mrf.mxu0
        %v1733 = vadd.f32 0.0, %v1732
        %v1734 = vpop.f32.mrf.mxu0
        %v1735 = vadd.f32 0.0, %v1734
        %1736 = vmatmul.bf16.gmra.mxu0 %v373
        %v1737 = vpop.f32.mrf.mxu0
        %v1738 = vadd.f32 0.0, %v1737
        %v1739 = vpop.f32.mrf.mxu0
        %v1740 = vadd.f32 0.0, %v1739
        %1741 = vmatmul.bf16.gmra.mxu0 %v374
        %v1742 = vpop.f32.mrf.mxu0
        %v1743 = vadd.f32 0.0, %v1742
        %v1744 = vpop.f32.mrf.mxu0
        %v1745 = vadd.f32 0.0, %v1744
        %1746 = vmatmul.bf16.gmra.mxu0 %v375
        %v1747 = vpop.f32.mrf.mxu0
        %v1748 = vadd.f32 0.0, %v1747
        %v1749 = vpop.f32.mrf.mxu0
        %v1750 = vadd.f32 0.0, %v1749
        %1751 = vmatmul.bf16.gmra.mxu0 %v376
        %v1752 = vpop.f32.mrf.mxu0
        %v1753 = vadd.f32 0.0, %v1752
        %v1754 = vpop.f32.mrf.mxu0
        %v1755 = vadd.f32 0.0, %v1754
        %1756 = vmatmul.bf16.gmra.mxu0 %v377
        %v1757 = vpop.f32.mrf.mxu0
        %v1758 = vadd.f32 0.0, %v1757
        %v1759 = vpop.f32.mrf.mxu0
        %v1760 = vadd.f32 0.0, %v1759
        %1761 = vmatmul.bf16.gmra.mxu0 %v378
        %v1762 = vpop.f32.mrf.mxu0
        %v1763 = vadd.f32 0.0, %v1762
        %v1764 = vpop.f32.mrf.mxu0
        %v1765 = vadd.f32 0.0, %v1764
        %1766 = vmatmul.bf16.gmra.mxu0 %v379
        %v1767 = vpop.f32.mrf.mxu0
        %v1768 = vadd.f32 0.0, %v1767
        %v1769 = vpop.f32.mrf.mxu0
        %v1770 = vadd.f32 0.0, %v1769
        %1771 = vmatmul.bf16.gmra.mxu0 %v380
        %v1772 = vpop.f32.mrf.mxu0
        %v1773 = vadd.f32 0.0, %v1772
        %v1774 = vpop.f32.mrf.mxu0
        %v1775 = vadd.f32 0.0, %v1774
        %1776 = vmatmul.bf16.gmra.mxu0 %v381
        %v1777 = vpop.f32.mrf.mxu0
        %v1778 = vadd.f32 0.0, %v1777
        %v1779 = vpop.f32.mrf.mxu0
        %v1780 = vadd.f32 0.0, %v1779
        %1781 = vmatmul.bf16.gmra.mxu0 %v382
        %v1782 = vpop.f32.mrf.mxu0
        %v1783 = vadd.f32 0.0, %v1782
        %v1784 = vpop.f32.mrf.mxu0
        %v1785 = vadd.f32 0.0, %v1784
        %1786 = vmatmul.bf16.gmra.mxu0 %v1132
        %v1787 = vpop.f32.mrf.mxu0
        %v1788 = vadd.f32 0.0, %v1787
        %v1789 = vpop.f32.mrf.mxu0
        %v1790 = vadd.f32 0.0, %v1789
        %1791 = vmatmul.bf16.gmra.mxu0 %v1659
        %v1792 = vpop.f32.mrf.mxu0
        %v1793 = vadd.f32 0.0, %v1792
        %v1794 = vpop.f32.mrf.mxu0
        %v1795 = vadd.f32 0.0, %v1794
        %1796 = vdwg.mxu0
        %v1797 = vadd.f32 %v1627, %v1718
        %v1798 = vadd.f32 %v1628, %v1720
        %v1799 = vadd.f32 %v1629, %v1723
        %v1800 = vadd.f32 %v1630, %v1725
        %v1801 = vadd.f32 %v1631, %v1728
        %v1802 = vadd.f32 %v1632, %v1730
        %v1803 = vadd.f32 %v1633, %v1733
        %v1804 = vadd.f32 %v1634, %v1735
        %v1805 = vadd.f32 %v1635, %v1738
        %v1806 = vadd.f32 %v1636, %v1740
        %v1807 = vadd.f32 %v1637, %v1743
        %v1808 = vadd.f32 %v1638, %v1745
        %v1809 = vadd.f32 %v1639, %v1748
        %v1810 = vadd.f32 %v1640, %v1750
        %v1811 = vadd.f32 %v1641, %v1753
        %v1812 = vadd.f32 %v1642, %v1755
        %v1813 = vadd.f32 %v1643, %v1758
        %v1814 = vadd.f32 %v1644, %v1760
        %v1815 = vadd.f32 %v1645, %v1763
        %v1816 = vadd.f32 %v1646, %v1765
        %v1817 = vadd.f32 %v1647, %v1768
        %v1818 = vadd.f32 %v1648, %v1770
        %v1819 = vadd.f32 %v1649, %v1773
        %v1820 = vadd.f32 %v1650, %v1775
        %v1821 = vadd.f32 %v1651, %v1778
        %v1822 = vadd.f32 %v1652, %v1780
        %v1823 = vadd.f32 %v1653, %v1783
        %v1824 = vadd.f32 %v1654, %v1785
        %v1825 = vadd.f32 %v1655, %v1788
        %v1826 = vadd.f32 %v1656, %v1790
        %v1827 = vadd.f32 %v1657, %v1793
        %v1828 = vadd.f32 %v1658, %v1795
        %v1832 = vrot.slane %v220, 1
        %v1833 = vrot.slane %v221, 1
        %v1834 = vsel %vm431, %v1832, %v1833
        %v1835 = vrot.slane %v222, 1
        %v1836 = vsel %vm431, %v1833, %v1835
        %v1839 = vpack.c.bf16 %v1836, %v1834
        %v1856 = vunpack.c.l.b16 %v335
        %v1857 = vunpack.c.l.b16 %v336
        %v1858 = vunpack.c.l.b16 %v337
        %v1859 = vunpack.c.l.b16 %v338
        %v1860 = vunpack.c.l.b16 %v339
        %v1861 = vunpack.c.l.b16 %v340
        %v1862 = vunpack.c.l.b16 %v341
        %v1863 = vunpack.c.l.b16 %v342
        %v1864 = vunpack.c.l.b16 %v343
        %v1865 = vunpack.c.l.b16 %v344
        %v1866 = vunpack.c.l.b16 %v345
        %v1867 = vunpack.c.l.b16 %v346
        %v1868 = vunpack.c.l.b16 %v347
        %v1869 = vunpack.c.l.b16 %v348
        %v1870 = vunpack.c.l.b16 %v349
        %v1871 = vunpack.c.l.b16 %v350
        %v1872 = vpack.c.b16 %v1857, %v1856
        %v1873 = vpack.c.b16 %v1859, %v1858
        %v1874 = vpack.c.b16 %v1861, %v1860
        %v1875 = vpack.c.b16 %v1863, %v1862
        %v1876 = vpack.c.b16 %v1865, %v1864
        %v1877 = vpack.c.b16 %v1867, %v1866
        %v1878 = vpack.c.b16 %v1869, %v1868
        %v1879 = vpack.c.b16 %v1871, %v1870
        %1888 = vmatpush.bf16.msra.mxu0 %v1879
        %1889 = vmatpush.bf16.msra.mxu0 %v1878
        %1890 = vmatpush.bf16.msra.mxu0 %v1877
        %1891 = vmatpush.bf16.msra.mxu0 %v1876
        %1892 = vmatpush.bf16.msra.mxu0 %v1875
        %1893 = vmatpush.bf16.msra.mxu0 %v1874
        %1894 = vmatpush.bf16.msra.mxu0 %v1873
        %1895 = vmatpush.bf16.msra.mxu0 %v1872
        %1896 = vmatmul.bf16.gmra.mxu0 %v546
        %v1897 = vpop.f32.mrf.mxu0
        %v1898 = vadd.f32 0.0, %v1897
        %v1899 = vpop.f32.mrf.mxu0
        %v1900 = vadd.f32 0.0, %v1899
        %1901 = vmatmul.bf16.gmra.mxu0 %v547
        %v1902 = vpop.f32.mrf.mxu0
        %v1903 = vadd.f32 0.0, %v1902
        %v1904 = vpop.f32.mrf.mxu0
        %v1905 = vadd.f32 0.0, %v1904
        %1906 = vmatmul.bf16.gmra.mxu0 %v548
        %v1907 = vpop.f32.mrf.mxu0
        %v1908 = vadd.f32 0.0, %v1907
        %v1909 = vpop.f32.mrf.mxu0
        %v1910 = vadd.f32 0.0, %v1909
        %1911 = vmatmul.bf16.gmra.mxu0 %v549
        %v1912 = vpop.f32.mrf.mxu0
        %v1913 = vadd.f32 0.0, %v1912
        %v1914 = vpop.f32.mrf.mxu0
        %v1915 = vadd.f32 0.0, %v1914
        %1916 = vmatmul.bf16.gmra.mxu0 %v550
        %v1917 = vpop.f32.mrf.mxu0
        %v1918 = vadd.f32 0.0, %v1917
        %v1919 = vpop.f32.mrf.mxu0
        %v1920 = vadd.f32 0.0, %v1919
        %1921 = vmatmul.bf16.gmra.mxu0 %v551
        %v1922 = vpop.f32.mrf.mxu0
        %v1923 = vadd.f32 0.0, %v1922
        %v1924 = vpop.f32.mrf.mxu0
        %v1925 = vadd.f32 0.0, %v1924
        %1926 = vmatmul.bf16.gmra.mxu0 %v552
        %v1927 = vpop.f32.mrf.mxu0
        %v1928 = vadd.f32 0.0, %v1927
        %v1929 = vpop.f32.mrf.mxu0
        %v1930 = vadd.f32 0.0, %v1929
        %1931 = vmatmul.bf16.gmra.mxu0 %v553
        %v1932 = vpop.f32.mrf.mxu0
        %v1933 = vadd.f32 0.0, %v1932
        %v1934 = vpop.f32.mrf.mxu0
        %v1935 = vadd.f32 0.0, %v1934
        %1936 = vmatmul.bf16.gmra.mxu0 %v554
        %v1937 = vpop.f32.mrf.mxu0
        %v1938 = vadd.f32 0.0, %v1937
        %v1939 = vpop.f32.mrf.mxu0
        %v1940 = vadd.f32 0.0, %v1939
        %1941 = vmatmul.bf16.gmra.mxu0 %v555
        %v1942 = vpop.f32.mrf.mxu0
        %v1943 = vadd.f32 0.0, %v1942
        %v1944 = vpop.f32.mrf.mxu0
        %v1945 = vadd.f32 0.0, %v1944
        %1946 = vmatmul.bf16.gmra.mxu0 %v556
        %v1947 = vpop.f32.mrf.mxu0
        %v1948 = vadd.f32 0.0, %v1947
        %v1949 = vpop.f32.mrf.mxu0
        %v1950 = vadd.f32 0.0, %v1949
        %1951 = vmatmul.bf16.gmra.mxu0 %v557
        %v1952 = vpop.f32.mrf.mxu0
        %v1953 = vadd.f32 0.0, %v1952
        %v1954 = vpop.f32.mrf.mxu0
        %v1955 = vadd.f32 0.0, %v1954
        %1956 = vmatmul.bf16.gmra.mxu0 %v558
        %v1957 = vpop.f32.mrf.mxu0
        %v1958 = vadd.f32 0.0, %v1957
        %v1959 = vpop.f32.mrf.mxu0
        %v1960 = vadd.f32 0.0, %v1959
        %1961 = vmatmul.bf16.gmra.mxu0 %v559
        %v1962 = vpop.f32.mrf.mxu0
        %v1963 = vadd.f32 0.0, %v1962
        %v1964 = vpop.f32.mrf.mxu0
        %v1965 = vadd.f32 0.0, %v1964
        %1966 = vmatmul.bf16.gmra.mxu0 %v1312
        %v1967 = vpop.f32.mrf.mxu0
        %v1968 = vadd.f32 0.0, %v1967
        %v1969 = vpop.f32.mrf.mxu0
        %v1970 = vadd.f32 0.0, %v1969
        %1971 = vmatmul.bf16.gmra.mxu0 %v1839
        %v1972 = vpop.f32.mrf.mxu0
        %v1973 = vadd.f32 0.0, %v1972
        %v1974 = vpop.f32.mrf.mxu0
        %v1975 = vadd.f32 0.0, %v1974
        %1976 = vdwg.mxu0
        %v1977 = vadd.f32 %v1797, %v1898
        %v1978 = vadd.f32 %v1798, %v1900
        %v1979 = vadd.f32 %v1799, %v1903
        %v1980 = vadd.f32 %v1800, %v1905
        %v1981 = vadd.f32 %v1801, %v1908
        %v1982 = vadd.f32 %v1802, %v1910
        %v1983 = vadd.f32 %v1803, %v1913
        %v1984 = vadd.f32 %v1804, %v1915
        %v1985 = vadd.f32 %v1805, %v1918
        %v1986 = vadd.f32 %v1806, %v1920
        %v1987 = vadd.f32 %v1807, %v1923
        %v1988 = vadd.f32 %v1808, %v1925
        %v1989 = vadd.f32 %v1809, %v1928
        %v1990 = vadd.f32 %v1810, %v1930
        %v1991 = vadd.f32 %v1811, %v1933
        %v1992 = vadd.f32 %v1812, %v1935
        %v1993 = vadd.f32 %v1813, %v1938
        %v1994 = vadd.f32 %v1814, %v1940
        %v1995 = vadd.f32 %v1815, %v1943
        %v1996 = vadd.f32 %v1816, %v1945
        %v1997 = vadd.f32 %v1817, %v1948
        %v1998 = vadd.f32 %v1818, %v1950
        %v1999 = vadd.f32 %v1819, %v1953
        %v2000 = vadd.f32 %v1820, %v1955
        %v2001 = vadd.f32 %v1821, %v1958
        %v2002 = vadd.f32 %v1822, %v1960
        %v2003 = vadd.f32 %v1823, %v1963
        %v2004 = vadd.f32 %v1824, %v1965
        %v2005 = vadd.f32 %v1825, %v1968
        %v2006 = vadd.f32 %v1826, %v1970
        %v2007 = vadd.f32 %v1827, %v1973
        %v2008 = vadd.f32 %v1828, %v1975
        %v2009 = vrot.slane %v220, 2
        %v2010 = vrot.slane %v221, 2
        %v2011 = vsel %vm834, %v2009, %v2010
        %v2012 = vrot.slane %v222, 2
        %v2013 = vsel %vm834, %v2010, %v2012
        %v2016 = vpack.c.bf16 %v2013, %v2011
        %v2033 = vunpack.c.l.b16 %v351
        %v2034 = vunpack.c.l.b16 %v352
        %v2035 = vunpack.c.l.b16 %v353
        %v2036 = vunpack.c.l.b16 %v354
        %v2037 = vunpack.c.l.b16 %v355
        %v2038 = vunpack.c.l.b16 %v356
        %v2039 = vunpack.c.l.b16 %v357
        %v2040 = vunpack.c.l.b16 %v358
        %v2041 = vunpack.c.l.b16 %v359
        %v2042 = vunpack.c.l.b16 %v360
        %v2043 = vunpack.c.l.b16 %v361
        %v2044 = vunpack.c.l.b16 %v362
        %v2045 = vunpack.c.l.b16 %v363
        %v2046 = vunpack.c.l.b16 %v364
        %v2047 = vunpack.c.l.b16 %v365
        %v2048 = vunpack.c.l.b16 %v366
        %v2049 = vpack.c.b16 %v2034, %v2033
        %v2050 = vpack.c.b16 %v2036, %v2035
        %v2051 = vpack.c.b16 %v2038, %v2037
        %v2052 = vpack.c.b16 %v2040, %v2039
        %v2053 = vpack.c.b16 %v2042, %v2041
        %v2054 = vpack.c.b16 %v2044, %v2043
        %v2055 = vpack.c.b16 %v2046, %v2045
        %v2056 = vpack.c.b16 %v2048, %v2047
        %2065 = vmatpush.bf16.msra.mxu0 %v2056
        %2066 = vmatpush.bf16.msra.mxu0 %v2055
        %2067 = vmatpush.bf16.msra.mxu0 %v2054
        %2068 = vmatpush.bf16.msra.mxu0 %v2053
        %2069 = vmatpush.bf16.msra.mxu0 %v2052
        %2070 = vmatpush.bf16.msra.mxu0 %v2051
        %2071 = vmatpush.bf16.msra.mxu0 %v2050
        %2072 = vmatpush.bf16.msra.mxu0 %v2049
        %2073 = vmatmul.bf16.gmra.mxu0 %v949
        %v2074 = vpop.f32.mrf.mxu0
        %v2075 = vadd.f32 0.0, %v2074
        %v2076 = vpop.f32.mrf.mxu0
        %v2077 = vadd.f32 0.0, %v2076
        %2078 = vmatmul.bf16.gmra.mxu0 %v950
        %v2079 = vpop.f32.mrf.mxu0
        %v2080 = vadd.f32 0.0, %v2079
        %v2081 = vpop.f32.mrf.mxu0
        %v2082 = vadd.f32 0.0, %v2081
        %2083 = vmatmul.bf16.gmra.mxu0 %v951
        %v2084 = vpop.f32.mrf.mxu0
        %v2085 = vadd.f32 0.0, %v2084
        %v2086 = vpop.f32.mrf.mxu0
        %v2087 = vadd.f32 0.0, %v2086
        %2088 = vmatmul.bf16.gmra.mxu0 %v952
        %v2089 = vpop.f32.mrf.mxu0
        %v2090 = vadd.f32 0.0, %v2089
        %v2091 = vpop.f32.mrf.mxu0
        %v2092 = vadd.f32 0.0, %v2091
        %2093 = vmatmul.bf16.gmra.mxu0 %v953
        %v2094 = vpop.f32.mrf.mxu0
        %v2095 = vadd.f32 0.0, %v2094
        %v2096 = vpop.f32.mrf.mxu0
        %v2097 = vadd.f32 0.0, %v2096
        %2098 = vmatmul.bf16.gmra.mxu0 %v954
        %v2099 = vpop.f32.mrf.mxu0
        %v2100 = vadd.f32 0.0, %v2099
        %v2101 = vpop.f32.mrf.mxu0
        %v2102 = vadd.f32 0.0, %v2101
        %2103 = vmatmul.bf16.gmra.mxu0 %v955
        %v2104 = vpop.f32.mrf.mxu0
        %v2105 = vadd.f32 0.0, %v2104
        %v2106 = vpop.f32.mrf.mxu0
        %v2107 = vadd.f32 0.0, %v2106
        %2108 = vmatmul.bf16.gmra.mxu0 %v956
        %v2109 = vpop.f32.mrf.mxu0
        %v2110 = vadd.f32 0.0, %v2109
        %v2111 = vpop.f32.mrf.mxu0
        %v2112 = vadd.f32 0.0, %v2111
        %2113 = vmatmul.bf16.gmra.mxu0 %v957
        %v2114 = vpop.f32.mrf.mxu0
        %v2115 = vadd.f32 0.0, %v2114
        %v2116 = vpop.f32.mrf.mxu0
        %v2117 = vadd.f32 0.0, %v2116
        %2118 = vmatmul.bf16.gmra.mxu0 %v958
        %v2119 = vpop.f32.mrf.mxu0
        %v2120 = vadd.f32 0.0, %v2119
        %v2121 = vpop.f32.mrf.mxu0
        %v2122 = vadd.f32 0.0, %v2121
        %2123 = vmatmul.bf16.gmra.mxu0 %v959
        %v2124 = vpop.f32.mrf.mxu0
        %v2125 = vadd.f32 0.0, %v2124
        %v2126 = vpop.f32.mrf.mxu0
        %v2127 = vadd.f32 0.0, %v2126
        %2128 = vmatmul.bf16.gmra.mxu0 %v960
        %v2129 = vpop.f32.mrf.mxu0
        %v2130 = vadd.f32 0.0, %v2129
        %v2131 = vpop.f32.mrf.mxu0
        %v2132 = vadd.f32 0.0, %v2131
        %2133 = vmatmul.bf16.gmra.mxu0 %v961
        %v2134 = vpop.f32.mrf.mxu0
        %v2135 = vadd.f32 0.0, %v2134
        %v2136 = vpop.f32.mrf.mxu0
        %v2137 = vadd.f32 0.0, %v2136
        %2138 = vmatmul.bf16.gmra.mxu0 %v962
        %v2139 = vpop.f32.mrf.mxu0
        %v2140 = vadd.f32 0.0, %v2139
        %v2141 = vpop.f32.mrf.mxu0
        %v2142 = vadd.f32 0.0, %v2141
        %2143 = vmatmul.bf16.gmra.mxu0 %v1489
        %v2144 = vpop.f32.mrf.mxu0
        %v2145 = vadd.f32 0.0, %v2144
        %v2146 = vpop.f32.mrf.mxu0
        %v2147 = vadd.f32 0.0, %v2146
        %2148 = vmatmul.bf16.gmra.mxu0 %v2016
        %v2149 = vpop.f32.mrf.mxu0
        %v2150 = vadd.f32 0.0, %v2149
        %v2151 = vpop.f32.mrf.mxu0
        %v2152 = vadd.f32 0.0, %v2151
        %2153 = vdwg.mxu0
        %v2154 = vadd.f32 %v1977, %v2075
        %v2155 = vadd.f32 %v1978, %v2077
        %v2156 = vadd.f32 %v1979, %v2080
        %v2157 = vadd.f32 %v1980, %v2082
        %v2158 = vadd.f32 %v1981, %v2085
        %v2159 = vadd.f32 %v1982, %v2087
        %v2160 = vadd.f32 %v1983, %v2090
        %v2161 = vadd.f32 %v1984, %v2092
        %v2162 = vadd.f32 %v1985, %v2095
        %v2163 = vadd.f32 %v1986, %v2097
        %v2164 = vadd.f32 %v1987, %v2100
        %v2165 = vadd.f32 %v1988, %v2102
        %v2166 = vadd.f32 %v1989, %v2105
        %v2167 = vadd.f32 %v1990, %v2107
        %v2168 = vadd.f32 %v1991, %v2110
        %v2169 = vadd.f32 %v1992, %v2112
        %v2170 = vadd.f32 %v1993, %v2115
        %v2171 = vadd.f32 %v1994, %v2117
        %v2172 = vadd.f32 %v1995, %v2120
        %v2173 = vadd.f32 %v1996, %v2122
        %v2174 = vadd.f32 %v1997, %v2125
        %v2175 = vadd.f32 %v1998, %v2127
        %v2176 = vadd.f32 %v1999, %v2130
        %v2177 = vadd.f32 %v2000, %v2132
        %v2178 = vadd.f32 %v2001, %v2135
        %v2179 = vadd.f32 %v2002, %v2137
        %v2180 = vadd.f32 %v2003, %v2140
        %v2181 = vadd.f32 %v2004, %v2142
        %v2182 = vadd.f32 %v2005, %v2145
        %v2183 = vadd.f32 %v2006, %v2147
        %v2184 = vadd.f32 %v2007, %v2150
        %v2185 = vadd.f32 %v2008, %v2152
        %v2186 = vld [vmem:[%s2] sm:$0x1]
        %v2188 = vperm.slane %v2186, 0
        %v2190 = vadd.f32 %v2154, %v2188
        %v2191 = vadd.f32 %v2155, %v2188
        %v2192 = vadd.f32 %v2156, %v2188
        %v2193 = vadd.f32 %v2157, %v2188
        %v2194 = vadd.f32 %v2158, %v2188
        %v2195 = vadd.f32 %v2159, %v2188
        %v2196 = vadd.f32 %v2160, %v2188
        %v2197 = vadd.f32 %v2161, %v2188
        %v2198 = vadd.f32 %v2162, %v2188
        %v2199 = vadd.f32 %v2163, %v2188
        %v2200 = vadd.f32 %v2164, %v2188
        %v2201 = vadd.f32 %v2165, %v2188
        %v2202 = vadd.f32 %v2166, %v2188
        %v2203 = vadd.f32 %v2167, %v2188
        %v2204 = vadd.f32 %v2168, %v2188
        %v2205 = vadd.f32 %v2169, %v2188
        %v2206 = vadd.f32 %v2170, %v2188
        %v2207 = vadd.f32 %v2171, %v2188
        %v2208 = vadd.f32 %v2172, %v2188
        %v2209 = vadd.f32 %v2173, %v2188
        %v2210 = vadd.f32 %v2174, %v2188
        %v2211 = vadd.f32 %v2175, %v2188
        %v2212 = vadd.f32 %v2176, %v2188
        %v2213 = vadd.f32 %v2177, %v2188
        %v2214 = vadd.f32 %v2178, %v2188
        %v2215 = vadd.f32 %v2179, %v2188
        %v2216 = vadd.f32 %v2180, %v2188
        %v2217 = vadd.f32 %v2181, %v2188
        %v2218 = vadd.f32 %v2182, %v2188
        %v2219 = vadd.f32 %v2183, %v2188
        %v2220 = vadd.f32 %v2184, %v2188
        %v2221 = vadd.f32 %v2185, %v2188
        %2222 = vst [vmem:[%s163] sm:$0xff] %v2190
        %2223 = vst [vmem:[%s163 + $0x8] sm:$0xff] %v2191
        %2224 = vst [vmem:[%s163 + $0x10] sm:$0xff] %v2192
        %2225 = vst [vmem:[%s163 + $0x18] sm:$0xff] %v2193
        %2226 = vst [vmem:[%s163 + $0x20] sm:$0xff] %v2194
        %2227 = vst [vmem:[%s163 + $0x28] sm:$0xff] %v2195
        %2228 = vst [vmem:[%s163 + $0x30] sm:$0xff] %v2196
        %2229 = vst [vmem:[%s163 + $0x38] sm:$0xff] %v2197
        %2230 = vst [vmem:[%s163 + $0x40] sm:$0xff] %v2198
        %2231 = vst [vmem:[%s163 + $0x48] sm:$0xff] %v2199
        %2232 = vst [vmem:[%s163 + $0x50] sm:$0xff] %v2200
        %2233 = vst [vmem:[%s163 + $0x58] sm:$0xff] %v2201
        %2234 = vst [vmem:[%s163 + $0x60] sm:$0xff] %v2202
        %2235 = vst [vmem:[%s163 + $0x68] sm:$0xff] %v2203
        %2236 = vst [vmem:[%s163 + $0x70] sm:$0xff] %v2204
        %2237 = vst [vmem:[%s163 + $0x78] sm:$0xff] %v2205
        %2238 = vst [vmem:[%s163 + $0x80] sm:$0xff] %v2206
        %2239 = vst [vmem:[%s163 + $0x88] sm:$0xff] %v2207
        %2240 = vst [vmem:[%s163 + $0x90] sm:$0xff] %v2208
        %2241 = vst [vmem:[%s163 + $0x98] sm:$0xff] %v2209
        %2242 = vst [vmem:[%s163 + $0xa0] sm:$0xff] %v2210
        %2243 = vst [vmem:[%s163 + $0xa8] sm:$0xff] %v2211
        %2244 = vst [vmem:[%s163 + $0xb0] sm:$0xff] %v2212
        %2245 = vst [vmem:[%s163 + $0xb8] sm:$0xff] %v2213
        %2246 = vst [vmem:[%s163 + $0xc0] sm:$0xff] %v2214
        %2247 = vst [vmem:[%s163 + $0xc8] sm:$0xff] %v2215
        %2248 = vst [vmem:[%s163 + $0xd0] sm:$0xff] %v2216
        %2249 = vst [vmem:[%s163 + $0xd8] sm:$0xff] %v2217
        %2250 = vst [vmem:[%s163 + $0xe0] sm:$0xff] %v2218
        %2251 = vst [vmem:[%s163 + $0xe8] sm:$0xff] %v2219
        %2252 = vst [vmem:[%s163 + $0xf0] sm:$0xff] %v2220
        %2253 = vst [vmem:[%s163 + $0xf8] sm:$0xff] %v2221
        %s2254 = sand.u32 %s93, 1
        %s2255 = scalar_lea.sflag [#allocation3], %s2254
        %s2256 = sand.u32 %s93, 1
        %s2257 = smul.addr %s2256, 256
        %s2258 = scalar_lea.vmem [#allocation2], %s2257
        // Predicated region
        $region33: #{pyramid_forward.13} parent=31 // pred_check
          %p2259 = pneg %p103
        $region34: #{pyramid_forward.13} parent=31 // pred_check_branch
          %2261 = sbr.rel (%p2259) target = $region36
        $region35: #{pyramid_forward.13} parent=31 // pred_region
          %2263 = vsyncadd %s2255, 0
          %s2264 = smul.addr %s17, 32
          %s2265 = smul.addr %s2264, 8
          %s2266 = scalar_lea.hbm %s3, %s2265
          %s2267 = sshll.u32 %s2258, 4
          %s2268 = int_to_ptr.vmem [resolvable:$true] %s2267
          %s2269 = sshll.u32 %s2266, 4
          %s2270 = int_to_ptr.hbm [resolvable:$true] %s2269
          %2275 = dma.vmem_to_hbm [thread:$0]  %s2268, 4096, %s2270, %s2255, 128, 128, 8
        $region36: #{pyramid_forward.13} parent=31 // pred_fallthru
          _
      $region32: #{pyramid_forward.13} parent=5 // pred_fallthru
        _
      %p2276 = scmp.le.s32.totalorder 2, %s12
      // Predicated region
      $region37: #{pyramid_forward.13} parent=5 // pred_check
        %p2277 = pneg %p2276
      $region38: #{pyramid_forward.13} parent=5 // pred_check_branch
        %2279 = sbr.rel (%p2277) target = $region40
      $region39: #{pyramid_forward.13} parent=5 // pred_region
        %s2280 = ssub.s32 %s12, 2
        // Predicated region
        $region41: #{pyramid_forward.13} parent=39 // pred_check
          %p2281 = pneg %p109
        $region42: #{pyramid_forward.13} parent=39 // pred_check_branch
          %2283 = sbr.rel (%p2281) target = $region44
        $region43: #{pyramid_forward.13} parent=39 // pred_region
          %s2284 = sand.u32 %s94, 1
          %s2285 = scalar_lea.sflag [#allocation3], %s2284
          %s2286 = sand.u32 %s94, 1
          %s2287 = smul.addr %s2286, 256
          %s2288 = scalar_lea.vmem [#allocation2], %s2287
          %2290 = dma.done %s2285, 4096
        $region44: #{pyramid_forward.13} parent=39 // pred_fallthru
          _
      $region40: #{pyramid_forward.13} parent=5 // pred_fallthru
        _
    $region6: #{pyramid_forward.13} parent=1 // loop_footer
      %s16 = sadd.s32 1, %s12
    $region7: #{pyramid_forward.13} parent=1 // loop_footer_branch
      %11 = sbr.rel target = $region3
    $region8: #{pyramid_forward.13} parent=1 // loop_exit
      _
    %2291 = vsyncpa [#allocation3], 1
    %s2292 = scalar_lea.sflag [#allocation3], 1
    %2293 = vsyncpa %s2292, 1

// kernel: pyramid_forward.14
$region0: #{pyramid_forward.14}
  #allocation0 [shape = 'u32[]', space=smem, size = 0x4, offset = 0x4, fixed_abs, tag = 'smem constant byte address 0x4 - core index']
  #allocation1 [shape = 'u32[72,128]{1,0:T(1,128)}', space=vmem, size = 0x9000, scoped, tag = 'internal scratch']
  %s0 = inlined_call_operand.vmem [shape: f32[2,4,3,3,128], index: 0, kind: input, shape index: {}]
  %s1 = inlined_call_operand.vmem [shape: bf16[9,128,128], index: 1, kind: input, shape index: {}]
  %s2 = inlined_call_operand.vmem [shape: f32[1,128], index: 2, kind: input, shape index: {}]
  %s3 = inlined_call_operand.vmem [shape: f32[2,2,2,128], index: 3, kind: output, shape index: {}]
  %s4 = sld [smem:[#allocation0]]
  $region45: #{pyramid_forward.14} parent=0
    _
  %s6 = ssub.s32 1, %s4
  %s7 = scalar_select 0, %s6, %s4
  loop: start=0, step=1, limit=4
  $region2: #{pyramid_forward.14} parent=0 // loop_pre_header
    _
  $region3: #{pyramid_forward.14} parent=0 // loop_header
    %s9 = sphi 0, %s13
    %p10 = scmp.ge.s32.totalorder %s9, 4
    %s19 = sphi 0, %s21
    %s22 = sphi 0, %s19
    %s23 = sphi 0, %s22
    %s39 = sphi 0, %s23
    %s43 = sphi 0, %s43
    %s45 = sphi 0, %s43
    %s46 = sphi 0, %s45
    %s60 = sphi 0, %s46
    %s64 = sphi 0, %s64
    %s66 = sphi 0, %s64
    %s67 = sphi 0, %s66
    %s81 = sphi 0, %s67
    %s87 = sphi 0, %s89
    %s90 = sphi 0, %s87
    %s91 = sphi 0, %s90
    %s107 = sphi 0, %s91
  $region4: #{pyramid_forward.14} parent=0 // loop_header_branch
    %12 = sbr.rel (%p10) target = $region8
  $region5: #{pyramid_forward.14} parent=0 // loop_body
    %s14 = ssub.s32 %s9, 1
    %s15 = ssub.s32 %s9, 2
    %s16 = sadd.s32 %s9, 1
    %s17 = ssub.s32 %s9, %s16
    %p18 = scmp.eq.s32.totalorder %s17, 0
    %s20 = sadd.s32 %s19, 1
    %s21 = scalar_select %p18, %s19, %s20
    %p24 = pneg %p18
    %p25 = scmp.eq.s32.totalorder %s9, 1
    %p26 = por %p24, %p25
    %p27 = scmp.ne.s32.totalorder %s19, %s22
    %p28 = scmp.eq.s32.totalorder %s9, 0
    %p29 = por %p27, %p28
    %p30 = scmp.ne.s32.totalorder %s19, %s22
    %p31 = scmp.eq.s32.totalorder %s14, 1
    %p32 = por %p30, %p31
    %p33 = scmp.ne.s32.totalorder %s22, %s23
    %p34 = scmp.eq.s32.totalorder %s14, 0
    %p35 = por %p33, %p34
    %p36 = scmp.ne.s32.totalorder %s22, %s23
    %p37 = scmp.eq.s32.totalorder %s15, 1
    %p38 = por %p36, %p37
    %p40 = scmp.ne.s32.totalorder %s23, %s39
    %p41 = scmp.eq.s32.totalorder %s15, 0
    %p42 = por %p40, %p41
    %s44 = sadd.s32 %s43, 1
    %p47 = scmp.eq.s32.totalorder %s9, 1
    %p48 = scmp.ne.s32.totalorder %s43, %s45
    %p49 = scmp.eq.s32.totalorder %s9, 0
    %p50 = por %p48, %p49
    %p51 = scmp.ne.s32.totalorder %s43, %s45
    %p52 = scmp.eq.s32.totalorder %s14, 1
    %p53 = por %p51, %p52
    %p54 = scmp.ne.s32.totalorder %s45, %s46
    %p55 = scmp.eq.s32.totalorder %s14, 0
    %p56 = por %p54, %p55
    %p57 = scmp.ne.s32.totalorder %s45, %s46
    %p58 = scmp.eq.s32.totalorder %s15, 1
    %p59 = por %p57, %p58
    %p61 = scmp.ne.s32.totalorder %s46, %s60
    %p62 = scmp.eq.s32.totalorder %s15, 0
    %p63 = por %p61, %p62
    %s65 = sadd.s32 %s64, 1
    %p68 = scmp.eq.s32.totalorder %s9, 1
    %p69 = scmp.ne.s32.totalorder %s64, %s66
    %p70 = scmp.eq.s32.totalorder %s9, 0
    %p71 = por %p69, %p70
    %p72 = scmp.ne.s32.totalorder %s64, %s66
    %p73 = scmp.eq.s32.totalorder %s14, 1
    %p74 = por %p72, %p73
    %p75 = scmp.ne.s32.totalorder %s66, %s67
    %p76 = scmp.eq.s32.totalorder %s14, 0
    %p77 = por %p75, %p76
    %p78 = scmp.ne.s32.totalorder %s66, %s67
    %p79 = scmp.eq.s32.totalorder %s15, 1
    %p80 = por %p78, %p79
    %p82 = scmp.ne.s32.totalorder %s67, %s81
    %p83 = scmp.eq.s32.totalorder %s15, 0
    %p84 = por %p82, %p83
    %s85 = ssub.s32 %s9, %s16
    %p86 = scmp.eq.s32.totalorder %s85, 0
    %s88 = sadd.s32 %s87, 1
    %s89 = scalar_select %p86, %s87, %s88
    %p92 = pneg %p86
    %p93 = scmp.eq.s32.totalorder %s9, 1
    %p94 = por %p92, %p93
    %p95 = scmp.ne.s32.totalorder %s87, %s90
    %p96 = scmp.eq.s32.totalorder %s9, 0
    %p97 = por %p95, %p96
    %p98 = scmp.ne.s32.totalorder %s87, %s90
    %p99 = scmp.eq.s32.totalorder %s14, 1
    %p100 = por %p98, %p99
    %p101 = scmp.ne.s32.totalorder %s90, %s91
    %p102 = scmp.eq.s32.totalorder %s14, 0
    %p103 = por %p101, %p102
    %p104 = scmp.ne.s32.totalorder %s90, %s91
    %p105 = scmp.eq.s32.totalorder %s15, 1
    %p106 = por %p104, %p105
    %p108 = scmp.ne.s32.totalorder %s91, %s107
    %p109 = scmp.eq.s32.totalorder %s15, 0
    %p110 = por %p108, %p109
    %p111 = scmp.le.s32.totalorder 1, %s9
    %p112 = scmp.lt.s32.totalorder %s9, 3
    %p113 = pnand %p111, %p112
    %p114 = pneg %p113
    // Predicated region
    $region9: #{pyramid_forward.14} parent=5 // pred_check
      _
    $region10: #{pyramid_forward.14} parent=5 // pred_check_branch
      %116 = sbr.rel (%p113) target = $region12
    $region11: #{pyramid_forward.14} parent=5 // pred_region
      %s117 = ssub.s32 %s9, 1
      // Predicated region
      $region13: #{pyramid_forward.14} parent=11 // pred_check
        %p118 = pneg %p56
      $region14: #{pyramid_forward.14} parent=11 // pred_check_branch
        %120 = sbr.rel (%p118) target = $region16
      $region15: #{pyramid_forward.14} parent=11 // pred_region
        _
      $region16: #{pyramid_forward.14} parent=11 // pred_fallthru
        _
      // Predicated region
      $region17: #{pyramid_forward.14} parent=11 // pred_check
        %p121 = pneg %p77
      $region18: #{pyramid_forward.14} parent=11 // pred_check_branch
        %123 = sbr.rel (%p121) target = $region20
      $region19: #{pyramid_forward.14} parent=11 // pred_region
        _
      $region20: #{pyramid_forward.14} parent=11 // pred_fallthru
        _
    $region12: #{pyramid_forward.14} parent=5 // pred_fallthru
      _
    %p124 = scmp.lt.s32.totalorder %s9, 2
    // Predicated region
    $region21: #{pyramid_forward.14} parent=5 // pred_check
      %p125 = pneg %p124
    $region22: #{pyramid_forward.14} parent=5 // pred_check_branch
      %127 = sbr.rel (%p125) target = $region24
    $region23: #{pyramid_forward.14} parent=5 // pred_region
      // Predicated region
      $region25: #{pyramid_forward.14} parent=23 // pred_check
        %p128 = pneg %p29
      $region26: #{pyramid_forward.14} parent=23 // pred_check_branch
        %130 = sbr.rel (%p128) target = $region28
      $region27: #{pyramid_forward.14} parent=23 // pred_region
        %p131 = scmp.lt.s32.totalorder %s9, 1
        %s132 = scalar_select %p131, %s9, 1
        %s133 = smul.addr %s132, 12
        %s134 = smul.addr %s133, 4
        %s135 = scalar_lea.vmem %s0, %s134
      $region28: #{pyramid_forward.14} parent=23 // pred_fallthru
        _
    $region24: #{pyramid_forward.14} parent=5 // pred_fallthru
      _
    %p136 = scmp.le.s32.totalorder 1, %s9
    %p137 = scmp.lt.s32.totalorder %s9, 3
    %p138 = pnand %p136, %p137
    %p139 = pneg %p138
    // Predicated region
    $region29: #{pyramid_forward.14} parent=5 // pred_check
      _
    $region30: #{pyramid_forward.14} parent=5 // pred_check_branch
      %141 = sbr.rel (%p138) target = $region32
    $region31: #{pyramid_forward.14} parent=5 // pred_region
      %s142 = ssub.s32 %s9, 1
      %p143 = scmp.lt.s32.totalorder %s14, 1
      %s144 = scalar_select %p143, %s14, 1
      %s145 = smul.addr %s144, 12
      %s146 = smul.addr %s145, 4
      %s147 = scalar_lea.vmem %s0, %s146
      %p148 = pneg %p35
      %p149 = pneg %p32
      %p150 = pneg %p56
      %p151 = pneg %p53
      %p152 = pneg %p77
      %p153 = pneg %p74
      %p154 = pneg %p103
      %p155 = pneg %p100
      %p156 = scmp.lt.s32.totalorder %s14, 1
      %s157 = scalar_select %p156, %s14, 1
      %s158 = smul.addr %s157, 2
      %s159 = smul.addr %s158, 2
      %s160 = scalar_lea.vmem %s3, %s159
      %p161 = scmp.lt.s32.totalorder %s14, 1
      %s162 = scalar_select %p161, %s14, 1
      %s163 = smul.addr %s162, 12
      %s164 = smul.addr %s163, 4
      %s165 = scalar_lea.vmem %s0, %s164
      %p166 = scmp.lt.s32.totalorder %s14, 1
      %s167 = scalar_select %p166, %s14, 1
      %s168 = smul.addr %s167, 2
      %s169 = smul.addr %s168, 2
      %s170 = scalar_lea.vmem %s3, %s169
      %v171 = vld [vmem:[%s165] sm:$0x7]
      %v172 = vld [vmem:[%s165 + $0x4] sm:$0x7]
      %v173 = vld [vmem:[%s165 + $0x8] sm:$0x7]
      %v174 = vld [vmem:[%s165 + $0xc] sm:$0x7]
      %v175 = vld [vmem:[%s165 + $0x10] sm:$0x7]
      %v176 = vld [vmem:[%s165 + $0x14] sm:$0x7]
      %v177 = vld [vmem:[%s165 + $0x18] sm:$0x7]
      %v178 = vld [vmem:[%s165 + $0x1c] sm:$0x7]
      %v179 = vld [vmem:[%s165 + $0x24] sm:$0x7]
      %v180 = vld [vmem:[%s165 + $0x28] sm:$0x7]
      %v181 = vld [vmem:[%s1] sm:$0xf]
      %v182 = vld [vmem:[%s1 + $0x4] sm:$0xf]
      %v183 = vld [vmem:[%s1 + $0x8] sm:$0xf]
      %v184 = vld [vmem:[%s1 + $0xc] sm:$0xf]
      %v185 = vld [vmem:[%s1 + $0x10] sm:$0xf]
      %v186 = vld [vmem:[%s1 + $0x14] sm:$0xf]
      %v187 = vld [vmem:[%s1 + $0x18] sm:$0xf]
      %v188 = vld [vmem:[%s1 + $0x1c] sm:$0xf]
      %v189 = vld [vmem:[%s1 + $0x20] sm:$0xf]
      %v190 = vld [vmem:[%s1 + $0x24] sm:$0xf]
      %v191 = vld [vmem:[%s1 + $0x28] sm:$0xf]
      %v192 = vld [vmem:[%s1 + $0x2c] sm:$0xf]
      %v193 = vld [vmem:[%s1 + $0x30] sm:$0xf]
      %v194 = vld [vmem:[%s1 + $0x34] sm:$0xf]
      %v195 = vld [vmem:[%s1 + $0x38] sm:$0xf]
      %v196 = vld [vmem:[%s1 + $0x3c] sm:$0xf]
      %v197 = vld [vmem:[%s1 + $0x40] sm:$0xf]
      %v198 = vld [vmem:[%s1 + $0x44] sm:$0xf]
      %v199 = vld [vmem:[%s1 + $0x48] sm:$0xf]
      %v200 = vld [vmem:[%s1 + $0x4c] sm:$0xf]
      %v201 = vld [vmem:[%s1 + $0x50] sm:$0xf]
      %v202 = vld [vmem:[%s1 + $0x54] sm:$0xf]
      %v203 = vld [vmem:[%s1 + $0x58] sm:$0xf]
      %v204 = vld [vmem:[%s1 + $0x5c] sm:$0xf]
      %v205 = vld [vmem:[%s1 + $0x60] sm:$0xf]
      %v206 = vld [vmem:[%s1 + $0x64] sm:$0xf]
      %v207 = vld [vmem:[%s1 + $0x68] sm:$0xf]
      %v208 = vld [vmem:[%s1 + $0x6c] sm:$0xf]
      %v209 = vld [vmem:[%s1 + $0x70] sm:$0xf]
      %v210 = vld [vmem:[%s1 + $0x74] sm:$0xf]
      %v211 = vld [vmem:[%s1 + $0x78] sm:$0xf]
      %v212 = vld [vmem:[%s1 + $0x7c] sm:$0xf]
      %v213 = vld [vmem:[%s1 + $0x80] sm:$0xf]
      %v214 = vld [vmem:[%s1 + $0x84] sm:$0xf]
      %v215 = vld [vmem:[%s1 + $0x88] sm:$0xf]
      %v216 = vld [vmem:[%s1 + $0x8c] sm:$0xf]
      %v217 = vld [vmem:[%s1 + $0x90] sm:$0xf]
      %v218 = vld [vmem:[%s1 + $0x94] sm:$0xf]
      %v219 = vld [vmem:[%s1 + $0x98] sm:$0xf]
      %v220 = vld [vmem:[%s1 + $0x9c] sm:$0xf]
      %v221 = vld [vmem:[%s1 + $0xa0] sm:$0xf]
      %v222 = vld [vmem:[%s1 + $0xa4] sm:$0xf]
      %v223 = vld [vmem:[%s1 + $0xa8] sm:$0xf]
      %v224 = vld [vmem:[%s1 + $0xac] sm:$0xf]
      %v225 = vld [vmem:[%s1 + $0xb0] sm:$0xf]
      %v226 = vld [vmem:[%s1 + $0xb4] sm:$0xf]
      %v227 = vld [vmem:[%s1 + $0xb8] sm:$0xf]
      %v228 = vld [vmem:[%s1 + $0xbc] sm:$0xf]
      %v229 = vld [vmem:[%s1 + $0xc0] sm:$0xf]
      %v230 = vld [vmem:[%s1 + $0xc4] sm:$0xf]
      %v231 = vld [vmem:[%s1 + $0xc8] sm:$0xf]
      %v232 = vld [vmem:[%s1 + $0xcc] sm:$0xf]
      %v233 = vld [vmem:[%s1 + $0xd0] sm:$0xf]
      %v234 = vld [vmem:[%s1 + $0xd4] sm:$0xf]
      %v235 = vld [vmem:[%s1 + $0xd8] sm:$0xf]
      %v236 = vld [vmem:[%s1 + $0xdc] sm:$0xf]
      %v237 = vld [vmem:[%s1 + $0xe0] sm:$0xf]
      %v238 = vld [vmem:[%s1 + $0xe4] sm:$0xf]
      %v239 = vld [vmem:[%s1 + $0xe8] sm:$0xf]
      %v240 = vld [vmem:[%s1 + $0xec] sm:$0xf]
      %v241 = vld [vmem:[%s1 + $0xf0] sm:$0xf]
      %v242 = vld [vmem:[%s1 + $0xf4] sm:$0xf]
      %v243 = vld [vmem:[%s1 + $0xf8] sm:$0xf]
      %v244 = vld [vmem:[%s1 + $0xfc] sm:$0xf]
      %v245 = vld [vmem:[%s1 + $0x100] sm:$0xf]
      %v246 = vld [vmem:[%s1 + $0x104] sm:$0xf]
      %v247 = vld [vmem:[%s1 + $0x108] sm:$0xf]
      %v248 = vld [vmem:[%s1 + $0x10c] sm:$0xf]
      %v249 = vld [vmem:[%s1 + $0x110] sm:$0xf]
      %v250 = vld [vmem:[%s1 + $0x114] sm:$0xf]
      %v251 = vld [vmem:[%s1 + $0x118] sm:$0xf]
      %v252 = vld [vmem:[%s1 + $0x11c] sm:$0xf]
      %v253 = vld [vmem:[%s1 + $0x120] sm:$0xf]
      %v254 = vld [vmem:[%s1 + $0x124] sm:$0xf]
      %v255 = vld [vmem:[%s1 + $0x128] sm:$0xf]
      %v256 = vld [vmem:[%s1 + $0x12c] sm:$0xf]
      %v257 = vld [vmem:[%s1 + $0x130] sm:$0xf]
      %v258 = vld [vmem:[%s1 + $0x134] sm:$0xf]
      %v259 = vld [vmem:[%s1 + $0x138] sm:$0xf]
      %v260 = vld [vmem:[%s1 + $0x13c] sm:$0xf]
      %v261 = vld [vmem:[%s1 + $0x140] sm:$0xf]
      %v262 = vld [vmem:[%s1 + $0x144] sm:$0xf]
      %v263 = vld [vmem:[%s1 + $0x148] sm:$0xf]
      %v264 = vld [vmem:[%s1 + $0x14c] sm:$0xf]
      %v265 = vld [vmem:[%s1 + $0x150] sm:$0xf]
      %v266 = vld [vmem:[%s1 + $0x154] sm:$0xf]
      %v267 = vld [vmem:[%s1 + $0x158] sm:$0xf]
      %v268 = vld [vmem:[%s1 + $0x15c] sm:$0xf]
      %v269 = vld [vmem:[%s1 + $0x160] sm:$0xf]
      %v270 = vld [vmem:[%s1 + $0x164] sm:$0xf]
      %v271 = vld [vmem:[%s1 + $0x168] sm:$0xf]
      %v272 = vld [vmem:[%s1 + $0x16c] sm:$0xf]
      %v273 = vld [vmem:[%s1 + $0x170] sm:$0xf]
      %v274 = vld [vmem:[%s1 + $0x174] sm:$0xf]
      %v275 = vld [vmem:[%s1 + $0x178] sm:$0xf]
      %v276 = vld [vmem:[%s1 + $0x17c] sm:$0xf]
      %v277 = vld [vmem:[%s1 + $0x180] sm:$0xf]
      %v278 = vld [vmem:[%s1 + $0x184] sm:$0xf]
      %v279 = vld [vmem:[%s1 + $0x188] sm:$0xf]
      %v280 = vld [vmem:[%s1 + $0x18c] sm:$0xf]
      %v281 = vld [vmem:[%s1 + $0x190] sm:$0xf]
      %v282 = vld [vmem:[%s1 + $0x194] sm:$0xf]
      %v283 = vld [vmem:[%s1 + $0x198] sm:$0xf]
      %v284 = vld [vmem:[%s1 + $0x19c] sm:$0xf]
      %v285 = vld [vmem:[%s1 + $0x1a0] sm:$0xf]
      %v286 = vld [vmem:[%s1 + $0x1a4] sm:$0xf]
      %v287 = vld [vmem:[%s1 + $0x1a8] sm:$0xf]
      %v288 = vld [vmem:[%s1 + $0x1ac] sm:$0xf]
      %v289 = vld [vmem:[%s1 + $0x1b0] sm:$0xf]
      %v290 = vld [vmem:[%s1 + $0x1b4] sm:$0xf]
      %v291 = vld [vmem:[%s1 + $0x1b8] sm:$0xf]
      %v292 = vld [vmem:[%s1 + $0x1bc] sm:$0xf]
      %v293 = vld [vmem:[%s1 + $0x1c0] sm:$0xf]
      %v294 = vld [vmem:[%s1 + $0x1c4] sm:$0xf]
      %v295 = vld [vmem:[%s1 + $0x1c8] sm:$0xf]
      %v296 = vld [vmem:[%s1 + $0x1cc] sm:$0xf]
      %v297 = vld [vmem:[%s1 + $0x1d0] sm:$0xf]
      %v298 = vld [vmem:[%s1 + $0x1d4] sm:$0xf]
      %v299 = vld [vmem:[%s1 + $0x1d8] sm:$0xf]
      %v300 = vld [vmem:[%s1 + $0x1dc] sm:$0xf]
      %v301 = vld [vmem:[%s1 + $0x1e0] sm:$0xf]
      %v302 = vld [vmem:[%s1 + $0x1e4] sm:$0xf]
      %v303 = vld [vmem:[%s1 + $0x1e8] sm:$0xf]
      %v304 = vld [vmem:[%s1 + $0x1ec] sm:$0xf]
      %v305 = vld [vmem:[%s1 + $0x1f0] sm:$0xf]
      %v306 = vld [vmem:[%s1 + $0x1f4] sm:$0xf]
      %v307 = vld [vmem:[%s1 + $0x1f8] sm:$0xf]
      %v308 = vld [vmem:[%s1 + $0x1fc] sm:$0xf]
      %v309 = vld [vmem:[%s1 + $0x200] sm:$0xf]
      %v310 = vld [vmem:[%s1 + $0x204] sm:$0xf]
      %v311 = vld [vmem:[%s1 + $0x208] sm:$0xf]
      %v312 = vld [vmem:[%s1 + $0x20c] sm:$0xf]
      %v313 = vld [vmem:[%s1 + $0x210] sm:$0xf]
      %v314 = vld [vmem:[%s1 + $0x214] sm:$0xf]
      %v315 = vld [vmem:[%s1 + $0x218] sm:$0xf]
      %v316 = vld [vmem:[%s1 + $0x21c] sm:$0xf]
      %v317 = vld [vmem:[%s1 + $0x220] sm:$0xf]
      %v318 = vld [vmem:[%s1 + $0x224] sm:$0xf]
      %v319 = vld [vmem:[%s1 + $0x228] sm:$0xf]
      %v320 = vld [vmem:[%s1 + $0x22c] sm:$0xf]
      %v321 = vld [vmem:[%s1 + $0x230] sm:$0xf]
      %v322 = vld [vmem:[%s1 + $0x234] sm:$0xf]
      %v323 = vld [vmem:[%s1 + $0x238] sm:$0xf]
      %v324 = vld [vmem:[%s1 + $0x23c] sm:$0xf]
      %327 = vst [vmem:[#allocation1] ss:$4 sm:$0xff] %v171
      %s328 = scalar_lea.vmem [#allocation1], 1
      %329 = vst [vmem:[%s328] ss:$4 sm:$0xff] %v172
      %v330 = vld.sshfl [vmem:[#allocation1] sm:$0xff pattern:$0x73625140]
      %v332 = vpack.c.bf16 %v330, %v330
      %335 = vst [vmem:[#allocation1] ss:$4 sm:$0xff] %v174
      %s336 = scalar_lea.vmem [#allocation1], 1
      %337 = vst [vmem:[%s336] ss:$4 sm:$0xff] %v175
      %v338 = vld.sshfl [vmem:[#allocation1] sm:$0xff pattern:$0x73625140]
      %v340 = vpack.c.bf16 %v338, %v338
      %v357 = vunpack.c.l.b16 %v197
      %v358 = vunpack.c.l.b16 %v198
      %v359 = vunpack.c.l.b16 %v199
      %v360 = vunpack.c.l.b16 %v200
      %v361 = vunpack.c.l.b16 %v201
      %v362 = vunpack.c.l.b16 %v202
      %v363 = vunpack.c.l.b16 %v203
      %v364 = vunpack.c.l.b16 %v204
      %v365 = vunpack.c.l.b16 %v205
      %v366 = vunpack.c.l.b16 %v206
      %v367 = vunpack.c.l.b16 %v207
      %v368 = vunpack.c.l.b16 %v208
      %v369 = vunpack.c.l.b16 %v209
      %v370 = vunpack.c.l.b16 %v210
      %v371 = vunpack.c.l.b16 %v211
      %v372 = vunpack.c.l.b16 %v212
      %v373 = vpack.c.b16 %v358, %v357
      %v374 = vpack.c.b16 %v360, %v359
      %v375 = vpack.c.b16 %v362, %v361
      %v376 = vpack.c.b16 %v364, %v363
      %v377 = vpack.c.b16 %v366, %v365
      %v378 = vpack.c.b16 %v368, %v367
      %v379 = vpack.c.b16 %v370, %v369
      %v380 = vpack.c.b16 %v372, %v371
      %389 = vmatpush.bf16.msra.mxu0 %v380
      %390 = vmatpush.bf16.msra.mxu0 %v379
      %391 = vmatpush.bf16.msra.mxu0 %v378
      %392 = vmatpush.bf16.msra.mxu0 %v377
      %393 = vmatpush.bf16.msra.mxu0 %v376
      %394 = vmatpush.bf16.msra.mxu0 %v375
      %395 = vmatpush.bf16.msra.mxu0 %v374
      %396 = vmatpush.bf16.msra.mxu0 %v373
      %397 = vmatmul.bf16.gmra.mxu0 %v340
      %v398 = vpop.f32.mrf.mxu0
      %v399 = vadd.f32 0.0, %v398
      %v400 = vpop.f32.mrf.mxu0
      %401 = vdwg.mxu0
      %v418 = vunpack.c.l.b16 %v181
      %v419 = vunpack.c.l.b16 %v182
      %v420 = vunpack.c.l.b16 %v183
      %v421 = vunpack.c.l.b16 %v184
      %v422 = vunpack.c.l.b16 %v185
      %v423 = vunpack.c.l.b16 %v186
      %v424 = vunpack.c.l.b16 %v187
      %v425 = vunpack.c.l.b16 %v188
      %v426 = vunpack.c.l.b16 %v189
      %v427 = vunpack.c.l.b16 %v190
      %v428 = vunpack.c.l.b16 %v191
      %v429 = vunpack.c.l.b16 %v192
      %v430 = vunpack.c.l.b16 %v193
      %v431 = vunpack.c.l.b16 %v194
      %v432 = vunpack.c.l.b16 %v195
      %v433 = vunpack.c.l.b16 %v196
      %v434 = vpack.c.b16 %v419, %v418
      %v435 = vpack.c.b16 %v421, %v420
      %v436 = vpack.c.b16 %v423, %v422
      %v437 = vpack.c.b16 %v425, %v424
      %v438 = vpack.c.b16 %v427, %v426
      %v439 = vpack.c.b16 %v429, %v428
      %v440 = vpack.c.b16 %v431, %v430
      %v441 = vpack.c.b16 %v433, %v432
      %450 = vmatpush.bf16.msra.mxu0 %v441
      %451 = vmatpush.bf16.msra.mxu0 %v440
      %452 = vmatpush.bf16.msra.mxu0 %v439
      %453 = vmatpush.bf16.msra.mxu0 %v438
      %454 = vmatpush.bf16.msra.mxu0 %v437
      %455 = vmatpush.bf16.msra.mxu0 %v436
      %456 = vmatpush.bf16.msra.mxu0 %v435
      %457 = vmatpush.bf16.msra.mxu0 %v434
      %458 = vmatmul.bf16.gmra.mxu0 %v332
      %v459 = vpop.f32.mrf.mxu0
      %v460 = vadd.f32 %v399, %v459
      %v461 = vpop.f32.mrf.mxu0
      %462 = vdwg.mxu0
      %v463 = vrot.slane %v171, 2
      %v464 = vrot.slane %v172, 2
      %vm465 = vcmask 1040384
      %vm466 = vcmask 1042434
      %vm467 = vmor %vm465, %vm466
      %vm468 = vcmask 1044484
      %vm469 = vmor %vm467, %vm468
      %vm470 = vcmask 1046534
      %vm471 = vmor %vm469, %vm470
      %v472 = vrot.slane %v171, 7
      %v473 = vrot.slane %v472, 2
      %v474 = vrot.slane %v463, 7
      %v475 = vsel %vm471, %v473, %v474
      %v476 = vrot.slane %v172, 7
      %v477 = vrot.slane %v476, 2
      %v478 = vrot.slane %v464, 7
      %v479 = vsel %vm471, %v477, %v478
      %480 = vst [vmem:[#allocation1] ss:$4 sm:$0xff] %v475
      %s481 = scalar_lea.vmem [#allocation1], 1
      %482 = vst [vmem:[%s481] ss:$4 sm:$0xff] %v479
      %v483 = vld.sshfl [vmem:[#allocation1] sm:$0xff pattern:$0x73625140]
      %v485 = vpack.c.bf16 %v483, %v483
      %v502 = vunpack.c.l.b16 %v213
      %v503 = vunpack.c.l.b16 %v214
      %v504 = vunpack.c.l.b16 %v215
      %v505 = vunpack.c.l.b16 %v216
      %v506 = vunpack.c.l.b16 %v217
      %v507 = vunpack.c.l.b16 %v218
      %v508 = vunpack.c.l.b16 %v219
      %v509 = vunpack.c.l.b16 %v220
      %v510 = vunpack.c.l.b16 %v221
      %v511 = vunpack.c.l.b16 %v222
      %v512 = vunpack.c.l.b16 %v223
      %v513 = vunpack.c.l.b16 %v224
      %v514 = vunpack.c.l.b16 %v225
      %v515 = vunpack.c.l.b16 %v226
      %v516 = vunpack.c.l.b16 %v227
      %v517 = vunpack.c.l.b16 %v228
      %v518 = vpack.c.b16 %v503, %v502
      %v519 = vpack.c.b16 %v505, %v504
      %v520 = vpack.c.b16 %v507, %v506
      %v521 = vpack.c.b16 %v509, %v508
      %v522 = vpack.c.b16 %v511, %v510
      %v523 = vpack.c.b16 %v513, %v512
      %v524 = vpack.c.b16 %v515, %v514
      %v525 = vpack.c.b16 %v517, %v516
      %534 = vmatpush.bf16.msra.mxu0 %v525
      %535 = vmatpush.bf16.msra.mxu0 %v524
      %536 = vmatpush.bf16.msra.mxu0 %v523
      %537 = vmatpush.bf16.msra.mxu0 %v522
      %538 = vmatpush.bf16.msra.mxu0 %v521
      %539 = vmatpush.bf16.msra.mxu0 %v520
      %540 = vmatpush.bf16.msra.mxu0 %v519
      %541 = vmatpush.bf16.msra.mxu0 %v518
      %542 = vmatmul.bf16.gmra.mxu0 %v485
      %v543 = vpop.f32.mrf.mxu0
      %v544 = vadd.f32 0.0, %v543
      %v545 = vpop.f32.mrf.mxu0
      %546 = vdwg.mxu0
      %v547 = vadd.f32 %v460, %v544
      %550 = vst [vmem:[#allocation1] ss:$4 sm:$0xff] %v177
      %s551 = scalar_lea.vmem [#allocation1], 1
      %552 = vst [vmem:[%s551] ss:$4 sm:$0xff] %v178
      %v553 = vld.sshfl [vmem:[#allocation1] sm:$0xff pattern:$0x73625140]
      %v555 = vpack.c.bf16 %v553, %v553
      %v572 = vunpack.c.l.b16 %v229
      %v573 = vunpack.c.l.b16 %v230
      %v574 = vunpack.c.l.b16 %v231
      %v575 = vunpack.c.l.b16 %v232
      %v576 = vunpack.c.l.b16 %v233
      %v577 = vunpack.c.l.b16 %v234
      %v578 = vunpack.c.l.b16 %v235
      %v579 = vunpack.c.l.b16 %v236
      %v580 = vunpack.c.l.b16 %v237
      %v581 = vunpack.c.l.b16 %v238
      %v582 = vunpack.c.l.b16 %v239
      %v583 = vunpack.c.l.b16 %v240
      %v584 = vunpack.c.l.b16 %v241
      %v585 = vunpack.c.l.b16 %v242
      %v586 = vunpack.c.l.b16 %v243
      %v587 = vunpack.c.l.b16 %v244
      %v588 = vpack.c.b16 %v573, %v572
      %v589 = vpack.c.b16 %v575, %v574
      %v590 = vpack.c.b16 %v577, %v576
      %v591 = vpack.c.b16 %v579, %v578
      %v592 = vpack.c.b16 %v581, %v580
      %v593 = vpack.c.b16 %v583, %v582
      %v594 = vpack.c.b16 %v585, %v584
      %v595 = vpack.c.b16 %v587, %v586
      %604 = vmatpush.bf16.msra.mxu0 %v595
      %605 = vmatpush.bf16.msra.mxu0 %v594
      %606 = vmatpush.bf16.msra.mxu0 %v593
      %607 = vmatpush.bf16.msra.mxu0 %v592
      %608 = vmatpush.bf16.msra.mxu0 %v591
      %609 = vmatpush.bf16.msra.mxu0 %v590
      %610 = vmatpush.bf16.msra.mxu0 %v589
      %611 = vmatpush.bf16.msra.mxu0 %v588
      %612 = vmatmul.bf16.gmra.mxu0 %v555
      %v613 = vpop.f32.mrf.mxu0
      %v614 = vadd.f32 0.0, %v613
      %v615 = vpop.f32.mrf.mxu0
      %616 = vdwg.mxu0
      %v617 = vadd.f32 %v547, %v614
      %620 = vst [vmem:[#allocation1] ss:$4 sm:$0xff] %v179
      %s621 = scalar_lea.vmem [#allocation1], 1
      %622 = vst [vmem:[%s621] ss:$4 sm:$0xff] %v180
      %v623 = vld.sshfl [vmem:[#allocation1] sm:$0xff pattern:$0x73625140]
      %v625 = vpack.c.bf16 %v623, %v623
      %v642 = vunpack.c.l.b16 %v245
      %v643 = vunpack.c.l.b16 %v246
      %v644 = vunpack.c.l.b16 %v247
      %v645 = vunpack.c.l.b16 %v248
      %v646 = vunpack.c.l.b16 %v249
      %v647 = vunpack.c.l.b16 %v250
      %v648 = vunpack.c.l.b16 %v251
      %v649 = vunpack.c.l.b16 %v252
      %v650 = vunpack.c.l.b16 %v253
      %v651 = vunpack.c.l.b16 %v254
      %v652 = vunpack.c.l.b16 %v255
      %v653 = vunpack.c.l.b16 %v256
      %v654 = vunpack.c.l.b16 %v257
      %v655 = vunpack.c.l.b16 %v258
      %v656 = vunpack.c.l.b16 %v259
      %v657 = vunpack.c.l.b16 %v260
      %v658 = vpack.c.b16 %v643, %v642
      %v659 = vpack.c.b16 %v645, %v644
      %v660 = vpack.c.b16 %v647, %v646
      %v661 = vpack.c.b16 %v649, %v648
      %v662 = vpack.c.b16 %v651, %v650
      %v663 = vpack.c.b16 %v653, %v652
      %v664 = vpack.c.b16 %v655, %v654
      %v665 = vpack.c.b16 %v657, %v656
      %674 = vmatpush.bf16.msra.mxu0 %v665
      %675 = vmatpush.bf16.msra.mxu0 %v664
      %676 = vmatpush.bf16.msra.mxu0 %v663
      %677 = vmatpush.bf16.msra.mxu0 %v662
      %678 = vmatpush.bf16.msra.mxu0 %v661
      %679 = vmatpush.bf16.msra.mxu0 %v660
      %680 = vmatpush.bf16.msra.mxu0 %v659
      %681 = vmatpush.bf16.msra.mxu0 %v658
      %682 = vmatmul.bf16.gmra.mxu0 %v625
      %v683 = vpop.f32.mrf.mxu0
      %v684 = vadd.f32 0.0, %v683
      %v685 = vpop.f32.mrf.mxu0
      %686 = vdwg.mxu0
      %v687 = vadd.f32 %v617, %v684
      %v688 = vrot.slane %v177, 2
      %v689 = vrot.slane %v178, 2
      %v690 = vrot.slane %v177, 7
      %v691 = vrot.slane %v690, 2
      %v692 = vrot.slane %v688, 7
      %v693 = vsel %vm471, %v691, %v692
      %v694 = vrot.slane %v178, 7
      %v695 = vrot.slane %v694, 2
      %v696 = vrot.slane %v689, 7
      %v697 = vsel %vm471, %v695, %v696
      %698 = vst [vmem:[#allocation1] ss:$4 sm:$0xff] %v693
      %s699 = scalar_lea.vmem [#allocation1], 1
      %700 = vst [vmem:[%s699] ss:$4 sm:$0xff] %v697
      %v701 = vld.sshfl [vmem:[#allocation1] sm:$0xff pattern:$0x73625140]
      %v703 = vpack.c.bf16 %v701, %v701
      %v720 = vunpack.c.l.b16 %v261
      %v721 = vunpack.c.l.b16 %v262
      %v722 = vunpack.c.l.b16 %v263
      %v723 = vunpack.c.l.b16 %v264
      %v724 = vunpack.c.l.b16 %v265
      %v725 = vunpack.c.l.b16 %v266
      %v726 = vunpack.c.l.b16 %v267
      %v727 = vunpack.c.l.b16 %v268
      %v728 = vunpack.c.l.b16 %v269
      %v729 = vunpack.c.l.b16 %v270
      %v730 = vunpack.c.l.b16 %v271
      %v731 = vunpack.c.l.b16 %v272
      %v732 = vunpack.c.l.b16 %v273
      %v733 = vunpack.c.l.b16 %v274
      %v734 = vunpack.c.l.b16 %v275
      %v735 = vunpack.c.l.b16 %v276
      %v736 = vpack.c.b16 %v721, %v720
      %v737 = vpack.c.b16 %v723, %v722
      %v738 = vpack.c.b16 %v725, %v724
      %v739 = vpack.c.b16 %v727, %v726
      %v740 = vpack.c.b16 %v729, %v728
      %v741 = vpack.c.b16 %v731, %v730
      %v742 = vpack.c.b16 %v733, %v732
      %v743 = vpack.c.b16 %v735, %v734
      %752 = vmatpush.bf16.msra.mxu0 %v743
      %753 = vmatpush.bf16.msra.mxu0 %v742
      %754 = vmatpush.bf16.msra.mxu0 %v741
      %755 = vmatpush.bf16.msra.mxu0 %v740
      %756 = vmatpush.bf16.msra.mxu0 %v739
      %757 = vmatpush.bf16.msra.mxu0 %v738
      %758 = vmatpush.bf16.msra.mxu0 %v737
      %759 = vmatpush.bf16.msra.mxu0 %v736
      %760 = vmatmul.bf16.gmra.mxu0 %v703
      %v761 = vpop.f32.mrf.mxu0
      %v762 = vadd.f32 0.0, %v761
      %v763 = vpop.f32.mrf.mxu0
      %764 = vdwg.mxu0
      %v765 = vadd.f32 %v687, %v762
      %767 = vst [vmem:[#allocation1] ss:$4 sm:$0xff] %v172
      %s768 = scalar_lea.vmem [#allocation1], 1
      %769 = vst [vmem:[%s768] ss:$4 sm:$0xff] %v173
      %v770 = vld.sshfl [vmem:[#allocation1] sm:$0xff pattern:$0x73625140]
      %v772 = vpack.c.bf16 %v770, %v770
      %v789 = vunpack.c.l.b16 %v277
      %v790 = vunpack.c.l.b16 %v278
      %v791 = vunpack.c.l.b16 %v279
      %v792 = vunpack.c.l.b16 %v280
      %v793 = vunpack.c.l.b16 %v281
      %v794 = vunpack.c.l.b16 %v282
      %v795 = vunpack.c.l.b16 %v283
      %v796 = vunpack.c.l.b16 %v284
      %v797 = vunpack.c.l.b16 %v285
      %v798 = vunpack.c.l.b16 %v286
      %v799 = vunpack.c.l.b16 %v287
      %v800 = vunpack.c.l.b16 %v288
      %v801 = vunpack.c.l.b16 %v289
      %v802 = vunpack.c.l.b16 %v290
      %v803 = vunpack.c.l.b16 %v291
      %v804 = vunpack.c.l.b16 %v292
      %v805 = vpack.c.b16 %v790, %v789
      %v806 = vpack.c.b16 %v792, %v791
      %v807 = vpack.c.b16 %v794, %v793
      %v808 = vpack.c.b16 %v796, %v795
      %v809 = vpack.c.b16 %v798, %v797
      %v810 = vpack.c.b16 %v800, %v799
      %v811 = vpack.c.b16 %v802, %v801
      %v812 = vpack.c.b16 %v804, %v803
      %821 = vmatpush.bf16.msra.mxu0 %v812
      %822 = vmatpush.bf16.msra.mxu0 %v811
      %823 = vmatpush.bf16.msra.mxu0 %v810
      %824 = vmatpush.bf16.msra.mxu0 %v809
      %825 = vmatpush.bf16.msra.mxu0 %v808
      %826 = vmatpush.bf16.msra.mxu0 %v807
      %827 = vmatpush.bf16.msra.mxu0 %v806
      %828 = vmatpush.bf16.msra.mxu0 %v805
      %829 = vmatmul.bf16.gmra.mxu0 %v772
      %v830 = vpop.f32.mrf.mxu0
      %v831 = vadd.f32 0.0, %v830
      %v832 = vpop.f32.mrf.mxu0
      %833 = vdwg.mxu0
      %v834 = vadd.f32 %v765, %v831
      %836 = vst [vmem:[#allocation1] ss:$4 sm:$0xff] %v175
      %s837 = scalar_lea.vmem [#allocation1], 1
      %838 = vst [vmem:[%s837] ss:$4 sm:$0xff] %v176
      %v839 = vld.sshfl [vmem:[#allocation1] sm:$0xff pattern:$0x73625140]
      %v841 = vpack.c.bf16 %v839, %v839
      %v858 = vunpack.c.l.b16 %v293
      %v859 = vunpack.c.l.b16 %v294
      %v860 = vunpack.c.l.b16 %v295
      %v861 = vunpack.c.l.b16 %v296
      %v862 = vunpack.c.l.b16 %v297
      %v863 = vunpack.c.l.b16 %v298
      %v864 = vunpack.c.l.b16 %v299
      %v865 = vunpack.c.l.b16 %v300
      %v866 = vunpack.c.l.b16 %v301
      %v867 = vunpack.c.l.b16 %v302
      %v868 = vunpack.c.l.b16 %v303
      %v869 = vunpack.c.l.b16 %v304
      %v870 = vunpack.c.l.b16 %v305
      %v871 = vunpack.c.l.b16 %v306
      %v872 = vunpack.c.l.b16 %v307
      %v873 = vunpack.c.l.b16 %v308
      %v874 = vpack.c.b16 %v859, %v858
      %v875 = vpack.c.b16 %v861, %v860
      %v876 = vpack.c.b16 %v863, %v862
      %v877 = vpack.c.b16 %v865, %v864
      %v878 = vpack.c.b16 %v867, %v866
      %v879 = vpack.c.b16 %v869, %v868
      %v880 = vpack.c.b16 %v871, %v870
      %v881 = vpack.c.b16 %v873, %v872
      %890 = vmatpush.bf16.msra.mxu0 %v881
      %891 = vmatpush.bf16.msra.mxu0 %v880
      %892 = vmatpush.bf16.msra.mxu0 %v879
      %893 = vmatpush.bf16.msra.mxu0 %v878
      %894 = vmatpush.bf16.msra.mxu0 %v877
      %895 = vmatpush.bf16.msra.mxu0 %v876
      %896 = vmatpush.bf16.msra.mxu0 %v875
      %897 = vmatpush.bf16.msra.mxu0 %v874
      %898 = vmatmul.bf16.gmra.mxu0 %v841
      %v899 = vpop.f32.mrf.mxu0
      %v900 = vadd.f32 0.0, %v899
      %v901 = vpop.f32.mrf.mxu0
      %902 = vdwg.mxu0
      %v903 = vadd.f32 %v834, %v900
      %v904 = vrot.slane %v173, 2
      %v905 = vrot.slane %v173, 7
      %v906 = vrot.slane %v905, 2
      %v907 = vrot.slane %v904, 7
      %v908 = vsel %vm471, %v906, %v907
      %909 = vst [vmem:[#allocation1] ss:$4 sm:$0xff] %v479
      %s910 = scalar_lea.vmem [#allocation1], 1
      %911 = vst [vmem:[%s910] ss:$4 sm:$0xff] %v908
      %v912 = vld.sshfl [vmem:[#allocation1] sm:$0xff pattern:$0x73625140]
      %v914 = vpack.c.bf16 %v912, %v912
      %v931 = vunpack.c.l.b16 %v309
      %v932 = vunpack.c.l.b16 %v310
      %v933 = vunpack.c.l.b16 %v311
      %v934 = vunpack.c.l.b16 %v312
      %v935 = vunpack.c.l.b16 %v313
      %v936 = vunpack.c.l.b16 %v314
      %v937 = vunpack.c.l.b16 %v315
      %v938 = vunpack.c.l.b16 %v316
      %v939 = vunpack.c.l.b16 %v317
      %v940 = vunpack.c.l.b16 %v318
      %v941 = vunpack.c.l.b16 %v319
      %v942 = vunpack.c.l.b16 %v320
      %v943 = vunpack.c.l.b16 %v321
      %v944 = vunpack.c.l.b16 %v322
      %v945 = vunpack.c.l.b16 %v323
      %v946 = vunpack.c.l.b16 %v324
      %v947 = vpack.c.b16 %v932, %v931
      %v948 = vpack.c.b16 %v934, %v933
      %v949 = vpack.c.b16 %v936, %v935
      %v950 = vpack.c.b16 %v938, %v937
      %v951 = vpack.c.b16 %v940, %v939
      %v952 = vpack.c.b16 %v942, %v941
      %v953 = vpack.c.b16 %v944, %v943
      %v954 = vpack.c.b16 %v946, %v945
      %963 = vmatpush.bf16.msra.mxu0 %v954
      %964 = vmatpush.bf16.msra.mxu0 %v953
      %965 = vmatpush.bf16.msra.mxu0 %v952
      %966 = vmatpush.bf16.msra.mxu0 %v951
      %967 = vmatpush.bf16.msra.mxu0 %v950
      %968 = vmatpush.bf16.msra.mxu0 %v949
      %969 = vmatpush.bf16.msra.mxu0 %v948
      %970 = vmatpush.bf16.msra.mxu0 %v947
      %971 = vmatmul.bf16.gmra.mxu0 %v914
      %v972 = vpop.f32.mrf.mxu0
      %v973 = vadd.f32 0.0, %v972
      %v974 = vpop.f32.mrf.mxu0
      %975 = vdwg.mxu0
      %v976 = vadd.f32 %v903, %v973
      %v977 = vld [vmem:[%s2] sm:$0x1]
      %v979 = vperm.slane %v977, 0
      %v981 = vadd.f32 %v976, %v979
      %v983 = vrot.slane %v981, 2
      %985 = vst [vmem:[%s170] sm:$0x3] %v981
      %986 = vst [vmem:[%s170 + $0x2] sm:$0x3] %v983
      %p987 = scmp.lt.s32.totalorder %s14, 1
      %s988 = scalar_select %p987, %s14, 1
      %s989 = smul.addr %s988, 2
      %s990 = smul.addr %s989, 2
      %s991 = scalar_lea.vmem %s3, %s990
      // Predicated region
      $region33: #{pyramid_forward.14} parent=31 // pred_check
        %p992 = pneg %p100
      $region34: #{pyramid_forward.14} parent=31 // pred_check_branch
        %994 = sbr.rel (%p992) target = $region36
      $region35: #{pyramid_forward.14} parent=31 // pred_region
        _
      $region36: #{pyramid_forward.14} parent=31 // pred_fallthru
        _
    $region32: #{pyramid_forward.14} parent=5 // pred_fallthru
      _
    %p995 = scmp.le.s32.totalorder 2, %s9
    // Predicated region
    $region37: #{pyramid_forward.14} parent=5 // pred_check
      %p996 = pneg %p995
    $region38: #{pyramid_forward.14} parent=5 // pred_check_branch
      %998 = sbr.rel (%p996) target = $region40
    $region39: #{pyramid_forward.14} parent=5 // pred_region
      %s999 = ssub.s32 %s9, 2
      // Predicated region
      $region41: #{pyramid_forward.14} parent=39 // pred_check
        %p1000 = pneg %p106
      $region42: #{pyramid_forward.14} parent=39 // pred_check_branch
        %1002 = sbr.rel (%p1000) target = $region44
      $region43: #{pyramid_forward.14} parent=39 // pred_region
        %p1003 = scmp.lt.s32.totalorder %s15, 1
        %s1004 = scalar_select %p1003, %s15, 1
        %s1005 = smul.addr %s1004, 2
        %s1006 = smul.addr %s1005, 2
        %s1007 = scalar_lea.vmem %s3, %s1006
      $region44: #{pyramid_forward.14} parent=39 // pred_fallthru
        _
    $region40: #{pyramid_forward.14} parent=5 // pred_fallthru
      _
  $region6: #{pyramid_forward.14} parent=0 // loop_footer
    %s13 = sadd.s32 1, %s9
  $region7: #{pyramid_forward.14} parent=0 // loop_footer_branch
    %8 = sbr.rel target = $region3
  $region8: #{pyramid_forward.14} parent=0 // loop_exit
    _

// kernel: pyramid_forward.15
$region0: #{pyramid_forward.15}
  #allocation0 [shape = 'u32[]', space=smem, size = 0x4, offset = 0x4, fixed_abs, tag = 'smem constant byte address 0x4 - core index']
  #allocation1 [shape = 'u32[72,128]{1,0:T(1,128)}', space=vmem, size = 0x9000, scoped, tag = 'internal scratch']
  %s0 = inlined_call_operand.vmem [shape: f32[2,4,2,2,128], index: 0, kind: input, shape index: {}]
  %s1 = inlined_call_operand.vmem [shape: bf16[9,128,128], index: 1, kind: input, shape index: {}]
  %s2 = inlined_call_operand.vmem [shape: f32[1,128], index: 2, kind: input, shape index: {}]
  %s3 = inlined_call_operand.hbm [shape: f32[2,1,1,128], index: 3, kind: output, shape index: {}]
  %s4 = sld [smem:[#allocation0]]
  $region45: #{pyramid_forward.15} parent=0
    _
  %s6 = ssub.s32 1, %s4
  %s7 = scalar_select 0, %s6, %s4
  $region1: #{pyramid_forward.15} parent=0
    #allocation2 [shape = 'u8[1024]{0}', space=vmem, size = 0x400, scoped, tag = 'output window, operand 0']
    #allocation3 [shape = 's32[2]{0}', space=sflag, size = 0x8, scoped, tag = 'scoped memory for pyramid_forward.15']
    %8 = vsyncpa [#allocation3], 0
    %s9 = scalar_lea.sflag [#allocation3], 1
    %10 = vsyncpa %s9, 0
    loop: start=0, step=1, limit=4
    $region2: #{pyramid_forward.15} parent=1 // loop_pre_header
      _
    $region3: #{pyramid_forward.15} parent=1 // loop_header
      %s12 = sphi 0, %s16
      %p13 = scmp.ge.s32.totalorder %s12, 4
      %s22 = sphi 0, %s24
      %s25 = sphi 0, %s22
      %s26 = sphi 0, %s25
      %s42 = sphi 0, %s26
      %s46 = sphi 0, %s46
      %s48 = sphi 0, %s46
      %s49 = sphi 0, %s48
      %s63 = sphi 0, %s49
      %s67 = sphi 0, %s67
      %s69 = sphi 0, %s67
      %s70 = sphi 0, %s69
      %s84 = sphi 0, %s70
      %s90 = sphi 0, %s92
      %s93 = sphi 0, %s90
      %s94 = sphi 0, %s93
      %s110 = sphi 0, %s94
    $region4: #{pyramid_forward.15} parent=1 // loop_header_branch
      %15 = sbr.rel (%p13) target = $region8
    $region5: #{pyramid_forward.15} parent=1 // loop_body
      %s17 = ssub.s32 %s12, 1
      %s18 = ssub.s32 %s12, 2
      %s19 = sadd.s32 %s12, 1
      %s20 = ssub.s32 %s12, %s19
      %p21 = scmp.eq.s32.totalorder %s20, 0
      %s23 = sadd.s32 %s22, 1
      %s24 = scalar_select %p21, %s22, %s23
      %p27 = pneg %p21
      %p28 = scmp.eq.s32.totalorder %s12, 1
      %p29 = por %p27, %p28
      %p30 = scmp.ne.s32.totalorder %s22, %s25
      %p31 = scmp.eq.s32.totalorder %s12, 0
      %p32 = por %p30, %p31
      %p33 = scmp.ne.s32.totalorder %s22, %s25
      %p34 = scmp.eq.s32.totalorder %s17, 1
      %p35 = por %p33, %p34
      %p36 = scmp.ne.s32.totalorder %s25, %s26
      %p37 = scmp.eq.s32.totalorder %s17, 0
      %p38 = por %p36, %p37
      %p39 = scmp.ne.s32.totalorder %s25, %s26
      %p40 = scmp.eq.s32.totalorder %s18, 1
      %p41 = por %p39, %p40
      %p43 = scmp.ne.s32.totalorder %s26, %s42
      %p44 = scmp.eq.s32.totalorder %s18, 0
      %p45 = por %p43, %p44
      %s47 = sadd.s32 %s46, 1
      %p50 = scmp.eq.s32.totalorder %s12, 1
      %p51 = scmp.ne.s32.totalorder %s46, %s48
      %p52 = scmp.eq.s32.totalorder %s12, 0
      %p53 = por %p51, %p52
      %p54 = scmp.ne.s32.totalorder %s46, %s48
      %p55 = scmp.eq.s32.totalorder %s17, 1
      %p56 = por %p54, %p55
      %p57 = scmp.ne.s32.totalorder %s48, %s49
      %p58 = scmp.eq.s32.totalorder %s17, 0
      %p59 = por %p57, %p58
      %p60 = scmp.ne.s32.totalorder %s48, %s49
      %p61 = scmp.eq.s32.totalorder %s18, 1
      %p62 = por %p60, %p61
      %p64 = scmp.ne.s32.totalorder %s49, %s63
      %p65 = scmp.eq.s32.totalorder %s18, 0
      %p66 = por %p64, %p65
      %s68 = sadd.s32 %s67, 1
      %p71 = scmp.eq.s32.totalorder %s12, 1
      %p72 = scmp.ne.s32.totalorder %s67, %s69
      %p73 = scmp.eq.s32.totalorder %s12, 0
      %p74 = por %p72, %p73
      %p75 = scmp.ne.s32.totalorder %s67, %s69
      %p76 = scmp.eq.s32.totalorder %s17, 1
      %p77 = por %p75, %p76
      %p78 = scmp.ne.s32.totalorder %s69, %s70
      %p79 = scmp.eq.s32.totalorder %s17, 0
      %p80 = por %p78, %p79
      %p81 = scmp.ne.s32.totalorder %s69, %s70
      %p82 = scmp.eq.s32.totalorder %s18, 1
      %p83 = por %p81, %p82
      %p85 = scmp.ne.s32.totalorder %s70, %s84
      %p86 = scmp.eq.s32.totalorder %s18, 0
      %p87 = por %p85, %p86
      %s88 = ssub.s32 %s12, %s19
      %p89 = scmp.eq.s32.totalorder %s88, 0
      %s91 = sadd.s32 %s90, 1
      %s92 = scalar_select %p89, %s90, %s91
      %p95 = pneg %p89
      %p96 = scmp.eq.s32.totalorder %s12, 1
      %p97 = por %p95, %p96
      %p98 = scmp.ne.s32.totalorder %s90, %s93
      %p99 = scmp.eq.s32.totalorder %s12, 0
      %p100 = por %p98, %p99
      %p101 = scmp.ne.s32.totalorder %s90, %s93
      %p102 = scmp.eq.s32.totalorder %s17, 1
      %p103 = por %p101, %p102
      %p104 = scmp.ne.s32.totalorder %s93, %s94
      %p105 = scmp.eq.s32.totalorder %s17, 0
      %p106 = por %p104, %p105
      %p107 = scmp.ne.s32.totalorder %s93, %s94
      %p108 = scmp.eq.s32.totalorder %s18, 1
      %p109 = por %p107, %p108
      %p111 = scmp.ne.s32.totalorder %s94, %s110
      %p112 = scmp.eq.s32.totalorder %s18, 0
      %p113 = por %p111, %p112
      %p114 = scmp.le.s32.totalorder 1, %s12
      %p115 = scmp.lt.s32.totalorder %s12, 3
      %p116 = pnand %p114, %p115
      %p117 = pneg %p116
      // Predicated region
      $region9: #{pyramid_forward.15} parent=5 // pred_check
        _
      $region10: #{pyramid_forward.15} parent=5 // pred_check_branch
        %119 = sbr.rel (%p116) target = $region12
      $region11: #{pyramid_forward.15} parent=5 // pred_region
        %s120 = ssub.s32 %s12, 1
        // Predicated region
        $region13: #{pyramid_forward.15} parent=11 // pred_check
          %p121 = pneg %p59
        $region14: #{pyramid_forward.15} parent=11 // pred_check_branch
          %123 = sbr.rel (%p121) target = $region16
        $region15: #{pyramid_forward.15} parent=11 // pred_region
          _
        $region16: #{pyramid_forward.15} parent=11 // pred_fallthru
          _
        // Predicated region
        $region17: #{pyramid_forward.15} parent=11 // pred_check
          %p124 = pneg %p80
        $region18: #{pyramid_forward.15} parent=11 // pred_check_branch
          %126 = sbr.rel (%p124) target = $region20
        $region19: #{pyramid_forward.15} parent=11 // pred_region
          _
        $region20: #{pyramid_forward.15} parent=11 // pred_fallthru
          _
      $region12: #{pyramid_forward.15} parent=5 // pred_fallthru
        _
      %p127 = scmp.lt.s32.totalorder %s12, 2
      // Predicated region
      $region21: #{pyramid_forward.15} parent=5 // pred_check
        %p128 = pneg %p127
      $region22: #{pyramid_forward.15} parent=5 // pred_check_branch
        %130 = sbr.rel (%p128) target = $region24
      $region23: #{pyramid_forward.15} parent=5 // pred_region
        // Predicated region
        $region25: #{pyramid_forward.15} parent=23 // pred_check
          %p131 = pneg %p32
        $region26: #{pyramid_forward.15} parent=23 // pred_check_branch
          %133 = sbr.rel (%p131) target = $region28
        $region27: #{pyramid_forward.15} parent=23 // pred_region
          %p134 = scmp.lt.s32.totalorder %s12, 1
          %s135 = scalar_select %p134, %s12, 1
          %s136 = smul.addr %s135, 8
          %s137 = smul.addr %s136, 2
          %s138 = scalar_lea.vmem %s0, %s137
        $region28: #{pyramid_forward.15} parent=23 // pred_fallthru
          _
      $region24: #{pyramid_forward.15} parent=5 // pred_fallthru
        _
      %p139 = scmp.le.s32.totalorder 1, %s12
      %p140 = scmp.lt.s32.totalorder %s12, 3
      %p141 = pnand %p139, %p140
      %p142 = pneg %p141
      // Predicated region
      $region29: #{pyramid_forward.15} parent=5 // pred_check
        _
      $region30: #{pyramid_forward.15} parent=5 // pred_check_branch
        %144 = sbr.rel (%p141) target = $region32
      $region31: #{pyramid_forward.15} parent=5 // pred_region
        %s145 = ssub.s32 %s12, 1
        %p146 = scmp.lt.s32.totalorder %s17, 1
        %s147 = scalar_select %p146, %s17, 1
        %s148 = smul.addr %s147, 8
        %s149 = smul.addr %s148, 2
        %s150 = scalar_lea.vmem %s0, %s149
        %p151 = pneg %p38
        %p152 = pneg %p35
        %p153 = pneg %p59
        %p154 = pneg %p56
        %p155 = pneg %p80
        %p156 = pneg %p77
        %p157 = pneg %p106
        %p158 = pneg %p103
        %s159 = sand.u32 %s93, 1
        %s160 = scalar_lea.sflag [#allocation3], %s159
        %s161 = sand.u32 %s93, 1
        %s162 = scalar_lea.vmem [#allocation2], %s161
        %p163 = scmp.lt.s32.totalorder %s17, 1
        %s164 = scalar_select %p163, %s17, 1
        %s165 = smul.addr %s164, 8
        %s166 = smul.addr %s165, 2
        %s167 = scalar_lea.vmem %s0, %s166
        %v168 = vld [vmem:[%s167] sm:$0x3]
        %v169 = vld [vmem:[%s167 + $0x2] sm:$0x3]
        %v170 = vld [vmem:[%s167 + $0x4] sm:$0x3]
        %v171 = vld [vmem:[%s167 + $0x6] sm:$0x3]
        %v172 = vld [vmem:[%s167 + $0x8] sm:$0x3]
        %v173 = vld [vmem:[%s167 + $0xc] sm:$0x3]
        %v174 = vld [vmem:[%s1] sm:$0xf]
        %v175 = vld [vmem:[%s1 + $0x4] sm:$0xf]
        %v176 = vld [vmem:[%s1 + $0x8] sm:$0xf]
        %v177 = vld [vmem:[%s1 + $0xc] sm:$0xf]
        %v178 = vld [vmem:[%s1 + $0x10] sm:$0xf]
        %v179 = vld [vmem:[%s1 + $0x14] sm:$0xf]
        %v180 = vld [vmem:[%s1 + $0x18] sm:$0xf]
        %v181 = vld [vmem:[%s1 + $0x1c] sm:$0xf]
        %v182 = vld [vmem:[%s1 + $0x20] sm:$0xf]
        %v183 = vld [vmem:[%s1 + $0x24] sm:$0xf]
        %v184 = vld [vmem:[%s1 + $0x28] sm:$0xf]
        %v185 = vld [vmem:[%s1 + $0x2c] sm:$0xf]
        %v186 = vld [vmem:[%s1 + $0x30] sm:$0xf]
        %v187 = vld [vmem:[%s1 + $0x34] sm:$0xf]
        %v188 = vld [vmem:[%s1 + $0x38] sm:$0xf]
        %v189 = vld [vmem:[%s1 + $0x3c] sm:$0xf]
        %v190 = vld [vmem:[%s1 + $0x40] sm:$0xf]
        %v191 = vld [vmem:[%s1 + $0x44] sm:$0xf]
        %v192 = vld [vmem:[%s1 + $0x48] sm:$0xf]
        %v193 = vld [vmem:[%s1 + $0x4c] sm:$0xf]
        %v194 = vld [vmem:[%s1 + $0x50] sm:$0xf]
        %v195 = vld [vmem:[%s1 + $0x54] sm:$0xf]
        %v196 = vld [vmem:[%s1 + $0x58] sm:$0xf]
        %v197 = vld [vmem:[%s1 + $0x5c] sm:$0xf]
        %v198 = vld [vmem:[%s1 + $0x60] sm:$0xf]
        %v199 = vld [vmem:[%s1 + $0x64] sm:$0xf]
        %v200 = vld [vmem:[%s1 + $0x68] sm:$0xf]
        %v201 = vld [vmem:[%s1 + $0x6c] sm:$0xf]
        %v202 = vld [vmem:[%s1 + $0x70] sm:$0xf]
        %v203 = vld [vmem:[%s1 + $0x74] sm:$0xf]
        %v204 = vld [vmem:[%s1 + $0x78] sm:$0xf]
        %v205 = vld [vmem:[%s1 + $0x7c] sm:$0xf]
        %v206 = vld [vmem:[%s1 + $0x80] sm:$0xf]
        %v207 = vld [vmem:[%s1 + $0x84] sm:$0xf]
        %v208 = vld [vmem:[%s1 + $0x88] sm:$0xf]
        %v209 = vld [vmem:[%s1 + $0x8c] sm:$0xf]
        %v210 = vld [vmem:[%s1 + $0x90] sm:$0xf]
        %v211 = vld [vmem:[%s1 + $0x94] sm:$0xf]
        %v212 = vld [vmem:[%s1 + $0x98] sm:$0xf]
        %v213 = vld [vmem:[%s1 + $0x9c] sm:$0xf]
        %v214 = vld [vmem:[%s1 + $0xa0] sm:$0xf]
        %v215 = vld [vmem:[%s1 + $0xa4] sm:$0xf]
        %v216 = vld [vmem:[%s1 + $0xa8] sm:$0xf]
        %v217 = vld [vmem:[%s1 + $0xac] sm:$0xf]
        %v218 = vld [vmem:[%s1 + $0xb0] sm:$0xf]
        %v219 = vld [vmem:[%s1 + $0xb4] sm:$0xf]
        %v220 = vld [vmem:[%s1 + $0xb8] sm:$0xf]
        %v221 = vld [vmem:[%s1 + $0xbc] sm:$0xf]
        %v222 = vld [vmem:[%s1 + $0xc0] sm:$0xf]
        %v223 = vld [vmem:[%s1 + $0xc4] sm:$0xf]
        %v224 = vld [vmem:[%s1 + $0xc8] sm:$0xf]
        %v225 = vld [vmem:[%s1 + $0xcc] sm:$0xf]
        %v226 = vld [vmem:[%s1 + $0xd0] sm:$0xf]
        %v227 = vld [vmem:[%s1 + $0xd4] sm:$0xf]
        %v228 = vld [vmem:[%s1 + $0xd8] sm:$0xf]
        %v229 = vld [vmem:[%s1 + $0xdc] sm:$0xf]
        %v230 = vld [vmem:[%s1 + $0xe0] sm:$0xf]
        %v231 = vld [vmem:[%s1 + $0xe4] sm:$0xf]
        %v232 = vld [vmem:[%s1 + $0xe8] sm:$0xf]
        %v233 = vld [vmem:[%s1 + $0xec] sm:$0xf]
        %v234 = vld [vmem:[%s1 + $0xf0] sm:$0xf]
        %v235 = vld [vmem:[%s1 + $0xf4] sm:$0xf]
        %v236 = vld [vmem:[%s1 + $0xf8] sm:$0xf]
        %v237 = vld [vmem:[%s1 + $0xfc] sm:$0xf]
        %v238 = vld [vmem:[%s1 + $0x100] sm:$0xf]
        %v239 = vld [vmem:[%s1 + $0x104] sm:$0xf]
        %v240 = vld [vmem:[%s1 + $0x108] sm:$0xf]
        %v241 = vld [vmem:[%s1 + $0x10c] sm:$0xf]
        %v242 = vld [vmem:[%s1 + $0x110] sm:$0xf]
        %v243 = vld [vmem:[%s1 + $0x114] sm:$0xf]
        %v244 = vld [vmem:[%s1 + $0x118] sm:$0xf]
        %v245 = vld [vmem:[%s1 + $0x11c] sm:$0xf]
        %v246 = vld [vmem:[%s1 + $0x120] sm:$0xf]
        %v247 = vld [vmem:[%s1 + $0x124] sm:$0xf]
        %v248 = vld [vmem:[%s1 + $0x128] sm:$0xf]
        %v249 = vld [vmem:[%s1 + $0x12c] sm:$0xf]
        %v250 = vld [vmem:[%s1 + $0x130] sm:$0xf]
        %v251 = vld [vmem:[%s1 + $0x134] sm:$0xf]
        %v252 = vld [vmem:[%s1 + $0x138] sm:$0xf]
        %v253 = vld [vmem:[%s1 + $0x13c] sm:$0xf]
        %v254 = vld [vmem:[%s1 + $0x140] sm:$0xf]
        %v255 = vld [vmem:[%s1 + $0x144] sm:$0xf]
        %v256 = vld [vmem:[%s1 + $0x148] sm:$0xf]
        %v257 = vld [vmem:[%s1 + $0x14c] sm:$0xf]
        %v258 = vld [vmem:[%s1 + $0x150] sm:$0xf]
        %v259 = vld [vmem:[%s1 + $0x154] sm:$0xf]
        %v260 = vld [vmem:[%s1 + $0x158] sm:$0xf]
        %v261 = vld [vmem:[%s1 + $0x15c] sm:$0xf]
        %v262 = vld [vmem:[%s1 + $0x160] sm:$0xf]
        %v263 = vld [vmem:[%s1 + $0x164] sm:$0xf]
        %v264 = vld [vmem:[%s1 + $0x168] sm:$0xf]
        %v265 = vld [vmem:[%s1 + $0x16c] sm:$0xf]
        %v266 = vld [vmem:[%s1 + $0x170] sm:$0xf]
        %v267 = vld [vmem:[%s1 + $0x174] sm:$0xf]
        %v268 = vld [vmem:[%s1 + $0x178] sm:$0xf]
        %v269 = vld [vmem:[%s1 + $0x17c] sm:$0xf]
        %v270 = vld [vmem:[%s1 + $0x180] sm:$0xf]
        %v271 = vld [vmem:[%s1 + $0x184] sm:$0xf]
        %v272 = vld [vmem:[%s1 + $0x188] sm:$0xf]
        %v273 = vld [vmem:[%s1 + $0x18c] sm:$0xf]
        %v274 = vld [vmem:[%s1 + $0x190] sm:$0xf]
        %v275 = vld [vmem:[%s1 + $0x194] sm:$0xf]
        %v276 = vld [vmem:[%s1 + $0x198] sm:$0xf]
        %v277 = vld [vmem:[%s1 + $0x19c] sm:$0xf]
        %v278 = vld [vmem:[%s1 + $0x1a0] sm:$0xf]
        %v279 = vld [vmem:[%s1 + $0x1a4] sm:$0xf]
        %v280 = vld [vmem:[%s1 + $0x1a8] sm:$0xf]
        %v281 = vld [vmem:[%s1 + $0x1ac] sm:$0xf]
        %v282 = vld [vmem:[%s1 + $0x1b0] sm:$0xf]
        %v283 = vld [vmem:[%s1 + $0x1b4] sm:$0xf]
        %v284 = vld [vmem:[%s1 + $0x1b8] sm:$0xf]
        %v285 = vld [vmem:[%s1 + $0x1bc] sm:$0xf]
        %v286 = vld [vmem:[%s1 + $0x1c0] sm:$0xf]
        %v287 = vld [vmem:[%s1 + $0x1c4] sm:$0xf]
        %v288 = vld [vmem:[%s1 + $0x1c8] sm:$0xf]
        %v289 = vld [vmem:[%s1 + $0x1cc] sm:$0xf]
        %v290 = vld [vmem:[%s1 + $0x1d0] sm:$0xf]
        %v291 = vld [vmem:[%s1 + $0x1d4] sm:$0xf]
        %v292 = vld [vmem:[%s1 + $0x1d8] sm:$0xf]
        %v293 = vld [vmem:[%s1 + $0x1dc] sm:$0xf]
        %v294 = vld [vmem:[%s1 + $0x1e0] sm:$0xf]
        %v295 = vld [vmem:[%s1 + $0x1e4] sm:$0xf]
        %v296 = vld [vmem:[%s1 + $0x1e8] sm:$0xf]
        %v297 = vld [vmem:[%s1 + $0x1ec] sm:$0xf]
        %v298 = vld [vmem:[%s1 + $0x1f0] sm:$0xf]
        %v299 = vld [vmem:[%s1 + $0x1f4] sm:$0xf]
        %v300 = vld [vmem:[%s1 + $0x1f8] sm:$0xf]
        %v301 = vld [vmem:[%s1 + $0x1fc] sm:$0xf]
        %v302 = vld [vmem:[%s1 + $0x200] sm:$0xf]
        %v303 = vld [vmem:[%s1 + $0x204] sm:$0xf]
        %v304 = vld [vmem:[%s1 + $0x208] sm:$0xf]
        %v305 = vld [vmem:[%s1 + $0x20c] sm:$0xf]
        %v306 = vld [vmem:[%s1 + $0x210] sm:$0xf]
        %v307 = vld [vmem:[%s1 + $0x214] sm:$0xf]
        %v308 = vld [vmem:[%s1 + $0x218] sm:$0xf]
        %v309 = vld [vmem:[%s1 + $0x21c] sm:$0xf]
        %v310 = vld [vmem:[%s1 + $0x220] sm:$0xf]
        %v311 = vld [vmem:[%s1 + $0x224] sm:$0xf]
        %v312 = vld [vmem:[%s1 + $0x228] sm:$0xf]
        %v313 = vld [vmem:[%s1 + $0x22c] sm:$0xf]
        %v314 = vld [vmem:[%s1 + $0x230] sm:$0xf]
        %v315 = vld [vmem:[%s1 + $0x234] sm:$0xf]
        %v316 = vld [vmem:[%s1 + $0x238] sm:$0xf]
        %v317 = vld [vmem:[%s1 + $0x23c] sm:$0xf]
        %v318 = vpack.c.bf16 %v168, %v168
        %v319 = vpack.c.bf16 %v170, %v170
        %v336 = vunpack.c.l.b16 %v190
        %v337 = vunpack.c.l.b16 %v191
        %v338 = vunpack.c.l.b16 %v192
        %v339 = vunpack.c.l.b16 %v193
        %v340 = vunpack.c.l.b16 %v194
        %v341 = vunpack.c.l.b16 %v195
        %v342 = vunpack.c.l.b16 %v196
        %v343 = vunpack.c.l.b16 %v197
        %v344 = vunpack.c.l.b16 %v198
        %v345 = vunpack.c.l.b16 %v199
        %v346 = vunpack.c.l.b16 %v200
        %v347 = vunpack.c.l.b16 %v201
        %v348 = vunpack.c.l.b16 %v202
        %v349 = vunpack.c.l.b16 %v203
        %v350 = vunpack.c.l.b16 %v204
        %v351 = vunpack.c.l.b16 %v205
        %v352 = vpack.c.b16 %v337, %v336
        %v353 = vpack.c.b16 %v339, %v338
        %v354 = vpack.c.b16 %v341, %v340
        %v355 = vpack.c.b16 %v343, %v342
        %v356 = vpack.c.b16 %v345, %v344
        %v357 = vpack.c.b16 %v347, %v346
        %v358 = vpack.c.b16 %v349, %v348
        %v359 = vpack.c.b16 %v351, %v350
        %368 = vmatpush.bf16.msra.mxu0 %v359
        %369 = vmatpush.bf16.msra.mxu0 %v358
        %370 = vmatpush.bf16.msra.mxu0 %v357
        %371 = vmatpush.bf16.msra.mxu0 %v356
        %372 = vmatpush.bf16.msra.mxu0 %v355
        %373 = vmatpush.bf16.msra.mxu0 %v354
        %374 = vmatpush.bf16.msra.mxu0 %v353
        %375 = vmatpush.bf16.msra.mxu0 %v352
        %376 = vmatmul.bf16.gmra.mxu0 %v319
        %v377 = vpop.f32.mrf.mxu0
        %v378 = vadd.f32 0.0, %v377
        %v379 = vpop.f32.mrf.mxu0
        %380 = vdwg.mxu0
        %v397 = vunpack.c.l.b16 %v174
        %v398 = vunpack.c.l.b16 %v175
        %v399 = vunpack.c.l.b16 %v176
        %v400 = vunpack.c.l.b16 %v177
        %v401 = vunpack.c.l.b16 %v178
        %v402 = vunpack.c.l.b16 %v179
        %v403 = vunpack.c.l.b16 %v180
        %v404 = vunpack.c.l.b16 %v181
        %v405 = vunpack.c.l.b16 %v182
        %v406 = vunpack.c.l.b16 %v183
        %v407 = vunpack.c.l.b16 %v184
        %v408 = vunpack.c.l.b16 %v185
        %v409 = vunpack.c.l.b16 %v186
        %v410 = vunpack.c.l.b16 %v187
        %v411 = vunpack.c.l.b16 %v188
        %v412 = vunpack.c.l.b16 %v189
        %v413 = vpack.c.b16 %v398, %v397
        %v414 = vpack.c.b16 %v400, %v399
        %v415 = vpack.c.b16 %v402, %v401
        %v416 = vpack.c.b16 %v404, %v403
        %v417 = vpack.c.b16 %v406, %v405
        %v418 = vpack.c.b16 %v408, %v407
        %v419 = vpack.c.b16 %v410, %v409
        %v420 = vpack.c.b16 %v412, %v411
        %429 = vmatpush.bf16.msra.mxu0 %v420
        %430 = vmatpush.bf16.msra.mxu0 %v419
        %431 = vmatpush.bf16.msra.mxu0 %v418
        %432 = vmatpush.bf16.msra.mxu0 %v417
        %433 = vmatpush.bf16.msra.mxu0 %v416
        %434 = vmatpush.bf16.msra.mxu0 %v415
        %435 = vmatpush.bf16.msra.mxu0 %v414
        %436 = vmatpush.bf16.msra.mxu0 %v413
        %437 = vmatmul.bf16.gmra.mxu0 %v318
        %v438 = vpop.f32.mrf.mxu0
        %v439 = vadd.f32 %v378, %v438
        %v440 = vpop.f32.mrf.mxu0
        %441 = vdwg.mxu0
        %v443 = vshrl.u32 %v318, 16
        %v462 = vunpack.c.l.b16 %v206
        %v463 = vunpack.c.l.b16 %v207
        %v464 = vunpack.c.l.b16 %v208
        %v465 = vunpack.c.l.b16 %v209
        %v466 = vunpack.c.l.b16 %v210
        %v467 = vunpack.c.l.b16 %v211
        %v468 = vunpack.c.l.b16 %v212
        %v469 = vunpack.c.l.b16 %v213
        %v470 = vunpack.c.l.b16 %v214
        %v471 = vunpack.c.l.b16 %v215
        %v472 = vunpack.c.l.b16 %v216
        %v473 = vunpack.c.l.b16 %v217
        %v474 = vunpack.c.l.b16 %v218
        %v475 = vunpack.c.l.b16 %v219
        %v476 = vunpack.c.l.b16 %v220
        %v477 = vunpack.c.l.b16 %v221
        %v478 = vpack.c.b16 %v463, %v462
        %v479 = vpack.c.b16 %v465, %v464
        %v480 = vpack.c.b16 %v467, %v466
        %v481 = vpack.c.b16 %v469, %v468
        %v482 = vpack.c.b16 %v471, %v470
        %v483 = vpack.c.b16 %v473, %v472
        %v484 = vpack.c.b16 %v475, %v474
        %v485 = vpack.c.b16 %v477, %v476
        %494 = vmatpush.bf16.msra.mxu0 %v485
        %495 = vmatpush.bf16.msra.mxu0 %v484
        %496 = vmatpush.bf16.msra.mxu0 %v483
        %497 = vmatpush.bf16.msra.mxu0 %v482
        %498 = vmatpush.bf16.msra.mxu0 %v481
        %499 = vmatpush.bf16.msra.mxu0 %v480
        %500 = vmatpush.bf16.msra.mxu0 %v479
        %501 = vmatpush.bf16.msra.mxu0 %v478
        %502 = vmatmul.bf16.gmra.mxu0 %v443
        %v503 = vpop.f32.mrf.mxu0
        %v504 = vadd.f32 0.0, %v503
        %v505 = vpop.f32.mrf.mxu0
        %506 = vdwg.mxu0
        %v507 = vadd.f32 %v439, %v504
        %v508 = vpack.c.bf16 %v172, %v172
        %v525 = vunpack.c.l.b16 %v222
        %v526 = vunpack.c.l.b16 %v223
        %v527 = vunpack.c.l.b16 %v224
        %v528 = vunpack.c.l.b16 %v225
        %v529 = vunpack.c.l.b16 %v226
        %v530 = vunpack.c.l.b16 %v227
        %v531 = vunpack.c.l.b16 %v228
        %v532 = vunpack.c.l.b16 %v229
        %v533 = vunpack.c.l.b16 %v230
        %v534 = vunpack.c.l.b16 %v231
        %v535 = vunpack.c.l.b16 %v232
        %v536 = vunpack.c.l.b16 %v233
        %v537 = vunpack.c.l.b16 %v234
        %v538 = vunpack.c.l.b16 %v235
        %v539 = vunpack.c.l.b16 %v236
        %v540 = vunpack.c.l.b16 %v237
        %v541 = vpack.c.b16 %v526, %v525
        %v542 = vpack.c.b16 %v528, %v527
        %v543 = vpack.c.b16 %v530, %v529
        %v544 = vpack.c.b16 %v532, %v531
        %v545 = vpack.c.b16 %v534, %v533
        %v546 = vpack.c.b16 %v536, %v535
        %v547 = vpack.c.b16 %v538, %v537
        %v548 = vpack.c.b16 %v540, %v539
        %557 = vmatpush.bf16.msra.mxu0 %v548
        %558 = vmatpush.bf16.msra.mxu0 %v547
        %559 = vmatpush.bf16.msra.mxu0 %v546
        %560 = vmatpush.bf16.msra.mxu0 %v545
        %561 = vmatpush.bf16.msra.mxu0 %v544
        %562 = vmatpush.bf16.msra.mxu0 %v543
        %563 = vmatpush.bf16.msra.mxu0 %v542
        %564 = vmatpush.bf16.msra.mxu0 %v541
        %565 = vmatmul.bf16.gmra.mxu0 %v508
        %v566 = vpop.f32.mrf.mxu0
        %v567 = vadd.f32 0.0, %v566
        %v568 = vpop.f32.mrf.mxu0
        %569 = vdwg.mxu0
        %v570 = vadd.f32 %v507, %v567
        %v571 = vpack.c.bf16 %v173, %v173
        %v588 = vunpack.c.l.b16 %v238
        %v589 = vunpack.c.l.b16 %v239
        %v590 = vunpack.c.l.b16 %v240
        %v591 = vunpack.c.l.b16 %v241
        %v592 = vunpack.c.l.b16 %v242
        %v593 = vunpack.c.l.b16 %v243
        %v594 = vunpack.c.l.b16 %v244
        %v595 = vunpack.c.l.b16 %v245
        %v596 = vunpack.c.l.b16 %v246
        %v597 = vunpack.c.l.b16 %v247
        %v598 = vunpack.c.l.b16 %v248
        %v599 = vunpack.c.l.b16 %v249
        %v600 = vunpack.c.l.b16 %v250
        %v601 = vunpack.c.l.b16 %v251
        %v602 = vunpack.c.l.b16 %v252
        %v603 = vunpack.c.l.b16 %v253
        %v604 = vpack.c.b16 %v589, %v588
        %v605 = vpack.c.b16 %v591, %v590
        %v606 = vpack.c.b16 %v593, %v592
        %v607 = vpack.c.b16 %v595, %v594
        %v608 = vpack.c.b16 %v597, %v596
        %v609 = vpack.c.b16 %v599, %v598
        %v610 = vpack.c.b16 %v601, %v600
        %v611 = vpack.c.b16 %v603, %v602
        %620 = vmatpush.bf16.msra.mxu0 %v611
        %621 = vmatpush.bf16.msra.mxu0 %v610
        %622 = vmatpush.bf16.msra.mxu0 %v609
        %623 = vmatpush.bf16.msra.mxu0 %v608
        %624 = vmatpush.bf16.msra.mxu0 %v607
        %625 = vmatpush.bf16.msra.mxu0 %v606
        %626 = vmatpush.bf16.msra.mxu0 %v605
        %627 = vmatpush.bf16.msra.mxu0 %v604
        %628 = vmatmul.bf16.gmra.mxu0 %v571
        %v629 = vpop.f32.mrf.mxu0
        %v630 = vadd.f32 0.0, %v629
        %v631 = vpop.f32.mrf.mxu0
        %632 = vdwg.mxu0
        %v633 = vadd.f32 %v570, %v630
        %v635 = vshrl.u32 %v508, 16
        %v654 = vunpack.c.l.b16 %v254
        %v655 = vunpack.c.l.b16 %v255
        %v656 = vunpack.c.l.b16 %v256
        %v657 = vunpack.c.l.b16 %v257
        %v658 = vunpack.c.l.b16 %v258
        %v659 = vunpack.c.l.b16 %v259
        %v660 = vunpack.c.l.b16 %v260
        %v661 = vunpack.c.l.b16 %v261
        %v662 = vunpack.c.l.b16 %v262
        %v663 = vunpack.c.l.b16 %v263
        %v664 = vunpack.c.l.b16 %v264
        %v665 = vunpack.c.l.b16 %v265
        %v666 = vunpack.c.l.b16 %v266
        %v667 = vunpack.c.l.b16 %v267
        %v668 = vunpack.c.l.b16 %v268
        %v669 = vunpack.c.l.b16 %v269
        %v670 = vpack.c.b16 %v655, %v654
        %v671 = vpack.c.b16 %v657, %v656
        %v672 = vpack.c.b16 %v659, %v658
        %v673 = vpack.c.b16 %v661, %v660
        %v674 = vpack.c.b16 %v663, %v662
        %v675 = vpack.c.b16 %v665, %v664
        %v676 = vpack.c.b16 %v667, %v666
        %v677 = vpack.c.b16 %v669, %v668
        %686 = vmatpush.bf16.msra.mxu0 %v677
        %687 = vmatpush.bf16.msra.mxu0 %v676
        %688 = vmatpush.bf16.msra.mxu0 %v675
        %689 = vmatpush.bf16.msra.mxu0 %v674
        %690 = vmatpush.bf16.msra.mxu0 %v673
        %691 = vmatpush.bf16.msra.mxu0 %v672
        %692 = vmatpush.bf16.msra.mxu0 %v671
        %693 = vmatpush.bf16.msra.mxu0 %v670
        %694 = vmatmul.bf16.gmra.mxu0 %v635
        %v695 = vpop.f32.mrf.mxu0
        %v696 = vadd.f32 0.0, %v695
        %v697 = vpop.f32.mrf.mxu0
        %698 = vdwg.mxu0
        %v699 = vadd.f32 %v633, %v696
        %v700 = vpack.c.bf16 %v169, %v169
        %v717 = vunpack.c.l.b16 %v270
        %v718 = vunpack.c.l.b16 %v271
        %v719 = vunpack.c.l.b16 %v272
        %v720 = vunpack.c.l.b16 %v273
        %v721 = vunpack.c.l.b16 %v274
        %v722 = vunpack.c.l.b16 %v275
        %v723 = vunpack.c.l.b16 %v276
        %v724 = vunpack.c.l.b16 %v277
        %v725 = vunpack.c.l.b16 %v278
        %v726 = vunpack.c.l.b16 %v279
        %v727 = vunpack.c.l.b16 %v280
        %v728 = vunpack.c.l.b16 %v281
        %v729 = vunpack.c.l.b16 %v282
        %v730 = vunpack.c.l.b16 %v283
        %v731 = vunpack.c.l.b16 %v284
        %v732 = vunpack.c.l.b16 %v285
        %v733 = vpack.c.b16 %v718, %v717
        %v734 = vpack.c.b16 %v720, %v719
        %v735 = vpack.c.b16 %v722, %v721
        %v736 = vpack.c.b16 %v724, %v723
        %v737 = vpack.c.b16 %v726, %v725
        %v738 = vpack.c.b16 %v728, %v727
        %v739 = vpack.c.b16 %v730, %v729
        %v740 = vpack.c.b16 %v732, %v731
        %749 = vmatpush.bf16.msra.mxu0 %v740
        %750 = vmatpush.bf16.msra.mxu0 %v739
        %751 = vmatpush.bf16.msra.mxu0 %v738
        %752 = vmatpush.bf16.msra.mxu0 %v737
        %753 = vmatpush.bf16.msra.mxu0 %v736
        %754 = vmatpush.bf16.msra.mxu0 %v735
        %755 = vmatpush.bf16.msra.mxu0 %v734
        %756 = vmatpush.bf16.msra.mxu0 %v733
        %757 = vmatmul.bf16.gmra.mxu0 %v700
        %v758 = vpop.f32.mrf.mxu0
        %v759 = vadd.f32 0.0, %v758
        %v760 = vpop.f32.mrf.mxu0
        %761 = vdwg.mxu0
        %v762 = vadd.f32 %v699, %v759
        %v763 = vpack.c.bf16 %v171, %v171
        %v780 = vunpack.c.l.b16 %v286
        %v781 = vunpack.c.l.b16 %v287
        %v782 = vunpack.c.l.b16 %v288
        %v783 = vunpack.c.l.b16 %v289
        %v784 = vunpack.c.l.b16 %v290
        %v785 = vunpack.c.l.b16 %v291
        %v786 = vunpack.c.l.b16 %v292
        %v787 = vunpack.c.l.b16 %v293
        %v788 = vunpack.c.l.b16 %v294
        %v789 = vunpack.c.l.b16 %v295
        %v790 = vunpack.c.l.b16 %v296
        %v791 = vunpack.c.l.b16 %v297
        %v792 = vunpack.c.l.b16 %v298
        %v793 = vunpack.c.l.b16 %v299
        %v794 = vunpack.c.l.b16 %v300
        %v795 = vunpack.c.l.b16 %v301
        %v796 = vpack.c.b16 %v781, %v780
        %v797 = vpack.c.b16 %v783, %v782
        %v798 = vpack.c.b16 %v785, %v784
        %v799 = vpack.c.b16 %v787, %v786
        %v800 = vpack.c.b16 %v789, %v788
        %v801 = vpack.c.b16 %v791, %v790
        %v802 = vpack.c.b16 %v793, %v792
        %v803 = vpack.c.b16 %v795, %v794
        %812 = vmatpush.bf16.msra.mxu0 %v803
        %813 = vmatpush.bf16.msra.mxu0 %v802
        %814 = vmatpush.bf16.msra.mxu0 %v801
        %815 = vmatpush.bf16.msra.mxu0 %v800
        %816 = vmatpush.bf16.msra.mxu0 %v799
        %817 = vmatpush.bf16.msra.mxu0 %v798
        %818 = vmatpush.bf16.msra.mxu0 %v797
        %819 = vmatpush.bf16.msra.mxu0 %v796
        %820 = vmatmul.bf16.gmra.mxu0 %v763
        %v821 = vpop.f32.mrf.mxu0
        %v822 = vadd.f32 0.0, %v821
        %v823 = vpop.f32.mrf.mxu0
        %824 = vdwg.mxu0
        %v825 = vadd.f32 %v762, %v822
        %v827 = vshrl.u32 %v700, 16
        %v846 = vunpack.c.l.b16 %v302
        %v847 = vunpack.c.l.b16 %v303
        %v848 = vunpack.c.l.b16 %v304
        %v849 = vunpack.c.l.b16 %v305
        %v850 = vunpack.c.l.b16 %v306
        %v851 = vunpack.c.l.b16 %v307
        %v852 = vunpack.c.l.b16 %v308
        %v853 = vunpack.c.l.b16 %v309
        %v854 = vunpack.c.l.b16 %v310
        %v855 = vunpack.c.l.b16 %v311
        %v856 = vunpack.c.l.b16 %v312
        %v857 = vunpack.c.l.b16 %v313
        %v858 = vunpack.c.l.b16 %v314
        %v859 = vunpack.c.l.b16 %v315
        %v860 = vunpack.c.l.b16 %v316
        %v861 = vunpack.c.l.b16 %v317
        %v862 = vpack.c.b16 %v847, %v846
        %v863 = vpack.c.b16 %v849, %v848
        %v864 = vpack.c.b16 %v851, %v850
        %v865 = vpack.c.b16 %v853, %v852
        %v866 = vpack.c.b16 %v855, %v854
        %v867 = vpack.c.b16 %v857, %v856
        %v868 = vpack.c.b16 %v859, %v858
        %v869 = vpack.c.b16 %v861, %v860
        %878 = vmatpush.bf16.msra.mxu0 %v869
        %879 = vmatpush.bf16.msra.mxu0 %v868
        %880 = vmatpush.bf16.msra.mxu0 %v867
        %881 = vmatpush.bf16.msra.mxu0 %v866
        %882 = vmatpush.bf16.msra.mxu0 %v865
        %883 = vmatpush.bf16.msra.mxu0 %v864
        %884 = vmatpush.bf16.msra.mxu0 %v863
        %885 = vmatpush.bf16.msra.mxu0 %v862
        %886 = vmatmul.bf16.gmra.mxu0 %v827
        %v887 = vpop.f32.mrf.mxu0
        %v888 = vadd.f32 0.0, %v887
        %v889 = vpop.f32.mrf.mxu0
        %890 = vdwg.mxu0
        %v891 = vadd.f32 %v825, %v888
        %v892 = vld [vmem:[%s2] sm:$0x1]
        %v893 = vadd.f32 %v891, %v892
        %v894 = vmax.f32 %v893, 0.0
        %895 = vst [vmem:[%s162] sm:$0x1] %v894
        %s896 = sand.u32 %s93, 1
        %s897 = scalar_lea.sflag [#allocation3], %s896
        %s898 = sand.u32 %s93, 1
        %s899 = scalar_lea.vmem [#allocation2], %s898
        // Predicated region
        $region33: #{pyramid_forward.15} parent=31 // pred_check
          %p900 = pneg %p103
        $region34: #{pyramid_forward.15} parent=31 // pred_check_branch
          %902 = sbr.rel (%p900) target = $region36
        $region35: #{pyramid_forward.15} parent=31 // pred_region
          %904 = vsyncadd %s897, 0
          %s905 = scalar_lea.hbm %s3, %s17
          %s907 = sshll.u32 %s899, 4
          %s908 = int_to_ptr.vmem [resolvable:$true] %s907
          %s909 = sshll.u32 %s905, 4
          %s910 = int_to_ptr.hbm [resolvable:$true] %s909
          %912 = dma.vmem_to_hbm [thread:$0]  %s908, 16, %s910, %s897
        $region36: #{pyramid_forward.15} parent=31 // pred_fallthru
          _
      $region32: #{pyramid_forward.15} parent=5 // pred_fallthru
        _
      %p913 = scmp.le.s32.totalorder 2, %s12
      // Predicated region
      $region37: #{pyramid_forward.15} parent=5 // pred_check
        %p914 = pneg %p913
      $region38: #{pyramid_forward.15} parent=5 // pred_check_branch
        %916 = sbr.rel (%p914) target = $region40
      $region39: #{pyramid_forward.15} parent=5 // pred_region
        %s917 = ssub.s32 %s12, 2
        // Predicated region
        $region41: #{pyramid_forward.15} parent=39 // pred_check
          %p918 = pneg %p109
        $region42: #{pyramid_forward.15} parent=39 // pred_check_branch
          %920 = sbr.rel (%p918) target = $region44
        $region43: #{pyramid_forward.15} parent=39 // pred_region
          %s921 = sand.u32 %s94, 1
          %s922 = scalar_lea.sflag [#allocation3], %s921
          %s923 = sand.u32 %s94, 1
          %s924 = scalar_lea.vmem [#allocation2], %s923
          %926 = dma.done %s922, 16
        $region44: #{pyramid_forward.15} parent=39 // pred_fallthru
          _
      $region40: #{pyramid_forward.15} parent=5 // pred_fallthru
        _
    $region6: #{pyramid_forward.15} parent=1 // loop_footer
      %s16 = sadd.s32 1, %s12
    $region7: #{pyramid_forward.15} parent=1 // loop_footer_branch
      %11 = sbr.rel target = $region3
    $region8: #{pyramid_forward.15} parent=1 // loop_exit
      _
    %927 = vsyncpa [#allocation3], 1
    %s928 = scalar_lea.sflag [#allocation3], 1
    %929 = vsyncpa %s928, 1

</llo_original>
